<compile_context>
chip_gen: v7x
topology: tpu7x:2x2x1
jax: 0.10.0
libtpu: 0.0.40
codegen_flags: <defaults>
</compile_context>

<pallas_src>
import math

import jax
import jax.numpy as jnp
from jax.experimental import pallas as pl
from jax.experimental.pallas import tpu as pltpu

EPS = 1e-5  # nn.BatchNorm2d default eps

_TAPS = [(dy, dx) for dy in range(3) for dx in range(3)]  # dy-major, dx-minor


# ------------------------------ fused kernel --------------------------------

def _double_conv_kernel(xpad_ref, w1_ref, p1_ref, w2_ref, p2_ref, o_ref, mid_ref):
    # xpad_ref: (N, H+2, W+2, Cin)  f32, zero-padded borders
    # w1_ref:   (9, Cin,  Cmid)     bf16   (tap index t = dy*3 + dx)
    # p1_ref:   (3, Cmid)           f32    rows = [conv bias, bn gamma, bn beta]
    # w2_ref:   (9, Cmid, Cout)     bf16
    # p2_ref:   (3, Cout)           f32
    # o_ref:    (Cout, N*H*W)       f32    lane-dense output
    # mid_ref:  (N, H+2, W+2, Cmid) f32    VMEM scratch (padded intermediate)
    N, Hp, Wp, Cin = xpad_ref.shape
    H, W = Hp - 2, Wp - 2
    Cmid = w1_ref.shape[2]
    Cout = w2_ref.shape[2]
    M = N * H * W

    def conv3x3_bn_relu(src_ref, w_ref, p_ref, c_in, c_out):
        # 3x3 / pad=1 conv as 9 shifted bf16 matmuls, accumulated in f32.
        acc = jnp.zeros((M, c_out), jnp.float32)
        for t, (dy, dx) in enumerate(_TAPS):
            tap = src_ref[:, dy:dy + H, dx:dx + W, :].reshape(M, c_in)
            acc = acc + jnp.dot(tap.astype(jnp.bfloat16), w_ref[t],
                                preferred_element_type=jnp.float32)
        y = acc + p_ref[0:1, :]                                   # conv bias
        # BatchNorm2d (fresh module => training mode => biased batch stats), f32.
        mean = jnp.mean(y, axis=0, keepdims=True)
        var = jnp.mean(jnp.square(y - mean), axis=0, keepdims=True)
        scale = p_ref[1:2, :] * jax.lax.rsqrt(var + EPS)          # gamma folded in
        shift = p_ref[2:3, :] - mean * scale
        return jnp.maximum(y * scale + shift, 0.0)                # ReLU

    # conv1 -> BN -> ReLU
    h1 = conv3x3_bn_relu(xpad_ref, w1_ref, p1_ref, Cin, Cmid)

    # keep the (padded) intermediate in VMEM for the second conv
    mid_ref[...] = jnp.zeros(mid_ref.shape, mid_ref.dtype)
    mid_ref[:, 1:1 + H, 1:1 + W, :] = h1.reshape(N, H, W, Cmid)

    # conv2 -> BN -> ReLU
    h2 = conv3x3_bn_relu(mid_ref, w2_ref, p2_ref, Cmid, Cout)

    # lane-dense store: (Cout, N*H*W) with N*H*W on the 128-lane axis
    o_ref[...] = h2.T


# ------------------------------ wrapper --------------------------------------

def _full_spec(shape):
    n = len(shape)
    return pl.BlockSpec(shape, lambda i, _n=n: (0,) * _n)


def double_conv(x_nchw, params):
    """PyTorch DoubleConv forward: (N, Cin, H, W) f32 -> (N, Cout, H, W) f32."""
    N, Cin, H, W = x_nchw.shape
    w1, w2 = params['w1'], params['w2']          # (3,3,Cin,Cmid), (3,3,Cmid,Cout)
    Cmid, Cout = w1.shape[-1], w2.shape[-1]
    M = N * H * W

    # NCHW -> NHWC, pad once for the first 3x3 / pad=1 conv (tiny XLA-side op)
    x_nhwc = jnp.transpose(x_nchw, (0, 2, 3, 1)).astype(jnp.float32)
    xpad = jnp.pad(x_nhwc, ((0, 0), (1, 1), (1, 1), (0, 0)))

    # bf16 conv weights (tap-major), packed f32 [bias; gamma; beta] per conv
    w1k = w1.reshape(9, Cin, Cmid).astype(jnp.bfloat16)
    w2k = w2.reshape(9, Cmid, Cout).astype(jnp.bfloat16)
    p1k = jnp.stack([params['b1'], params['g1'], params['be1']]).astype(jnp.float32)
    p2k = jnp.stack([params['b2'], params['g2'], params['be2']]).astype(jnp.float32)

    args = (xpad, w1k, p1k, w2k, p2k)
    out = pl.pallas_call(
        _double_conv_kernel,
        grid=(1,),
        in_specs=[_full_spec(a.shape) for a in args],
        out_specs=_full_spec((Cout, M)),
        out_shape=jax.ShapeDtypeStruct((Cout, M), jnp.float32),
        scratch_shapes=[pltpu.VMEM((N, H + 2, W + 2, Cmid), jnp.float32)],
        compiler_params=pltpu.CompilerParams(dimension_semantics=("arbitrary",)),
    )(*args)

    # (Cout, N*H*W) -> (N, Cout, H, W)   (PyTorch NCHW)
    return jnp.transpose(out.reshape(Cout, N, H, W), (1, 0, 2, 3))


# ------------------------------ parameters -----------------------------------

def init_params(key, cin, cout, cmid=None):
    cmid = cmid or cout          # DoubleConv default: mid_channels = out_channels
    ks = jax.random.split(key, 6)

    def conv_p(k, ci, co):
        kw, kb = jax.random.split(k)
        bound = 1.0 / math.sqrt(ci * 9)                  # PyTorch Conv2d default init
        w = jax.random.uniform(kw, (3, 3, ci, co), jnp.float32, -bound, bound)
        b = jax.random.uniform(kb, (co,), jnp.float32, -bound, bound)
        return w, b

    w1, b1 = conv_p(ks[0], cin, cmid)
    w2, b2 = conv_p(ks[1], cmid, cout)
    # mildly perturbed BN affine params so the gamma/beta path is exercised
    g1 = 1.0 + 0.1 * jax.random.normal(ks[2], (cmid,), jnp.float32)
    be1 = 0.1 * jax.random.normal(ks[3], (cmid,), jnp.float32)
    g2 = 1.0 + 0.1 * jax.random.normal(ks[4], (cout,), jnp.float32)
    be2 = 0.1 * jax.random.normal(ks[5], (cout,), jnp.float32)
    return dict(w1=w1, b1=b1, g1=g1, be1=be1, w2=w2, b2=b2, g2=g2, be2=be2)


# ------------------------------ pure-JAX reference ----------------------------

def _ref_conv_bn_relu(x, w_hwio, b, g, be):
    w_oihw = jnp.transpose(w_hwio, (3, 2, 0, 1))
    y = jax.lax.conv_general_dilated(
        x, w_oihw, window_strides=(1, 1), padding=((1, 1), (1, 1)),
        dimension_numbers=('NCHW', 'OIHW', 'NCHW'))
    y = y + b[None, :, None, None]
    mean = jnp.mean(y, axis=(0, 2, 3), keepdims=True)
    var = jnp.mean(jnp.square(y - mean), axis=(0, 2, 3), keepdims=True)
    y = (y - mean) * jax.lax.rsqrt(var + EPS)
    y = y * g[None, :, None, None] + be[None, :, None, None]
    return jnp.maximum(y, 0.0)


def ref_double_conv(x, p):
    y = _ref_conv_bn_relu(x, p['w1'], p['b1'], p['g1'], p['be1'])
    return _ref_conv_bn_relu(y, p['w2'], p['b2'], p['g2'], p['be2'])


# --------------------------------- main ---------------------------------------

if __name__ == "__main__":
    key = jax.random.PRNGKey(0)
    kx, kp = jax.random.split(key)

    x = jax.random.normal(kx, (2, 4, 16, 16), jnp.float32)   # NCHW, like PyTorch
    params = init_params(kp, cin=4, cout=16)                 # DoubleConv(4, 16)

    out = jax.block_until_ready(jax.jit(double_conv)(x, params))
    ref = ref_double_conv(x, params)

    assert out.shape == (2, 16, 16, 16), out.shape
    assert bool(jnp.all(jnp.isfinite(out)))
    max_err = float(jnp.max(jnp.abs(out - ref)))
    assert max_err < 0.2, f"max |pallas - reference| = {max_err}"   # bf16 MXU tolerance
    print("KERNEL_OK")
</pallas_src>

<mosaic_0001>
module attributes {stable_mosaic.version = 11 : i64} {
  func.func @_double_conv_kernel(%arg0: i32, %arg1: memref<2x18x18x4xf32, #tpu.memory_space<vmem>>, %arg2: memref<9x4x16xbf16, #tpu.memory_space<vmem>>, %arg3: memref<3x16xf32, #tpu.memory_space<vmem>>, %arg4: memref<9x16x16xbf16, #tpu.memory_space<vmem>>, %arg5: memref<3x16xf32, #tpu.memory_space<vmem>>, %arg6: memref<16x512xf32, #tpu.memory_space<vmem>>, %arg7: memref<2x18x18x16xf32, #tpu.memory_space<vmem>>) attributes {dimension_semantics = [#tpu.dimension_semantics<arbitrary>], iteration_bounds = array<i64: 1>, scalar_prefetch = 0 : i64, scratch_operands = 1 : i64, tpu.core_type = #tpu.core_type<tc>, window_params = [{pipeline_mode = #tpu.pipeline_mode<synchronous>, transform_indices = @transform_0, window_bounds = array<i64: 2, 18, 18, 4>}, {pipeline_mode = #tpu.pipeline_mode<synchronous>, transform_indices = @transform_1, window_bounds = array<i64: 9, 4, 16>}, {pipeline_mode = #tpu.pipeline_mode<synchronous>, transform_indices = @transform_2, window_bounds = array<i64: 3, 16>}, {pipeline_mode = #tpu.pipeline_mode<synchronous>, transform_indices = @transform_3, window_bounds = array<i64: 9, 16, 16>}, {pipeline_mode = #tpu.pipeline_mode<synchronous>, transform_indices = @transform_4, window_bounds = array<i64: 3, 16>}, {pipeline_mode = #tpu.pipeline_mode<synchronous>, transform_indices = @transform_5, window_bounds = array<i64: 16, 512>}]} {
    %cst = arith.constant 0.000000e+00 : f32
    %0 = vector.broadcast %cst : f32 to vector<512x16xf32>
    %c0 = arith.constant 0 : index
    %c0_0 = arith.constant 0 : index
    %c0_1 = arith.constant 0 : index
    %c0_2 = arith.constant 0 : index
    %1 = vector.load %arg1[%c0, %c0_0, %c0_1, %c0_2] : memref<2x18x18x4xf32, #tpu.memory_space<vmem>>, vector<2x16x16x4xf32>
    %2 = vector.shape_cast %1 : vector<2x16x16x4xf32> to vector<512x4xf32>
    %3 = arith.truncf %2 : vector<512x4xf32> to vector<512x4xbf16>
    %c0_3 = arith.constant 0 : index
    %c0_4 = arith.constant 0 : index
    %c0_5 = arith.constant 0 : index
    %4 = vector.load %arg2[%c0_3, %c0_4, %c0_5] : memref<9x4x16xbf16, #tpu.memory_space<vmem>>, vector<1x4x16xbf16>
    %5 = vector.shape_cast %4 : vector<1x4x16xbf16> to vector<4x16xbf16>
    %cst_6 = arith.constant dense<0.000000e+00> : vector<512x16xf32>
    %6 = tpu.matmul %3, %5, %cst_6 {dimension_numbers = #tpu.dot_dimension_numbers<[1], [0], [0], [1], [0, 0, 1, 1], [], []>} : vector<512x4xbf16>, vector<4x16xbf16>, vector<512x16xf32> -> vector<512x16xf32>
    %7 = arith.addf %0, %6 : vector<512x16xf32>
    %c0_7 = arith.constant 0 : index
    %c0_8 = arith.constant 0 : index
    %c1 = arith.constant 1 : index
    %c0_9 = arith.constant 0 : index
    %8 = vector.load %arg1[%c0_7, %c0_8, %c1, %c0_9] : memref<2x18x18x4xf32, #tpu.memory_space<vmem>>, vector<2x16x16x4xf32>
    %9 = vector.shape_cast %8 : vector<2x16x16x4xf32> to vector<512x4xf32>
    %10 = arith.truncf %9 : vector<512x4xf32> to vector<512x4xbf16>
    %c1_10 = arith.constant 1 : index
    %c0_11 = arith.constant 0 : index
    %c0_12 = arith.constant 0 : index
    %11 = vector.load %arg2[%c1_10, %c0_11, %c0_12] : memref<9x4x16xbf16, #tpu.memory_space<vmem>>, vector<1x4x16xbf16>
    %12 = vector.shape_cast %11 : vector<1x4x16xbf16> to vector<4x16xbf16>
    %cst_13 = arith.constant dense<0.000000e+00> : vector<512x16xf32>
    %13 = tpu.matmul %10, %12, %cst_13 {dimension_numbers = #tpu.dot_dimension_numbers<[1], [0], [0], [1], [0, 0, 1, 1], [], []>} : vector<512x4xbf16>, vector<4x16xbf16>, vector<512x16xf32> -> vector<512x16xf32>
    %14 = arith.addf %7, %13 : vector<512x16xf32>
    %c0_14 = arith.constant 0 : index
    %c0_15 = arith.constant 0 : index
    %c2 = arith.constant 2 : index
    %c0_16 = arith.constant 0 : index
    %15 = vector.load %arg1[%c0_14, %c0_15, %c2, %c0_16] : memref<2x18x18x4xf32, #tpu.memory_space<vmem>>, vector<2x16x16x4xf32>
    %16 = vector.shape_cast %15 : vector<2x16x16x4xf32> to vector<512x4xf32>
    %17 = arith.truncf %16 : vector<512x4xf32> to vector<512x4xbf16>
    %c2_17 = arith.constant 2 : index
    %c0_18 = arith.constant 0 : index
    %c0_19 = arith.constant 0 : index
    %18 = vector.load %arg2[%c2_17, %c0_18, %c0_19] : memref<9x4x16xbf16, #tpu.memory_space<vmem>>, vector<1x4x16xbf16>
    %19 = vector.shape_cast %18 : vector<1x4x16xbf16> to vector<4x16xbf16>
    %cst_20 = arith.constant dense<0.000000e+00> : vector<512x16xf32>
    %20 = tpu.matmul %17, %19, %cst_20 {dimension_numbers = #tpu.dot_dimension_numbers<[1], [0], [0], [1], [0, 0, 1, 1], [], []>} : vector<512x4xbf16>, vector<4x16xbf16>, vector<512x16xf32> -> vector<512x16xf32>
    %21 = arith.addf %14, %20 : vector<512x16xf32>
    %c0_21 = arith.constant 0 : index
    %c1_22 = arith.constant 1 : index
    %c0_23 = arith.constant 0 : index
    %c0_24 = arith.constant 0 : index
    %22 = vector.load %arg1[%c0_21, %c1_22, %c0_23, %c0_24] : memref<2x18x18x4xf32, #tpu.memory_space<vmem>>, vector<2x16x16x4xf32>
    %23 = vector.shape_cast %22 : vector<2x16x16x4xf32> to vector<512x4xf32>
    %24 = arith.truncf %23 : vector<512x4xf32> to vector<512x4xbf16>
    %c3 = arith.constant 3 : index
    %c0_25 = arith.constant 0 : index
    %c0_26 = arith.constant 0 : index
    %25 = vector.load %arg2[%c3, %c0_25, %c0_26] : memref<9x4x16xbf16, #tpu.memory_space<vmem>>, vector<1x4x16xbf16>
    %26 = vector.shape_cast %25 : vector<1x4x16xbf16> to vector<4x16xbf16>
    %cst_27 = arith.constant dense<0.000000e+00> : vector<512x16xf32>
    %27 = tpu.matmul %24, %26, %cst_27 {dimension_numbers = #tpu.dot_dimension_numbers<[1], [0], [0], [1], [0, 0, 1, 1], [], []>} : vector<512x4xbf16>, vector<4x16xbf16>, vector<512x16xf32> -> vector<512x16xf32>
    %28 = arith.addf %21, %27 : vector<512x16xf32>
    %c0_28 = arith.constant 0 : index
    %c1_29 = arith.constant 1 : index
    %c1_30 = arith.constant 1 : index
    %c0_31 = arith.constant 0 : index
    %29 = vector.load %arg1[%c0_28, %c1_29, %c1_30, %c0_31] : memref<2x18x18x4xf32, #tpu.memory_space<vmem>>, vector<2x16x16x4xf32>
    %30 = vector.shape_cast %29 : vector<2x16x16x4xf32> to vector<512x4xf32>
    %31 = arith.truncf %30 : vector<512x4xf32> to vector<512x4xbf16>
    %c4 = arith.constant 4 : index
    %c0_32 = arith.constant 0 : index
    %c0_33 = arith.constant 0 : index
    %32 = vector.load %arg2[%c4, %c0_32, %c0_33] : memref<9x4x16xbf16, #tpu.memory_space<vmem>>, vector<1x4x16xbf16>
    %33 = vector.shape_cast %32 : vector<1x4x16xbf16> to vector<4x16xbf16>
    %cst_34 = arith.constant dense<0.000000e+00> : vector<512x16xf32>
    %34 = tpu.matmul %31, %33, %cst_34 {dimension_numbers = #tpu.dot_dimension_numbers<[1], [0], [0], [1], [0, 0, 1, 1], [], []>} : vector<512x4xbf16>, vector<4x16xbf16>, vector<512x16xf32> -> vector<512x16xf32>
    %35 = arith.addf %28, %34 : vector<512x16xf32>
    %c0_35 = arith.constant 0 : index
    %c1_36 = arith.constant 1 : index
    %c2_37 = arith.constant 2 : index
    %c0_38 = arith.constant 0 : index
    %36 = vector.load %arg1[%c0_35, %c1_36, %c2_37, %c0_38] : memref<2x18x18x4xf32, #tpu.memory_space<vmem>>, vector<2x16x16x4xf32>
    %37 = vector.shape_cast %36 : vector<2x16x16x4xf32> to vector<512x4xf32>
    %38 = arith.truncf %37 : vector<512x4xf32> to vector<512x4xbf16>
    %c5 = arith.constant 5 : index
    %c0_39 = arith.constant 0 : index
    %c0_40 = arith.constant 0 : index
    %39 = vector.load %arg2[%c5, %c0_39, %c0_40] : memref<9x4x16xbf16, #tpu.memory_space<vmem>>, vector<1x4x16xbf16>
    %40 = vector.shape_cast %39 : vector<1x4x16xbf16> to vector<4x16xbf16>
    %cst_41 = arith.constant dense<0.000000e+00> : vector<512x16xf32>
    %41 = tpu.matmul %38, %40, %cst_41 {dimension_numbers = #tpu.dot_dimension_numbers<[1], [0], [0], [1], [0, 0, 1, 1], [], []>} : vector<512x4xbf16>, vector<4x16xbf16>, vector<512x16xf32> -> vector<512x16xf32>
    %42 = arith.addf %35, %41 : vector<512x16xf32>
    %c0_42 = arith.constant 0 : index
    %c2_43 = arith.constant 2 : index
    %c0_44 = arith.constant 0 : index
    %c0_45 = arith.constant 0 : index
    %43 = vector.load %arg1[%c0_42, %c2_43, %c0_44, %c0_45] : memref<2x18x18x4xf32, #tpu.memory_space<vmem>>, vector<2x16x16x4xf32>
    %44 = vector.shape_cast %43 : vector<2x16x16x4xf32> to vector<512x4xf32>
    %45 = arith.truncf %44 : vector<512x4xf32> to vector<512x4xbf16>
    %c6 = arith.constant 6 : index
    %c0_46 = arith.constant 0 : index
    %c0_47 = arith.constant 0 : index
    %46 = vector.load %arg2[%c6, %c0_46, %c0_47] : memref<9x4x16xbf16, #tpu.memory_space<vmem>>, vector<1x4x16xbf16>
    %47 = vector.shape_cast %46 : vector<1x4x16xbf16> to vector<4x16xbf16>
    %cst_48 = arith.constant dense<0.000000e+00> : vector<512x16xf32>
    %48 = tpu.matmul %45, %47, %cst_48 {dimension_numbers = #tpu.dot_dimension_numbers<[1], [0], [0], [1], [0, 0, 1, 1], [], []>} : vector<512x4xbf16>, vector<4x16xbf16>, vector<512x16xf32> -> vector<512x16xf32>
    %49 = arith.addf %42, %48 : vector<512x16xf32>
    %c0_49 = arith.constant 0 : index
    %c2_50 = arith.constant 2 : index
    %c1_51 = arith.constant 1 : index
    %c0_52 = arith.constant 0 : index
    %50 = vector.load %arg1[%c0_49, %c2_50, %c1_51, %c0_52] : memref<2x18x18x4xf32, #tpu.memory_space<vmem>>, vector<2x16x16x4xf32>
    %51 = vector.shape_cast %50 : vector<2x16x16x4xf32> to vector<512x4xf32>
    %52 = arith.truncf %51 : vector<512x4xf32> to vector<512x4xbf16>
    %c7 = arith.constant 7 : index
    %c0_53 = arith.constant 0 : index
    %c0_54 = arith.constant 0 : index
    %53 = vector.load %arg2[%c7, %c0_53, %c0_54] : memref<9x4x16xbf16, #tpu.memory_space<vmem>>, vector<1x4x16xbf16>
    %54 = vector.shape_cast %53 : vector<1x4x16xbf16> to vector<4x16xbf16>
    %cst_55 = arith.constant dense<0.000000e+00> : vector<512x16xf32>
    %55 = tpu.matmul %52, %54, %cst_55 {dimension_numbers = #tpu.dot_dimension_numbers<[1], [0], [0], [1], [0, 0, 1, 1], [], []>} : vector<512x4xbf16>, vector<4x16xbf16>, vector<512x16xf32> -> vector<512x16xf32>
    %56 = arith.addf %49, %55 : vector<512x16xf32>
    %c0_56 = arith.constant 0 : index
    %c2_57 = arith.constant 2 : index
    %c2_58 = arith.constant 2 : index
    %c0_59 = arith.constant 0 : index
    %57 = vector.load %arg1[%c0_56, %c2_57, %c2_58, %c0_59] : memref<2x18x18x4xf32, #tpu.memory_space<vmem>>, vector<2x16x16x4xf32>
    %58 = vector.shape_cast %57 : vector<2x16x16x4xf32> to vector<512x4xf32>
    %59 = arith.truncf %58 : vector<512x4xf32> to vector<512x4xbf16>
    %c8 = arith.constant 8 : index
    %c0_60 = arith.constant 0 : index
    %c0_61 = arith.constant 0 : index
    %60 = vector.load %arg2[%c8, %c0_60, %c0_61] : memref<9x4x16xbf16, #tpu.memory_space<vmem>>, vector<1x4x16xbf16>
    %61 = vector.shape_cast %60 : vector<1x4x16xbf16> to vector<4x16xbf16>
    %cst_62 = arith.constant dense<0.000000e+00> : vector<512x16xf32>
    %62 = tpu.matmul %59, %61, %cst_62 {dimension_numbers = #tpu.dot_dimension_numbers<[1], [0], [0], [1], [0, 0, 1, 1], [], []>} : vector<512x4xbf16>, vector<4x16xbf16>, vector<512x16xf32> -> vector<512x16xf32>
    %63 = arith.addf %56, %62 : vector<512x16xf32>
    %c0_63 = arith.constant 0 : index
    %c0_64 = arith.constant 0 : index
    %64 = vector.load %arg3[%c0_63, %c0_64] : memref<3x16xf32, #tpu.memory_space<vmem>>, vector<1x16xf32>
    %65 = vector.broadcast %64 : vector<1x16xf32> to vector<512x16xf32>
    %66 = arith.addf %63, %65 : vector<512x16xf32>
    %cst_65 = arith.constant dense<0.000000e+00> : vector<16xf32>
    %67 = vector.multi_reduction <add>, %66, %cst_65 [0] : vector<512x16xf32> to vector<16xf32>
    %68 = vector.shape_cast %67 : vector<16xf32> to vector<1x16xf32>
    %cst_66 = arith.constant 5.120000e+02 : f32
    %69 = vector.broadcast %cst_66 : f32 to vector<1x16xf32>
    %70 = arith.divf %68, %69 : vector<1x16xf32>
    %71 = vector.broadcast %70 : vector<1x16xf32> to vector<512x16xf32>
    %72 = arith.subf %66, %71 : vector<512x16xf32>
    %73 = arith.mulf %72, %72 : vector<512x16xf32>
    %cst_67 = arith.constant dense<0.000000e+00> : vector<16xf32>
    %74 = vector.multi_reduction <add>, %73, %cst_67 [0] : vector<512x16xf32> to vector<16xf32>
    %75 = vector.shape_cast %74 : vector<16xf32> to vector<1x16xf32>
    %cst_68 = arith.constant 5.120000e+02 : f32
    %76 = vector.broadcast %cst_68 : f32 to vector<1x16xf32>
    %77 = arith.divf %75, %76 : vector<1x16xf32>
    %c1_69 = arith.constant 1 : index
    %c0_70 = arith.constant 0 : index
    %78 = vector.load %arg3[%c1_69, %c0_70] : memref<3x16xf32, #tpu.memory_space<vmem>>, vector<1x16xf32>
    %cst_71 = arith.constant 9.99999974E-6 : f32
    %79 = vector.broadcast %cst_71 : f32 to vector<1x16xf32>
    %80 = arith.addf %77, %79 : vector<1x16xf32>
    %81 = math.rsqrt %80 : vector<1x16xf32>
    %82 = arith.mulf %78, %81 : vector<1x16xf32>
    %c2_72 = arith.constant 2 : index
    %c0_73 = arith.constant 0 : index
    %83 = vector.load %arg3[%c2_72, %c0_73] : memref<3x16xf32, #tpu.memory_space<vmem>>, vector<1x16xf32>
    %84 = arith.mulf %70, %82 : vector<1x16xf32>
    %85 = arith.subf %83, %84 : vector<1x16xf32>
    %86 = vector.broadcast %82 : vector<1x16xf32> to vector<512x16xf32>
    %87 = arith.mulf %66, %86 : vector<512x16xf32>
    %88 = vector.broadcast %85 : vector<1x16xf32> to vector<512x16xf32>
    %89 = arith.addf %87, %88 : vector<512x16xf32>
    %cst_74 = arith.constant 0.000000e+00 : f32
    %90 = vector.broadcast %cst_74 : f32 to vector<512x16xf32>
    %91 = arith.maximumf %89, %90 : vector<512x16xf32>
    %cst_75 = arith.constant 0.000000e+00 : f32
    %92 = vector.broadcast %cst_75 : f32 to vector<2x18x18x16xf32>
    %c0_76 = arith.constant 0 : index
    %c0_77 = arith.constant 0 : index
    %c0_78 = arith.constant 0 : index
    %c0_79 = arith.constant 0 : index
    %93 = vector.load %arg7[%c0_76, %c0_77, %c0_78, %c0_79] : memref<2x18x18x16xf32, #tpu.memory_space<vmem>>, vector<2x18x18x16xf32>
    tpu.vector_store %arg7[%c0_76, %c0_77, %c0_78, %c0_79], %92 {strides = array<i32>} : memref<2x18x18x16xf32, #tpu.memory_space<vmem>>, vector<2x18x18x16xf32>,
    %94 = vector.shape_cast %91 : vector<512x16xf32> to vector<2x16x16x16xf32>
    %c0_80 = arith.constant 0 : index
    %c1_81 = arith.constant 1 : index
    %c1_82 = arith.constant 1 : index
    %c0_83 = arith.constant 0 : index
    %95 = vector.load %arg7[%c0_80, %c1_81, %c1_82, %c0_83] : memref<2x18x18x16xf32, #tpu.memory_space<vmem>>, vector<2x16x16x16xf32>
    tpu.vector_store %arg7[%c0_80, %c1_81, %c1_82, %c0_83], %94 {strides = array<i32>} : memref<2x18x18x16xf32, #tpu.memory_space<vmem>>, vector<2x16x16x16xf32>,
    %cst_84 = arith.constant 0.000000e+00 : f32
    %96 = vector.broadcast %cst_84 : f32 to vector<512x16xf32>
    %c0_85 = arith.constant 0 : index
    %c0_86 = arith.constant 0 : index
    %c0_87 = arith.constant 0 : index
    %c0_88 = arith.constant 0 : index
    %97 = vector.load %arg7[%c0_85, %c0_86, %c0_87, %c0_88] : memref<2x18x18x16xf32, #tpu.memory_space<vmem>>, vector<2x16x16x16xf32>
    %98 = vector.shape_cast %97 : vector<2x16x16x16xf32> to vector<512x16xf32>
    %99 = arith.truncf %98 : vector<512x16xf32> to vector<512x16xbf16>
    %c0_89 = arith.constant 0 : index
    %c0_90 = arith.constant 0 : index
    %c0_91 = arith.constant 0 : index
    %100 = vector.load %arg4[%c0_89, %c0_90, %c0_91] : memref<9x16x16xbf16, #tpu.memory_space<vmem>>, vector<1x16x16xbf16>
    %101 = vector.shape_cast %100 : vector<1x16x16xbf16> to vector<16x16xbf16>
    %cst_92 = arith.constant dense<0.000000e+00> : vector<512x16xf32>
    %102 = tpu.matmul %99, %101, %cst_92 {dimension_numbers = #tpu.dot_dimension_numbers<[1], [0], [0], [1], [0, 0, 1, 1], [], []>} : vector<512x16xbf16>, vector<16x16xbf16>, vector<512x16xf32> -> vector<512x16xf32>
    %103 = arith.addf %96, %102 : vector<512x16xf32>
    %c0_93 = arith.constant 0 : index
    %c0_94 = arith.constant 0 : index
    %c1_95 = arith.constant 1 : index
    %c0_96 = arith.constant 0 : index
    %104 = vector.load %arg7[%c0_93, %c0_94, %c1_95, %c0_96] : memref<2x18x18x16xf32, #tpu.memory_space<vmem>>, vector<2x16x16x16xf32>
    %105 = vector.shape_cast %104 : vector<2x16x16x16xf32> to vector<512x16xf32>
    %106 = arith.truncf %105 : vector<512x16xf32> to vector<512x16xbf16>
    %c1_97 = arith.constant 1 : index
    %c0_98 = arith.constant 0 : index
    %c0_99 = arith.constant 0 : index
    %107 = vector.load %arg4[%c1_97, %c0_98, %c0_99] : memref<9x16x16xbf16, #tpu.memory_space<vmem>>, vector<1x16x16xbf16>
    %108 = vector.shape_cast %107 : vector<1x16x16xbf16> to vector<16x16xbf16>
    %cst_100 = arith.constant dense<0.000000e+00> : vector<512x16xf32>
    %109 = tpu.matmul %106, %108, %cst_100 {dimension_numbers = #tpu.dot_dimension_numbers<[1], [0], [0], [1], [0, 0, 1, 1], [], []>} : vector<512x16xbf16>, vector<16x16xbf16>, vector<512x16xf32> -> vector<512x16xf32>
    %110 = arith.addf %103, %109 : vector<512x16xf32>
    %c0_101 = arith.constant 0 : index
    %c0_102 = arith.constant 0 : index
    %c2_103 = arith.constant 2 : index
    %c0_104 = arith.constant 0 : index
    %111 = vector.load %arg7[%c0_101, %c0_102, %c2_103, %c0_104] : memref<2x18x18x16xf32, #tpu.memory_space<vmem>>, vector<2x16x16x16xf32>
    %112 = vector.shape_cast %111 : vector<2x16x16x16xf32> to vector<512x16xf32>
    %113 = arith.truncf %112 : vector<512x16xf32> to vector<512x16xbf16>
    %c2_105 = arith.constant 2 : index
    %c0_106 = arith.constant 0 : index
    %c0_107 = arith.constant 0 : index
    %114 = vector.load %arg4[%c2_105, %c0_106, %c0_107] : memref<9x16x16xbf16, #tpu.memory_space<vmem>>, vector<1x16x16xbf16>
    %115 = vector.shape_cast %114 : vector<1x16x16xbf16> to vector<16x16xbf16>
    %cst_108 = arith.constant dense<0.000000e+00> : vector<512x16xf32>
    %116 = tpu.matmul %113, %115, %cst_108 {dimension_numbers = #tpu.dot_dimension_numbers<[1], [0], [0], [1], [0, 0, 1, 1], [], []>} : vector<512x16xbf16>, vector<16x16xbf16>, vector<512x16xf32> -> vector<512x16xf32>
    %117 = arith.addf %110, %116 : vector<512x16xf32>
    %c0_109 = arith.constant 0 : index
    %c1_110 = arith.constant 1 : index
    %c0_111 = arith.constant 0 : index
    %c0_112 = arith.constant 0 : index
    %118 = vector.load %arg7[%c0_109, %c1_110, %c0_111, %c0_112] : memref<2x18x18x16xf32, #tpu.memory_space<vmem>>, vector<2x16x16x16xf32>
    %119 = vector.shape_cast %118 : vector<2x16x16x16xf32> to vector<512x16xf32>
    %120 = arith.truncf %119 : vector<512x16xf32> to vector<512x16xbf16>
    %c3_113 = arith.constant 3 : index
    %c0_114 = arith.constant 0 : index
    %c0_115 = arith.constant 0 : index
    %121 = vector.load %arg4[%c3_113, %c0_114, %c0_115] : memref<9x16x16xbf16, #tpu.memory_space<vmem>>, vector<1x16x16xbf16>
    %122 = vector.shape_cast %121 : vector<1x16x16xbf16> to vector<16x16xbf16>
    %cst_116 = arith.constant dense<0.000000e+00> : vector<512x16xf32>
    %123 = tpu.matmul %120, %122, %cst_116 {dimension_numbers = #tpu.dot_dimension_numbers<[1], [0], [0], [1], [0, 0, 1, 1], [], []>} : vector<512x16xbf16>, vector<16x16xbf16>, vector<512x16xf32> -> vector<512x16xf32>
    %124 = arith.addf %117, %123 : vector<512x16xf32>
    %c0_117 = arith.constant 0 : index
    %c1_118 = arith.constant 1 : index
    %c1_119 = arith.constant 1 : index
    %c0_120 = arith.constant 0 : index
    %125 = vector.load %arg7[%c0_117, %c1_118, %c1_119, %c0_120] : memref<2x18x18x16xf32, #tpu.memory_space<vmem>>, vector<2x16x16x16xf32>
    %126 = vector.shape_cast %125 : vector<2x16x16x16xf32> to vector<512x16xf32>
    %127 = arith.truncf %126 : vector<512x16xf32> to vector<512x16xbf16>
    %c4_121 = arith.constant 4 : index
    %c0_122 = arith.constant 0 : index
    %c0_123 = arith.constant 0 : index
    %128 = vector.load %arg4[%c4_121, %c0_122, %c0_123] : memref<9x16x16xbf16, #tpu.memory_space<vmem>>, vector<1x16x16xbf16>
    %129 = vector.shape_cast %128 : vector<1x16x16xbf16> to vector<16x16xbf16>
    %cst_124 = arith.constant dense<0.000000e+00> : vector<512x16xf32>
    %130 = tpu.matmul %127, %129, %cst_124 {dimension_numbers = #tpu.dot_dimension_numbers<[1], [0], [0], [1], [0, 0, 1, 1], [], []>} : vector<512x16xbf16>, vector<16x16xbf16>, vector<512x16xf32> -> vector<512x16xf32>
    %131 = arith.addf %124, %130 : vector<512x16xf32>
    %c0_125 = arith.constant 0 : index
    %c1_126 = arith.constant 1 : index
    %c2_127 = arith.constant 2 : index
    %c0_128 = arith.constant 0 : index
    %132 = vector.load %arg7[%c0_125, %c1_126, %c2_127, %c0_128] : memref<2x18x18x16xf32, #tpu.memory_space<vmem>>, vector<2x16x16x16xf32>
    %133 = vector.shape_cast %132 : vector<2x16x16x16xf32> to vector<512x16xf32>
    %134 = arith.truncf %133 : vector<512x16xf32> to vector<512x16xbf16>
    %c5_129 = arith.constant 5 : index
    %c0_130 = arith.constant 0 : index
    %c0_131 = arith.constant 0 : index
    %135 = vector.load %arg4[%c5_129, %c0_130, %c0_131] : memref<9x16x16xbf16, #tpu.memory_space<vmem>>, vector<1x16x16xbf16>
    %136 = vector.shape_cast %135 : vector<1x16x16xbf16> to vector<16x16xbf16>
    %cst_132 = arith.constant dense<0.000000e+00> : vector<512x16xf32>
    %137 = tpu.matmul %134, %136, %cst_132 {dimension_numbers = #tpu.dot_dimension_numbers<[1], [0], [0], [1], [0, 0, 1, 1], [], []>} : vector<512x16xbf16>, vector<16x16xbf16>, vector<512x16xf32> -> vector<512x16xf32>
    %138 = arith.addf %131, %137 : vector<512x16xf32>
    %c0_133 = arith.constant 0 : index
    %c2_134 = arith.constant 2 : index
    %c0_135 = arith.constant 0 : index
    %c0_136 = arith.constant 0 : index
    %139 = vector.load %arg7[%c0_133, %c2_134, %c0_135, %c0_136] : memref<2x18x18x16xf32, #tpu.memory_space<vmem>>, vector<2x16x16x16xf32>
    %140 = vector.shape_cast %139 : vector<2x16x16x16xf32> to vector<512x16xf32>
    %141 = arith.truncf %140 : vector<512x16xf32> to vector<512x16xbf16>
    %c6_137 = arith.constant 6 : index
    %c0_138 = arith.constant 0 : index
    %c0_139 = arith.constant 0 : index
    %142 = vector.load %arg4[%c6_137, %c0_138, %c0_139] : memref<9x16x16xbf16, #tpu.memory_space<vmem>>, vector<1x16x16xbf16>
    %143 = vector.shape_cast %142 : vector<1x16x16xbf16> to vector<16x16xbf16>
    %cst_140 = arith.constant dense<0.000000e+00> : vector<512x16xf32>
    %144 = tpu.matmul %141, %143, %cst_140 {dimension_numbers = #tpu.dot_dimension_numbers<[1], [0], [0], [1], [0, 0, 1, 1], [], []>} : vector<512x16xbf16>, vector<16x16xbf16>, vector<512x16xf32> -> vector<512x16xf32>
    %145 = arith.addf %138, %144 : vector<512x16xf32>
    %c0_141 = arith.constant 0 : index
    %c2_142 = arith.constant 2 : index
    %c1_143 = arith.constant 1 : index
    %c0_144 = arith.constant 0 : index
    %146 = vector.load %arg7[%c0_141, %c2_142, %c1_143, %c0_144] : memref<2x18x18x16xf32, #tpu.memory_space<vmem>>, vector<2x16x16x16xf32>
    %147 = vector.shape_cast %146 : vector<2x16x16x16xf32> to vector<512x16xf32>
    %148 = arith.truncf %147 : vector<512x16xf32> to vector<512x16xbf16>
    %c7_145 = arith.constant 7 : index
    %c0_146 = arith.constant 0 : index
    %c0_147 = arith.constant 0 : index
    %149 = vector.load %arg4[%c7_145, %c0_146, %c0_147] : memref<9x16x16xbf16, #tpu.memory_space<vmem>>, vector<1x16x16xbf16>
    %150 = vector.shape_cast %149 : vector<1x16x16xbf16> to vector<16x16xbf16>
    %cst_148 = arith.constant dense<0.000000e+00> : vector<512x16xf32>
    %151 = tpu.matmul %148, %150, %cst_148 {dimension_numbers = #tpu.dot_dimension_numbers<[1], [0], [0], [1], [0, 0, 1, 1], [], []>} : vector<512x16xbf16>, vector<16x16xbf16>, vector<512x16xf32> -> vector<512x16xf32>
    %152 = arith.addf %145, %151 : vector<512x16xf32>
    %c0_149 = arith.constant 0 : index
    %c2_150 = arith.constant 2 : index
    %c2_151 = arith.constant 2 : index
    %c0_152 = arith.constant 0 : index
    %153 = vector.load %arg7[%c0_149, %c2_150, %c2_151, %c0_152] : memref<2x18x18x16xf32, #tpu.memory_space<vmem>>, vector<2x16x16x16xf32>
    %154 = vector.shape_cast %153 : vector<2x16x16x16xf32> to vector<512x16xf32>
    %155 = arith.truncf %154 : vector<512x16xf32> to vector<512x16xbf16>
    %c8_153 = arith.constant 8 : index
    %c0_154 = arith.constant 0 : index
    %c0_155 = arith.constant 0 : index
    %156 = vector.load %arg4[%c8_153, %c0_154, %c0_155] : memref<9x16x16xbf16, #tpu.memory_space<vmem>>, vector<1x16x16xbf16>
    %157 = vector.shape_cast %156 : vector<1x16x16xbf16> to vector<16x16xbf16>
    %cst_156 = arith.constant dense<0.000000e+00> : vector<512x16xf32>
    %158 = tpu.matmul %155, %157, %cst_156 {dimension_numbers = #tpu.dot_dimension_numbers<[1], [0], [0], [1], [0, 0, 1, 1], [], []>} : vector<512x16xbf16>, vector<16x16xbf16>, vector<512x16xf32> -> vector<512x16xf32>
    %159 = arith.addf %152, %158 : vector<512x16xf32>
    %c0_157 = arith.constant 0 : index
    %c0_158 = arith.constant 0 : index
    %160 = vector.load %arg5[%c0_157, %c0_158] : memref<3x16xf32, #tpu.memory_space<vmem>>, vector<1x16xf32>
    %161 = vector.broadcast %160 : vector<1x16xf32> to vector<512x16xf32>
    %162 = arith.addf %159, %161 : vector<512x16xf32>
    %cst_159 = arith.constant dense<0.000000e+00> : vector<16xf32>
    %163 = vector.multi_reduction <add>, %162, %cst_159 [0] : vector<512x16xf32> to vector<16xf32>
    %164 = vector.shape_cast %163 : vector<16xf32> to vector<1x16xf32>
    %cst_160 = arith.constant 5.120000e+02 : f32
    %165 = vector.broadcast %cst_160 : f32 to vector<1x16xf32>
    %166 = arith.divf %164, %165 : vector<1x16xf32>
    %167 = vector.broadcast %166 : vector<1x16xf32> to vector<512x16xf32>
    %168 = arith.subf %162, %167 : vector<512x16xf32>
    %169 = arith.mulf %168, %168 : vector<512x16xf32>
    %cst_161 = arith.constant dense<0.000000e+00> : vector<16xf32>
    %170 = vector.multi_reduction <add>, %169, %cst_161 [0] : vector<512x16xf32> to vector<16xf32>
    %171 = vector.shape_cast %170 : vector<16xf32> to vector<1x16xf32>
    %cst_162 = arith.constant 5.120000e+02 : f32
    %172 = vector.broadcast %cst_162 : f32 to vector<1x16xf32>
    %173 = arith.divf %171, %172 : vector<1x16xf32>
    %c1_163 = arith.constant 1 : index
    %c0_164 = arith.constant 0 : index
    %174 = vector.load %arg5[%c1_163, %c0_164] : memref<3x16xf32, #tpu.memory_space<vmem>>, vector<1x16xf32>
    %cst_165 = arith.constant 9.99999974E-6 : f32
    %175 = vector.broadcast %cst_165 : f32 to vector<1x16xf32>
    %176 = arith.addf %173, %175 : vector<1x16xf32>
    %177 = math.rsqrt %176 : vector<1x16xf32>
    %178 = arith.mulf %174, %177 : vector<1x16xf32>
    %c2_166 = arith.constant 2 : index
    %c0_167 = arith.constant 0 : index
    %179 = vector.load %arg5[%c2_166, %c0_167] : memref<3x16xf32, #tpu.memory_space<vmem>>, vector<1x16xf32>
    %180 = arith.mulf %166, %178 : vector<1x16xf32>
    %181 = arith.subf %179, %180 : vector<1x16xf32>
    %182 = vector.broadcast %178 : vector<1x16xf32> to vector<512x16xf32>
    %183 = arith.mulf %162, %182 : vector<512x16xf32>
    %184 = vector.broadcast %181 : vector<1x16xf32> to vector<512x16xf32>
    %185 = arith.addf %183, %184 : vector<512x16xf32>
    %cst_168 = arith.constant 0.000000e+00 : f32
    %186 = vector.broadcast %cst_168 : f32 to vector<512x16xf32>
    %187 = arith.maximumf %185, %186 : vector<512x16xf32>
    %188 = tpu.transpose %187, [1, 0] : vector<512x16xf32> -> vector<16x512xf32>
    %c0_169 = arith.constant 0 : index
    %c0_170 = arith.constant 0 : index
    %189 = vector.load %arg6[%c0_169, %c0_170] : memref<16x512xf32, #tpu.memory_space<vmem>>, vector<16x512xf32>
    tpu.vector_store %arg6[%c0_169, %c0_170], %188 {strides = array<i32>} : memref<16x512xf32, #tpu.memory_space<vmem>>, vector<16x512xf32>,
    return
  }
  func.func @transform_0(%arg0: i32) -> (i32, i32, i32, i32) {
    %c0_i32 = arith.constant 0 : i32
    %c0_i32_0 = arith.constant 0 : i32
    %c0_i32_1 = arith.constant 0 : i32
    %c0_i32_2 = arith.constant 0 : i32
    %c0_i32_3 = arith.constant 0 : i32
    return %c0_i32, %c0_i32_0, %c0_i32_1, %c0_i32_2 : i32, i32, i32, i32
  }
  func.func @transform_1(%arg0: i32) -> (i32, i32, i32) {
    %c0_i32 = arith.constant 0 : i32
    %c0_i32_0 = arith.constant 0 : i32
    %c0_i32_1 = arith.constant 0 : i32
    %c0_i32_2 = arith.constant 0 : i32
    return %c0_i32, %c0_i32_0, %c0_i32_1 : i32, i32, i32
  }
  func.func @transform_2(%arg0: i32) -> (i32, i32) {
    %c0_i32 = arith.constant 0 : i32
    %c0_i32_0 = arith.constant 0 : i32
    %c0_i32_1 = arith.constant 0 : i32
    return %c0_i32, %c0_i32_0 : i32, i32
  }
  func.func @transform_3(%arg0: i32) -> (i32, i32, i32) {
    %c0_i32 = arith.constant 0 : i32
    %c0_i32_0 = arith.constant 0 : i32
    %c0_i32_1 = arith.constant 0 : i32
    %c0_i32_2 = arith.constant 0 : i32
    return %c0_i32, %c0_i32_0, %c0_i32_1 : i32, i32, i32
  }
  func.func @transform_4(%arg0: i32) -> (i32, i32) {
    %c0_i32 = arith.constant 0 : i32
    %c0_i32_0 = arith.constant 0 : i32
    %c0_i32_1 = arith.constant 0 : i32
    return %c0_i32, %c0_i32_0 : i32, i32
  }
  func.func @transform_5(%arg0: i32) -> (i32, i32) {
    %c0_i32 = arith.constant 0 : i32
    %c0_i32_0 = arith.constant 0 : i32
    %c0_i32_1 = arith.constant 0 : i32
    return %c0_i32, %c0_i32_0 : i32, i32
  }
}

</mosaic_0001>

<llo_original>
// kernel: double_conv.1
$region0: #{double_conv.1}
  #allocation0 [shape = 'u32[]', space=smem, size = 0x4, offset = 0x4, fixed_abs, tag = 'smem constant byte address 0x4 - core index']
  #allocation1 [shape = 'u32[144,128]{1,0:T(1,128)}', space=vmem, size = 0x12000, scoped, tag = 'internal scratch']
  #allocation2 [shape = 'f32[2,18,18,16]{3,2,1,0:T(8,128)}', space=vmem, size = 0x6c000, scoped, tag = 'scratch operand']
  %s0 = inlined_call_operand.vmem [shape: f32[2,18,18,4], index: 0, kind: input, shape index: {}]
  %s1 = inlined_call_operand.vmem [shape: bf16[9,4,16], index: 1, kind: input, shape index: {}]
  %s2 = inlined_call_operand.vmem [shape: f32[3,16], index: 2, kind: input, shape index: {}]
  %s3 = inlined_call_operand.vmem [shape: bf16[9,16,16], index: 3, kind: input, shape index: {}]
  %s4 = inlined_call_operand.vmem [shape: f32[3,16], index: 4, kind: input, shape index: {}]
  %s5 = inlined_call_operand.vmem [shape: f32[16,512], index: 5, kind: output, shape index: {}]
  %s6 = sld [smem:[#allocation0]]
  $region30: #{double_conv.1} parent=0
    _
  %s8 = ssub.s32 1, %s6
  %s9 = scalar_select 0, %s8, %s6
  // Predicated region
  $region2: #{double_conv.1} parent=0 // pred_check
    _
  $region3: #{double_conv.1} parent=0 // pred_check_branch
    %11 = sbr.rel (0) target = $region5
  $region4: #{double_conv.1} parent=0 // pred_region
    _
  $region5: #{double_conv.1} parent=0 // pred_fallthru
    _
  // Predicated region
  $region6: #{double_conv.1} parent=0 // pred_check
    _
  $region7: #{double_conv.1} parent=0 // pred_check_branch
    %13 = sbr.rel (0) target = $region9
  $region8: #{double_conv.1} parent=0 // pred_region
    _
  $region9: #{double_conv.1} parent=0 // pred_fallthru
    _
  // Predicated region
  $region10: #{double_conv.1} parent=0 // pred_check
    _
  $region11: #{double_conv.1} parent=0 // pred_check_branch
    %15 = sbr.rel (0) target = $region13
  $region12: #{double_conv.1} parent=0 // pred_region
    _
  $region13: #{double_conv.1} parent=0 // pred_fallthru
    _
  // Predicated region
  $region14: #{double_conv.1} parent=0 // pred_check
    _
  $region15: #{double_conv.1} parent=0 // pred_check_branch
    %17 = sbr.rel (0) target = $region17
  $region16: #{double_conv.1} parent=0 // pred_region
    _
  $region17: #{double_conv.1} parent=0 // pred_fallthru
    _
  // Predicated region
  $region18: #{double_conv.1} parent=0 // pred_check
    _
  $region19: #{double_conv.1} parent=0 // pred_check_branch
    %19 = sbr.rel (0) target = $region21
  $region20: #{double_conv.1} parent=0 // pred_region
    _
  $region21: #{double_conv.1} parent=0 // pred_fallthru
    _
  %v21 = vld [vmem:[%s0] sm:$0xff]
  %v22 = vld [vmem:[%s0 + $0x8] sm:$0xff]
  %v23 = vld [vmem:[%s0 + $0x18] sm:$0xff]
  %v24 = vld [vmem:[%s0 + $0x20] sm:$0xff]
  %v25 = vld [vmem:[%s0 + $0x30] sm:$0xff]
  %v26 = vld [vmem:[%s0 + $0x38] sm:$0xff]
  %v27 = vld [vmem:[%s0 + $0x48] sm:$0xff]
  %v28 = vld [vmem:[%s0 + $0x50] sm:$0xff]
  %v29 = vld [vmem:[%s0 + $0x60] sm:$0xff]
  %v30 = vld [vmem:[%s0 + $0x68] sm:$0xff]
  %v31 = vld [vmem:[%s0 + $0x78] sm:$0xff]
  %v32 = vld [vmem:[%s0 + $0x80] sm:$0xff]
  %v33 = vld [vmem:[%s0 + $0x90] sm:$0xff]
  %v34 = vld [vmem:[%s0 + $0x98] sm:$0xff]
  %v35 = vld [vmem:[%s0 + $0xa8] sm:$0xff]
  %v36 = vld [vmem:[%s0 + $0xb0] sm:$0xff]
  %v37 = vld [vmem:[%s0 + $0xc0] sm:$0xff]
  %v38 = vld [vmem:[%s0 + $0xc8] sm:$0xff]
  %v39 = vld [vmem:[%s0 + $0xd8] sm:$0xff]
  %v40 = vld [vmem:[%s0 + $0xe0] sm:$0xff]
  %v41 = vld [vmem:[%s0 + $0xf0] sm:$0xff]
  %v42 = vld [vmem:[%s0 + $0xf8] sm:$0xff]
  %v43 = vld [vmem:[%s0 + $0x108] sm:$0xff]
  %v44 = vld [vmem:[%s0 + $0x110] sm:$0xff]
  %v45 = vld [vmem:[%s0 + $0x120] sm:$0xff]
  %v46 = vld [vmem:[%s0 + $0x128] sm:$0xff]
  %v47 = vld [vmem:[%s0 + $0x138] sm:$0xff]
  %v48 = vld [vmem:[%s0 + $0x140] sm:$0xff]
  %v49 = vld [vmem:[%s0 + $0x150] sm:$0xff]
  %v50 = vld [vmem:[%s0 + $0x158] sm:$0xff]
  %v51 = vld [vmem:[%s0 + $0x168] sm:$0xff]
  %v52 = vld [vmem:[%s0 + $0x170] sm:$0xff]
  %v53 = vld [vmem:[%s0 + $0x1b0] sm:$0xff]
  %v54 = vld [vmem:[%s0 + $0x1b8] sm:$0xff]
  %v55 = vld [vmem:[%s0 + $0x1c8] sm:$0xff]
  %v56 = vld [vmem:[%s0 + $0x1d0] sm:$0xff]
  %v57 = vld [vmem:[%s0 + $0x1e0] sm:$0xff]
  %v58 = vld [vmem:[%s0 + $0x1e8] sm:$0xff]
  %v59 = vld [vmem:[%s0 + $0x1f8] sm:$0xff]
  %v60 = vld [vmem:[%s0 + $0x200] sm:$0xff]
  %v61 = vld [vmem:[%s0 + $0x210] sm:$0xff]
  %v62 = vld [vmem:[%s0 + $0x218] sm:$0xff]
  %v63 = vld [vmem:[%s0 + $0x228] sm:$0xff]
  %v64 = vld [vmem:[%s0 + $0x230] sm:$0xff]
  %v65 = vld [vmem:[%s0 + $0x240] sm:$0xff]
  %v66 = vld [vmem:[%s0 + $0x248] sm:$0xff]
  %v67 = vld [vmem:[%s0 + $0x258] sm:$0xff]
  %v68 = vld [vmem:[%s0 + $0x260] sm:$0xff]
  %v69 = vld [vmem:[%s0 + $0x270] sm:$0xff]
  %v70 = vld [vmem:[%s0 + $0x278] sm:$0xff]
  %v71 = vld [vmem:[%s0 + $0x288] sm:$0xff]
  %v72 = vld [vmem:[%s0 + $0x290] sm:$0xff]
  %v73 = vld [vmem:[%s0 + $0x2a0] sm:$0xff]
  %v74 = vld [vmem:[%s0 + $0x2a8] sm:$0xff]
  %v75 = vld [vmem:[%s0 + $0x2b8] sm:$0xff]
  %v76 = vld [vmem:[%s0 + $0x2c0] sm:$0xff]
  %v77 = vld [vmem:[%s0 + $0x2d0] sm:$0xff]
  %v78 = vld [vmem:[%s0 + $0x2d8] sm:$0xff]
  %v79 = vld [vmem:[%s0 + $0x2e8] sm:$0xff]
  %v80 = vld [vmem:[%s0 + $0x2f0] sm:$0xff]
  %v81 = vld [vmem:[%s0 + $0x300] sm:$0xff]
  %v82 = vld [vmem:[%s0 + $0x308] sm:$0xff]
  %v83 = vld [vmem:[%s0 + $0x318] sm:$0xff]
  %v84 = vld [vmem:[%s0 + $0x320] sm:$0xff]
  %v85 = vpack.c.bf16 %v22, %v21
  %v86 = vpack.c.bf16 %v24, %v23
  %v87 = vpack.c.bf16 %v26, %v25
  %v88 = vpack.c.bf16 %v28, %v27
  %v89 = vpack.c.bf16 %v30, %v29
  %v90 = vpack.c.bf16 %v32, %v31
  %v91 = vpack.c.bf16 %v34, %v33
  %v92 = vpack.c.bf16 %v36, %v35
  %v93 = vpack.c.bf16 %v38, %v37
  %v94 = vpack.c.bf16 %v40, %v39
  %v95 = vpack.c.bf16 %v42, %v41
  %v96 = vpack.c.bf16 %v44, %v43
  %v97 = vpack.c.bf16 %v46, %v45
  %v98 = vpack.c.bf16 %v48, %v47
  %v99 = vpack.c.bf16 %v50, %v49
  %v100 = vpack.c.bf16 %v52, %v51
  %v101 = vpack.c.bf16 %v54, %v53
  %v102 = vpack.c.bf16 %v56, %v55
  %v103 = vpack.c.bf16 %v58, %v57
  %v104 = vpack.c.bf16 %v60, %v59
  %v105 = vpack.c.bf16 %v62, %v61
  %v106 = vpack.c.bf16 %v64, %v63
  %v107 = vpack.c.bf16 %v66, %v65
  %v108 = vpack.c.bf16 %v68, %v67
  %v109 = vpack.c.bf16 %v70, %v69
  %v110 = vpack.c.bf16 %v72, %v71
  %v111 = vpack.c.bf16 %v74, %v73
  %v112 = vpack.c.bf16 %v76, %v75
  %v113 = vpack.c.bf16 %v78, %v77
  %v114 = vpack.c.bf16 %v80, %v79
  %v115 = vpack.c.bf16 %v82, %v81
  %v116 = vpack.c.bf16 %v84, %v83
  %v117 = vld [vmem:[%s1] sm:$0x3]
  %v118 = vld [vmem:[%s0 + $0x1] sm:$0xff]
  %v119 = vld [vmem:[%s0 + $0x9] sm:$0xff]
  %v120 = vld [vmem:[%s0 + $0x19] sm:$0xff]
  %v121 = vld [vmem:[%s0 + $0x21] sm:$0xff]
  %v122 = vld [vmem:[%s0 + $0x31] sm:$0xff]
  %v123 = vld [vmem:[%s0 + $0x39] sm:$0xff]
  %v124 = vld [vmem:[%s0 + $0x49] sm:$0xff]
  %v125 = vld [vmem:[%s0 + $0x51] sm:$0xff]
  %v126 = vld [vmem:[%s0 + $0x61] sm:$0xff]
  %v127 = vld [vmem:[%s0 + $0x69] sm:$0xff]
  %v128 = vld [vmem:[%s0 + $0x79] sm:$0xff]
  %v129 = vld [vmem:[%s0 + $0x81] sm:$0xff]
  %v130 = vld [vmem:[%s0 + $0x91] sm:$0xff]
  %v131 = vld [vmem:[%s0 + $0x99] sm:$0xff]
  %v132 = vld [vmem:[%s0 + $0xa9] sm:$0xff]
  %v133 = vld [vmem:[%s0 + $0xb1] sm:$0xff]
  %v134 = vld [vmem:[%s0 + $0xc1] sm:$0xff]
  %v135 = vld [vmem:[%s0 + $0xc9] sm:$0xff]
  %v136 = vld [vmem:[%s0 + $0xd9] sm:$0xff]
  %v137 = vld [vmem:[%s0 + $0xe1] sm:$0xff]
  %v138 = vld [vmem:[%s0 + $0xf1] sm:$0xff]
  %v139 = vld [vmem:[%s0 + $0xf9] sm:$0xff]
  %v140 = vld [vmem:[%s0 + $0x109] sm:$0xff]
  %v141 = vld [vmem:[%s0 + $0x111] sm:$0xff]
  %v142 = vld [vmem:[%s0 + $0x121] sm:$0xff]
  %v143 = vld [vmem:[%s0 + $0x129] sm:$0xff]
  %v144 = vld [vmem:[%s0 + $0x139] sm:$0xff]
  %v145 = vld [vmem:[%s0 + $0x141] sm:$0xff]
  %v146 = vld [vmem:[%s0 + $0x151] sm:$0xff]
  %v147 = vld [vmem:[%s0 + $0x159] sm:$0xff]
  %v148 = vld [vmem:[%s0 + $0x169] sm:$0xff]
  %v149 = vld [vmem:[%s0 + $0x171] sm:$0xff]
  %v150 = vld [vmem:[%s0 + $0x1b1] sm:$0xff]
  %v151 = vld [vmem:[%s0 + $0x1b9] sm:$0xff]
  %v152 = vld [vmem:[%s0 + $0x1c9] sm:$0xff]
  %v153 = vld [vmem:[%s0 + $0x1d1] sm:$0xff]
  %v154 = vld [vmem:[%s0 + $0x1e1] sm:$0xff]
  %v155 = vld [vmem:[%s0 + $0x1e9] sm:$0xff]
  %v156 = vld [vmem:[%s0 + $0x1f9] sm:$0xff]
  %v157 = vld [vmem:[%s0 + $0x201] sm:$0xff]
  %v158 = vld [vmem:[%s0 + $0x211] sm:$0xff]
  %v159 = vld [vmem:[%s0 + $0x219] sm:$0xff]
  %v160 = vld [vmem:[%s0 + $0x229] sm:$0xff]
  %v161 = vld [vmem:[%s0 + $0x231] sm:$0xff]
  %v162 = vld [vmem:[%s0 + $0x241] sm:$0xff]
  %v163 = vld [vmem:[%s0 + $0x249] sm:$0xff]
  %v164 = vld [vmem:[%s0 + $0x259] sm:$0xff]
  %v165 = vld [vmem:[%s0 + $0x261] sm:$0xff]
  %v166 = vld [vmem:[%s0 + $0x271] sm:$0xff]
  %v167 = vld [vmem:[%s0 + $0x279] sm:$0xff]
  %v168 = vld [vmem:[%s0 + $0x289] sm:$0xff]
  %v169 = vld [vmem:[%s0 + $0x291] sm:$0xff]
  %v170 = vld [vmem:[%s0 + $0x2a1] sm:$0xff]
  %v171 = vld [vmem:[%s0 + $0x2a9] sm:$0xff]
  %v172 = vld [vmem:[%s0 + $0x2b9] sm:$0xff]
  %v173 = vld [vmem:[%s0 + $0x2c1] sm:$0xff]
  %v174 = vld [vmem:[%s0 + $0x2d1] sm:$0xff]
  %v175 = vld [vmem:[%s0 + $0x2d9] sm:$0xff]
  %v176 = vld [vmem:[%s0 + $0x2e9] sm:$0xff]
  %v177 = vld [vmem:[%s0 + $0x2f1] sm:$0xff]
  %v178 = vld [vmem:[%s0 + $0x301] sm:$0xff]
  %v179 = vld [vmem:[%s0 + $0x309] sm:$0xff]
  %v180 = vld [vmem:[%s0 + $0x319] sm:$0xff]
  %v181 = vld [vmem:[%s0 + $0x321] sm:$0xff]
  %v182 = vpack.c.bf16 %v119, %v118
  %v183 = vpack.c.bf16 %v121, %v120
  %v184 = vpack.c.bf16 %v123, %v122
  %v185 = vpack.c.bf16 %v125, %v124
  %v186 = vpack.c.bf16 %v127, %v126
  %v187 = vpack.c.bf16 %v129, %v128
  %v188 = vpack.c.bf16 %v131, %v130
  %v189 = vpack.c.bf16 %v133, %v132
  %v190 = vpack.c.bf16 %v135, %v134
  %v191 = vpack.c.bf16 %v137, %v136
  %v192 = vpack.c.bf16 %v139, %v138
  %v193 = vpack.c.bf16 %v141, %v140
  %v194 = vpack.c.bf16 %v143, %v142
  %v195 = vpack.c.bf16 %v145, %v144
  %v196 = vpack.c.bf16 %v147, %v146
  %v197 = vpack.c.bf16 %v149, %v148
  %v198 = vpack.c.bf16 %v151, %v150
  %v199 = vpack.c.bf16 %v153, %v152
  %v200 = vpack.c.bf16 %v155, %v154
  %v201 = vpack.c.bf16 %v157, %v156
  %v202 = vpack.c.bf16 %v159, %v158
  %v203 = vpack.c.bf16 %v161, %v160
  %v204 = vpack.c.bf16 %v163, %v162
  %v205 = vpack.c.bf16 %v165, %v164
  %v206 = vpack.c.bf16 %v167, %v166
  %v207 = vpack.c.bf16 %v169, %v168
  %v208 = vpack.c.bf16 %v171, %v170
  %v209 = vpack.c.bf16 %v173, %v172
  %v210 = vpack.c.bf16 %v175, %v174
  %v211 = vpack.c.bf16 %v177, %v176
  %v212 = vpack.c.bf16 %v179, %v178
  %v213 = vpack.c.bf16 %v181, %v180
  %s214 = scalar_lea.vmem %s1, 2
  %v215 = vld [vmem:[%s214] sm:$0x3]
  %vm216 = vcmask 31744
  %v218 = vsel %vm216, %v182, 0
  %v221 = vsel %vm216, %v183, 0
  %v224 = vsel %vm216, %v184, 0
  %v227 = vsel %vm216, %v185, 0
  %v230 = vsel %vm216, %v186, 0
  %v233 = vsel %vm216, %v187, 0
  %v236 = vsel %vm216, %v188, 0
  %v239 = vsel %vm216, %v189, 0
  %v242 = vsel %vm216, %v190, 0
  %v245 = vsel %vm216, %v191, 0
  %v248 = vsel %vm216, %v192, 0
  %v251 = vsel %vm216, %v193, 0
  %v254 = vsel %vm216, %v194, 0
  %v257 = vsel %vm216, %v195, 0
  %v260 = vsel %vm216, %v196, 0
  %v263 = vsel %vm216, %v197, 0
  %v266 = vsel %vm216, %v198, 0
  %v269 = vsel %vm216, %v199, 0
  %v272 = vsel %vm216, %v200, 0
  %v275 = vsel %vm216, %v201, 0
  %v278 = vsel %vm216, %v202, 0
  %v281 = vsel %vm216, %v203, 0
  %v284 = vsel %vm216, %v204, 0
  %v287 = vsel %vm216, %v205, 0
  %v290 = vsel %vm216, %v206, 0
  %v293 = vsel %vm216, %v207, 0
  %v296 = vsel %vm216, %v208, 0
  %v299 = vsel %vm216, %v209, 0
  %v302 = vsel %vm216, %v210, 0
  %v305 = vsel %vm216, %v211, 0
  %v308 = vsel %vm216, %v212, 0
  %v311 = vsel %vm216, %v213, 0
  %vm313 = vcmask 1041408
  %v315 = vsel %vm313, %v215, 0
  %317 = vmatprep.subr.bf16.mxu0 0
  %318 = vmatpush1.bf16.msra.mxu0 %v315
  %319 = vmatprep.subr.bf16.mxu0 0
  %320 = vmatpush1.bf16.msra.mxu0 0
  %321 = vmatprep.subr.bf16.mxu0 0
  %322 = vmatpush1.bf16.msra.mxu0 0
  %323 = vmatprep.subr.bf16.mxu0 0
  %324 = vmatpush1.bf16.msra.mxu0 0
  %325 = vmatprep.subr.bf16.mxu0 0
  %326 = vmatpush1.bf16.msra.mxu0 0
  %327 = vmatprep.subr.bf16.mxu0 0
  %328 = vmatpush1.bf16.msra.mxu0 0
  %329 = vmatprep.subr.bf16.mxu0 0
  %330 = vmatpush1.bf16.msra.mxu0 0
  %331 = vmatprep.subr.bf16.mxu0 0
  %332 = vmatpush1.bf16.msra.mxu0 0
  %333 = vmatprep.subr.bf16.mxu0 0
  %334 = vmatpush1.bf16.msra.mxu0 0
  %335 = vmatprep.subr.bf16.mxu0 0
  %336 = vmatpush1.bf16.msra.mxu0 0
  %337 = vmatprep.subr.bf16.mxu0 0
  %338 = vmatpush1.bf16.msra.mxu0 0
  %339 = vmatprep.subr.bf16.mxu0 0
  %340 = vmatpush1.bf16.msra.mxu0 0
  %341 = vmatprep.subr.bf16.mxu0 0
  %342 = vmatpush1.bf16.msra.mxu0 0
  %343 = vmatprep.subr.bf16.mxu0 0
  %344 = vmatpush1.bf16.msra.mxu0 0
  %345 = vmatprep.subr.bf16.mxu0 0
  %346 = vmatpush1.bf16.msra.mxu0 0
  %347 = vmatprep.subr.bf16.mxu0 0
  %348 = vmatpush1.bf16.msra.mxu0 0
  %349 = vmatprep.mubr.bf16.mxu0 0
  %350 = vmatmul.mubr.bf16.gmra.mrb[0].mxu0 %v218
  %v351 = vpop.f32.mrb[0].mxu0
  %v352 = vadd.f32 0.0, %v351
  %v353 = vpop.f32.mrb[0].mxu0
  %v354 = vpop.f32.mrb[0].mxu0
  %v355 = vadd.f32 0.0, %v354
  %v356 = vpop.f32.mrb[0].mxu0
  %357 = vmatprep.mubr.bf16.mxu0 0
  %358 = vmatmul.mubr.bf16.gmra.mrb[0].mxu0 %v221
  %v359 = vpop.f32.mrb[0].mxu0
  %v360 = vadd.f32 0.0, %v359
  %v361 = vpop.f32.mrb[0].mxu0
  %v362 = vpop.f32.mrb[0].mxu0
  %v363 = vadd.f32 0.0, %v362
  %v364 = vpop.f32.mrb[0].mxu0
  %365 = vmatprep.mubr.bf16.mxu0 0
  %366 = vmatmul.mubr.bf16.gmra.mrb[0].mxu0 %v224
  %v367 = vpop.f32.mrb[0].mxu0
  %v368 = vadd.f32 0.0, %v367
  %v369 = vpop.f32.mrb[0].mxu0
  %v370 = vpop.f32.mrb[0].mxu0
  %v371 = vadd.f32 0.0, %v370
  %v372 = vpop.f32.mrb[0].mxu0
  %373 = vmatprep.mubr.bf16.mxu0 0
  %374 = vmatmul.mubr.bf16.gmra.mrb[0].mxu0 %v227
  %v375 = vpop.f32.mrb[0].mxu0
  %v376 = vadd.f32 0.0, %v375
  %v377 = vpop.f32.mrb[0].mxu0
  %v378 = vpop.f32.mrb[0].mxu0
  %v379 = vadd.f32 0.0, %v378
  %v380 = vpop.f32.mrb[0].mxu0
  %381 = vmatprep.mubr.bf16.mxu0 0
  %382 = vmatmul.mubr.bf16.gmra.mrb[0].mxu0 %v230
  %v383 = vpop.f32.mrb[0].mxu0
  %v384 = vadd.f32 0.0, %v383
  %v385 = vpop.f32.mrb[0].mxu0
  %v386 = vpop.f32.mrb[0].mxu0
  %v387 = vadd.f32 0.0, %v386
  %v388 = vpop.f32.mrb[0].mxu0
  %389 = vmatprep.mubr.bf16.mxu0 0
  %390 = vmatmul.mubr.bf16.gmra.mrb[0].mxu0 %v233
  %v391 = vpop.f32.mrb[0].mxu0
  %v392 = vadd.f32 0.0, %v391
  %v393 = vpop.f32.mrb[0].mxu0
  %v394 = vpop.f32.mrb[0].mxu0
  %v395 = vadd.f32 0.0, %v394
  %v396 = vpop.f32.mrb[0].mxu0
  %397 = vmatprep.mubr.bf16.mxu0 0
  %398 = vmatmul.mubr.bf16.gmra.mrb[0].mxu0 %v236
  %v399 = vpop.f32.mrb[0].mxu0
  %v400 = vadd.f32 0.0, %v399
  %v401 = vpop.f32.mrb[0].mxu0
  %v402 = vpop.f32.mrb[0].mxu0
  %v403 = vadd.f32 0.0, %v402
  %v404 = vpop.f32.mrb[0].mxu0
  %405 = vmatprep.mubr.bf16.mxu0 0
  %406 = vmatmul.mubr.bf16.gmra.mrb[0].mxu0 %v239
  %v407 = vpop.f32.mrb[0].mxu0
  %v408 = vadd.f32 0.0, %v407
  %v409 = vpop.f32.mrb[0].mxu0
  %v410 = vpop.f32.mrb[0].mxu0
  %v411 = vadd.f32 0.0, %v410
  %v412 = vpop.f32.mrb[0].mxu0
  %413 = vmatprep.mubr.bf16.mxu0 0
  %414 = vmatmul.mubr.bf16.gmra.mrb[0].mxu0 %v242
  %v415 = vpop.f32.mrb[0].mxu0
  %v416 = vadd.f32 0.0, %v415
  %v417 = vpop.f32.mrb[0].mxu0
  %v418 = vpop.f32.mrb[0].mxu0
  %v419 = vadd.f32 0.0, %v418
  %v420 = vpop.f32.mrb[0].mxu0
  %421 = vmatprep.mubr.bf16.mxu0 0
  %422 = vmatmul.mubr.bf16.gmra.mrb[0].mxu0 %v245
  %v423 = vpop.f32.mrb[0].mxu0
  %v424 = vadd.f32 0.0, %v423
  %v425 = vpop.f32.mrb[0].mxu0
  %v426 = vpop.f32.mrb[0].mxu0
  %v427 = vadd.f32 0.0, %v426
  %v428 = vpop.f32.mrb[0].mxu0
  %429 = vmatprep.mubr.bf16.mxu0 0
  %430 = vmatmul.mubr.bf16.gmra.mrb[0].mxu0 %v248
  %v431 = vpop.f32.mrb[0].mxu0
  %v432 = vadd.f32 0.0, %v431
  %v433 = vpop.f32.mrb[0].mxu0
  %v434 = vpop.f32.mrb[0].mxu0
  %v435 = vadd.f32 0.0, %v434
  %v436 = vpop.f32.mrb[0].mxu0
  %437 = vmatprep.mubr.bf16.mxu0 0
  %438 = vmatmul.mubr.bf16.gmra.mrb[0].mxu0 %v251
  %v439 = vpop.f32.mrb[0].mxu0
  %v440 = vadd.f32 0.0, %v439
  %v441 = vpop.f32.mrb[0].mxu0
  %v442 = vpop.f32.mrb[0].mxu0
  %v443 = vadd.f32 0.0, %v442
  %v444 = vpop.f32.mrb[0].mxu0
  %445 = vmatprep.mubr.bf16.mxu0 0
  %446 = vmatmul.mubr.bf16.gmra.mrb[0].mxu0 %v254
  %v447 = vpop.f32.mrb[0].mxu0
  %v448 = vadd.f32 0.0, %v447
  %v449 = vpop.f32.mrb[0].mxu0
  %v450 = vpop.f32.mrb[0].mxu0
  %v451 = vadd.f32 0.0, %v450
  %v452 = vpop.f32.mrb[0].mxu0
  %453 = vmatprep.mubr.bf16.mxu0 0
  %454 = vmatmul.mubr.bf16.gmra.mrb[0].mxu0 %v257
  %v455 = vpop.f32.mrb[0].mxu0
  %v456 = vadd.f32 0.0, %v455
  %v457 = vpop.f32.mrb[0].mxu0
  %v458 = vpop.f32.mrb[0].mxu0
  %v459 = vadd.f32 0.0, %v458
  %v460 = vpop.f32.mrb[0].mxu0
  %461 = vmatprep.mubr.bf16.mxu0 0
  %462 = vmatmul.mubr.bf16.gmra.mrb[0].mxu0 %v260
  %v463 = vpop.f32.mrb[0].mxu0
  %v464 = vadd.f32 0.0, %v463
  %v465 = vpop.f32.mrb[0].mxu0
  %v466 = vpop.f32.mrb[0].mxu0
  %v467 = vadd.f32 0.0, %v466
  %v468 = vpop.f32.mrb[0].mxu0
  %469 = vmatprep.mubr.bf16.mxu0 0
  %470 = vmatmul.mubr.bf16.gmra.mrb[0].mxu0 %v263
  %v471 = vpop.f32.mrb[0].mxu0
  %v472 = vadd.f32 0.0, %v471
  %v473 = vpop.f32.mrb[0].mxu0
  %v474 = vpop.f32.mrb[0].mxu0
  %v475 = vadd.f32 0.0, %v474
  %v476 = vpop.f32.mrb[0].mxu0
  %477 = vmatprep.mubr.bf16.mxu0 0
  %478 = vmatmul.mubr.bf16.gmra.mrb[0].mxu0 %v266
  %v479 = vpop.f32.mrb[0].mxu0
  %v480 = vadd.f32 0.0, %v479
  %v481 = vpop.f32.mrb[0].mxu0
  %v482 = vpop.f32.mrb[0].mxu0
  %v483 = vadd.f32 0.0, %v482
  %v484 = vpop.f32.mrb[0].mxu0
  %485 = vmatprep.mubr.bf16.mxu0 0
  %486 = vmatmul.mubr.bf16.gmra.mrb[0].mxu0 %v269
  %v487 = vpop.f32.mrb[0].mxu0
  %v488 = vadd.f32 0.0, %v487
  %v489 = vpop.f32.mrb[0].mxu0
  %v490 = vpop.f32.mrb[0].mxu0
  %v491 = vadd.f32 0.0, %v490
  %v492 = vpop.f32.mrb[0].mxu0
  %493 = vmatprep.mubr.bf16.mxu0 0
  %494 = vmatmul.mubr.bf16.gmra.mrb[0].mxu0 %v272
  %v495 = vpop.f32.mrb[0].mxu0
  %v496 = vadd.f32 0.0, %v495
  %v497 = vpop.f32.mrb[0].mxu0
  %v498 = vpop.f32.mrb[0].mxu0
  %v499 = vadd.f32 0.0, %v498
  %v500 = vpop.f32.mrb[0].mxu0
  %501 = vmatprep.mubr.bf16.mxu0 0
  %502 = vmatmul.mubr.bf16.gmra.mrb[0].mxu0 %v275
  %v503 = vpop.f32.mrb[0].mxu0
  %v504 = vadd.f32 0.0, %v503
  %v505 = vpop.f32.mrb[0].mxu0
  %v506 = vpop.f32.mrb[0].mxu0
  %v507 = vadd.f32 0.0, %v506
  %v508 = vpop.f32.mrb[0].mxu0
  %509 = vmatprep.mubr.bf16.mxu0 0
  %510 = vmatmul.mubr.bf16.gmra.mrb[0].mxu0 %v278
  %v511 = vpop.f32.mrb[0].mxu0
  %v512 = vadd.f32 0.0, %v511
  %v513 = vpop.f32.mrb[0].mxu0
  %v514 = vpop.f32.mrb[0].mxu0
  %v515 = vadd.f32 0.0, %v514
  %v516 = vpop.f32.mrb[0].mxu0
  %517 = vmatprep.mubr.bf16.mxu0 0
  %518 = vmatmul.mubr.bf16.gmra.mrb[0].mxu0 %v281
  %v519 = vpop.f32.mrb[0].mxu0
  %v520 = vadd.f32 0.0, %v519
  %v521 = vpop.f32.mrb[0].mxu0
  %v522 = vpop.f32.mrb[0].mxu0
  %v523 = vadd.f32 0.0, %v522
  %v524 = vpop.f32.mrb[0].mxu0
  %525 = vmatprep.mubr.bf16.mxu0 0
  %526 = vmatmul.mubr.bf16.gmra.mrb[0].mxu0 %v284
  %v527 = vpop.f32.mrb[0].mxu0
  %v528 = vadd.f32 0.0, %v527
  %v529 = vpop.f32.mrb[0].mxu0
  %v530 = vpop.f32.mrb[0].mxu0
  %v531 = vadd.f32 0.0, %v530
  %v532 = vpop.f32.mrb[0].mxu0
  %533 = vmatprep.mubr.bf16.mxu0 0
  %534 = vmatmul.mubr.bf16.gmra.mrb[0].mxu0 %v287
  %v535 = vpop.f32.mrb[0].mxu0
  %v536 = vadd.f32 0.0, %v535
  %v537 = vpop.f32.mrb[0].mxu0
  %v538 = vpop.f32.mrb[0].mxu0
  %v539 = vadd.f32 0.0, %v538
  %v540 = vpop.f32.mrb[0].mxu0
  %541 = vmatprep.mubr.bf16.mxu0 0
  %542 = vmatmul.mubr.bf16.gmra.mrb[0].mxu0 %v290
  %v543 = vpop.f32.mrb[0].mxu0
  %v544 = vadd.f32 0.0, %v543
  %v545 = vpop.f32.mrb[0].mxu0
  %v546 = vpop.f32.mrb[0].mxu0
  %v547 = vadd.f32 0.0, %v546
  %v548 = vpop.f32.mrb[0].mxu0
  %549 = vmatprep.mubr.bf16.mxu0 0
  %550 = vmatmul.mubr.bf16.gmra.mrb[0].mxu0 %v293
  %v551 = vpop.f32.mrb[0].mxu0
  %v552 = vadd.f32 0.0, %v551
  %v553 = vpop.f32.mrb[0].mxu0
  %v554 = vpop.f32.mrb[0].mxu0
  %v555 = vadd.f32 0.0, %v554
  %v556 = vpop.f32.mrb[0].mxu0
  %557 = vmatprep.mubr.bf16.mxu0 0
  %558 = vmatmul.mubr.bf16.gmra.mrb[0].mxu0 %v296
  %v559 = vpop.f32.mrb[0].mxu0
  %v560 = vadd.f32 0.0, %v559
  %v561 = vpop.f32.mrb[0].mxu0
  %v562 = vpop.f32.mrb[0].mxu0
  %v563 = vadd.f32 0.0, %v562
  %v564 = vpop.f32.mrb[0].mxu0
  %565 = vmatprep.mubr.bf16.mxu0 0
  %566 = vmatmul.mubr.bf16.gmra.mrb[0].mxu0 %v299
  %v567 = vpop.f32.mrb[0].mxu0
  %v568 = vadd.f32 0.0, %v567
  %v569 = vpop.f32.mrb[0].mxu0
  %v570 = vpop.f32.mrb[0].mxu0
  %v571 = vadd.f32 0.0, %v570
  %v572 = vpop.f32.mrb[0].mxu0
  %573 = vmatprep.mubr.bf16.mxu0 0
  %574 = vmatmul.mubr.bf16.gmra.mrb[0].mxu0 %v302
  %v575 = vpop.f32.mrb[0].mxu0
  %v576 = vadd.f32 0.0, %v575
  %v577 = vpop.f32.mrb[0].mxu0
  %v578 = vpop.f32.mrb[0].mxu0
  %v579 = vadd.f32 0.0, %v578
  %v580 = vpop.f32.mrb[0].mxu0
  %581 = vmatprep.mubr.bf16.mxu0 0
  %582 = vmatmul.mubr.bf16.gmra.mrb[0].mxu0 %v305
  %v583 = vpop.f32.mrb[0].mxu0
  %v584 = vadd.f32 0.0, %v583
  %v585 = vpop.f32.mrb[0].mxu0
  %v586 = vpop.f32.mrb[0].mxu0
  %v587 = vadd.f32 0.0, %v586
  %v588 = vpop.f32.mrb[0].mxu0
  %589 = vmatprep.mubr.bf16.mxu0 0
  %590 = vmatmul.mubr.bf16.gmra.mrb[0].mxu0 %v308
  %v591 = vpop.f32.mrb[0].mxu0
  %v592 = vadd.f32 0.0, %v591
  %v593 = vpop.f32.mrb[0].mxu0
  %v594 = vpop.f32.mrb[0].mxu0
  %v595 = vadd.f32 0.0, %v594
  %v596 = vpop.f32.mrb[0].mxu0
  %597 = vmatprep.mubr.bf16.mxu0 0
  %598 = vmatmul.mubr.bf16.gmra.mrb[0].mxu0 %v311
  %v599 = vpop.f32.mrb[0].mxu0
  %v600 = vadd.f32 0.0, %v599
  %v601 = vpop.f32.mrb[0].mxu0
  %v602 = vpop.f32.mrb[0].mxu0
  %v603 = vadd.f32 0.0, %v602
  %v604 = vpop.f32.mrb[0].mxu0
  %605 = vdwg.mxu0
  %v607 = vsel %vm216, %v85, 0
  %v610 = vsel %vm216, %v86, 0
  %v613 = vsel %vm216, %v87, 0
  %v616 = vsel %vm216, %v88, 0
  %v619 = vsel %vm216, %v89, 0
  %v622 = vsel %vm216, %v90, 0
  %v625 = vsel %vm216, %v91, 0
  %v628 = vsel %vm216, %v92, 0
  %v631 = vsel %vm216, %v93, 0
  %v634 = vsel %vm216, %v94, 0
  %v637 = vsel %vm216, %v95, 0
  %v640 = vsel %vm216, %v96, 0
  %v643 = vsel %vm216, %v97, 0
  %v646 = vsel %vm216, %v98, 0
  %v649 = vsel %vm216, %v99, 0
  %v652 = vsel %vm216, %v100, 0
  %v655 = vsel %vm216, %v101, 0
  %v658 = vsel %vm216, %v102, 0
  %v661 = vsel %vm216, %v103, 0
  %v664 = vsel %vm216, %v104, 0
  %v667 = vsel %vm216, %v105, 0
  %v670 = vsel %vm216, %v106, 0
  %v673 = vsel %vm216, %v107, 0
  %v676 = vsel %vm216, %v108, 0
  %v679 = vsel %vm216, %v109, 0
  %v682 = vsel %vm216, %v110, 0
  %v685 = vsel %vm216, %v111, 0
  %v688 = vsel %vm216, %v112, 0
  %v691 = vsel %vm216, %v113, 0
  %v694 = vsel %vm216, %v114, 0
  %v697 = vsel %vm216, %v115, 0
  %v700 = vsel %vm216, %v116, 0
  %v703 = vsel %vm313, %v117, 0
  %705 = vmatprep.subr.bf16.mxu0 0
  %706 = vmatpush1.bf16.msra.mxu0 %v703
  %707 = vmatprep.subr.bf16.mxu0 0
  %708 = vmatpush1.bf16.msra.mxu0 0
  %709 = vmatprep.subr.bf16.mxu0 0
  %710 = vmatpush1.bf16.msra.mxu0 0
  %711 = vmatprep.subr.bf16.mxu0 0
  %712 = vmatpush1.bf16.msra.mxu0 0
  %713 = vmatprep.subr.bf16.mxu0 0
  %714 = vmatpush1.bf16.msra.mxu0 0
  %715 = vmatprep.subr.bf16.mxu0 0
  %716 = vmatpush1.bf16.msra.mxu0 0
  %717 = vmatprep.subr.bf16.mxu0 0
  %718 = vmatpush1.bf16.msra.mxu0 0
  %719 = vmatprep.subr.bf16.mxu0 0
  %720 = vmatpush1.bf16.msra.mxu0 0
  %721 = vmatprep.subr.bf16.mxu0 0
  %722 = vmatpush1.bf16.msra.mxu0 0
  %723 = vmatprep.subr.bf16.mxu0 0
  %724 = vmatpush1.bf16.msra.mxu0 0
  %725 = vmatprep.subr.bf16.mxu0 0
  %726 = vmatpush1.bf16.msra.mxu0 0
  %727 = vmatprep.subr.bf16.mxu0 0
  %728 = vmatpush1.bf16.msra.mxu0 0
  %729 = vmatprep.subr.bf16.mxu0 0
  %730 = vmatpush1.bf16.msra.mxu0 0
  %731 = vmatprep.subr.bf16.mxu0 0
  %732 = vmatpush1.bf16.msra.mxu0 0
  %733 = vmatprep.subr.bf16.mxu0 0
  %734 = vmatpush1.bf16.msra.mxu0 0
  %735 = vmatprep.subr.bf16.mxu0 0
  %736 = vmatpush1.bf16.msra.mxu0 0
  %737 = vmatprep.mubr.bf16.mxu0 0
  %738 = vmatmul.mubr.bf16.gmra.mrb[0].mxu0 %v607
  %v739 = vpop.f32.mrb[0].mxu0
  %v740 = vadd.f32 %v352, %v739
  %v741 = vpop.f32.mrb[0].mxu0
  %v742 = vpop.f32.mrb[0].mxu0
  %v743 = vadd.f32 %v355, %v742
  %v744 = vpop.f32.mrb[0].mxu0
  %745 = vmatprep.mubr.bf16.mxu0 0
  %746 = vmatmul.mubr.bf16.gmra.mrb[0].mxu0 %v610
  %v747 = vpop.f32.mrb[0].mxu0
  %v748 = vadd.f32 %v360, %v747
  %v749 = vpop.f32.mrb[0].mxu0
  %v750 = vpop.f32.mrb[0].mxu0
  %v751 = vadd.f32 %v363, %v750
  %v752 = vpop.f32.mrb[0].mxu0
  %753 = vmatprep.mubr.bf16.mxu0 0
  %754 = vmatmul.mubr.bf16.gmra.mrb[0].mxu0 %v613
  %v755 = vpop.f32.mrb[0].mxu0
  %v756 = vadd.f32 %v368, %v755
  %v757 = vpop.f32.mrb[0].mxu0
  %v758 = vpop.f32.mrb[0].mxu0
  %v759 = vadd.f32 %v371, %v758
  %v760 = vpop.f32.mrb[0].mxu0
  %761 = vmatprep.mubr.bf16.mxu0 0
  %762 = vmatmul.mubr.bf16.gmra.mrb[0].mxu0 %v616
  %v763 = vpop.f32.mrb[0].mxu0
  %v764 = vadd.f32 %v376, %v763
  %v765 = vpop.f32.mrb[0].mxu0
  %v766 = vpop.f32.mrb[0].mxu0
  %v767 = vadd.f32 %v379, %v766
  %v768 = vpop.f32.mrb[0].mxu0
  %769 = vmatprep.mubr.bf16.mxu0 0
  %770 = vmatmul.mubr.bf16.gmra.mrb[0].mxu0 %v619
  %v771 = vpop.f32.mrb[0].mxu0
  %v772 = vadd.f32 %v384, %v771
  %v773 = vpop.f32.mrb[0].mxu0
  %v774 = vpop.f32.mrb[0].mxu0
  %v775 = vadd.f32 %v387, %v774
  %v776 = vpop.f32.mrb[0].mxu0
  %777 = vmatprep.mubr.bf16.mxu0 0
  %778 = vmatmul.mubr.bf16.gmra.mrb[0].mxu0 %v622
  %v779 = vpop.f32.mrb[0].mxu0
  %v780 = vadd.f32 %v392, %v779
  %v781 = vpop.f32.mrb[0].mxu0
  %v782 = vpop.f32.mrb[0].mxu0
  %v783 = vadd.f32 %v395, %v782
  %v784 = vpop.f32.mrb[0].mxu0
  %785 = vmatprep.mubr.bf16.mxu0 0
  %786 = vmatmul.mubr.bf16.gmra.mrb[0].mxu0 %v625
  %v787 = vpop.f32.mrb[0].mxu0
  %v788 = vadd.f32 %v400, %v787
  %v789 = vpop.f32.mrb[0].mxu0
  %v790 = vpop.f32.mrb[0].mxu0
  %v791 = vadd.f32 %v403, %v790
  %v792 = vpop.f32.mrb[0].mxu0
  %793 = vmatprep.mubr.bf16.mxu0 0
  %794 = vmatmul.mubr.bf16.gmra.mrb[0].mxu0 %v628
  %v795 = vpop.f32.mrb[0].mxu0
  %v796 = vadd.f32 %v408, %v795
  %v797 = vpop.f32.mrb[0].mxu0
  %v798 = vpop.f32.mrb[0].mxu0
  %v799 = vadd.f32 %v411, %v798
  %v800 = vpop.f32.mrb[0].mxu0
  %801 = vmatprep.mubr.bf16.mxu0 0
  %802 = vmatmul.mubr.bf16.gmra.mrb[0].mxu0 %v631
  %v803 = vpop.f32.mrb[0].mxu0
  %v804 = vadd.f32 %v416, %v803
  %v805 = vpop.f32.mrb[0].mxu0
  %v806 = vpop.f32.mrb[0].mxu0
  %v807 = vadd.f32 %v419, %v806
  %v808 = vpop.f32.mrb[0].mxu0
  %809 = vmatprep.mubr.bf16.mxu0 0
  %810 = vmatmul.mubr.bf16.gmra.mrb[0].mxu0 %v634
  %v811 = vpop.f32.mrb[0].mxu0
  %v812 = vadd.f32 %v424, %v811
  %v813 = vpop.f32.mrb[0].mxu0
  %v814 = vpop.f32.mrb[0].mxu0
  %v815 = vadd.f32 %v427, %v814
  %v816 = vpop.f32.mrb[0].mxu0
  %817 = vmatprep.mubr.bf16.mxu0 0
  %818 = vmatmul.mubr.bf16.gmra.mrb[0].mxu0 %v637
  %v819 = vpop.f32.mrb[0].mxu0
  %v820 = vadd.f32 %v432, %v819
  %v821 = vpop.f32.mrb[0].mxu0
  %v822 = vpop.f32.mrb[0].mxu0
  %v823 = vadd.f32 %v435, %v822
  %v824 = vpop.f32.mrb[0].mxu0
  %825 = vmatprep.mubr.bf16.mxu0 0
  %826 = vmatmul.mubr.bf16.gmra.mrb[0].mxu0 %v640
  %v827 = vpop.f32.mrb[0].mxu0
  %v828 = vadd.f32 %v440, %v827
  %v829 = vpop.f32.mrb[0].mxu0
  %v830 = vpop.f32.mrb[0].mxu0
  %v831 = vadd.f32 %v443, %v830
  %v832 = vpop.f32.mrb[0].mxu0
  %833 = vmatprep.mubr.bf16.mxu0 0
  %834 = vmatmul.mubr.bf16.gmra.mrb[0].mxu0 %v643
  %v835 = vpop.f32.mrb[0].mxu0
  %v836 = vadd.f32 %v448, %v835
  %v837 = vpop.f32.mrb[0].mxu0
  %v838 = vpop.f32.mrb[0].mxu0
  %v839 = vadd.f32 %v451, %v838
  %v840 = vpop.f32.mrb[0].mxu0
  %841 = vmatprep.mubr.bf16.mxu0 0
  %842 = vmatmul.mubr.bf16.gmra.mrb[0].mxu0 %v646
  %v843 = vpop.f32.mrb[0].mxu0
  %v844 = vadd.f32 %v456, %v843
  %v845 = vpop.f32.mrb[0].mxu0
  %v846 = vpop.f32.mrb[0].mxu0
  %v847 = vadd.f32 %v459, %v846
  %v848 = vpop.f32.mrb[0].mxu0
  %849 = vmatprep.mubr.bf16.mxu0 0
  %850 = vmatmul.mubr.bf16.gmra.mrb[0].mxu0 %v649
  %v851 = vpop.f32.mrb[0].mxu0
  %v852 = vadd.f32 %v464, %v851
  %v853 = vpop.f32.mrb[0].mxu0
  %v854 = vpop.f32.mrb[0].mxu0
  %v855 = vadd.f32 %v467, %v854
  %v856 = vpop.f32.mrb[0].mxu0
  %857 = vmatprep.mubr.bf16.mxu0 0
  %858 = vmatmul.mubr.bf16.gmra.mrb[0].mxu0 %v652
  %v859 = vpop.f32.mrb[0].mxu0
  %v860 = vadd.f32 %v472, %v859
  %v861 = vpop.f32.mrb[0].mxu0
  %v862 = vpop.f32.mrb[0].mxu0
  %v863 = vadd.f32 %v475, %v862
  %v864 = vpop.f32.mrb[0].mxu0
  %865 = vmatprep.mubr.bf16.mxu0 0
  %866 = vmatmul.mubr.bf16.gmra.mrb[0].mxu0 %v655
  %v867 = vpop.f32.mrb[0].mxu0
  %v868 = vadd.f32 %v480, %v867
  %v869 = vpop.f32.mrb[0].mxu0
  %v870 = vpop.f32.mrb[0].mxu0
  %v871 = vadd.f32 %v483, %v870
  %v872 = vpop.f32.mrb[0].mxu0
  %873 = vmatprep.mubr.bf16.mxu0 0
  %874 = vmatmul.mubr.bf16.gmra.mrb[0].mxu0 %v658
  %v875 = vpop.f32.mrb[0].mxu0
  %v876 = vadd.f32 %v488, %v875
  %v877 = vpop.f32.mrb[0].mxu0
  %v878 = vpop.f32.mrb[0].mxu0
  %v879 = vadd.f32 %v491, %v878
  %v880 = vpop.f32.mrb[0].mxu0
  %881 = vmatprep.mubr.bf16.mxu0 0
  %882 = vmatmul.mubr.bf16.gmra.mrb[0].mxu0 %v661
  %v883 = vpop.f32.mrb[0].mxu0
  %v884 = vadd.f32 %v496, %v883
  %v885 = vpop.f32.mrb[0].mxu0
  %v886 = vpop.f32.mrb[0].mxu0
  %v887 = vadd.f32 %v499, %v886
  %v888 = vpop.f32.mrb[0].mxu0
  %889 = vmatprep.mubr.bf16.mxu0 0
  %890 = vmatmul.mubr.bf16.gmra.mrb[0].mxu0 %v664
  %v891 = vpop.f32.mrb[0].mxu0
  %v892 = vadd.f32 %v504, %v891
  %v893 = vpop.f32.mrb[0].mxu0
  %v894 = vpop.f32.mrb[0].mxu0
  %v895 = vadd.f32 %v507, %v894
  %v896 = vpop.f32.mrb[0].mxu0
  %897 = vmatprep.mubr.bf16.mxu0 0
  %898 = vmatmul.mubr.bf16.gmra.mrb[0].mxu0 %v667
  %v899 = vpop.f32.mrb[0].mxu0
  %v900 = vadd.f32 %v512, %v899
  %v901 = vpop.f32.mrb[0].mxu0
  %v902 = vpop.f32.mrb[0].mxu0
  %v903 = vadd.f32 %v515, %v902
  %v904 = vpop.f32.mrb[0].mxu0
  %905 = vmatprep.mubr.bf16.mxu0 0
  %906 = vmatmul.mubr.bf16.gmra.mrb[0].mxu0 %v670
  %v907 = vpop.f32.mrb[0].mxu0
  %v908 = vadd.f32 %v520, %v907
  %v909 = vpop.f32.mrb[0].mxu0
  %v910 = vpop.f32.mrb[0].mxu0
  %v911 = vadd.f32 %v523, %v910
  %v912 = vpop.f32.mrb[0].mxu0
  %913 = vmatprep.mubr.bf16.mxu0 0
  %914 = vmatmul.mubr.bf16.gmra.mrb[0].mxu0 %v673
  %v915 = vpop.f32.mrb[0].mxu0
  %v916 = vadd.f32 %v528, %v915
  %v917 = vpop.f32.mrb[0].mxu0
  %v918 = vpop.f32.mrb[0].mxu0
  %v919 = vadd.f32 %v531, %v918
  %v920 = vpop.f32.mrb[0].mxu0
  %921 = vmatprep.mubr.bf16.mxu0 0
  %922 = vmatmul.mubr.bf16.gmra.mrb[0].mxu0 %v676
  %v923 = vpop.f32.mrb[0].mxu0
  %v924 = vadd.f32 %v536, %v923
  %v925 = vpop.f32.mrb[0].mxu0
  %v926 = vpop.f32.mrb[0].mxu0
  %v927 = vadd.f32 %v539, %v926
  %v928 = vpop.f32.mrb[0].mxu0
  %929 = vmatprep.mubr.bf16.mxu0 0
  %930 = vmatmul.mubr.bf16.gmra.mrb[0].mxu0 %v679
  %v931 = vpop.f32.mrb[0].mxu0
  %v932 = vadd.f32 %v544, %v931
  %v933 = vpop.f32.mrb[0].mxu0
  %v934 = vpop.f32.mrb[0].mxu0
  %v935 = vadd.f32 %v547, %v934
  %v936 = vpop.f32.mrb[0].mxu0
  %937 = vmatprep.mubr.bf16.mxu0 0
  %938 = vmatmul.mubr.bf16.gmra.mrb[0].mxu0 %v682
  %v939 = vpop.f32.mrb[0].mxu0
  %v940 = vadd.f32 %v552, %v939
  %v941 = vpop.f32.mrb[0].mxu0
  %v942 = vpop.f32.mrb[0].mxu0
  %v943 = vadd.f32 %v555, %v942
  %v944 = vpop.f32.mrb[0].mxu0
  %945 = vmatprep.mubr.bf16.mxu0 0
  %946 = vmatmul.mubr.bf16.gmra.mrb[0].mxu0 %v685
  %v947 = vpop.f32.mrb[0].mxu0
  %v948 = vadd.f32 %v560, %v947
  %v949 = vpop.f32.mrb[0].mxu0
  %v950 = vpop.f32.mrb[0].mxu0
  %v951 = vadd.f32 %v563, %v950
  %v952 = vpop.f32.mrb[0].mxu0
  %953 = vmatprep.mubr.bf16.mxu0 0
  %954 = vmatmul.mubr.bf16.gmra.mrb[0].mxu0 %v688
  %v955 = vpop.f32.mrb[0].mxu0
  %v956 = vadd.f32 %v568, %v955
  %v957 = vpop.f32.mrb[0].mxu0
  %v958 = vpop.f32.mrb[0].mxu0
  %v959 = vadd.f32 %v571, %v958
  %v960 = vpop.f32.mrb[0].mxu0
  %961 = vmatprep.mubr.bf16.mxu0 0
  %962 = vmatmul.mubr.bf16.gmra.mrb[0].mxu0 %v691
  %v963 = vpop.f32.mrb[0].mxu0
  %v964 = vadd.f32 %v576, %v963
  %v965 = vpop.f32.mrb[0].mxu0
  %v966 = vpop.f32.mrb[0].mxu0
  %v967 = vadd.f32 %v579, %v966
  %v968 = vpop.f32.mrb[0].mxu0
  %969 = vmatprep.mubr.bf16.mxu0 0
  %970 = vmatmul.mubr.bf16.gmra.mrb[0].mxu0 %v694
  %v971 = vpop.f32.mrb[0].mxu0
  %v972 = vadd.f32 %v584, %v971
  %v973 = vpop.f32.mrb[0].mxu0
  %v974 = vpop.f32.mrb[0].mxu0
  %v975 = vadd.f32 %v587, %v974
  %v976 = vpop.f32.mrb[0].mxu0
  %977 = vmatprep.mubr.bf16.mxu0 0
  %978 = vmatmul.mubr.bf16.gmra.mrb[0].mxu0 %v697
  %v979 = vpop.f32.mrb[0].mxu0
  %v980 = vadd.f32 %v592, %v979
  %v981 = vpop.f32.mrb[0].mxu0
  %v982 = vpop.f32.mrb[0].mxu0
  %v983 = vadd.f32 %v595, %v982
  %v984 = vpop.f32.mrb[0].mxu0
  %985 = vmatprep.mubr.bf16.mxu0 0
  %986 = vmatmul.mubr.bf16.gmra.mrb[0].mxu0 %v700
  %v987 = vpop.f32.mrb[0].mxu0
  %v988 = vadd.f32 %v600, %v987
  %v989 = vpop.f32.mrb[0].mxu0
  %v990 = vpop.f32.mrb[0].mxu0
  %v991 = vadd.f32 %v603, %v990
  %v992 = vpop.f32.mrb[0].mxu0
  %993 = vdwg.mxu0
  %v994 = vld [vmem:[%s0 + $0x2] sm:$0xff]
  %v995 = vld [vmem:[%s0 + $0xa] sm:$0xff]
  %v996 = vld [vmem:[%s0 + $0x1a] sm:$0xff]
  %v997 = vld [vmem:[%s0 + $0x22] sm:$0xff]
  %v998 = vld [vmem:[%s0 + $0x32] sm:$0xff]
  %v999 = vld [vmem:[%s0 + $0x3a] sm:$0xff]
  %v1000 = vld [vmem:[%s0 + $0x4a] sm:$0xff]
  %v1001 = vld [vmem:[%s0 + $0x52] sm:$0xff]
  %v1002 = vld [vmem:[%s0 + $0x62] sm:$0xff]
  %v1003 = vld [vmem:[%s0 + $0x6a] sm:$0xff]
  %v1004 = vld [vmem:[%s0 + $0x7a] sm:$0xff]
  %v1005 = vld [vmem:[%s0 + $0x82] sm:$0xff]
  %v1006 = vld [vmem:[%s0 + $0x92] sm:$0xff]
  %v1007 = vld [vmem:[%s0 + $0x9a] sm:$0xff]
  %v1008 = vld [vmem:[%s0 + $0xaa] sm:$0xff]
  %v1009 = vld [vmem:[%s0 + $0xb2] sm:$0xff]
  %v1010 = vld [vmem:[%s0 + $0xc2] sm:$0xff]
  %v1011 = vld [vmem:[%s0 + $0xca] sm:$0xff]
  %v1012 = vld [vmem:[%s0 + $0xda] sm:$0xff]
  %v1013 = vld [vmem:[%s0 + $0xe2] sm:$0xff]
  %v1014 = vld [vmem:[%s0 + $0xf2] sm:$0xff]
  %v1015 = vld [vmem:[%s0 + $0xfa] sm:$0xff]
  %v1016 = vld [vmem:[%s0 + $0x10a] sm:$0xff]
  %v1017 = vld [vmem:[%s0 + $0x112] sm:$0xff]
  %v1018 = vld [vmem:[%s0 + $0x122] sm:$0xff]
  %v1019 = vld [vmem:[%s0 + $0x12a] sm:$0xff]
  %v1020 = vld [vmem:[%s0 + $0x13a] sm:$0xff]
  %v1021 = vld [vmem:[%s0 + $0x142] sm:$0xff]
  %v1022 = vld [vmem:[%s0 + $0x152] sm:$0xff]
  %v1023 = vld [vmem:[%s0 + $0x15a] sm:$0xff]
  %v1024 = vld [vmem:[%s0 + $0x16a] sm:$0xff]
  %v1025 = vld [vmem:[%s0 + $0x172] sm:$0xff]
  %v1026 = vld [vmem:[%s0 + $0x1b2] sm:$0xff]
  %v1027 = vld [vmem:[%s0 + $0x1ba] sm:$0xff]
  %v1028 = vld [vmem:[%s0 + $0x1ca] sm:$0xff]
  %v1029 = vld [vmem:[%s0 + $0x1d2] sm:$0xff]
  %v1030 = vld [vmem:[%s0 + $0x1e2] sm:$0xff]
  %v1031 = vld [vmem:[%s0 + $0x1ea] sm:$0xff]
  %v1032 = vld [vmem:[%s0 + $0x1fa] sm:$0xff]
  %v1033 = vld [vmem:[%s0 + $0x202] sm:$0xff]
  %v1034 = vld [vmem:[%s0 + $0x212] sm:$0xff]
  %v1035 = vld [vmem:[%s0 + $0x21a] sm:$0xff]
  %v1036 = vld [vmem:[%s0 + $0x22a] sm:$0xff]
  %v1037 = vld [vmem:[%s0 + $0x232] sm:$0xff]
  %v1038 = vld [vmem:[%s0 + $0x242] sm:$0xff]
  %v1039 = vld [vmem:[%s0 + $0x24a] sm:$0xff]
  %v1040 = vld [vmem:[%s0 + $0x25a] sm:$0xff]
  %v1041 = vld [vmem:[%s0 + $0x262] sm:$0xff]
  %v1042 = vld [vmem:[%s0 + $0x272] sm:$0xff]
  %v1043 = vld [vmem:[%s0 + $0x27a] sm:$0xff]
  %v1044 = vld [vmem:[%s0 + $0x28a] sm:$0xff]
  %v1045 = vld [vmem:[%s0 + $0x292] sm:$0xff]
  %v1046 = vld [vmem:[%s0 + $0x2a2] sm:$0xff]
  %v1047 = vld [vmem:[%s0 + $0x2aa] sm:$0xff]
  %v1048 = vld [vmem:[%s0 + $0x2ba] sm:$0xff]
  %v1049 = vld [vmem:[%s0 + $0x2c2] sm:$0xff]
  %v1050 = vld [vmem:[%s0 + $0x2d2] sm:$0xff]
  %v1051 = vld [vmem:[%s0 + $0x2da] sm:$0xff]
  %v1052 = vld [vmem:[%s0 + $0x2ea] sm:$0xff]
  %v1053 = vld [vmem:[%s0 + $0x2f2] sm:$0xff]
  %v1054 = vld [vmem:[%s0 + $0x302] sm:$0xff]
  %v1055 = vld [vmem:[%s0 + $0x30a] sm:$0xff]
  %v1056 = vld [vmem:[%s0 + $0x31a] sm:$0xff]
  %v1057 = vld [vmem:[%s0 + $0x322] sm:$0xff]
  %v1058 = vpack.c.bf16 %v995, %v994
  %v1059 = vpack.c.bf16 %v997, %v996
  %v1060 = vpack.c.bf16 %v999, %v998
  %v1061 = vpack.c.bf16 %v1001, %v1000
  %v1062 = vpack.c.bf16 %v1003, %v1002
  %v1063 = vpack.c.bf16 %v1005, %v1004
  %v1064 = vpack.c.bf16 %v1007, %v1006
  %v1065 = vpack.c.bf16 %v1009, %v1008
  %v1066 = vpack.c.bf16 %v1011, %v1010
  %v1067 = vpack.c.bf16 %v1013, %v1012
  %v1068 = vpack.c.bf16 %v1015, %v1014
  %v1069 = vpack.c.bf16 %v1017, %v1016
  %v1070 = vpack.c.bf16 %v1019, %v1018
  %v1071 = vpack.c.bf16 %v1021, %v1020
  %v1072 = vpack.c.bf16 %v1023, %v1022
  %v1073 = vpack.c.bf16 %v1025, %v1024
  %v1074 = vpack.c.bf16 %v1027, %v1026
  %v1075 = vpack.c.bf16 %v1029, %v1028
  %v1076 = vpack.c.bf16 %v1031, %v1030
  %v1077 = vpack.c.bf16 %v1033, %v1032
  %v1078 = vpack.c.bf16 %v1035, %v1034
  %v1079 = vpack.c.bf16 %v1037, %v1036
  %v1080 = vpack.c.bf16 %v1039, %v1038
  %v1081 = vpack.c.bf16 %v1041, %v1040
  %v1082 = vpack.c.bf16 %v1043, %v1042
  %v1083 = vpack.c.bf16 %v1045, %v1044
  %v1084 = vpack.c.bf16 %v1047, %v1046
  %v1085 = vpack.c.bf16 %v1049, %v1048
  %v1086 = vpack.c.bf16 %v1051, %v1050
  %v1087 = vpack.c.bf16 %v1053, %v1052
  %v1088 = vpack.c.bf16 %v1055, %v1054
  %v1089 = vpack.c.bf16 %v1057, %v1056
  %s1090 = scalar_lea.vmem %s1, 4
  %v1091 = vld [vmem:[%s1090] sm:$0x3]
  %v1093 = vsel %vm216, %v1058, 0
  %v1096 = vsel %vm216, %v1059, 0
  %v1099 = vsel %vm216, %v1060, 0
  %v1102 = vsel %vm216, %v1061, 0
  %v1105 = vsel %vm216, %v1062, 0
  %v1108 = vsel %vm216, %v1063, 0
  %v1111 = vsel %vm216, %v1064, 0
  %v1114 = vsel %vm216, %v1065, 0
  %v1117 = vsel %vm216, %v1066, 0
  %v1120 = vsel %vm216, %v1067, 0
  %v1123 = vsel %vm216, %v1068, 0
  %v1126 = vsel %vm216, %v1069, 0
  %v1129 = vsel %vm216, %v1070, 0
  %v1132 = vsel %vm216, %v1071, 0
  %v1135 = vsel %vm216, %v1072, 0
  %v1138 = vsel %vm216, %v1073, 0
  %v1141 = vsel %vm216, %v1074, 0
  %v1144 = vsel %vm216, %v1075, 0
  %v1147 = vsel %vm216, %v1076, 0
  %v1150 = vsel %vm216, %v1077, 0
  %v1153 = vsel %vm216, %v1078, 0
  %v1156 = vsel %vm216, %v1079, 0
  %v1159 = vsel %vm216, %v1080, 0
  %v1162 = vsel %vm216, %v1081, 0
  %v1165 = vsel %vm216, %v1082, 0
  %v1168 = vsel %vm216, %v1083, 0
  %v1171 = vsel %vm216, %v1084, 0
  %v1174 = vsel %vm216, %v1085, 0
  %v1177 = vsel %vm216, %v1086, 0
  %v1180 = vsel %vm216, %v1087, 0
  %v1183 = vsel %vm216, %v1088, 0
  %v1186 = vsel %vm216, %v1089, 0
  %v1189 = vsel %vm313, %v1091, 0
  %1191 = vmatprep.subr.bf16.mxu0 0
  %1192 = vmatpush1.bf16.msra.mxu0 %v1189
  %1193 = vmatprep.subr.bf16.mxu0 0
  %1194 = vmatpush1.bf16.msra.mxu0 0
  %1195 = vmatprep.subr.bf16.mxu0 0
  %1196 = vmatpush1.bf16.msra.mxu0 0
  %1197 = vmatprep.subr.bf16.mxu0 0
  %1198 = vmatpush1.bf16.msra.mxu0 0
  %1199 = vmatprep.subr.bf16.mxu0 0
  %1200 = vmatpush1.bf16.msra.mxu0 0
  %1201 = vmatprep.subr.bf16.mxu0 0
  %1202 = vmatpush1.bf16.msra.mxu0 0
  %1203 = vmatprep.subr.bf16.mxu0 0
  %1204 = vmatpush1.bf16.msra.mxu0 0
  %1205 = vmatprep.subr.bf16.mxu0 0
  %1206 = vmatpush1.bf16.msra.mxu0 0
  %1207 = vmatprep.subr.bf16.mxu0 0
  %1208 = vmatpush1.bf16.msra.mxu0 0
  %1209 = vmatprep.subr.bf16.mxu0 0
  %1210 = vmatpush1.bf16.msra.mxu0 0
  %1211 = vmatprep.subr.bf16.mxu0 0
  %1212 = vmatpush1.bf16.msra.mxu0 0
  %1213 = vmatprep.subr.bf16.mxu0 0
  %1214 = vmatpush1.bf16.msra.mxu0 0
  %1215 = vmatprep.subr.bf16.mxu0 0
  %1216 = vmatpush1.bf16.msra.mxu0 0
  %1217 = vmatprep.subr.bf16.mxu0 0
  %1218 = vmatpush1.bf16.msra.mxu0 0
  %1219 = vmatprep.subr.bf16.mxu0 0
  %1220 = vmatpush1.bf16.msra.mxu0 0
  %1221 = vmatprep.subr.bf16.mxu0 0
  %1222 = vmatpush1.bf16.msra.mxu0 0
  %1223 = vmatprep.mubr.bf16.mxu0 0
  %1224 = vmatmul.mubr.bf16.gmra.mrb[0].mxu0 %v1093
  %v1225 = vpop.f32.mrb[0].mxu0
  %v1226 = vadd.f32 0.0, %v1225
  %v1227 = vpop.f32.mrb[0].mxu0
  %v1228 = vpop.f32.mrb[0].mxu0
  %v1229 = vadd.f32 0.0, %v1228
  %v1230 = vpop.f32.mrb[0].mxu0
  %1231 = vmatprep.mubr.bf16.mxu0 0
  %1232 = vmatmul.mubr.bf16.gmra.mrb[0].mxu0 %v1096
  %v1233 = vpop.f32.mrb[0].mxu0
  %v1234 = vadd.f32 0.0, %v1233
  %v1235 = vpop.f32.mrb[0].mxu0
  %v1236 = vpop.f32.mrb[0].mxu0
  %v1237 = vadd.f32 0.0, %v1236
  %v1238 = vpop.f32.mrb[0].mxu0
  %1239 = vmatprep.mubr.bf16.mxu0 0
  %1240 = vmatmul.mubr.bf16.gmra.mrb[0].mxu0 %v1099
  %v1241 = vpop.f32.mrb[0].mxu0
  %v1242 = vadd.f32 0.0, %v1241
  %v1243 = vpop.f32.mrb[0].mxu0
  %v1244 = vpop.f32.mrb[0].mxu0
  %v1245 = vadd.f32 0.0, %v1244
  %v1246 = vpop.f32.mrb[0].mxu0
  %1247 = vmatprep.mubr.bf16.mxu0 0
  %1248 = vmatmul.mubr.bf16.gmra.mrb[0].mxu0 %v1102
  %v1249 = vpop.f32.mrb[0].mxu0
  %v1250 = vadd.f32 0.0, %v1249
  %v1251 = vpop.f32.mrb[0].mxu0
  %v1252 = vpop.f32.mrb[0].mxu0
  %v1253 = vadd.f32 0.0, %v1252
  %v1254 = vpop.f32.mrb[0].mxu0
  %1255 = vmatprep.mubr.bf16.mxu0 0
  %1256 = vmatmul.mubr.bf16.gmra.mrb[0].mxu0 %v1105
  %v1257 = vpop.f32.mrb[0].mxu0
  %v1258 = vadd.f32 0.0, %v1257
  %v1259 = vpop.f32.mrb[0].mxu0
  %v1260 = vpop.f32.mrb[0].mxu0
  %v1261 = vadd.f32 0.0, %v1260
  %v1262 = vpop.f32.mrb[0].mxu0
  %1263 = vmatprep.mubr.bf16.mxu0 0
  %1264 = vmatmul.mubr.bf16.gmra.mrb[0].mxu0 %v1108
  %v1265 = vpop.f32.mrb[0].mxu0
  %v1266 = vadd.f32 0.0, %v1265
  %v1267 = vpop.f32.mrb[0].mxu0
  %v1268 = vpop.f32.mrb[0].mxu0
  %v1269 = vadd.f32 0.0, %v1268
  %v1270 = vpop.f32.mrb[0].mxu0
  %1271 = vmatprep.mubr.bf16.mxu0 0
  %1272 = vmatmul.mubr.bf16.gmra.mrb[0].mxu0 %v1111
  %v1273 = vpop.f32.mrb[0].mxu0
  %v1274 = vadd.f32 0.0, %v1273
  %v1275 = vpop.f32.mrb[0].mxu0
  %v1276 = vpop.f32.mrb[0].mxu0
  %v1277 = vadd.f32 0.0, %v1276
  %v1278 = vpop.f32.mrb[0].mxu0
  %1279 = vmatprep.mubr.bf16.mxu0 0
  %1280 = vmatmul.mubr.bf16.gmra.mrb[0].mxu0 %v1114
  %v1281 = vpop.f32.mrb[0].mxu0
  %v1282 = vadd.f32 0.0, %v1281
  %v1283 = vpop.f32.mrb[0].mxu0
  %v1284 = vpop.f32.mrb[0].mxu0
  %v1285 = vadd.f32 0.0, %v1284
  %v1286 = vpop.f32.mrb[0].mxu0
  %1287 = vmatprep.mubr.bf16.mxu0 0
  %1288 = vmatmul.mubr.bf16.gmra.mrb[0].mxu0 %v1117
  %v1289 = vpop.f32.mrb[0].mxu0
  %v1290 = vadd.f32 0.0, %v1289
  %v1291 = vpop.f32.mrb[0].mxu0
  %v1292 = vpop.f32.mrb[0].mxu0
  %v1293 = vadd.f32 0.0, %v1292
  %v1294 = vpop.f32.mrb[0].mxu0
  %1295 = vmatprep.mubr.bf16.mxu0 0
  %1296 = vmatmul.mubr.bf16.gmra.mrb[0].mxu0 %v1120
  %v1297 = vpop.f32.mrb[0].mxu0
  %v1298 = vadd.f32 0.0, %v1297
  %v1299 = vpop.f32.mrb[0].mxu0
  %v1300 = vpop.f32.mrb[0].mxu0
  %v1301 = vadd.f32 0.0, %v1300
  %v1302 = vpop.f32.mrb[0].mxu0
  %1303 = vmatprep.mubr.bf16.mxu0 0
  %1304 = vmatmul.mubr.bf16.gmra.mrb[0].mxu0 %v1123
  %v1305 = vpop.f32.mrb[0].mxu0
  %v1306 = vadd.f32 0.0, %v1305
  %v1307 = vpop.f32.mrb[0].mxu0
  %v1308 = vpop.f32.mrb[0].mxu0
  %v1309 = vadd.f32 0.0, %v1308
  %v1310 = vpop.f32.mrb[0].mxu0
  %1311 = vmatprep.mubr.bf16.mxu0 0
  %1312 = vmatmul.mubr.bf16.gmra.mrb[0].mxu0 %v1126
  %v1313 = vpop.f32.mrb[0].mxu0
  %v1314 = vadd.f32 0.0, %v1313
  %v1315 = vpop.f32.mrb[0].mxu0
  %v1316 = vpop.f32.mrb[0].mxu0
  %v1317 = vadd.f32 0.0, %v1316
  %v1318 = vpop.f32.mrb[0].mxu0
  %1319 = vmatprep.mubr.bf16.mxu0 0
  %1320 = vmatmul.mubr.bf16.gmra.mrb[0].mxu0 %v1129
  %v1321 = vpop.f32.mrb[0].mxu0
  %v1322 = vadd.f32 0.0, %v1321
  %v1323 = vpop.f32.mrb[0].mxu0
  %v1324 = vpop.f32.mrb[0].mxu0
  %v1325 = vadd.f32 0.0, %v1324
  %v1326 = vpop.f32.mrb[0].mxu0
  %1327 = vmatprep.mubr.bf16.mxu0 0
  %1328 = vmatmul.mubr.bf16.gmra.mrb[0].mxu0 %v1132
  %v1329 = vpop.f32.mrb[0].mxu0
  %v1330 = vadd.f32 0.0, %v1329
  %v1331 = vpop.f32.mrb[0].mxu0
  %v1332 = vpop.f32.mrb[0].mxu0
  %v1333 = vadd.f32 0.0, %v1332
  %v1334 = vpop.f32.mrb[0].mxu0
  %1335 = vmatprep.mubr.bf16.mxu0 0
  %1336 = vmatmul.mubr.bf16.gmra.mrb[0].mxu0 %v1135
  %v1337 = vpop.f32.mrb[0].mxu0
  %v1338 = vadd.f32 0.0, %v1337
  %v1339 = vpop.f32.mrb[0].mxu0
  %v1340 = vpop.f32.mrb[0].mxu0
  %v1341 = vadd.f32 0.0, %v1340
  %v1342 = vpop.f32.mrb[0].mxu0
  %1343 = vmatprep.mubr.bf16.mxu0 0
  %1344 = vmatmul.mubr.bf16.gmra.mrb[0].mxu0 %v1138
  %v1345 = vpop.f32.mrb[0].mxu0
  %v1346 = vadd.f32 0.0, %v1345
  %v1347 = vpop.f32.mrb[0].mxu0
  %v1348 = vpop.f32.mrb[0].mxu0
  %v1349 = vadd.f32 0.0, %v1348
  %v1350 = vpop.f32.mrb[0].mxu0
  %1351 = vmatprep.mubr.bf16.mxu0 0
  %1352 = vmatmul.mubr.bf16.gmra.mrb[0].mxu0 %v1141
  %v1353 = vpop.f32.mrb[0].mxu0
  %v1354 = vadd.f32 0.0, %v1353
  %v1355 = vpop.f32.mrb[0].mxu0
  %v1356 = vpop.f32.mrb[0].mxu0
  %v1357 = vadd.f32 0.0, %v1356
  %v1358 = vpop.f32.mrb[0].mxu0
  %1359 = vmatprep.mubr.bf16.mxu0 0
  %1360 = vmatmul.mubr.bf16.gmra.mrb[0].mxu0 %v1144
  %v1361 = vpop.f32.mrb[0].mxu0
  %v1362 = vadd.f32 0.0, %v1361
  %v1363 = vpop.f32.mrb[0].mxu0
  %v1364 = vpop.f32.mrb[0].mxu0
  %v1365 = vadd.f32 0.0, %v1364
  %v1366 = vpop.f32.mrb[0].mxu0
  %1367 = vmatprep.mubr.bf16.mxu0 0
  %1368 = vmatmul.mubr.bf16.gmra.mrb[0].mxu0 %v1147
  %v1369 = vpop.f32.mrb[0].mxu0
  %v1370 = vadd.f32 0.0, %v1369
  %v1371 = vpop.f32.mrb[0].mxu0
  %v1372 = vpop.f32.mrb[0].mxu0
  %v1373 = vadd.f32 0.0, %v1372
  %v1374 = vpop.f32.mrb[0].mxu0
  %1375 = vmatprep.mubr.bf16.mxu0 0
  %1376 = vmatmul.mubr.bf16.gmra.mrb[0].mxu0 %v1150
  %v1377 = vpop.f32.mrb[0].mxu0
  %v1378 = vadd.f32 0.0, %v1377
  %v1379 = vpop.f32.mrb[0].mxu0
  %v1380 = vpop.f32.mrb[0].mxu0
  %v1381 = vadd.f32 0.0, %v1380
  %v1382 = vpop.f32.mrb[0].mxu0
  %1383 = vmatprep.mubr.bf16.mxu0 0
  %1384 = vmatmul.mubr.bf16.gmra.mrb[0].mxu0 %v1153
  %v1385 = vpop.f32.mrb[0].mxu0
  %v1386 = vadd.f32 0.0, %v1385
  %v1387 = vpop.f32.mrb[0].mxu0
  %v1388 = vpop.f32.mrb[0].mxu0
  %v1389 = vadd.f32 0.0, %v1388
  %v1390 = vpop.f32.mrb[0].mxu0
  %1391 = vmatprep.mubr.bf16.mxu0 0
  %1392 = vmatmul.mubr.bf16.gmra.mrb[0].mxu0 %v1156
  %v1393 = vpop.f32.mrb[0].mxu0
  %v1394 = vadd.f32 0.0, %v1393
  %v1395 = vpop.f32.mrb[0].mxu0
  %v1396 = vpop.f32.mrb[0].mxu0
  %v1397 = vadd.f32 0.0, %v1396
  %v1398 = vpop.f32.mrb[0].mxu0
  %1399 = vmatprep.mubr.bf16.mxu0 0
  %1400 = vmatmul.mubr.bf16.gmra.mrb[0].mxu0 %v1159
  %v1401 = vpop.f32.mrb[0].mxu0
  %v1402 = vadd.f32 0.0, %v1401
  %v1403 = vpop.f32.mrb[0].mxu0
  %v1404 = vpop.f32.mrb[0].mxu0
  %v1405 = vadd.f32 0.0, %v1404
  %v1406 = vpop.f32.mrb[0].mxu0
  %1407 = vmatprep.mubr.bf16.mxu0 0
  %1408 = vmatmul.mubr.bf16.gmra.mrb[0].mxu0 %v1162
  %v1409 = vpop.f32.mrb[0].mxu0
  %v1410 = vadd.f32 0.0, %v1409
  %v1411 = vpop.f32.mrb[0].mxu0
  %v1412 = vpop.f32.mrb[0].mxu0
  %v1413 = vadd.f32 0.0, %v1412
  %v1414 = vpop.f32.mrb[0].mxu0
  %1415 = vmatprep.mubr.bf16.mxu0 0
  %1416 = vmatmul.mubr.bf16.gmra.mrb[0].mxu0 %v1165
  %v1417 = vpop.f32.mrb[0].mxu0
  %v1418 = vadd.f32 0.0, %v1417
  %v1419 = vpop.f32.mrb[0].mxu0
  %v1420 = vpop.f32.mrb[0].mxu0
  %v1421 = vadd.f32 0.0, %v1420
  %v1422 = vpop.f32.mrb[0].mxu0
  %1423 = vmatprep.mubr.bf16.mxu0 0
  %1424 = vmatmul.mubr.bf16.gmra.mrb[0].mxu0 %v1168
  %v1425 = vpop.f32.mrb[0].mxu0
  %v1426 = vadd.f32 0.0, %v1425
  %v1427 = vpop.f32.mrb[0].mxu0
  %v1428 = vpop.f32.mrb[0].mxu0
  %v1429 = vadd.f32 0.0, %v1428
  %v1430 = vpop.f32.mrb[0].mxu0
  %1431 = vmatprep.mubr.bf16.mxu0 0
  %1432 = vmatmul.mubr.bf16.gmra.mrb[0].mxu0 %v1171
  %v1433 = vpop.f32.mrb[0].mxu0
  %v1434 = vadd.f32 0.0, %v1433
  %v1435 = vpop.f32.mrb[0].mxu0
  %v1436 = vpop.f32.mrb[0].mxu0
  %v1437 = vadd.f32 0.0, %v1436
  %v1438 = vpop.f32.mrb[0].mxu0
  %1439 = vmatprep.mubr.bf16.mxu0 0
  %1440 = vmatmul.mubr.bf16.gmra.mrb[0].mxu0 %v1174
  %v1441 = vpop.f32.mrb[0].mxu0
  %v1442 = vadd.f32 0.0, %v1441
  %v1443 = vpop.f32.mrb[0].mxu0
  %v1444 = vpop.f32.mrb[0].mxu0
  %v1445 = vadd.f32 0.0, %v1444
  %v1446 = vpop.f32.mrb[0].mxu0
  %1447 = vmatprep.mubr.bf16.mxu0 0
  %1448 = vmatmul.mubr.bf16.gmra.mrb[0].mxu0 %v1177
  %v1449 = vpop.f32.mrb[0].mxu0
  %v1450 = vadd.f32 0.0, %v1449
  %v1451 = vpop.f32.mrb[0].mxu0
  %v1452 = vpop.f32.mrb[0].mxu0
  %v1453 = vadd.f32 0.0, %v1452
  %v1454 = vpop.f32.mrb[0].mxu0
  %1455 = vmatprep.mubr.bf16.mxu0 0
  %1456 = vmatmul.mubr.bf16.gmra.mrb[0].mxu0 %v1180
  %v1457 = vpop.f32.mrb[0].mxu0
  %v1458 = vadd.f32 0.0, %v1457
  %v1459 = vpop.f32.mrb[0].mxu0
  %v1460 = vpop.f32.mrb[0].mxu0
  %v1461 = vadd.f32 0.0, %v1460
  %v1462 = vpop.f32.mrb[0].mxu0
  %1463 = vmatprep.mubr.bf16.mxu0 0
  %1464 = vmatmul.mubr.bf16.gmra.mrb[0].mxu0 %v1183
  %v1465 = vpop.f32.mrb[0].mxu0
  %v1466 = vadd.f32 0.0, %v1465
  %v1467 = vpop.f32.mrb[0].mxu0
  %v1468 = vpop.f32.mrb[0].mxu0
  %v1469 = vadd.f32 0.0, %v1468
  %v1470 = vpop.f32.mrb[0].mxu0
  %1471 = vmatprep.mubr.bf16.mxu0 0
  %1472 = vmatmul.mubr.bf16.gmra.mrb[0].mxu0 %v1186
  %v1473 = vpop.f32.mrb[0].mxu0
  %v1474 = vadd.f32 0.0, %v1473
  %v1475 = vpop.f32.mrb[0].mxu0
  %v1476 = vpop.f32.mrb[0].mxu0
  %v1477 = vadd.f32 0.0, %v1476
  %v1478 = vpop.f32.mrb[0].mxu0
  %1479 = vdwg.mxu0
  %v1480 = vadd.f32 %v740, %v1226
  %v1481 = vadd.f32 %v743, %v1229
  %v1482 = vadd.f32 %v748, %v1234
  %v1483 = vadd.f32 %v751, %v1237
  %v1484 = vadd.f32 %v756, %v1242
  %v1485 = vadd.f32 %v759, %v1245
  %v1486 = vadd.f32 %v764, %v1250
  %v1487 = vadd.f32 %v767, %v1253
  %v1488 = vadd.f32 %v772, %v1258
  %v1489 = vadd.f32 %v775, %v1261
  %v1490 = vadd.f32 %v780, %v1266
  %v1491 = vadd.f32 %v783, %v1269
  %v1492 = vadd.f32 %v788, %v1274
  %v1493 = vadd.f32 %v791, %v1277
  %v1494 = vadd.f32 %v796, %v1282
  %v1495 = vadd.f32 %v799, %v1285
  %v1496 = vadd.f32 %v804, %v1290
  %v1497 = vadd.f32 %v807, %v1293
  %v1498 = vadd.f32 %v812, %v1298
  %v1499 = vadd.f32 %v815, %v1301
  %v1500 = vadd.f32 %v820, %v1306
  %v1501 = vadd.f32 %v823, %v1309
  %v1502 = vadd.f32 %v828, %v1314
  %v1503 = vadd.f32 %v831, %v1317
  %v1504 = vadd.f32 %v836, %v1322
  %v1505 = vadd.f32 %v839, %v1325
  %v1506 = vadd.f32 %v844, %v1330
  %v1507 = vadd.f32 %v847, %v1333
  %v1508 = vadd.f32 %v852, %v1338
  %v1509 = vadd.f32 %v855, %v1341
  %v1510 = vadd.f32 %v860, %v1346
  %v1511 = vadd.f32 %v863, %v1349
  %v1512 = vadd.f32 %v868, %v1354
  %v1513 = vadd.f32 %v871, %v1357
  %v1514 = vadd.f32 %v876, %v1362
  %v1515 = vadd.f32 %v879, %v1365
  %v1516 = vadd.f32 %v884, %v1370
  %v1517 = vadd.f32 %v887, %v1373
  %v1518 = vadd.f32 %v892, %v1378
  %v1519 = vadd.f32 %v895, %v1381
  %v1520 = vadd.f32 %v900, %v1386
  %v1521 = vadd.f32 %v903, %v1389
  %v1522 = vadd.f32 %v908, %v1394
  %v1523 = vadd.f32 %v911, %v1397
  %v1524 = vadd.f32 %v916, %v1402
  %v1525 = vadd.f32 %v919, %v1405
  %v1526 = vadd.f32 %v924, %v1410
  %v1527 = vadd.f32 %v927, %v1413
  %v1528 = vadd.f32 %v932, %v1418
  %v1529 = vadd.f32 %v935, %v1421
  %v1530 = vadd.f32 %v940, %v1426
  %v1531 = vadd.f32 %v943, %v1429
  %v1532 = vadd.f32 %v948, %v1434
  %v1533 = vadd.f32 %v951, %v1437
  %v1534 = vadd.f32 %v956, %v1442
  %v1535 = vadd.f32 %v959, %v1445
  %v1536 = vadd.f32 %v964, %v1450
  %v1537 = vadd.f32 %v967, %v1453
  %v1538 = vadd.f32 %v972, %v1458
  %v1539 = vadd.f32 %v975, %v1461
  %v1540 = vadd.f32 %v980, %v1466
  %v1541 = vadd.f32 %v983, %v1469
  %v1542 = vadd.f32 %v988, %v1474
  %v1543 = vadd.f32 %v991, %v1477
  %s1544 = scalar_lea.vmem %s0, 24
  %v1545 = vld [vmem:[%s1544] sm:$0xff]
  %v1546 = vld [vmem:[%s1544 + $0x8] sm:$0xff]
  %v1547 = vld [vmem:[%s1544 + $0x18] sm:$0xff]
  %v1548 = vld [vmem:[%s1544 + $0x20] sm:$0xff]
  %v1549 = vld [vmem:[%s1544 + $0x30] sm:$0xff]
  %v1550 = vld [vmem:[%s1544 + $0x38] sm:$0xff]
  %v1551 = vld [vmem:[%s1544 + $0x48] sm:$0xff]
  %v1552 = vld [vmem:[%s1544 + $0x50] sm:$0xff]
  %v1553 = vld [vmem:[%s1544 + $0x60] sm:$0xff]
  %v1554 = vld [vmem:[%s1544 + $0x68] sm:$0xff]
  %v1555 = vld [vmem:[%s1544 + $0x78] sm:$0xff]
  %v1556 = vld [vmem:[%s1544 + $0x80] sm:$0xff]
  %v1557 = vld [vmem:[%s1544 + $0x90] sm:$0xff]
  %v1558 = vld [vmem:[%s1544 + $0x98] sm:$0xff]
  %v1559 = vld [vmem:[%s1544 + $0xa8] sm:$0xff]
  %v1560 = vld [vmem:[%s1544 + $0xb0] sm:$0xff]
  %v1561 = vld [vmem:[%s1544 + $0xc0] sm:$0xff]
  %v1562 = vld [vmem:[%s1544 + $0xc8] sm:$0xff]
  %v1563 = vld [vmem:[%s1544 + $0xd8] sm:$0xff]
  %v1564 = vld [vmem:[%s1544 + $0xe0] sm:$0xff]
  %v1565 = vld [vmem:[%s1544 + $0xf0] sm:$0xff]
  %v1566 = vld [vmem:[%s1544 + $0xf8] sm:$0xff]
  %v1567 = vld [vmem:[%s1544 + $0x108] sm:$0xff]
  %v1568 = vld [vmem:[%s1544 + $0x110] sm:$0xff]
  %v1569 = vld [vmem:[%s1544 + $0x120] sm:$0xff]
  %v1570 = vld [vmem:[%s1544 + $0x128] sm:$0xff]
  %v1571 = vld [vmem:[%s1544 + $0x138] sm:$0xff]
  %v1572 = vld [vmem:[%s1544 + $0x140] sm:$0xff]
  %v1573 = vld [vmem:[%s1544 + $0x150] sm:$0xff]
  %v1574 = vld [vmem:[%s1544 + $0x158] sm:$0xff]
  %v1575 = vld [vmem:[%s1544 + $0x168] sm:$0xff]
  %v1576 = vld [vmem:[%s1544 + $0x170] sm:$0xff]
  %v1577 = vld [vmem:[%s1544 + $0x1b0] sm:$0xff]
  %v1578 = vld [vmem:[%s1544 + $0x1b8] sm:$0xff]
  %v1579 = vld [vmem:[%s1544 + $0x1c8] sm:$0xff]
  %v1580 = vld [vmem:[%s1544 + $0x1d0] sm:$0xff]
  %v1581 = vld [vmem:[%s1544 + $0x1e0] sm:$0xff]
  %v1582 = vld [vmem:[%s1544 + $0x1e8] sm:$0xff]
  %v1583 = vld [vmem:[%s1544 + $0x1f8] sm:$0xff]
  %v1584 = vld [vmem:[%s1544 + $0x200] sm:$0xff]
  %v1585 = vld [vmem:[%s1544 + $0x210] sm:$0xff]
  %v1586 = vld [vmem:[%s1544 + $0x218] sm:$0xff]
  %v1587 = vld [vmem:[%s1544 + $0x228] sm:$0xff]
  %v1588 = vld [vmem:[%s1544 + $0x230] sm:$0xff]
  %v1589 = vld [vmem:[%s1544 + $0x240] sm:$0xff]
  %v1590 = vld [vmem:[%s1544 + $0x248] sm:$0xff]
  %v1591 = vld [vmem:[%s1544 + $0x258] sm:$0xff]
  %v1592 = vld [vmem:[%s1544 + $0x260] sm:$0xff]
  %v1593 = vld [vmem:[%s1544 + $0x270] sm:$0xff]
  %v1594 = vld [vmem:[%s1544 + $0x278] sm:$0xff]
  %v1595 = vld [vmem:[%s1544 + $0x288] sm:$0xff]
  %v1596 = vld [vmem:[%s1544 + $0x290] sm:$0xff]
  %v1597 = vld [vmem:[%s1544 + $0x2a0] sm:$0xff]
  %v1598 = vld [vmem:[%s1544 + $0x2a8] sm:$0xff]
  %v1599 = vld [vmem:[%s1544 + $0x2b8] sm:$0xff]
  %v1600 = vld [vmem:[%s1544 + $0x2c0] sm:$0xff]
  %v1601 = vld [vmem:[%s1544 + $0x2d0] sm:$0xff]
  %v1602 = vld [vmem:[%s1544 + $0x2d8] sm:$0xff]
  %v1603 = vld [vmem:[%s1544 + $0x2e8] sm:$0xff]
  %v1604 = vld [vmem:[%s1544 + $0x2f0] sm:$0xff]
  %v1605 = vld [vmem:[%s1544 + $0x300] sm:$0xff]
  %v1606 = vld [vmem:[%s1544 + $0x308] sm:$0xff]
  %v1607 = vld [vmem:[%s1544 + $0x318] sm:$0xff]
  %v1608 = vld [vmem:[%s1544 + $0x320] sm:$0xff]
  %v1609 = vpack.c.bf16 %v1546, %v1545
  %v1610 = vpack.c.bf16 %v1548, %v1547
  %v1611 = vpack.c.bf16 %v1550, %v1549
  %v1612 = vpack.c.bf16 %v1552, %v1551
  %v1613 = vpack.c.bf16 %v1554, %v1553
  %v1614 = vpack.c.bf16 %v1556, %v1555
  %v1615 = vpack.c.bf16 %v1558, %v1557
  %v1616 = vpack.c.bf16 %v1560, %v1559
  %v1617 = vpack.c.bf16 %v1562, %v1561
  %v1618 = vpack.c.bf16 %v1564, %v1563
  %v1619 = vpack.c.bf16 %v1566, %v1565
  %v1620 = vpack.c.bf16 %v1568, %v1567
  %v1621 = vpack.c.bf16 %v1570, %v1569
  %v1622 = vpack.c.bf16 %v1572, %v1571
  %v1623 = vpack.c.bf16 %v1574, %v1573
  %v1624 = vpack.c.bf16 %v1576, %v1575
  %v1625 = vpack.c.bf16 %v1578, %v1577
  %v1626 = vpack.c.bf16 %v1580, %v1579
  %v1627 = vpack.c.bf16 %v1582, %v1581
  %v1628 = vpack.c.bf16 %v1584, %v1583
  %v1629 = vpack.c.bf16 %v1586, %v1585
  %v1630 = vpack.c.bf16 %v1588, %v1587
  %v1631 = vpack.c.bf16 %v1590, %v1589
  %v1632 = vpack.c.bf16 %v1592, %v1591
  %v1633 = vpack.c.bf16 %v1594, %v1593
  %v1634 = vpack.c.bf16 %v1596, %v1595
  %v1635 = vpack.c.bf16 %v1598, %v1597
  %v1636 = vpack.c.bf16 %v1600, %v1599
  %v1637 = vpack.c.bf16 %v1602, %v1601
  %v1638 = vpack.c.bf16 %v1604, %v1603
  %v1639 = vpack.c.bf16 %v1606, %v1605
  %v1640 = vpack.c.bf16 %v1608, %v1607
  %s1641 = scalar_lea.vmem %s1, 6
  %v1642 = vld [vmem:[%s1641] sm:$0x3]
  %v1644 = vsel %vm216, %v1609, 0
  %v1647 = vsel %vm216, %v1610, 0
  %v1650 = vsel %vm216, %v1611, 0
  %v1653 = vsel %vm216, %v1612, 0
  %v1656 = vsel %vm216, %v1613, 0
  %v1659 = vsel %vm216, %v1614, 0
  %v1662 = vsel %vm216, %v1615, 0
  %v1665 = vsel %vm216, %v1616, 0
  %v1668 = vsel %vm216, %v1617, 0
  %v1671 = vsel %vm216, %v1618, 0
  %v1674 = vsel %vm216, %v1619, 0
  %v1677 = vsel %vm216, %v1620, 0
  %v1680 = vsel %vm216, %v1621, 0
  %v1683 = vsel %vm216, %v1622, 0
  %v1686 = vsel %vm216, %v1623, 0
  %v1689 = vsel %vm216, %v1624, 0
  %v1692 = vsel %vm216, %v1625, 0
  %v1695 = vsel %vm216, %v1626, 0
  %v1698 = vsel %vm216, %v1627, 0
  %v1701 = vsel %vm216, %v1628, 0
  %v1704 = vsel %vm216, %v1629, 0
  %v1707 = vsel %vm216, %v1630, 0
  %v1710 = vsel %vm216, %v1631, 0
  %v1713 = vsel %vm216, %v1632, 0
  %v1716 = vsel %vm216, %v1633, 0
  %v1719 = vsel %vm216, %v1634, 0
  %v1722 = vsel %vm216, %v1635, 0
  %v1725 = vsel %vm216, %v1636, 0
  %v1728 = vsel %vm216, %v1637, 0
  %v1731 = vsel %vm216, %v1638, 0
  %v1734 = vsel %vm216, %v1639, 0
  %v1737 = vsel %vm216, %v1640, 0
  %v1740 = vsel %vm313, %v1642, 0
  %1742 = vmatprep.subr.bf16.mxu0 0
  %1743 = vmatpush1.bf16.msra.mxu0 %v1740
  %1744 = vmatprep.subr.bf16.mxu0 0
  %1745 = vmatpush1.bf16.msra.mxu0 0
  %1746 = vmatprep.subr.bf16.mxu0 0
  %1747 = vmatpush1.bf16.msra.mxu0 0
  %1748 = vmatprep.subr.bf16.mxu0 0
  %1749 = vmatpush1.bf16.msra.mxu0 0
  %1750 = vmatprep.subr.bf16.mxu0 0
  %1751 = vmatpush1.bf16.msra.mxu0 0
  %1752 = vmatprep.subr.bf16.mxu0 0
  %1753 = vmatpush1.bf16.msra.mxu0 0
  %1754 = vmatprep.subr.bf16.mxu0 0
  %1755 = vmatpush1.bf16.msra.mxu0 0
  %1756 = vmatprep.subr.bf16.mxu0 0
  %1757 = vmatpush1.bf16.msra.mxu0 0
  %1758 = vmatprep.subr.bf16.mxu0 0
  %1759 = vmatpush1.bf16.msra.mxu0 0
  %1760 = vmatprep.subr.bf16.mxu0 0
  %1761 = vmatpush1.bf16.msra.mxu0 0
  %1762 = vmatprep.subr.bf16.mxu0 0
  %1763 = vmatpush1.bf16.msra.mxu0 0
  %1764 = vmatprep.subr.bf16.mxu0 0
  %1765 = vmatpush1.bf16.msra.mxu0 0
  %1766 = vmatprep.subr.bf16.mxu0 0
  %1767 = vmatpush1.bf16.msra.mxu0 0
  %1768 = vmatprep.subr.bf16.mxu0 0
  %1769 = vmatpush1.bf16.msra.mxu0 0
  %1770 = vmatprep.subr.bf16.mxu0 0
  %1771 = vmatpush1.bf16.msra.mxu0 0
  %1772 = vmatprep.subr.bf16.mxu0 0
  %1773 = vmatpush1.bf16.msra.mxu0 0
  %1774 = vmatprep.mubr.bf16.mxu0 0
  %1775 = vmatmul.mubr.bf16.gmra.mrb[0].mxu0 %v1644
  %v1776 = vpop.f32.mrb[0].mxu0
  %v1777 = vadd.f32 0.0, %v1776
  %v1778 = vpop.f32.mrb[0].mxu0
  %v1779 = vpop.f32.mrb[0].mxu0
  %v1780 = vadd.f32 0.0, %v1779
  %v1781 = vpop.f32.mrb[0].mxu0
  %1782 = vmatprep.mubr.bf16.mxu0 0
  %1783 = vmatmul.mubr.bf16.gmra.mrb[0].mxu0 %v1647
  %v1784 = vpop.f32.mrb[0].mxu0
  %v1785 = vadd.f32 0.0, %v1784
  %v1786 = vpop.f32.mrb[0].mxu0
  %v1787 = vpop.f32.mrb[0].mxu0
  %v1788 = vadd.f32 0.0, %v1787
  %v1789 = vpop.f32.mrb[0].mxu0
  %1790 = vmatprep.mubr.bf16.mxu0 0
  %1791 = vmatmul.mubr.bf16.gmra.mrb[0].mxu0 %v1650
  %v1792 = vpop.f32.mrb[0].mxu0
  %v1793 = vadd.f32 0.0, %v1792
  %v1794 = vpop.f32.mrb[0].mxu0
  %v1795 = vpop.f32.mrb[0].mxu0
  %v1796 = vadd.f32 0.0, %v1795
  %v1797 = vpop.f32.mrb[0].mxu0
  %1798 = vmatprep.mubr.bf16.mxu0 0
  %1799 = vmatmul.mubr.bf16.gmra.mrb[0].mxu0 %v1653
  %v1800 = vpop.f32.mrb[0].mxu0
  %v1801 = vadd.f32 0.0, %v1800
  %v1802 = vpop.f32.mrb[0].mxu0
  %v1803 = vpop.f32.mrb[0].mxu0
  %v1804 = vadd.f32 0.0, %v1803
  %v1805 = vpop.f32.mrb[0].mxu0
  %1806 = vmatprep.mubr.bf16.mxu0 0
  %1807 = vmatmul.mubr.bf16.gmra.mrb[0].mxu0 %v1656
  %v1808 = vpop.f32.mrb[0].mxu0
  %v1809 = vadd.f32 0.0, %v1808
  %v1810 = vpop.f32.mrb[0].mxu0
  %v1811 = vpop.f32.mrb[0].mxu0
  %v1812 = vadd.f32 0.0, %v1811
  %v1813 = vpop.f32.mrb[0].mxu0
  %1814 = vmatprep.mubr.bf16.mxu0 0
  %1815 = vmatmul.mubr.bf16.gmra.mrb[0].mxu0 %v1659
  %v1816 = vpop.f32.mrb[0].mxu0
  %v1817 = vadd.f32 0.0, %v1816
  %v1818 = vpop.f32.mrb[0].mxu0
  %v1819 = vpop.f32.mrb[0].mxu0
  %v1820 = vadd.f32 0.0, %v1819
  %v1821 = vpop.f32.mrb[0].mxu0
  %1822 = vmatprep.mubr.bf16.mxu0 0
  %1823 = vmatmul.mubr.bf16.gmra.mrb[0].mxu0 %v1662
  %v1824 = vpop.f32.mrb[0].mxu0
  %v1825 = vadd.f32 0.0, %v1824
  %v1826 = vpop.f32.mrb[0].mxu0
  %v1827 = vpop.f32.mrb[0].mxu0
  %v1828 = vadd.f32 0.0, %v1827
  %v1829 = vpop.f32.mrb[0].mxu0
  %1830 = vmatprep.mubr.bf16.mxu0 0
  %1831 = vmatmul.mubr.bf16.gmra.mrb[0].mxu0 %v1665
  %v1832 = vpop.f32.mrb[0].mxu0
  %v1833 = vadd.f32 0.0, %v1832
  %v1834 = vpop.f32.mrb[0].mxu0
  %v1835 = vpop.f32.mrb[0].mxu0
  %v1836 = vadd.f32 0.0, %v1835
  %v1837 = vpop.f32.mrb[0].mxu0
  %1838 = vmatprep.mubr.bf16.mxu0 0
  %1839 = vmatmul.mubr.bf16.gmra.mrb[0].mxu0 %v1668
  %v1840 = vpop.f32.mrb[0].mxu0
  %v1841 = vadd.f32 0.0, %v1840
  %v1842 = vpop.f32.mrb[0].mxu0
  %v1843 = vpop.f32.mrb[0].mxu0
  %v1844 = vadd.f32 0.0, %v1843
  %v1845 = vpop.f32.mrb[0].mxu0
  %1846 = vmatprep.mubr.bf16.mxu0 0
  %1847 = vmatmul.mubr.bf16.gmra.mrb[0].mxu0 %v1671
  %v1848 = vpop.f32.mrb[0].mxu0
  %v1849 = vadd.f32 0.0, %v1848
  %v1850 = vpop.f32.mrb[0].mxu0
  %v1851 = vpop.f32.mrb[0].mxu0
  %v1852 = vadd.f32 0.0, %v1851
  %v1853 = vpop.f32.mrb[0].mxu0
  %1854 = vmatprep.mubr.bf16.mxu0 0
  %1855 = vmatmul.mubr.bf16.gmra.mrb[0].mxu0 %v1674
  %v1856 = vpop.f32.mrb[0].mxu0
  %v1857 = vadd.f32 0.0, %v1856
  %v1858 = vpop.f32.mrb[0].mxu0
  %v1859 = vpop.f32.mrb[0].mxu0
  %v1860 = vadd.f32 0.0, %v1859
  %v1861 = vpop.f32.mrb[0].mxu0
  %1862 = vmatprep.mubr.bf16.mxu0 0
  %1863 = vmatmul.mubr.bf16.gmra.mrb[0].mxu0 %v1677
  %v1864 = vpop.f32.mrb[0].mxu0
  %v1865 = vadd.f32 0.0, %v1864
  %v1866 = vpop.f32.mrb[0].mxu0
  %v1867 = vpop.f32.mrb[0].mxu0
  %v1868 = vadd.f32 0.0, %v1867
  %v1869 = vpop.f32.mrb[0].mxu0
  %1870 = vmatprep.mubr.bf16.mxu0 0
  %1871 = vmatmul.mubr.bf16.gmra.mrb[0].mxu0 %v1680
  %v1872 = vpop.f32.mrb[0].mxu0
  %v1873 = vadd.f32 0.0, %v1872
  %v1874 = vpop.f32.mrb[0].mxu0
  %v1875 = vpop.f32.mrb[0].mxu0
  %v1876 = vadd.f32 0.0, %v1875
  %v1877 = vpop.f32.mrb[0].mxu0
  %1878 = vmatprep.mubr.bf16.mxu0 0
  %1879 = vmatmul.mubr.bf16.gmra.mrb[0].mxu0 %v1683
  %v1880 = vpop.f32.mrb[0].mxu0
  %v1881 = vadd.f32 0.0, %v1880
  %v1882 = vpop.f32.mrb[0].mxu0
  %v1883 = vpop.f32.mrb[0].mxu0
  %v1884 = vadd.f32 0.0, %v1883
  %v1885 = vpop.f32.mrb[0].mxu0
  %1886 = vmatprep.mubr.bf16.mxu0 0
  %1887 = vmatmul.mubr.bf16.gmra.mrb[0].mxu0 %v1686
  %v1888 = vpop.f32.mrb[0].mxu0
  %v1889 = vadd.f32 0.0, %v1888
  %v1890 = vpop.f32.mrb[0].mxu0
  %v1891 = vpop.f32.mrb[0].mxu0
  %v1892 = vadd.f32 0.0, %v1891
  %v1893 = vpop.f32.mrb[0].mxu0
  %1894 = vmatprep.mubr.bf16.mxu0 0
  %1895 = vmatmul.mubr.bf16.gmra.mrb[0].mxu0 %v1689
  %v1896 = vpop.f32.mrb[0].mxu0
  %v1897 = vadd.f32 0.0, %v1896
  %v1898 = vpop.f32.mrb[0].mxu0
  %v1899 = vpop.f32.mrb[0].mxu0
  %v1900 = vadd.f32 0.0, %v1899
  %v1901 = vpop.f32.mrb[0].mxu0
  %1902 = vmatprep.mubr.bf16.mxu0 0
  %1903 = vmatmul.mubr.bf16.gmra.mrb[0].mxu0 %v1692
  %v1904 = vpop.f32.mrb[0].mxu0
  %v1905 = vadd.f32 0.0, %v1904
  %v1906 = vpop.f32.mrb[0].mxu0
  %v1907 = vpop.f32.mrb[0].mxu0
  %v1908 = vadd.f32 0.0, %v1907
  %v1909 = vpop.f32.mrb[0].mxu0
  %1910 = vmatprep.mubr.bf16.mxu0 0
  %1911 = vmatmul.mubr.bf16.gmra.mrb[0].mxu0 %v1695
  %v1912 = vpop.f32.mrb[0].mxu0
  %v1913 = vadd.f32 0.0, %v1912
  %v1914 = vpop.f32.mrb[0].mxu0
  %v1915 = vpop.f32.mrb[0].mxu0
  %v1916 = vadd.f32 0.0, %v1915
  %v1917 = vpop.f32.mrb[0].mxu0
  %1918 = vmatprep.mubr.bf16.mxu0 0
  %1919 = vmatmul.mubr.bf16.gmra.mrb[0].mxu0 %v1698
  %v1920 = vpop.f32.mrb[0].mxu0
  %v1921 = vadd.f32 0.0, %v1920
  %v1922 = vpop.f32.mrb[0].mxu0
  %v1923 = vpop.f32.mrb[0].mxu0
  %v1924 = vadd.f32 0.0, %v1923
  %v1925 = vpop.f32.mrb[0].mxu0
  %1926 = vmatprep.mubr.bf16.mxu0 0
  %1927 = vmatmul.mubr.bf16.gmra.mrb[0].mxu0 %v1701
  %v1928 = vpop.f32.mrb[0].mxu0
  %v1929 = vadd.f32 0.0, %v1928
  %v1930 = vpop.f32.mrb[0].mxu0
  %v1931 = vpop.f32.mrb[0].mxu0
  %v1932 = vadd.f32 0.0, %v1931
  %v1933 = vpop.f32.mrb[0].mxu0
  %1934 = vmatprep.mubr.bf16.mxu0 0
  %1935 = vmatmul.mubr.bf16.gmra.mrb[0].mxu0 %v1704
  %v1936 = vpop.f32.mrb[0].mxu0
  %v1937 = vadd.f32 0.0, %v1936
  %v1938 = vpop.f32.mrb[0].mxu0
  %v1939 = vpop.f32.mrb[0].mxu0
  %v1940 = vadd.f32 0.0, %v1939
  %v1941 = vpop.f32.mrb[0].mxu0
  %1942 = vmatprep.mubr.bf16.mxu0 0
  %1943 = vmatmul.mubr.bf16.gmra.mrb[0].mxu0 %v1707
  %v1944 = vpop.f32.mrb[0].mxu0
  %v1945 = vadd.f32 0.0, %v1944
  %v1946 = vpop.f32.mrb[0].mxu0
  %v1947 = vpop.f32.mrb[0].mxu0
  %v1948 = vadd.f32 0.0, %v1947
  %v1949 = vpop.f32.mrb[0].mxu0
  %1950 = vmatprep.mubr.bf16.mxu0 0
  %1951 = vmatmul.mubr.bf16.gmra.mrb[0].mxu0 %v1710
  %v1952 = vpop.f32.mrb[0].mxu0
  %v1953 = vadd.f32 0.0, %v1952
  %v1954 = vpop.f32.mrb[0].mxu0
  %v1955 = vpop.f32.mrb[0].mxu0
  %v1956 = vadd.f32 0.0, %v1955
  %v1957 = vpop.f32.mrb[0].mxu0
  %1958 = vmatprep.mubr.bf16.mxu0 0
  %1959 = vmatmul.mubr.bf16.gmra.mrb[0].mxu0 %v1713
  %v1960 = vpop.f32.mrb[0].mxu0
  %v1961 = vadd.f32 0.0, %v1960
  %v1962 = vpop.f32.mrb[0].mxu0
  %v1963 = vpop.f32.mrb[0].mxu0
  %v1964 = vadd.f32 0.0, %v1963
  %v1965 = vpop.f32.mrb[0].mxu0
  %1966 = vmatprep.mubr.bf16.mxu0 0
  %1967 = vmatmul.mubr.bf16.gmra.mrb[0].mxu0 %v1716
  %v1968 = vpop.f32.mrb[0].mxu0
  %v1969 = vadd.f32 0.0, %v1968
  %v1970 = vpop.f32.mrb[0].mxu0
  %v1971 = vpop.f32.mrb[0].mxu0
  %v1972 = vadd.f32 0.0, %v1971
  %v1973 = vpop.f32.mrb[0].mxu0
  %1974 = vmatprep.mubr.bf16.mxu0 0
  %1975 = vmatmul.mubr.bf16.gmra.mrb[0].mxu0 %v1719
  %v1976 = vpop.f32.mrb[0].mxu0
  %v1977 = vadd.f32 0.0, %v1976
  %v1978 = vpop.f32.mrb[0].mxu0
  %v1979 = vpop.f32.mrb[0].mxu0
  %v1980 = vadd.f32 0.0, %v1979
  %v1981 = vpop.f32.mrb[0].mxu0
  %1982 = vmatprep.mubr.bf16.mxu0 0
  %1983 = vmatmul.mubr.bf16.gmra.mrb[0].mxu0 %v1722
  %v1984 = vpop.f32.mrb[0].mxu0
  %v1985 = vadd.f32 0.0, %v1984
  %v1986 = vpop.f32.mrb[0].mxu0
  %v1987 = vpop.f32.mrb[0].mxu0
  %v1988 = vadd.f32 0.0, %v1987
  %v1989 = vpop.f32.mrb[0].mxu0
  %1990 = vmatprep.mubr.bf16.mxu0 0
  %1991 = vmatmul.mubr.bf16.gmra.mrb[0].mxu0 %v1725
  %v1992 = vpop.f32.mrb[0].mxu0
  %v1993 = vadd.f32 0.0, %v1992
  %v1994 = vpop.f32.mrb[0].mxu0
  %v1995 = vpop.f32.mrb[0].mxu0
  %v1996 = vadd.f32 0.0, %v1995
  %v1997 = vpop.f32.mrb[0].mxu0
  %1998 = vmatprep.mubr.bf16.mxu0 0
  %1999 = vmatmul.mubr.bf16.gmra.mrb[0].mxu0 %v1728
  %v2000 = vpop.f32.mrb[0].mxu0
  %v2001 = vadd.f32 0.0, %v2000
  %v2002 = vpop.f32.mrb[0].mxu0
  %v2003 = vpop.f32.mrb[0].mxu0
  %v2004 = vadd.f32 0.0, %v2003
  %v2005 = vpop.f32.mrb[0].mxu0
  %2006 = vmatprep.mubr.bf16.mxu0 0
  %2007 = vmatmul.mubr.bf16.gmra.mrb[0].mxu0 %v1731
  %v2008 = vpop.f32.mrb[0].mxu0
  %v2009 = vadd.f32 0.0, %v2008
  %v2010 = vpop.f32.mrb[0].mxu0
  %v2011 = vpop.f32.mrb[0].mxu0
  %v2012 = vadd.f32 0.0, %v2011
  %v2013 = vpop.f32.mrb[0].mxu0
  %2014 = vmatprep.mubr.bf16.mxu0 0
  %2015 = vmatmul.mubr.bf16.gmra.mrb[0].mxu0 %v1734
  %v2016 = vpop.f32.mrb[0].mxu0
  %v2017 = vadd.f32 0.0, %v2016
  %v2018 = vpop.f32.mrb[0].mxu0
  %v2019 = vpop.f32.mrb[0].mxu0
  %v2020 = vadd.f32 0.0, %v2019
  %v2021 = vpop.f32.mrb[0].mxu0
  %2022 = vmatprep.mubr.bf16.mxu0 0
  %2023 = vmatmul.mubr.bf16.gmra.mrb[0].mxu0 %v1737
  %v2024 = vpop.f32.mrb[0].mxu0
  %v2025 = vadd.f32 0.0, %v2024
  %v2026 = vpop.f32.mrb[0].mxu0
  %v2027 = vpop.f32.mrb[0].mxu0
  %v2028 = vadd.f32 0.0, %v2027
  %v2029 = vpop.f32.mrb[0].mxu0
  %2030 = vdwg.mxu0
  %v2031 = vadd.f32 %v1480, %v1777
  %v2032 = vadd.f32 %v1481, %v1780
  %v2033 = vadd.f32 %v1482, %v1785
  %v2034 = vadd.f32 %v1483, %v1788
  %v2035 = vadd.f32 %v1484, %v1793
  %v2036 = vadd.f32 %v1485, %v1796
  %v2037 = vadd.f32 %v1486, %v1801
  %v2038 = vadd.f32 %v1487, %v1804
  %v2039 = vadd.f32 %v1488, %v1809
  %v2040 = vadd.f32 %v1489, %v1812
  %v2041 = vadd.f32 %v1490, %v1817
  %v2042 = vadd.f32 %v1491, %v1820
  %v2043 = vadd.f32 %v1492, %v1825
  %v2044 = vadd.f32 %v1493, %v1828
  %v2045 = vadd.f32 %v1494, %v1833
  %v2046 = vadd.f32 %v1495, %v1836
  %v2047 = vadd.f32 %v1496, %v1841
  %v2048 = vadd.f32 %v1497, %v1844
  %v2049 = vadd.f32 %v1498, %v1849
  %v2050 = vadd.f32 %v1499, %v1852
  %v2051 = vadd.f32 %v1500, %v1857
  %v2052 = vadd.f32 %v1501, %v1860
  %v2053 = vadd.f32 %v1502, %v1865
  %v2054 = vadd.f32 %v1503, %v1868
  %v2055 = vadd.f32 %v1504, %v1873
  %v2056 = vadd.f32 %v1505, %v1876
  %v2057 = vadd.f32 %v1506, %v1881
  %v2058 = vadd.f32 %v1507, %v1884
  %v2059 = vadd.f32 %v1508, %v1889
  %v2060 = vadd.f32 %v1509, %v1892
  %v2061 = vadd.f32 %v1510, %v1897
  %v2062 = vadd.f32 %v1511, %v1900
  %v2063 = vadd.f32 %v1512, %v1905
  %v2064 = vadd.f32 %v1513, %v1908
  %v2065 = vadd.f32 %v1514, %v1913
  %v2066 = vadd.f32 %v1515, %v1916
  %v2067 = vadd.f32 %v1516, %v1921
  %v2068 = vadd.f32 %v1517, %v1924
  %v2069 = vadd.f32 %v1518, %v1929
  %v2070 = vadd.f32 %v1519, %v1932
  %v2071 = vadd.f32 %v1520, %v1937
  %v2072 = vadd.f32 %v1521, %v1940
  %v2073 = vadd.f32 %v1522, %v1945
  %v2074 = vadd.f32 %v1523, %v1948
  %v2075 = vadd.f32 %v1524, %v1953
  %v2076 = vadd.f32 %v1525, %v1956
  %v2077 = vadd.f32 %v1526, %v1961
  %v2078 = vadd.f32 %v1527, %v1964
  %v2079 = vadd.f32 %v1528, %v1969
  %v2080 = vadd.f32 %v1529, %v1972
  %v2081 = vadd.f32 %v1530, %v1977
  %v2082 = vadd.f32 %v1531, %v1980
  %v2083 = vadd.f32 %v1532, %v1985
  %v2084 = vadd.f32 %v1533, %v1988
  %v2085 = vadd.f32 %v1534, %v1993
  %v2086 = vadd.f32 %v1535, %v1996
  %v2087 = vadd.f32 %v1536, %v2001
  %v2088 = vadd.f32 %v1537, %v2004
  %v2089 = vadd.f32 %v1538, %v2009
  %v2090 = vadd.f32 %v1539, %v2012
  %v2091 = vadd.f32 %v1540, %v2017
  %v2092 = vadd.f32 %v1541, %v2020
  %v2093 = vadd.f32 %v1542, %v2025
  %v2094 = vadd.f32 %v1543, %v2028
  %v2095 = vld [vmem:[%s1544 + $0x1] sm:$0xff]
  %v2096 = vld [vmem:[%s1544 + $0x9] sm:$0xff]
  %v2097 = vld [vmem:[%s1544 + $0x19] sm:$0xff]
  %v2098 = vld [vmem:[%s1544 + $0x21] sm:$0xff]
  %v2099 = vld [vmem:[%s1544 + $0x31] sm:$0xff]
  %v2100 = vld [vmem:[%s1544 + $0x39] sm:$0xff]
  %v2101 = vld [vmem:[%s1544 + $0x49] sm:$0xff]
  %v2102 = vld [vmem:[%s1544 + $0x51] sm:$0xff]
  %v2103 = vld [vmem:[%s1544 + $0x61] sm:$0xff]
  %v2104 = vld [vmem:[%s1544 + $0x69] sm:$0xff]
  %v2105 = vld [vmem:[%s1544 + $0x79] sm:$0xff]
  %v2106 = vld [vmem:[%s1544 + $0x81] sm:$0xff]
  %v2107 = vld [vmem:[%s1544 + $0x91] sm:$0xff]
  %v2108 = vld [vmem:[%s1544 + $0x99] sm:$0xff]
  %v2109 = vld [vmem:[%s1544 + $0xa9] sm:$0xff]
  %v2110 = vld [vmem:[%s1544 + $0xb1] sm:$0xff]
  %v2111 = vld [vmem:[%s1544 + $0xc1] sm:$0xff]
  %v2112 = vld [vmem:[%s1544 + $0xc9] sm:$0xff]
  %v2113 = vld [vmem:[%s1544 + $0xd9] sm:$0xff]
  %v2114 = vld [vmem:[%s1544 + $0xe1] sm:$0xff]
  %v2115 = vld [vmem:[%s1544 + $0xf1] sm:$0xff]
  %v2116 = vld [vmem:[%s1544 + $0xf9] sm:$0xff]
  %v2117 = vld [vmem:[%s1544 + $0x109] sm:$0xff]
  %v2118 = vld [vmem:[%s1544 + $0x111] sm:$0xff]
  %v2119 = vld [vmem:[%s1544 + $0x121] sm:$0xff]
  %v2120 = vld [vmem:[%s1544 + $0x129] sm:$0xff]
  %v2121 = vld [vmem:[%s1544 + $0x139] sm:$0xff]
  %v2122 = vld [vmem:[%s1544 + $0x141] sm:$0xff]
  %v2123 = vld [vmem:[%s1544 + $0x151] sm:$0xff]
  %v2124 = vld [vmem:[%s1544 + $0x159] sm:$0xff]
  %v2125 = vld [vmem:[%s1544 + $0x169] sm:$0xff]
  %v2126 = vld [vmem:[%s1544 + $0x171] sm:$0xff]
  %v2127 = vld [vmem:[%s1544 + $0x1b1] sm:$0xff]
  %v2128 = vld [vmem:[%s1544 + $0x1b9] sm:$0xff]
  %v2129 = vld [vmem:[%s1544 + $0x1c9] sm:$0xff]
  %v2130 = vld [vmem:[%s1544 + $0x1d1] sm:$0xff]
  %v2131 = vld [vmem:[%s1544 + $0x1e1] sm:$0xff]
  %v2132 = vld [vmem:[%s1544 + $0x1e9] sm:$0xff]
  %v2133 = vld [vmem:[%s1544 + $0x1f9] sm:$0xff]
  %v2134 = vld [vmem:[%s1544 + $0x201] sm:$0xff]
  %v2135 = vld [vmem:[%s1544 + $0x211] sm:$0xff]
  %v2136 = vld [vmem:[%s1544 + $0x219] sm:$0xff]
  %v2137 = vld [vmem:[%s1544 + $0x229] sm:$0xff]
  %v2138 = vld [vmem:[%s1544 + $0x231] sm:$0xff]
  %v2139 = vld [vmem:[%s1544 + $0x241] sm:$0xff]
  %v2140 = vld [vmem:[%s1544 + $0x249] sm:$0xff]
  %v2141 = vld [vmem:[%s1544 + $0x259] sm:$0xff]
  %v2142 = vld [vmem:[%s1544 + $0x261] sm:$0xff]
  %v2143 = vld [vmem:[%s1544 + $0x271] sm:$0xff]
  %v2144 = vld [vmem:[%s1544 + $0x279] sm:$0xff]
  %v2145 = vld [vmem:[%s1544 + $0x289] sm:$0xff]
  %v2146 = vld [vmem:[%s1544 + $0x291] sm:$0xff]
  %v2147 = vld [vmem:[%s1544 + $0x2a1] sm:$0xff]
  %v2148 = vld [vmem:[%s1544 + $0x2a9] sm:$0xff]
  %v2149 = vld [vmem:[%s1544 + $0x2b9] sm:$0xff]
  %v2150 = vld [vmem:[%s1544 + $0x2c1] sm:$0xff]
  %v2151 = vld [vmem:[%s1544 + $0x2d1] sm:$0xff]
  %v2152 = vld [vmem:[%s1544 + $0x2d9] sm:$0xff]
  %v2153 = vld [vmem:[%s1544 + $0x2e9] sm:$0xff]
  %v2154 = vld [vmem:[%s1544 + $0x2f1] sm:$0xff]
  %v2155 = vld [vmem:[%s1544 + $0x301] sm:$0xff]
  %v2156 = vld [vmem:[%s1544 + $0x309] sm:$0xff]
  %v2157 = vld [vmem:[%s1544 + $0x319] sm:$0xff]
  %v2158 = vld [vmem:[%s1544 + $0x321] sm:$0xff]
  %v2159 = vpack.c.bf16 %v2096, %v2095
  %v2160 = vpack.c.bf16 %v2098, %v2097
  %v2161 = vpack.c.bf16 %v2100, %v2099
  %v2162 = vpack.c.bf16 %v2102, %v2101
  %v2163 = vpack.c.bf16 %v2104, %v2103
  %v2164 = vpack.c.bf16 %v2106, %v2105
  %v2165 = vpack.c.bf16 %v2108, %v2107
  %v2166 = vpack.c.bf16 %v2110, %v2109
  %v2167 = vpack.c.bf16 %v2112, %v2111
  %v2168 = vpack.c.bf16 %v2114, %v2113
  %v2169 = vpack.c.bf16 %v2116, %v2115
  %v2170 = vpack.c.bf16 %v2118, %v2117
  %v2171 = vpack.c.bf16 %v2120, %v2119
  %v2172 = vpack.c.bf16 %v2122, %v2121
  %v2173 = vpack.c.bf16 %v2124, %v2123
  %v2174 = vpack.c.bf16 %v2126, %v2125
  %v2175 = vpack.c.bf16 %v2128, %v2127
  %v2176 = vpack.c.bf16 %v2130, %v2129
  %v2177 = vpack.c.bf16 %v2132, %v2131
  %v2178 = vpack.c.bf16 %v2134, %v2133
  %v2179 = vpack.c.bf16 %v2136, %v2135
  %v2180 = vpack.c.bf16 %v2138, %v2137
  %v2181 = vpack.c.bf16 %v2140, %v2139
  %v2182 = vpack.c.bf16 %v2142, %v2141
  %v2183 = vpack.c.bf16 %v2144, %v2143
  %v2184 = vpack.c.bf16 %v2146, %v2145
  %v2185 = vpack.c.bf16 %v2148, %v2147
  %v2186 = vpack.c.bf16 %v2150, %v2149
  %v2187 = vpack.c.bf16 %v2152, %v2151
  %v2188 = vpack.c.bf16 %v2154, %v2153
  %v2189 = vpack.c.bf16 %v2156, %v2155
  %v2190 = vpack.c.bf16 %v2158, %v2157
  %s2191 = scalar_lea.vmem %s1, 8
  %v2192 = vld [vmem:[%s2191] sm:$0x3]
  %v2194 = vsel %vm216, %v2159, 0
  %v2197 = vsel %vm216, %v2160, 0
  %v2200 = vsel %vm216, %v2161, 0
  %v2203 = vsel %vm216, %v2162, 0
  %v2206 = vsel %vm216, %v2163, 0
  %v2209 = vsel %vm216, %v2164, 0
  %v2212 = vsel %vm216, %v2165, 0
  %v2215 = vsel %vm216, %v2166, 0
  %v2218 = vsel %vm216, %v2167, 0
  %v2221 = vsel %vm216, %v2168, 0
  %v2224 = vsel %vm216, %v2169, 0
  %v2227 = vsel %vm216, %v2170, 0
  %v2230 = vsel %vm216, %v2171, 0
  %v2233 = vsel %vm216, %v2172, 0
  %v2236 = vsel %vm216, %v2173, 0
  %v2239 = vsel %vm216, %v2174, 0
  %v2242 = vsel %vm216, %v2175, 0
  %v2245 = vsel %vm216, %v2176, 0
  %v2248 = vsel %vm216, %v2177, 0
  %v2251 = vsel %vm216, %v2178, 0
  %v2254 = vsel %vm216, %v2179, 0
  %v2257 = vsel %vm216, %v2180, 0
  %v2260 = vsel %vm216, %v2181, 0
  %v2263 = vsel %vm216, %v2182, 0
  %v2266 = vsel %vm216, %v2183, 0
  %v2269 = vsel %vm216, %v2184, 0
  %v2272 = vsel %vm216, %v2185, 0
  %v2275 = vsel %vm216, %v2186, 0
  %v2278 = vsel %vm216, %v2187, 0
  %v2281 = vsel %vm216, %v2188, 0
  %v2284 = vsel %vm216, %v2189, 0
  %v2287 = vsel %vm216, %v2190, 0
  %v2290 = vsel %vm313, %v2192, 0
  %2292 = vmatprep.subr.bf16.mxu0 0
  %2293 = vmatpush1.bf16.msra.mxu0 %v2290
  %2294 = vmatprep.subr.bf16.mxu0 0
  %2295 = vmatpush1.bf16.msra.mxu0 0
  %2296 = vmatprep.subr.bf16.mxu0 0
  %2297 = vmatpush1.bf16.msra.mxu0 0
  %2298 = vmatprep.subr.bf16.mxu0 0
  %2299 = vmatpush1.bf16.msra.mxu0 0
  %2300 = vmatprep.subr.bf16.mxu0 0
  %2301 = vmatpush1.bf16.msra.mxu0 0
  %2302 = vmatprep.subr.bf16.mxu0 0
  %2303 = vmatpush1.bf16.msra.mxu0 0
  %2304 = vmatprep.subr.bf16.mxu0 0
  %2305 = vmatpush1.bf16.msra.mxu0 0
  %2306 = vmatprep.subr.bf16.mxu0 0
  %2307 = vmatpush1.bf16.msra.mxu0 0
  %2308 = vmatprep.subr.bf16.mxu0 0
  %2309 = vmatpush1.bf16.msra.mxu0 0
  %2310 = vmatprep.subr.bf16.mxu0 0
  %2311 = vmatpush1.bf16.msra.mxu0 0
  %2312 = vmatprep.subr.bf16.mxu0 0
  %2313 = vmatpush1.bf16.msra.mxu0 0
  %2314 = vmatprep.subr.bf16.mxu0 0
  %2315 = vmatpush1.bf16.msra.mxu0 0
  %2316 = vmatprep.subr.bf16.mxu0 0
  %2317 = vmatpush1.bf16.msra.mxu0 0
  %2318 = vmatprep.subr.bf16.mxu0 0
  %2319 = vmatpush1.bf16.msra.mxu0 0
  %2320 = vmatprep.subr.bf16.mxu0 0
  %2321 = vmatpush1.bf16.msra.mxu0 0
  %2322 = vmatprep.subr.bf16.mxu0 0
  %2323 = vmatpush1.bf16.msra.mxu0 0
  %2324 = vmatprep.mubr.bf16.mxu0 0
  %2325 = vmatmul.mubr.bf16.gmra.mrb[0].mxu0 %v2194
  %v2326 = vpop.f32.mrb[0].mxu0
  %v2327 = vadd.f32 0.0, %v2326
  %v2328 = vpop.f32.mrb[0].mxu0
  %v2329 = vpop.f32.mrb[0].mxu0
  %v2330 = vadd.f32 0.0, %v2329
  %v2331 = vpop.f32.mrb[0].mxu0
  %2332 = vmatprep.mubr.bf16.mxu0 0
  %2333 = vmatmul.mubr.bf16.gmra.mrb[0].mxu0 %v2197
  %v2334 = vpop.f32.mrb[0].mxu0
  %v2335 = vadd.f32 0.0, %v2334
  %v2336 = vpop.f32.mrb[0].mxu0
  %v2337 = vpop.f32.mrb[0].mxu0
  %v2338 = vadd.f32 0.0, %v2337
  %v2339 = vpop.f32.mrb[0].mxu0
  %2340 = vmatprep.mubr.bf16.mxu0 0
  %2341 = vmatmul.mubr.bf16.gmra.mrb[0].mxu0 %v2200
  %v2342 = vpop.f32.mrb[0].mxu0
  %v2343 = vadd.f32 0.0, %v2342
  %v2344 = vpop.f32.mrb[0].mxu0
  %v2345 = vpop.f32.mrb[0].mxu0
  %v2346 = vadd.f32 0.0, %v2345
  %v2347 = vpop.f32.mrb[0].mxu0
  %2348 = vmatprep.mubr.bf16.mxu0 0
  %2349 = vmatmul.mubr.bf16.gmra.mrb[0].mxu0 %v2203
  %v2350 = vpop.f32.mrb[0].mxu0
  %v2351 = vadd.f32 0.0, %v2350
  %v2352 = vpop.f32.mrb[0].mxu0
  %v2353 = vpop.f32.mrb[0].mxu0
  %v2354 = vadd.f32 0.0, %v2353
  %v2355 = vpop.f32.mrb[0].mxu0
  %2356 = vmatprep.mubr.bf16.mxu0 0
  %2357 = vmatmul.mubr.bf16.gmra.mrb[0].mxu0 %v2206
  %v2358 = vpop.f32.mrb[0].mxu0
  %v2359 = vadd.f32 0.0, %v2358
  %v2360 = vpop.f32.mrb[0].mxu0
  %v2361 = vpop.f32.mrb[0].mxu0
  %v2362 = vadd.f32 0.0, %v2361
  %v2363 = vpop.f32.mrb[0].mxu0
  %2364 = vmatprep.mubr.bf16.mxu0 0
  %2365 = vmatmul.mubr.bf16.gmra.mrb[0].mxu0 %v2209
  %v2366 = vpop.f32.mrb[0].mxu0
  %v2367 = vadd.f32 0.0, %v2366
  %v2368 = vpop.f32.mrb[0].mxu0
  %v2369 = vpop.f32.mrb[0].mxu0
  %v2370 = vadd.f32 0.0, %v2369
  %v2371 = vpop.f32.mrb[0].mxu0
  %2372 = vmatprep.mubr.bf16.mxu0 0
  %2373 = vmatmul.mubr.bf16.gmra.mrb[0].mxu0 %v2212
  %v2374 = vpop.f32.mrb[0].mxu0
  %v2375 = vadd.f32 0.0, %v2374
  %v2376 = vpop.f32.mrb[0].mxu0
  %v2377 = vpop.f32.mrb[0].mxu0
  %v2378 = vadd.f32 0.0, %v2377
  %v2379 = vpop.f32.mrb[0].mxu0
  %2380 = vmatprep.mubr.bf16.mxu0 0
  %2381 = vmatmul.mubr.bf16.gmra.mrb[0].mxu0 %v2215
  %v2382 = vpop.f32.mrb[0].mxu0
  %v2383 = vadd.f32 0.0, %v2382
  %v2384 = vpop.f32.mrb[0].mxu0
  %v2385 = vpop.f32.mrb[0].mxu0
  %v2386 = vadd.f32 0.0, %v2385
  %v2387 = vpop.f32.mrb[0].mxu0
  %2388 = vmatprep.mubr.bf16.mxu0 0
  %2389 = vmatmul.mubr.bf16.gmra.mrb[0].mxu0 %v2218
  %v2390 = vpop.f32.mrb[0].mxu0
  %v2391 = vadd.f32 0.0, %v2390
  %v2392 = vpop.f32.mrb[0].mxu0
  %v2393 = vpop.f32.mrb[0].mxu0
  %v2394 = vadd.f32 0.0, %v2393
  %v2395 = vpop.f32.mrb[0].mxu0
  %2396 = vmatprep.mubr.bf16.mxu0 0
  %2397 = vmatmul.mubr.bf16.gmra.mrb[0].mxu0 %v2221
  %v2398 = vpop.f32.mrb[0].mxu0
  %v2399 = vadd.f32 0.0, %v2398
  %v2400 = vpop.f32.mrb[0].mxu0
  %v2401 = vpop.f32.mrb[0].mxu0
  %v2402 = vadd.f32 0.0, %v2401
  %v2403 = vpop.f32.mrb[0].mxu0
  %2404 = vmatprep.mubr.bf16.mxu0 0
  %2405 = vmatmul.mubr.bf16.gmra.mrb[0].mxu0 %v2224
  %v2406 = vpop.f32.mrb[0].mxu0
  %v2407 = vadd.f32 0.0, %v2406
  %v2408 = vpop.f32.mrb[0].mxu0
  %v2409 = vpop.f32.mrb[0].mxu0
  %v2410 = vadd.f32 0.0, %v2409
  %v2411 = vpop.f32.mrb[0].mxu0
  %2412 = vmatprep.mubr.bf16.mxu0 0
  %2413 = vmatmul.mubr.bf16.gmra.mrb[0].mxu0 %v2227
  %v2414 = vpop.f32.mrb[0].mxu0
  %v2415 = vadd.f32 0.0, %v2414
  %v2416 = vpop.f32.mrb[0].mxu0
  %v2417 = vpop.f32.mrb[0].mxu0
  %v2418 = vadd.f32 0.0, %v2417
  %v2419 = vpop.f32.mrb[0].mxu0
  %2420 = vmatprep.mubr.bf16.mxu0 0
  %2421 = vmatmul.mubr.bf16.gmra.mrb[0].mxu0 %v2230
  %v2422 = vpop.f32.mrb[0].mxu0
  %v2423 = vadd.f32 0.0, %v2422
  %v2424 = vpop.f32.mrb[0].mxu0
  %v2425 = vpop.f32.mrb[0].mxu0
  %v2426 = vadd.f32 0.0, %v2425
  %v2427 = vpop.f32.mrb[0].mxu0
  %2428 = vmatprep.mubr.bf16.mxu0 0
  %2429 = vmatmul.mubr.bf16.gmra.mrb[0].mxu0 %v2233
  %v2430 = vpop.f32.mrb[0].mxu0
  %v2431 = vadd.f32 0.0, %v2430
  %v2432 = vpop.f32.mrb[0].mxu0
  %v2433 = vpop.f32.mrb[0].mxu0
  %v2434 = vadd.f32 0.0, %v2433
  %v2435 = vpop.f32.mrb[0].mxu0
  %2436 = vmatprep.mubr.bf16.mxu0 0
  %2437 = vmatmul.mubr.bf16.gmra.mrb[0].mxu0 %v2236
  %v2438 = vpop.f32.mrb[0].mxu0
  %v2439 = vadd.f32 0.0, %v2438
  %v2440 = vpop.f32.mrb[0].mxu0
  %v2441 = vpop.f32.mrb[0].mxu0
  %v2442 = vadd.f32 0.0, %v2441
  %v2443 = vpop.f32.mrb[0].mxu0
  %2444 = vmatprep.mubr.bf16.mxu0 0
  %2445 = vmatmul.mubr.bf16.gmra.mrb[0].mxu0 %v2239
  %v2446 = vpop.f32.mrb[0].mxu0
  %v2447 = vadd.f32 0.0, %v2446
  %v2448 = vpop.f32.mrb[0].mxu0
  %v2449 = vpop.f32.mrb[0].mxu0
  %v2450 = vadd.f32 0.0, %v2449
  %v2451 = vpop.f32.mrb[0].mxu0
  %2452 = vmatprep.mubr.bf16.mxu0 0
  %2453 = vmatmul.mubr.bf16.gmra.mrb[0].mxu0 %v2242
  %v2454 = vpop.f32.mrb[0].mxu0
  %v2455 = vadd.f32 0.0, %v2454
  %v2456 = vpop.f32.mrb[0].mxu0
  %v2457 = vpop.f32.mrb[0].mxu0
  %v2458 = vadd.f32 0.0, %v2457
  %v2459 = vpop.f32.mrb[0].mxu0
  %2460 = vmatprep.mubr.bf16.mxu0 0
  %2461 = vmatmul.mubr.bf16.gmra.mrb[0].mxu0 %v2245
  %v2462 = vpop.f32.mrb[0].mxu0
  %v2463 = vadd.f32 0.0, %v2462
  %v2464 = vpop.f32.mrb[0].mxu0
  %v2465 = vpop.f32.mrb[0].mxu0
  %v2466 = vadd.f32 0.0, %v2465
  %v2467 = vpop.f32.mrb[0].mxu0
  %2468 = vmatprep.mubr.bf16.mxu0 0
  %2469 = vmatmul.mubr.bf16.gmra.mrb[0].mxu0 %v2248
  %v2470 = vpop.f32.mrb[0].mxu0
  %v2471 = vadd.f32 0.0, %v2470
  %v2472 = vpop.f32.mrb[0].mxu0
  %v2473 = vpop.f32.mrb[0].mxu0
  %v2474 = vadd.f32 0.0, %v2473
  %v2475 = vpop.f32.mrb[0].mxu0
  %2476 = vmatprep.mubr.bf16.mxu0 0
  %2477 = vmatmul.mubr.bf16.gmra.mrb[0].mxu0 %v2251
  %v2478 = vpop.f32.mrb[0].mxu0
  %v2479 = vadd.f32 0.0, %v2478
  %v2480 = vpop.f32.mrb[0].mxu0
  %v2481 = vpop.f32.mrb[0].mxu0
  %v2482 = vadd.f32 0.0, %v2481
  %v2483 = vpop.f32.mrb[0].mxu0
  %2484 = vmatprep.mubr.bf16.mxu0 0
  %2485 = vmatmul.mubr.bf16.gmra.mrb[0].mxu0 %v2254
  %v2486 = vpop.f32.mrb[0].mxu0
  %v2487 = vadd.f32 0.0, %v2486
  %v2488 = vpop.f32.mrb[0].mxu0
  %v2489 = vpop.f32.mrb[0].mxu0
  %v2490 = vadd.f32 0.0, %v2489
  %v2491 = vpop.f32.mrb[0].mxu0
  %2492 = vmatprep.mubr.bf16.mxu0 0
  %2493 = vmatmul.mubr.bf16.gmra.mrb[0].mxu0 %v2257
  %v2494 = vpop.f32.mrb[0].mxu0
  %v2495 = vadd.f32 0.0, %v2494
  %v2496 = vpop.f32.mrb[0].mxu0
  %v2497 = vpop.f32.mrb[0].mxu0
  %v2498 = vadd.f32 0.0, %v2497
  %v2499 = vpop.f32.mrb[0].mxu0
  %2500 = vmatprep.mubr.bf16.mxu0 0
  %2501 = vmatmul.mubr.bf16.gmra.mrb[0].mxu0 %v2260
  %v2502 = vpop.f32.mrb[0].mxu0
  %v2503 = vadd.f32 0.0, %v2502
  %v2504 = vpop.f32.mrb[0].mxu0
  %v2505 = vpop.f32.mrb[0].mxu0
  %v2506 = vadd.f32 0.0, %v2505
  %v2507 = vpop.f32.mrb[0].mxu0
  %2508 = vmatprep.mubr.bf16.mxu0 0
  %2509 = vmatmul.mubr.bf16.gmra.mrb[0].mxu0 %v2263
  %v2510 = vpop.f32.mrb[0].mxu0
  %v2511 = vadd.f32 0.0, %v2510
  %v2512 = vpop.f32.mrb[0].mxu0
  %v2513 = vpop.f32.mrb[0].mxu0
  %v2514 = vadd.f32 0.0, %v2513
  %v2515 = vpop.f32.mrb[0].mxu0
  %2516 = vmatprep.mubr.bf16.mxu0 0
  %2517 = vmatmul.mubr.bf16.gmra.mrb[0].mxu0 %v2266
  %v2518 = vpop.f32.mrb[0].mxu0
  %v2519 = vadd.f32 0.0, %v2518
  %v2520 = vpop.f32.mrb[0].mxu0
  %v2521 = vpop.f32.mrb[0].mxu0
  %v2522 = vadd.f32 0.0, %v2521
  %v2523 = vpop.f32.mrb[0].mxu0
  %2524 = vmatprep.mubr.bf16.mxu0 0
  %2525 = vmatmul.mubr.bf16.gmra.mrb[0].mxu0 %v2269
  %v2526 = vpop.f32.mrb[0].mxu0
  %v2527 = vadd.f32 0.0, %v2526
  %v2528 = vpop.f32.mrb[0].mxu0
  %v2529 = vpop.f32.mrb[0].mxu0
  %v2530 = vadd.f32 0.0, %v2529
  %v2531 = vpop.f32.mrb[0].mxu0
  %2532 = vmatprep.mubr.bf16.mxu0 0
  %2533 = vmatmul.mubr.bf16.gmra.mrb[0].mxu0 %v2272
  %v2534 = vpop.f32.mrb[0].mxu0
  %v2535 = vadd.f32 0.0, %v2534
  %v2536 = vpop.f32.mrb[0].mxu0
  %v2537 = vpop.f32.mrb[0].mxu0
  %v2538 = vadd.f32 0.0, %v2537
  %v2539 = vpop.f32.mrb[0].mxu0
  %2540 = vmatprep.mubr.bf16.mxu0 0
  %2541 = vmatmul.mubr.bf16.gmra.mrb[0].mxu0 %v2275
  %v2542 = vpop.f32.mrb[0].mxu0
  %v2543 = vadd.f32 0.0, %v2542
  %v2544 = vpop.f32.mrb[0].mxu0
  %v2545 = vpop.f32.mrb[0].mxu0
  %v2546 = vadd.f32 0.0, %v2545
  %v2547 = vpop.f32.mrb[0].mxu0
  %2548 = vmatprep.mubr.bf16.mxu0 0
  %2549 = vmatmul.mubr.bf16.gmra.mrb[0].mxu0 %v2278
  %v2550 = vpop.f32.mrb[0].mxu0
  %v2551 = vadd.f32 0.0, %v2550
  %v2552 = vpop.f32.mrb[0].mxu0
  %v2553 = vpop.f32.mrb[0].mxu0
  %v2554 = vadd.f32 0.0, %v2553
  %v2555 = vpop.f32.mrb[0].mxu0
  %2556 = vmatprep.mubr.bf16.mxu0 0
  %2557 = vmatmul.mubr.bf16.gmra.mrb[0].mxu0 %v2281
  %v2558 = vpop.f32.mrb[0].mxu0
  %v2559 = vadd.f32 0.0, %v2558
  %v2560 = vpop.f32.mrb[0].mxu0
  %v2561 = vpop.f32.mrb[0].mxu0
  %v2562 = vadd.f32 0.0, %v2561
  %v2563 = vpop.f32.mrb[0].mxu0
  %2564 = vmatprep.mubr.bf16.mxu0 0
  %2565 = vmatmul.mubr.bf16.gmra.mrb[0].mxu0 %v2284
  %v2566 = vpop.f32.mrb[0].mxu0
  %v2567 = vadd.f32 0.0, %v2566
  %v2568 = vpop.f32.mrb[0].mxu0
  %v2569 = vpop.f32.mrb[0].mxu0
  %v2570 = vadd.f32 0.0, %v2569
  %v2571 = vpop.f32.mrb[0].mxu0
  %2572 = vmatprep.mubr.bf16.mxu0 0
  %2573 = vmatmul.mubr.bf16.gmra.mrb[0].mxu0 %v2287
  %v2574 = vpop.f32.mrb[0].mxu0
  %v2575 = vadd.f32 0.0, %v2574
  %v2576 = vpop.f32.mrb[0].mxu0
  %v2577 = vpop.f32.mrb[0].mxu0
  %v2578 = vadd.f32 0.0, %v2577
  %v2579 = vpop.f32.mrb[0].mxu0
  %2580 = vdwg.mxu0
  %v2581 = vadd.f32 %v2031, %v2327
  %v2582 = vadd.f32 %v2032, %v2330
  %v2583 = vadd.f32 %v2033, %v2335
  %v2584 = vadd.f32 %v2034, %v2338
  %v2585 = vadd.f32 %v2035, %v2343
  %v2586 = vadd.f32 %v2036, %v2346
  %v2587 = vadd.f32 %v2037, %v2351
  %v2588 = vadd.f32 %v2038, %v2354
  %v2589 = vadd.f32 %v2039, %v2359
  %v2590 = vadd.f32 %v2040, %v2362
  %v2591 = vadd.f32 %v2041, %v2367
  %v2592 = vadd.f32 %v2042, %v2370
  %v2593 = vadd.f32 %v2043, %v2375
  %v2594 = vadd.f32 %v2044, %v2378
  %v2595 = vadd.f32 %v2045, %v2383
  %v2596 = vadd.f32 %v2046, %v2386
  %v2597 = vadd.f32 %v2047, %v2391
  %v2598 = vadd.f32 %v2048, %v2394
  %v2599 = vadd.f32 %v2049, %v2399
  %v2600 = vadd.f32 %v2050, %v2402
  %v2601 = vadd.f32 %v2051, %v2407
  %v2602 = vadd.f32 %v2052, %v2410
  %v2603 = vadd.f32 %v2053, %v2415
  %v2604 = vadd.f32 %v2054, %v2418
  %v2605 = vadd.f32 %v2055, %v2423
  %v2606 = vadd.f32 %v2056, %v2426
  %v2607 = vadd.f32 %v2057, %v2431
  %v2608 = vadd.f32 %v2058, %v2434
  %v2609 = vadd.f32 %v2059, %v2439
  %v2610 = vadd.f32 %v2060, %v2442
  %v2611 = vadd.f32 %v2061, %v2447
  %v2612 = vadd.f32 %v2062, %v2450
  %v2613 = vadd.f32 %v2063, %v2455
  %v2614 = vadd.f32 %v2064, %v2458
  %v2615 = vadd.f32 %v2065, %v2463
  %v2616 = vadd.f32 %v2066, %v2466
  %v2617 = vadd.f32 %v2067, %v2471
  %v2618 = vadd.f32 %v2068, %v2474
  %v2619 = vadd.f32 %v2069, %v2479
  %v2620 = vadd.f32 %v2070, %v2482
  %v2621 = vadd.f32 %v2071, %v2487
  %v2622 = vadd.f32 %v2072, %v2490
  %v2623 = vadd.f32 %v2073, %v2495
  %v2624 = vadd.f32 %v2074, %v2498
  %v2625 = vadd.f32 %v2075, %v2503
  %v2626 = vadd.f32 %v2076, %v2506
  %v2627 = vadd.f32 %v2077, %v2511
  %v2628 = vadd.f32 %v2078, %v2514
  %v2629 = vadd.f32 %v2079, %v2519
  %v2630 = vadd.f32 %v2080, %v2522
  %v2631 = vadd.f32 %v2081, %v2527
  %v2632 = vadd.f32 %v2082, %v2530
  %v2633 = vadd.f32 %v2083, %v2535
  %v2634 = vadd.f32 %v2084, %v2538
  %v2635 = vadd.f32 %v2085, %v2543
  %v2636 = vadd.f32 %v2086, %v2546
  %v2637 = vadd.f32 %v2087, %v2551
  %v2638 = vadd.f32 %v2088, %v2554
  %v2639 = vadd.f32 %v2089, %v2559
  %v2640 = vadd.f32 %v2090, %v2562
  %v2641 = vadd.f32 %v2091, %v2567
  %v2642 = vadd.f32 %v2092, %v2570
  %v2643 = vadd.f32 %v2093, %v2575
  %v2644 = vadd.f32 %v2094, %v2578
  %v2645 = vld [vmem:[%s1544 + $0x2] sm:$0xff]
  %v2646 = vld [vmem:[%s1544 + $0xa] sm:$0xff]
  %v2647 = vld [vmem:[%s1544 + $0x1a] sm:$0xff]
  %v2648 = vld [vmem:[%s1544 + $0x22] sm:$0xff]
  %v2649 = vld [vmem:[%s1544 + $0x32] sm:$0xff]
  %v2650 = vld [vmem:[%s1544 + $0x3a] sm:$0xff]
  %v2651 = vld [vmem:[%s1544 + $0x4a] sm:$0xff]
  %v2652 = vld [vmem:[%s1544 + $0x52] sm:$0xff]
  %v2653 = vld [vmem:[%s1544 + $0x62] sm:$0xff]
  %v2654 = vld [vmem:[%s1544 + $0x6a] sm:$0xff]
  %v2655 = vld [vmem:[%s1544 + $0x7a] sm:$0xff]
  %v2656 = vld [vmem:[%s1544 + $0x82] sm:$0xff]
  %v2657 = vld [vmem:[%s1544 + $0x92] sm:$0xff]
  %v2658 = vld [vmem:[%s1544 + $0x9a] sm:$0xff]
  %v2659 = vld [vmem:[%s1544 + $0xaa] sm:$0xff]
  %v2660 = vld [vmem:[%s1544 + $0xb2] sm:$0xff]
  %v2661 = vld [vmem:[%s1544 + $0xc2] sm:$0xff]
  %v2662 = vld [vmem:[%s1544 + $0xca] sm:$0xff]
  %v2663 = vld [vmem:[%s1544 + $0xda] sm:$0xff]
  %v2664 = vld [vmem:[%s1544 + $0xe2] sm:$0xff]
  %v2665 = vld [vmem:[%s1544 + $0xf2] sm:$0xff]
  %v2666 = vld [vmem:[%s1544 + $0xfa] sm:$0xff]
  %v2667 = vld [vmem:[%s1544 + $0x10a] sm:$0xff]
  %v2668 = vld [vmem:[%s1544 + $0x112] sm:$0xff]
  %v2669 = vld [vmem:[%s1544 + $0x122] sm:$0xff]
  %v2670 = vld [vmem:[%s1544 + $0x12a] sm:$0xff]
  %v2671 = vld [vmem:[%s1544 + $0x13a] sm:$0xff]
  %v2672 = vld [vmem:[%s1544 + $0x142] sm:$0xff]
  %v2673 = vld [vmem:[%s1544 + $0x152] sm:$0xff]
  %v2674 = vld [vmem:[%s1544 + $0x15a] sm:$0xff]
  %v2675 = vld [vmem:[%s1544 + $0x16a] sm:$0xff]
  %v2676 = vld [vmem:[%s1544 + $0x172] sm:$0xff]
  %v2677 = vld [vmem:[%s1544 + $0x1b2] sm:$0xff]
  %v2678 = vld [vmem:[%s1544 + $0x1ba] sm:$0xff]
  %v2679 = vld [vmem:[%s1544 + $0x1ca] sm:$0xff]
  %v2680 = vld [vmem:[%s1544 + $0x1d2] sm:$0xff]
  %v2681 = vld [vmem:[%s1544 + $0x1e2] sm:$0xff]
  %v2682 = vld [vmem:[%s1544 + $0x1ea] sm:$0xff]
  %v2683 = vld [vmem:[%s1544 + $0x1fa] sm:$0xff]
  %v2684 = vld [vmem:[%s1544 + $0x202] sm:$0xff]
  %v2685 = vld [vmem:[%s1544 + $0x212] sm:$0xff]
  %v2686 = vld [vmem:[%s1544 + $0x21a] sm:$0xff]
  %v2687 = vld [vmem:[%s1544 + $0x22a] sm:$0xff]
  %v2688 = vld [vmem:[%s1544 + $0x232] sm:$0xff]
  %v2689 = vld [vmem:[%s1544 + $0x242] sm:$0xff]
  %v2690 = vld [vmem:[%s1544 + $0x24a] sm:$0xff]
  %v2691 = vld [vmem:[%s1544 + $0x25a] sm:$0xff]
  %v2692 = vld [vmem:[%s1544 + $0x262] sm:$0xff]
  %v2693 = vld [vmem:[%s1544 + $0x272] sm:$0xff]
  %v2694 = vld [vmem:[%s1544 + $0x27a] sm:$0xff]
  %v2695 = vld [vmem:[%s1544 + $0x28a] sm:$0xff]
  %v2696 = vld [vmem:[%s1544 + $0x292] sm:$0xff]
  %v2697 = vld [vmem:[%s1544 + $0x2a2] sm:$0xff]
  %v2698 = vld [vmem:[%s1544 + $0x2aa] sm:$0xff]
  %v2699 = vld [vmem:[%s1544 + $0x2ba] sm:$0xff]
  %v2700 = vld [vmem:[%s1544 + $0x2c2] sm:$0xff]
  %v2701 = vld [vmem:[%s1544 + $0x2d2] sm:$0xff]
  %v2702 = vld [vmem:[%s1544 + $0x2da] sm:$0xff]
  %v2703 = vld [vmem:[%s1544 + $0x2ea] sm:$0xff]
  %v2704 = vld [vmem:[%s1544 + $0x2f2] sm:$0xff]
  %v2705 = vld [vmem:[%s1544 + $0x302] sm:$0xff]
  %v2706 = vld [vmem:[%s1544 + $0x30a] sm:$0xff]
  %v2707 = vld [vmem:[%s1544 + $0x31a] sm:$0xff]
  %v2708 = vld [vmem:[%s1544 + $0x322] sm:$0xff]
  %v2709 = vpack.c.bf16 %v2646, %v2645
  %v2710 = vpack.c.bf16 %v2648, %v2647
  %v2711 = vpack.c.bf16 %v2650, %v2649
  %v2712 = vpack.c.bf16 %v2652, %v2651
  %v2713 = vpack.c.bf16 %v2654, %v2653
  %v2714 = vpack.c.bf16 %v2656, %v2655
  %v2715 = vpack.c.bf16 %v2658, %v2657
  %v2716 = vpack.c.bf16 %v2660, %v2659
  %v2717 = vpack.c.bf16 %v2662, %v2661
  %v2718 = vpack.c.bf16 %v2664, %v2663
  %v2719 = vpack.c.bf16 %v2666, %v2665
  %v2720 = vpack.c.bf16 %v2668, %v2667
  %v2721 = vpack.c.bf16 %v2670, %v2669
  %v2722 = vpack.c.bf16 %v2672, %v2671
  %v2723 = vpack.c.bf16 %v2674, %v2673
  %v2724 = vpack.c.bf16 %v2676, %v2675
  %v2725 = vpack.c.bf16 %v2678, %v2677
  %v2726 = vpack.c.bf16 %v2680, %v2679
  %v2727 = vpack.c.bf16 %v2682, %v2681
  %v2728 = vpack.c.bf16 %v2684, %v2683
  %v2729 = vpack.c.bf16 %v2686, %v2685
  %v2730 = vpack.c.bf16 %v2688, %v2687
  %v2731 = vpack.c.bf16 %v2690, %v2689
  %v2732 = vpack.c.bf16 %v2692, %v2691
  %v2733 = vpack.c.bf16 %v2694, %v2693
  %v2734 = vpack.c.bf16 %v2696, %v2695
  %v2735 = vpack.c.bf16 %v2698, %v2697
  %v2736 = vpack.c.bf16 %v2700, %v2699
  %v2737 = vpack.c.bf16 %v2702, %v2701
  %v2738 = vpack.c.bf16 %v2704, %v2703
  %v2739 = vpack.c.bf16 %v2706, %v2705
  %v2740 = vpack.c.bf16 %v2708, %v2707
  %s2741 = scalar_lea.vmem %s1, 10
  %v2742 = vld [vmem:[%s2741] sm:$0x3]
  %v2744 = vsel %vm216, %v2709, 0
  %v2747 = vsel %vm216, %v2710, 0
  %v2750 = vsel %vm216, %v2711, 0
  %v2753 = vsel %vm216, %v2712, 0
  %v2756 = vsel %vm216, %v2713, 0
  %v2759 = vsel %vm216, %v2714, 0
  %v2762 = vsel %vm216, %v2715, 0
  %v2765 = vsel %vm216, %v2716, 0
  %v2768 = vsel %vm216, %v2717, 0
  %v2771 = vsel %vm216, %v2718, 0
  %v2774 = vsel %vm216, %v2719, 0
  %v2777 = vsel %vm216, %v2720, 0
  %v2780 = vsel %vm216, %v2721, 0
  %v2783 = vsel %vm216, %v2722, 0
  %v2786 = vsel %vm216, %v2723, 0
  %v2789 = vsel %vm216, %v2724, 0
  %v2792 = vsel %vm216, %v2725, 0
  %v2795 = vsel %vm216, %v2726, 0
  %v2798 = vsel %vm216, %v2727, 0
  %v2801 = vsel %vm216, %v2728, 0
  %v2804 = vsel %vm216, %v2729, 0
  %v2807 = vsel %vm216, %v2730, 0
  %v2810 = vsel %vm216, %v2731, 0
  %v2813 = vsel %vm216, %v2732, 0
  %v2816 = vsel %vm216, %v2733, 0
  %v2819 = vsel %vm216, %v2734, 0
  %v2822 = vsel %vm216, %v2735, 0
  %v2825 = vsel %vm216, %v2736, 0
  %v2828 = vsel %vm216, %v2737, 0
  %v2831 = vsel %vm216, %v2738, 0
  %v2834 = vsel %vm216, %v2739, 0
  %v2837 = vsel %vm216, %v2740, 0
  %v2840 = vsel %vm313, %v2742, 0
  %2842 = vmatprep.subr.bf16.mxu0 0
  %2843 = vmatpush1.bf16.msra.mxu0 %v2840
  %2844 = vmatprep.subr.bf16.mxu0 0
  %2845 = vmatpush1.bf16.msra.mxu0 0
  %2846 = vmatprep.subr.bf16.mxu0 0
  %2847 = vmatpush1.bf16.msra.mxu0 0
  %2848 = vmatprep.subr.bf16.mxu0 0
  %2849 = vmatpush1.bf16.msra.mxu0 0
  %2850 = vmatprep.subr.bf16.mxu0 0
  %2851 = vmatpush1.bf16.msra.mxu0 0
  %2852 = vmatprep.subr.bf16.mxu0 0
  %2853 = vmatpush1.bf16.msra.mxu0 0
  %2854 = vmatprep.subr.bf16.mxu0 0
  %2855 = vmatpush1.bf16.msra.mxu0 0
  %2856 = vmatprep.subr.bf16.mxu0 0
  %2857 = vmatpush1.bf16.msra.mxu0 0
  %2858 = vmatprep.subr.bf16.mxu0 0
  %2859 = vmatpush1.bf16.msra.mxu0 0
  %2860 = vmatprep.subr.bf16.mxu0 0
  %2861 = vmatpush1.bf16.msra.mxu0 0
  %2862 = vmatprep.subr.bf16.mxu0 0
  %2863 = vmatpush1.bf16.msra.mxu0 0
  %2864 = vmatprep.subr.bf16.mxu0 0
  %2865 = vmatpush1.bf16.msra.mxu0 0
  %2866 = vmatprep.subr.bf16.mxu0 0
  %2867 = vmatpush1.bf16.msra.mxu0 0
  %2868 = vmatprep.subr.bf16.mxu0 0
  %2869 = vmatpush1.bf16.msra.mxu0 0
  %2870 = vmatprep.subr.bf16.mxu0 0
  %2871 = vmatpush1.bf16.msra.mxu0 0
  %2872 = vmatprep.subr.bf16.mxu0 0
  %2873 = vmatpush1.bf16.msra.mxu0 0
  %2874 = vmatprep.mubr.bf16.mxu0 0
  %2875 = vmatmul.mubr.bf16.gmra.mrb[0].mxu0 %v2744
  %v2876 = vpop.f32.mrb[0].mxu0
  %v2877 = vadd.f32 0.0, %v2876
  %v2878 = vpop.f32.mrb[0].mxu0
  %v2879 = vpop.f32.mrb[0].mxu0
  %v2880 = vadd.f32 0.0, %v2879
  %v2881 = vpop.f32.mrb[0].mxu0
  %2882 = vmatprep.mubr.bf16.mxu0 0
  %2883 = vmatmul.mubr.bf16.gmra.mrb[0].mxu0 %v2747
  %v2884 = vpop.f32.mrb[0].mxu0
  %v2885 = vadd.f32 0.0, %v2884
  %v2886 = vpop.f32.mrb[0].mxu0
  %v2887 = vpop.f32.mrb[0].mxu0
  %v2888 = vadd.f32 0.0, %v2887
  %v2889 = vpop.f32.mrb[0].mxu0
  %2890 = vmatprep.mubr.bf16.mxu0 0
  %2891 = vmatmul.mubr.bf16.gmra.mrb[0].mxu0 %v2750
  %v2892 = vpop.f32.mrb[0].mxu0
  %v2893 = vadd.f32 0.0, %v2892
  %v2894 = vpop.f32.mrb[0].mxu0
  %v2895 = vpop.f32.mrb[0].mxu0
  %v2896 = vadd.f32 0.0, %v2895
  %v2897 = vpop.f32.mrb[0].mxu0
  %2898 = vmatprep.mubr.bf16.mxu0 0
  %2899 = vmatmul.mubr.bf16.gmra.mrb[0].mxu0 %v2753
  %v2900 = vpop.f32.mrb[0].mxu0
  %v2901 = vadd.f32 0.0, %v2900
  %v2902 = vpop.f32.mrb[0].mxu0
  %v2903 = vpop.f32.mrb[0].mxu0
  %v2904 = vadd.f32 0.0, %v2903
  %v2905 = vpop.f32.mrb[0].mxu0
  %2906 = vmatprep.mubr.bf16.mxu0 0
  %2907 = vmatmul.mubr.bf16.gmra.mrb[0].mxu0 %v2756
  %v2908 = vpop.f32.mrb[0].mxu0
  %v2909 = vadd.f32 0.0, %v2908
  %v2910 = vpop.f32.mrb[0].mxu0
  %v2911 = vpop.f32.mrb[0].mxu0
  %v2912 = vadd.f32 0.0, %v2911
  %v2913 = vpop.f32.mrb[0].mxu0
  %2914 = vmatprep.mubr.bf16.mxu0 0
  %2915 = vmatmul.mubr.bf16.gmra.mrb[0].mxu0 %v2759
  %v2916 = vpop.f32.mrb[0].mxu0
  %v2917 = vadd.f32 0.0, %v2916
  %v2918 = vpop.f32.mrb[0].mxu0
  %v2919 = vpop.f32.mrb[0].mxu0
  %v2920 = vadd.f32 0.0, %v2919
  %v2921 = vpop.f32.mrb[0].mxu0
  %2922 = vmatprep.mubr.bf16.mxu0 0
  %2923 = vmatmul.mubr.bf16.gmra.mrb[0].mxu0 %v2762
  %v2924 = vpop.f32.mrb[0].mxu0
  %v2925 = vadd.f32 0.0, %v2924
  %v2926 = vpop.f32.mrb[0].mxu0
  %v2927 = vpop.f32.mrb[0].mxu0
  %v2928 = vadd.f32 0.0, %v2927
  %v2929 = vpop.f32.mrb[0].mxu0
  %2930 = vmatprep.mubr.bf16.mxu0 0
  %2931 = vmatmul.mubr.bf16.gmra.mrb[0].mxu0 %v2765
  %v2932 = vpop.f32.mrb[0].mxu0
  %v2933 = vadd.f32 0.0, %v2932
  %v2934 = vpop.f32.mrb[0].mxu0
  %v2935 = vpop.f32.mrb[0].mxu0
  %v2936 = vadd.f32 0.0, %v2935
  %v2937 = vpop.f32.mrb[0].mxu0
  %2938 = vmatprep.mubr.bf16.mxu0 0
  %2939 = vmatmul.mubr.bf16.gmra.mrb[0].mxu0 %v2768
  %v2940 = vpop.f32.mrb[0].mxu0
  %v2941 = vadd.f32 0.0, %v2940
  %v2942 = vpop.f32.mrb[0].mxu0
  %v2943 = vpop.f32.mrb[0].mxu0
  %v2944 = vadd.f32 0.0, %v2943
  %v2945 = vpop.f32.mrb[0].mxu0
  %2946 = vmatprep.mubr.bf16.mxu0 0
  %2947 = vmatmul.mubr.bf16.gmra.mrb[0].mxu0 %v2771
  %v2948 = vpop.f32.mrb[0].mxu0
  %v2949 = vadd.f32 0.0, %v2948
  %v2950 = vpop.f32.mrb[0].mxu0
  %v2951 = vpop.f32.mrb[0].mxu0
  %v2952 = vadd.f32 0.0, %v2951
  %v2953 = vpop.f32.mrb[0].mxu0
  %2954 = vmatprep.mubr.bf16.mxu0 0
  %2955 = vmatmul.mubr.bf16.gmra.mrb[0].mxu0 %v2774
  %v2956 = vpop.f32.mrb[0].mxu0
  %v2957 = vadd.f32 0.0, %v2956
  %v2958 = vpop.f32.mrb[0].mxu0
  %v2959 = vpop.f32.mrb[0].mxu0
  %v2960 = vadd.f32 0.0, %v2959
  %v2961 = vpop.f32.mrb[0].mxu0
  %2962 = vmatprep.mubr.bf16.mxu0 0
  %2963 = vmatmul.mubr.bf16.gmra.mrb[0].mxu0 %v2777
  %v2964 = vpop.f32.mrb[0].mxu0
  %v2965 = vadd.f32 0.0, %v2964
  %v2966 = vpop.f32.mrb[0].mxu0
  %v2967 = vpop.f32.mrb[0].mxu0
  %v2968 = vadd.f32 0.0, %v2967
  %v2969 = vpop.f32.mrb[0].mxu0
  %2970 = vmatprep.mubr.bf16.mxu0 0
  %2971 = vmatmul.mubr.bf16.gmra.mrb[0].mxu0 %v2780
  %v2972 = vpop.f32.mrb[0].mxu0
  %v2973 = vadd.f32 0.0, %v2972
  %v2974 = vpop.f32.mrb[0].mxu0
  %v2975 = vpop.f32.mrb[0].mxu0
  %v2976 = vadd.f32 0.0, %v2975
  %v2977 = vpop.f32.mrb[0].mxu0
  %2978 = vmatprep.mubr.bf16.mxu0 0
  %2979 = vmatmul.mubr.bf16.gmra.mrb[0].mxu0 %v2783
  %v2980 = vpop.f32.mrb[0].mxu0
  %v2981 = vadd.f32 0.0, %v2980
  %v2982 = vpop.f32.mrb[0].mxu0
  %v2983 = vpop.f32.mrb[0].mxu0
  %v2984 = vadd.f32 0.0, %v2983
  %v2985 = vpop.f32.mrb[0].mxu0
  %2986 = vmatprep.mubr.bf16.mxu0 0
  %2987 = vmatmul.mubr.bf16.gmra.mrb[0].mxu0 %v2786
  %v2988 = vpop.f32.mrb[0].mxu0
  %v2989 = vadd.f32 0.0, %v2988
  %v2990 = vpop.f32.mrb[0].mxu0
  %v2991 = vpop.f32.mrb[0].mxu0
  %v2992 = vadd.f32 0.0, %v2991
  %v2993 = vpop.f32.mrb[0].mxu0
  %2994 = vmatprep.mubr.bf16.mxu0 0
  %2995 = vmatmul.mubr.bf16.gmra.mrb[0].mxu0 %v2789
  %v2996 = vpop.f32.mrb[0].mxu0
  %v2997 = vadd.f32 0.0, %v2996
  %v2998 = vpop.f32.mrb[0].mxu0
  %v2999 = vpop.f32.mrb[0].mxu0
  %v3000 = vadd.f32 0.0, %v2999
  %v3001 = vpop.f32.mrb[0].mxu0
  %3002 = vmatprep.mubr.bf16.mxu0 0
  %3003 = vmatmul.mubr.bf16.gmra.mrb[0].mxu0 %v2792
  %v3004 = vpop.f32.mrb[0].mxu0
  %v3005 = vadd.f32 0.0, %v3004
  %v3006 = vpop.f32.mrb[0].mxu0
  %v3007 = vpop.f32.mrb[0].mxu0
  %v3008 = vadd.f32 0.0, %v3007
  %v3009 = vpop.f32.mrb[0].mxu0
  %3010 = vmatprep.mubr.bf16.mxu0 0
  %3011 = vmatmul.mubr.bf16.gmra.mrb[0].mxu0 %v2795
  %v3012 = vpop.f32.mrb[0].mxu0
  %v3013 = vadd.f32 0.0, %v3012
  %v3014 = vpop.f32.mrb[0].mxu0
  %v3015 = vpop.f32.mrb[0].mxu0
  %v3016 = vadd.f32 0.0, %v3015
  %v3017 = vpop.f32.mrb[0].mxu0
  %3018 = vmatprep.mubr.bf16.mxu0 0
  %3019 = vmatmul.mubr.bf16.gmra.mrb[0].mxu0 %v2798
  %v3020 = vpop.f32.mrb[0].mxu0
  %v3021 = vadd.f32 0.0, %v3020
  %v3022 = vpop.f32.mrb[0].mxu0
  %v3023 = vpop.f32.mrb[0].mxu0
  %v3024 = vadd.f32 0.0, %v3023
  %v3025 = vpop.f32.mrb[0].mxu0
  %3026 = vmatprep.mubr.bf16.mxu0 0
  %3027 = vmatmul.mubr.bf16.gmra.mrb[0].mxu0 %v2801
  %v3028 = vpop.f32.mrb[0].mxu0
  %v3029 = vadd.f32 0.0, %v3028
  %v3030 = vpop.f32.mrb[0].mxu0
  %v3031 = vpop.f32.mrb[0].mxu0
  %v3032 = vadd.f32 0.0, %v3031
  %v3033 = vpop.f32.mrb[0].mxu0
  %3034 = vmatprep.mubr.bf16.mxu0 0
  %3035 = vmatmul.mubr.bf16.gmra.mrb[0].mxu0 %v2804
  %v3036 = vpop.f32.mrb[0].mxu0
  %v3037 = vadd.f32 0.0, %v3036
  %v3038 = vpop.f32.mrb[0].mxu0
  %v3039 = vpop.f32.mrb[0].mxu0
  %v3040 = vadd.f32 0.0, %v3039
  %v3041 = vpop.f32.mrb[0].mxu0
  %3042 = vmatprep.mubr.bf16.mxu0 0
  %3043 = vmatmul.mubr.bf16.gmra.mrb[0].mxu0 %v2807
  %v3044 = vpop.f32.mrb[0].mxu0
  %v3045 = vadd.f32 0.0, %v3044
  %v3046 = vpop.f32.mrb[0].mxu0
  %v3047 = vpop.f32.mrb[0].mxu0
  %v3048 = vadd.f32 0.0, %v3047
  %v3049 = vpop.f32.mrb[0].mxu0
  %3050 = vmatprep.mubr.bf16.mxu0 0
  %3051 = vmatmul.mubr.bf16.gmra.mrb[0].mxu0 %v2810
  %v3052 = vpop.f32.mrb[0].mxu0
  %v3053 = vadd.f32 0.0, %v3052
  %v3054 = vpop.f32.mrb[0].mxu0
  %v3055 = vpop.f32.mrb[0].mxu0
  %v3056 = vadd.f32 0.0, %v3055
  %v3057 = vpop.f32.mrb[0].mxu0
  %3058 = vmatprep.mubr.bf16.mxu0 0
  %3059 = vmatmul.mubr.bf16.gmra.mrb[0].mxu0 %v2813
  %v3060 = vpop.f32.mrb[0].mxu0
  %v3061 = vadd.f32 0.0, %v3060
  %v3062 = vpop.f32.mrb[0].mxu0
  %v3063 = vpop.f32.mrb[0].mxu0
  %v3064 = vadd.f32 0.0, %v3063
  %v3065 = vpop.f32.mrb[0].mxu0
  %3066 = vmatprep.mubr.bf16.mxu0 0
  %3067 = vmatmul.mubr.bf16.gmra.mrb[0].mxu0 %v2816
  %v3068 = vpop.f32.mrb[0].mxu0
  %v3069 = vadd.f32 0.0, %v3068
  %v3070 = vpop.f32.mrb[0].mxu0
  %v3071 = vpop.f32.mrb[0].mxu0
  %v3072 = vadd.f32 0.0, %v3071
  %v3073 = vpop.f32.mrb[0].mxu0
  %3074 = vmatprep.mubr.bf16.mxu0 0
  %3075 = vmatmul.mubr.bf16.gmra.mrb[0].mxu0 %v2819
  %v3076 = vpop.f32.mrb[0].mxu0
  %v3077 = vadd.f32 0.0, %v3076
  %v3078 = vpop.f32.mrb[0].mxu0
  %v3079 = vpop.f32.mrb[0].mxu0
  %v3080 = vadd.f32 0.0, %v3079
  %v3081 = vpop.f32.mrb[0].mxu0
  %3082 = vmatprep.mubr.bf16.mxu0 0
  %3083 = vmatmul.mubr.bf16.gmra.mrb[0].mxu0 %v2822
  %v3084 = vpop.f32.mrb[0].mxu0
  %v3085 = vadd.f32 0.0, %v3084
  %v3086 = vpop.f32.mrb[0].mxu0
  %v3087 = vpop.f32.mrb[0].mxu0
  %v3088 = vadd.f32 0.0, %v3087
  %v3089 = vpop.f32.mrb[0].mxu0
  %3090 = vmatprep.mubr.bf16.mxu0 0
  %3091 = vmatmul.mubr.bf16.gmra.mrb[0].mxu0 %v2825
  %v3092 = vpop.f32.mrb[0].mxu0
  %v3093 = vadd.f32 0.0, %v3092
  %v3094 = vpop.f32.mrb[0].mxu0
  %v3095 = vpop.f32.mrb[0].mxu0
  %v3096 = vadd.f32 0.0, %v3095
  %v3097 = vpop.f32.mrb[0].mxu0
  %3098 = vmatprep.mubr.bf16.mxu0 0
  %3099 = vmatmul.mubr.bf16.gmra.mrb[0].mxu0 %v2828
  %v3100 = vpop.f32.mrb[0].mxu0
  %v3101 = vadd.f32 0.0, %v3100
  %v3102 = vpop.f32.mrb[0].mxu0
  %v3103 = vpop.f32.mrb[0].mxu0
  %v3104 = vadd.f32 0.0, %v3103
  %v3105 = vpop.f32.mrb[0].mxu0
  %3106 = vmatprep.mubr.bf16.mxu0 0
  %3107 = vmatmul.mubr.bf16.gmra.mrb[0].mxu0 %v2831
  %v3108 = vpop.f32.mrb[0].mxu0
  %v3109 = vadd.f32 0.0, %v3108
  %v3110 = vpop.f32.mrb[0].mxu0
  %v3111 = vpop.f32.mrb[0].mxu0
  %v3112 = vadd.f32 0.0, %v3111
  %v3113 = vpop.f32.mrb[0].mxu0
  %3114 = vmatprep.mubr.bf16.mxu0 0
  %3115 = vmatmul.mubr.bf16.gmra.mrb[0].mxu0 %v2834
  %v3116 = vpop.f32.mrb[0].mxu0
  %v3117 = vadd.f32 0.0, %v3116
  %v3118 = vpop.f32.mrb[0].mxu0
  %v3119 = vpop.f32.mrb[0].mxu0
  %v3120 = vadd.f32 0.0, %v3119
  %v3121 = vpop.f32.mrb[0].mxu0
  %3122 = vmatprep.mubr.bf16.mxu0 0
  %3123 = vmatmul.mubr.bf16.gmra.mrb[0].mxu0 %v2837
  %v3124 = vpop.f32.mrb[0].mxu0
  %v3125 = vadd.f32 0.0, %v3124
  %v3126 = vpop.f32.mrb[0].mxu0
  %v3127 = vpop.f32.mrb[0].mxu0
  %v3128 = vadd.f32 0.0, %v3127
  %v3129 = vpop.f32.mrb[0].mxu0
  %3130 = vdwg.mxu0
  %v3131 = vadd.f32 %v2581, %v2877
  %v3132 = vadd.f32 %v2582, %v2880
  %v3133 = vadd.f32 %v2583, %v2885
  %v3134 = vadd.f32 %v2584, %v2888
  %v3135 = vadd.f32 %v2585, %v2893
  %v3136 = vadd.f32 %v2586, %v2896
  %v3137 = vadd.f32 %v2587, %v2901
  %v3138 = vadd.f32 %v2588, %v2904
  %v3139 = vadd.f32 %v2589, %v2909
  %v3140 = vadd.f32 %v2590, %v2912
  %v3141 = vadd.f32 %v2591, %v2917
  %v3142 = vadd.f32 %v2592, %v2920
  %v3143 = vadd.f32 %v2593, %v2925
  %v3144 = vadd.f32 %v2594, %v2928
  %v3145 = vadd.f32 %v2595, %v2933
  %v3146 = vadd.f32 %v2596, %v2936
  %v3147 = vadd.f32 %v2597, %v2941
  %v3148 = vadd.f32 %v2598, %v2944
  %v3149 = vadd.f32 %v2599, %v2949
  %v3150 = vadd.f32 %v2600, %v2952
  %v3151 = vadd.f32 %v2601, %v2957
  %v3152 = vadd.f32 %v2602, %v2960
  %v3153 = vadd.f32 %v2603, %v2965
  %v3154 = vadd.f32 %v2604, %v2968
  %v3155 = vadd.f32 %v2605, %v2973
  %v3156 = vadd.f32 %v2606, %v2976
  %v3157 = vadd.f32 %v2607, %v2981
  %v3158 = vadd.f32 %v2608, %v2984
  %v3159 = vadd.f32 %v2609, %v2989
  %v3160 = vadd.f32 %v2610, %v2992
  %v3161 = vadd.f32 %v2611, %v2997
  %v3162 = vadd.f32 %v2612, %v3000
  %v3163 = vadd.f32 %v2613, %v3005
  %v3164 = vadd.f32 %v2614, %v3008
  %v3165 = vadd.f32 %v2615, %v3013
  %v3166 = vadd.f32 %v2616, %v3016
  %v3167 = vadd.f32 %v2617, %v3021
  %v3168 = vadd.f32 %v2618, %v3024
  %v3169 = vadd.f32 %v2619, %v3029
  %v3170 = vadd.f32 %v2620, %v3032
  %v3171 = vadd.f32 %v2621, %v3037
  %v3172 = vadd.f32 %v2622, %v3040
  %v3173 = vadd.f32 %v2623, %v3045
  %v3174 = vadd.f32 %v2624, %v3048
  %v3175 = vadd.f32 %v2625, %v3053
  %v3176 = vadd.f32 %v2626, %v3056
  %v3177 = vadd.f32 %v2627, %v3061
  %v3178 = vadd.f32 %v2628, %v3064
  %v3179 = vadd.f32 %v2629, %v3069
  %v3180 = vadd.f32 %v2630, %v3072
  %v3181 = vadd.f32 %v2631, %v3077
  %v3182 = vadd.f32 %v2632, %v3080
  %v3183 = vadd.f32 %v2633, %v3085
  %v3184 = vadd.f32 %v2634, %v3088
  %v3185 = vadd.f32 %v2635, %v3093
  %v3186 = vadd.f32 %v2636, %v3096
  %v3187 = vadd.f32 %v2637, %v3101
  %v3188 = vadd.f32 %v2638, %v3104
  %v3189 = vadd.f32 %v2639, %v3109
  %v3190 = vadd.f32 %v2640, %v3112
  %v3191 = vadd.f32 %v2641, %v3117
  %v3192 = vadd.f32 %v2642, %v3120
  %v3193 = vadd.f32 %v2643, %v3125
  %v3194 = vadd.f32 %v2644, %v3128
  %s3195 = scalar_lea.vmem %s0, 48
  %v3196 = vld [vmem:[%s3195] sm:$0xff]
  %v3197 = vld [vmem:[%s3195 + $0x8] sm:$0xff]
  %v3198 = vld [vmem:[%s3195 + $0x18] sm:$0xff]
  %v3199 = vld [vmem:[%s3195 + $0x20] sm:$0xff]
  %v3200 = vld [vmem:[%s3195 + $0x30] sm:$0xff]
  %v3201 = vld [vmem:[%s3195 + $0x38] sm:$0xff]
  %v3202 = vld [vmem:[%s3195 + $0x48] sm:$0xff]
  %v3203 = vld [vmem:[%s3195 + $0x50] sm:$0xff]
  %v3204 = vld [vmem:[%s3195 + $0x60] sm:$0xff]
  %v3205 = vld [vmem:[%s3195 + $0x68] sm:$0xff]
  %v3206 = vld [vmem:[%s3195 + $0x78] sm:$0xff]
  %v3207 = vld [vmem:[%s3195 + $0x80] sm:$0xff]
  %v3208 = vld [vmem:[%s3195 + $0x90] sm:$0xff]
  %v3209 = vld [vmem:[%s3195 + $0x98] sm:$0xff]
  %v3210 = vld [vmem:[%s3195 + $0xa8] sm:$0xff]
  %v3211 = vld [vmem:[%s3195 + $0xb0] sm:$0xff]
  %v3212 = vld [vmem:[%s3195 + $0xc0] sm:$0xff]
  %v3213 = vld [vmem:[%s3195 + $0xc8] sm:$0xff]
  %v3214 = vld [vmem:[%s3195 + $0xd8] sm:$0xff]
  %v3215 = vld [vmem:[%s3195 + $0xe0] sm:$0xff]
  %v3216 = vld [vmem:[%s3195 + $0xf0] sm:$0xff]
  %v3217 = vld [vmem:[%s3195 + $0xf8] sm:$0xff]
  %v3218 = vld [vmem:[%s3195 + $0x108] sm:$0xff]
  %v3219 = vld [vmem:[%s3195 + $0x110] sm:$0xff]
  %v3220 = vld [vmem:[%s3195 + $0x120] sm:$0xff]
  %v3221 = vld [vmem:[%s3195 + $0x128] sm:$0xff]
  %v3222 = vld [vmem:[%s3195 + $0x138] sm:$0xff]
  %v3223 = vld [vmem:[%s3195 + $0x140] sm:$0xff]
  %v3224 = vld [vmem:[%s3195 + $0x150] sm:$0xff]
  %v3225 = vld [vmem:[%s3195 + $0x158] sm:$0xff]
  %v3226 = vld [vmem:[%s3195 + $0x168] sm:$0xff]
  %v3227 = vld [vmem:[%s3195 + $0x170] sm:$0xff]
  %v3228 = vld [vmem:[%s3195 + $0x1b0] sm:$0xff]
  %v3229 = vld [vmem:[%s3195 + $0x1b8] sm:$0xff]
  %v3230 = vld [vmem:[%s3195 + $0x1c8] sm:$0xff]
  %v3231 = vld [vmem:[%s3195 + $0x1d0] sm:$0xff]
  %v3232 = vld [vmem:[%s3195 + $0x1e0] sm:$0xff]
  %v3233 = vld [vmem:[%s3195 + $0x1e8] sm:$0xff]
  %v3234 = vld [vmem:[%s3195 + $0x1f8] sm:$0xff]
  %v3235 = vld [vmem:[%s3195 + $0x200] sm:$0xff]
  %v3236 = vld [vmem:[%s3195 + $0x210] sm:$0xff]
  %v3237 = vld [vmem:[%s3195 + $0x218] sm:$0xff]
  %v3238 = vld [vmem:[%s3195 + $0x228] sm:$0xff]
  %v3239 = vld [vmem:[%s3195 + $0x230] sm:$0xff]
  %v3240 = vld [vmem:[%s3195 + $0x240] sm:$0xff]
  %v3241 = vld [vmem:[%s3195 + $0x248] sm:$0xff]
  %v3242 = vld [vmem:[%s3195 + $0x258] sm:$0xff]
  %v3243 = vld [vmem:[%s3195 + $0x260] sm:$0xff]
  %v3244 = vld [vmem:[%s3195 + $0x270] sm:$0xff]
  %v3245 = vld [vmem:[%s3195 + $0x278] sm:$0xff]
  %v3246 = vld [vmem:[%s3195 + $0x288] sm:$0xff]
  %v3247 = vld [vmem:[%s3195 + $0x290] sm:$0xff]
  %v3248 = vld [vmem:[%s3195 + $0x2a0] sm:$0xff]
  %v3249 = vld [vmem:[%s3195 + $0x2a8] sm:$0xff]
  %v3250 = vld [vmem:[%s3195 + $0x2b8] sm:$0xff]
  %v3251 = vld [vmem:[%s3195 + $0x2c0] sm:$0xff]
  %v3252 = vld [vmem:[%s3195 + $0x2d0] sm:$0xff]
  %v3253 = vld [vmem:[%s3195 + $0x2d8] sm:$0xff]
  %v3254 = vld [vmem:[%s3195 + $0x2e8] sm:$0xff]
  %v3255 = vld [vmem:[%s3195 + $0x2f0] sm:$0xff]
  %v3256 = vld [vmem:[%s3195 + $0x300] sm:$0xff]
  %v3257 = vld [vmem:[%s3195 + $0x308] sm:$0xff]
  %v3258 = vld [vmem:[%s3195 + $0x318] sm:$0xff]
  %v3259 = vld [vmem:[%s3195 + $0x320] sm:$0xff]
  %v3260 = vpack.c.bf16 %v3197, %v3196
  %v3261 = vpack.c.bf16 %v3199, %v3198
  %v3262 = vpack.c.bf16 %v3201, %v3200
  %v3263 = vpack.c.bf16 %v3203, %v3202
  %v3264 = vpack.c.bf16 %v3205, %v3204
  %v3265 = vpack.c.bf16 %v3207, %v3206
  %v3266 = vpack.c.bf16 %v3209, %v3208
  %v3267 = vpack.c.bf16 %v3211, %v3210
  %v3268 = vpack.c.bf16 %v3213, %v3212
  %v3269 = vpack.c.bf16 %v3215, %v3214
  %v3270 = vpack.c.bf16 %v3217, %v3216
  %v3271 = vpack.c.bf16 %v3219, %v3218
  %v3272 = vpack.c.bf16 %v3221, %v3220
  %v3273 = vpack.c.bf16 %v3223, %v3222
  %v3274 = vpack.c.bf16 %v3225, %v3224
  %v3275 = vpack.c.bf16 %v3227, %v3226
  %v3276 = vpack.c.bf16 %v3229, %v3228
  %v3277 = vpack.c.bf16 %v3231, %v3230
  %v3278 = vpack.c.bf16 %v3233, %v3232
  %v3279 = vpack.c.bf16 %v3235, %v3234
  %v3280 = vpack.c.bf16 %v3237, %v3236
  %v3281 = vpack.c.bf16 %v3239, %v3238
  %v3282 = vpack.c.bf16 %v3241, %v3240
  %v3283 = vpack.c.bf16 %v3243, %v3242
  %v3284 = vpack.c.bf16 %v3245, %v3244
  %v3285 = vpack.c.bf16 %v3247, %v3246
  %v3286 = vpack.c.bf16 %v3249, %v3248
  %v3287 = vpack.c.bf16 %v3251, %v3250
  %v3288 = vpack.c.bf16 %v3253, %v3252
  %v3289 = vpack.c.bf16 %v3255, %v3254
  %v3290 = vpack.c.bf16 %v3257, %v3256
  %v3291 = vpack.c.bf16 %v3259, %v3258
  %s3292 = scalar_lea.vmem %s1, 12
  %v3293 = vld [vmem:[%s3292] sm:$0x3]
  %v3295 = vsel %vm216, %v3260, 0
  %v3298 = vsel %vm216, %v3261, 0
  %v3301 = vsel %vm216, %v3262, 0
  %v3304 = vsel %vm216, %v3263, 0
  %v3307 = vsel %vm216, %v3264, 0
  %v3310 = vsel %vm216, %v3265, 0
  %v3313 = vsel %vm216, %v3266, 0
  %v3316 = vsel %vm216, %v3267, 0
  %v3319 = vsel %vm216, %v3268, 0
  %v3322 = vsel %vm216, %v3269, 0
  %v3325 = vsel %vm216, %v3270, 0
  %v3328 = vsel %vm216, %v3271, 0
  %v3331 = vsel %vm216, %v3272, 0
  %v3334 = vsel %vm216, %v3273, 0
  %v3337 = vsel %vm216, %v3274, 0
  %v3340 = vsel %vm216, %v3275, 0
  %v3343 = vsel %vm216, %v3276, 0
  %v3346 = vsel %vm216, %v3277, 0
  %v3349 = vsel %vm216, %v3278, 0
  %v3352 = vsel %vm216, %v3279, 0
  %v3355 = vsel %vm216, %v3280, 0
  %v3358 = vsel %vm216, %v3281, 0
  %v3361 = vsel %vm216, %v3282, 0
  %v3364 = vsel %vm216, %v3283, 0
  %v3367 = vsel %vm216, %v3284, 0
  %v3370 = vsel %vm216, %v3285, 0
  %v3373 = vsel %vm216, %v3286, 0
  %v3376 = vsel %vm216, %v3287, 0
  %v3379 = vsel %vm216, %v3288, 0
  %v3382 = vsel %vm216, %v3289, 0
  %v3385 = vsel %vm216, %v3290, 0
  %v3388 = vsel %vm216, %v3291, 0
  %v3391 = vsel %vm313, %v3293, 0
  %3393 = vmatprep.subr.bf16.mxu0 0
  %3394 = vmatpush1.bf16.msra.mxu0 %v3391
  %3395 = vmatprep.subr.bf16.mxu0 0
  %3396 = vmatpush1.bf16.msra.mxu0 0
  %3397 = vmatprep.subr.bf16.mxu0 0
  %3398 = vmatpush1.bf16.msra.mxu0 0
  %3399 = vmatprep.subr.bf16.mxu0 0
  %3400 = vmatpush1.bf16.msra.mxu0 0
  %3401 = vmatprep.subr.bf16.mxu0 0
  %3402 = vmatpush1.bf16.msra.mxu0 0
  %3403 = vmatprep.subr.bf16.mxu0 0
  %3404 = vmatpush1.bf16.msra.mxu0 0
  %3405 = vmatprep.subr.bf16.mxu0 0
  %3406 = vmatpush1.bf16.msra.mxu0 0
  %3407 = vmatprep.subr.bf16.mxu0 0
  %3408 = vmatpush1.bf16.msra.mxu0 0
  %3409 = vmatprep.subr.bf16.mxu0 0
  %3410 = vmatpush1.bf16.msra.mxu0 0
  %3411 = vmatprep.subr.bf16.mxu0 0
  %3412 = vmatpush1.bf16.msra.mxu0 0
  %3413 = vmatprep.subr.bf16.mxu0 0
  %3414 = vmatpush1.bf16.msra.mxu0 0
  %3415 = vmatprep.subr.bf16.mxu0 0
  %3416 = vmatpush1.bf16.msra.mxu0 0
  %3417 = vmatprep.subr.bf16.mxu0 0
  %3418 = vmatpush1.bf16.msra.mxu0 0
  %3419 = vmatprep.subr.bf16.mxu0 0
  %3420 = vmatpush1.bf16.msra.mxu0 0
  %3421 = vmatprep.subr.bf16.mxu0 0
  %3422 = vmatpush1.bf16.msra.mxu0 0
  %3423 = vmatprep.subr.bf16.mxu0 0
  %3424 = vmatpush1.bf16.msra.mxu0 0
  %3425 = vmatprep.mubr.bf16.mxu0 0
  %3426 = vmatmul.mubr.bf16.gmra.mrb[0].mxu0 %v3295
  %v3427 = vpop.f32.mrb[0].mxu0
  %v3428 = vadd.f32 0.0, %v3427
  %v3429 = vpop.f32.mrb[0].mxu0
  %v3430 = vpop.f32.mrb[0].mxu0
  %v3431 = vadd.f32 0.0, %v3430
  %v3432 = vpop.f32.mrb[0].mxu0
  %3433 = vmatprep.mubr.bf16.mxu0 0
  %3434 = vmatmul.mubr.bf16.gmra.mrb[0].mxu0 %v3298
  %v3435 = vpop.f32.mrb[0].mxu0
  %v3436 = vadd.f32 0.0, %v3435
  %v3437 = vpop.f32.mrb[0].mxu0
  %v3438 = vpop.f32.mrb[0].mxu0
  %v3439 = vadd.f32 0.0, %v3438
  %v3440 = vpop.f32.mrb[0].mxu0
  %3441 = vmatprep.mubr.bf16.mxu0 0
  %3442 = vmatmul.mubr.bf16.gmra.mrb[0].mxu0 %v3301
  %v3443 = vpop.f32.mrb[0].mxu0
  %v3444 = vadd.f32 0.0, %v3443
  %v3445 = vpop.f32.mrb[0].mxu0
  %v3446 = vpop.f32.mrb[0].mxu0
  %v3447 = vadd.f32 0.0, %v3446
  %v3448 = vpop.f32.mrb[0].mxu0
  %3449 = vmatprep.mubr.bf16.mxu0 0
  %3450 = vmatmul.mubr.bf16.gmra.mrb[0].mxu0 %v3304
  %v3451 = vpop.f32.mrb[0].mxu0
  %v3452 = vadd.f32 0.0, %v3451
  %v3453 = vpop.f32.mrb[0].mxu0
  %v3454 = vpop.f32.mrb[0].mxu0
  %v3455 = vadd.f32 0.0, %v3454
  %v3456 = vpop.f32.mrb[0].mxu0
  %3457 = vmatprep.mubr.bf16.mxu0 0
  %3458 = vmatmul.mubr.bf16.gmra.mrb[0].mxu0 %v3307
  %v3459 = vpop.f32.mrb[0].mxu0
  %v3460 = vadd.f32 0.0, %v3459
  %v3461 = vpop.f32.mrb[0].mxu0
  %v3462 = vpop.f32.mrb[0].mxu0
  %v3463 = vadd.f32 0.0, %v3462
  %v3464 = vpop.f32.mrb[0].mxu0
  %3465 = vmatprep.mubr.bf16.mxu0 0
  %3466 = vmatmul.mubr.bf16.gmra.mrb[0].mxu0 %v3310
  %v3467 = vpop.f32.mrb[0].mxu0
  %v3468 = vadd.f32 0.0, %v3467
  %v3469 = vpop.f32.mrb[0].mxu0
  %v3470 = vpop.f32.mrb[0].mxu0
  %v3471 = vadd.f32 0.0, %v3470
  %v3472 = vpop.f32.mrb[0].mxu0
  %3473 = vmatprep.mubr.bf16.mxu0 0
  %3474 = vmatmul.mubr.bf16.gmra.mrb[0].mxu0 %v3313
  %v3475 = vpop.f32.mrb[0].mxu0
  %v3476 = vadd.f32 0.0, %v3475
  %v3477 = vpop.f32.mrb[0].mxu0
  %v3478 = vpop.f32.mrb[0].mxu0
  %v3479 = vadd.f32 0.0, %v3478
  %v3480 = vpop.f32.mrb[0].mxu0
  %3481 = vmatprep.mubr.bf16.mxu0 0
  %3482 = vmatmul.mubr.bf16.gmra.mrb[0].mxu0 %v3316
  %v3483 = vpop.f32.mrb[0].mxu0
  %v3484 = vadd.f32 0.0, %v3483
  %v3485 = vpop.f32.mrb[0].mxu0
  %v3486 = vpop.f32.mrb[0].mxu0
  %v3487 = vadd.f32 0.0, %v3486
  %v3488 = vpop.f32.mrb[0].mxu0
  %3489 = vmatprep.mubr.bf16.mxu0 0
  %3490 = vmatmul.mubr.bf16.gmra.mrb[0].mxu0 %v3319
  %v3491 = vpop.f32.mrb[0].mxu0
  %v3492 = vadd.f32 0.0, %v3491
  %v3493 = vpop.f32.mrb[0].mxu0
  %v3494 = vpop.f32.mrb[0].mxu0
  %v3495 = vadd.f32 0.0, %v3494
  %v3496 = vpop.f32.mrb[0].mxu0
  %3497 = vmatprep.mubr.bf16.mxu0 0
  %3498 = vmatmul.mubr.bf16.gmra.mrb[0].mxu0 %v3322
  %v3499 = vpop.f32.mrb[0].mxu0
  %v3500 = vadd.f32 0.0, %v3499
  %v3501 = vpop.f32.mrb[0].mxu0
  %v3502 = vpop.f32.mrb[0].mxu0
  %v3503 = vadd.f32 0.0, %v3502
  %v3504 = vpop.f32.mrb[0].mxu0
  %3505 = vmatprep.mubr.bf16.mxu0 0
  %3506 = vmatmul.mubr.bf16.gmra.mrb[0].mxu0 %v3325
  %v3507 = vpop.f32.mrb[0].mxu0
  %v3508 = vadd.f32 0.0, %v3507
  %v3509 = vpop.f32.mrb[0].mxu0
  %v3510 = vpop.f32.mrb[0].mxu0
  %v3511 = vadd.f32 0.0, %v3510
  %v3512 = vpop.f32.mrb[0].mxu0
  %3513 = vmatprep.mubr.bf16.mxu0 0
  %3514 = vmatmul.mubr.bf16.gmra.mrb[0].mxu0 %v3328
  %v3515 = vpop.f32.mrb[0].mxu0
  %v3516 = vadd.f32 0.0, %v3515
  %v3517 = vpop.f32.mrb[0].mxu0
  %v3518 = vpop.f32.mrb[0].mxu0
  %v3519 = vadd.f32 0.0, %v3518
  %v3520 = vpop.f32.mrb[0].mxu0
  %3521 = vmatprep.mubr.bf16.mxu0 0
  %3522 = vmatmul.mubr.bf16.gmra.mrb[0].mxu0 %v3331
  %v3523 = vpop.f32.mrb[0].mxu0
  %v3524 = vadd.f32 0.0, %v3523
  %v3525 = vpop.f32.mrb[0].mxu0
  %v3526 = vpop.f32.mrb[0].mxu0
  %v3527 = vadd.f32 0.0, %v3526
  %v3528 = vpop.f32.mrb[0].mxu0
  %3529 = vmatprep.mubr.bf16.mxu0 0
  %3530 = vmatmul.mubr.bf16.gmra.mrb[0].mxu0 %v3334
  %v3531 = vpop.f32.mrb[0].mxu0
  %v3532 = vadd.f32 0.0, %v3531
  %v3533 = vpop.f32.mrb[0].mxu0
  %v3534 = vpop.f32.mrb[0].mxu0
  %v3535 = vadd.f32 0.0, %v3534
  %v3536 = vpop.f32.mrb[0].mxu0
  %3537 = vmatprep.mubr.bf16.mxu0 0
  %3538 = vmatmul.mubr.bf16.gmra.mrb[0].mxu0 %v3337
  %v3539 = vpop.f32.mrb[0].mxu0
  %v3540 = vadd.f32 0.0, %v3539
  %v3541 = vpop.f32.mrb[0].mxu0
  %v3542 = vpop.f32.mrb[0].mxu0
  %v3543 = vadd.f32 0.0, %v3542
  %v3544 = vpop.f32.mrb[0].mxu0
  %3545 = vmatprep.mubr.bf16.mxu0 0
  %3546 = vmatmul.mubr.bf16.gmra.mrb[0].mxu0 %v3340
  %v3547 = vpop.f32.mrb[0].mxu0
  %v3548 = vadd.f32 0.0, %v3547
  %v3549 = vpop.f32.mrb[0].mxu0
  %v3550 = vpop.f32.mrb[0].mxu0
  %v3551 = vadd.f32 0.0, %v3550
  %v3552 = vpop.f32.mrb[0].mxu0
  %3553 = vmatprep.mubr.bf16.mxu0 0
  %3554 = vmatmul.mubr.bf16.gmra.mrb[0].mxu0 %v3343
  %v3555 = vpop.f32.mrb[0].mxu0
  %v3556 = vadd.f32 0.0, %v3555
  %v3557 = vpop.f32.mrb[0].mxu0
  %v3558 = vpop.f32.mrb[0].mxu0
  %v3559 = vadd.f32 0.0, %v3558
  %v3560 = vpop.f32.mrb[0].mxu0
  %3561 = vmatprep.mubr.bf16.mxu0 0
  %3562 = vmatmul.mubr.bf16.gmra.mrb[0].mxu0 %v3346
  %v3563 = vpop.f32.mrb[0].mxu0
  %v3564 = vadd.f32 0.0, %v3563
  %v3565 = vpop.f32.mrb[0].mxu0
  %v3566 = vpop.f32.mrb[0].mxu0
  %v3567 = vadd.f32 0.0, %v3566
  %v3568 = vpop.f32.mrb[0].mxu0
  %3569 = vmatprep.mubr.bf16.mxu0 0
  %3570 = vmatmul.mubr.bf16.gmra.mrb[0].mxu0 %v3349
  %v3571 = vpop.f32.mrb[0].mxu0
  %v3572 = vadd.f32 0.0, %v3571
  %v3573 = vpop.f32.mrb[0].mxu0
  %v3574 = vpop.f32.mrb[0].mxu0
  %v3575 = vadd.f32 0.0, %v3574
  %v3576 = vpop.f32.mrb[0].mxu0
  %3577 = vmatprep.mubr.bf16.mxu0 0
  %3578 = vmatmul.mubr.bf16.gmra.mrb[0].mxu0 %v3352
  %v3579 = vpop.f32.mrb[0].mxu0
  %v3580 = vadd.f32 0.0, %v3579
  %v3581 = vpop.f32.mrb[0].mxu0
  %v3582 = vpop.f32.mrb[0].mxu0
  %v3583 = vadd.f32 0.0, %v3582
  %v3584 = vpop.f32.mrb[0].mxu0
  %3585 = vmatprep.mubr.bf16.mxu0 0
  %3586 = vmatmul.mubr.bf16.gmra.mrb[0].mxu0 %v3355
  %v3587 = vpop.f32.mrb[0].mxu0
  %v3588 = vadd.f32 0.0, %v3587
  %v3589 = vpop.f32.mrb[0].mxu0
  %v3590 = vpop.f32.mrb[0].mxu0
  %v3591 = vadd.f32 0.0, %v3590
  %v3592 = vpop.f32.mrb[0].mxu0
  %3593 = vmatprep.mubr.bf16.mxu0 0
  %3594 = vmatmul.mubr.bf16.gmra.mrb[0].mxu0 %v3358
  %v3595 = vpop.f32.mrb[0].mxu0
  %v3596 = vadd.f32 0.0, %v3595
  %v3597 = vpop.f32.mrb[0].mxu0
  %v3598 = vpop.f32.mrb[0].mxu0
  %v3599 = vadd.f32 0.0, %v3598
  %v3600 = vpop.f32.mrb[0].mxu0
  %3601 = vmatprep.mubr.bf16.mxu0 0
  %3602 = vmatmul.mubr.bf16.gmra.mrb[0].mxu0 %v3361
  %v3603 = vpop.f32.mrb[0].mxu0
  %v3604 = vadd.f32 0.0, %v3603
  %v3605 = vpop.f32.mrb[0].mxu0
  %v3606 = vpop.f32.mrb[0].mxu0
  %v3607 = vadd.f32 0.0, %v3606
  %v3608 = vpop.f32.mrb[0].mxu0
  %3609 = vmatprep.mubr.bf16.mxu0 0
  %3610 = vmatmul.mubr.bf16.gmra.mrb[0].mxu0 %v3364
  %v3611 = vpop.f32.mrb[0].mxu0
  %v3612 = vadd.f32 0.0, %v3611
  %v3613 = vpop.f32.mrb[0].mxu0
  %v3614 = vpop.f32.mrb[0].mxu0
  %v3615 = vadd.f32 0.0, %v3614
  %v3616 = vpop.f32.mrb[0].mxu0
  %3617 = vmatprep.mubr.bf16.mxu0 0
  %3618 = vmatmul.mubr.bf16.gmra.mrb[0].mxu0 %v3367
  %v3619 = vpop.f32.mrb[0].mxu0
  %v3620 = vadd.f32 0.0, %v3619
  %v3621 = vpop.f32.mrb[0].mxu0
  %v3622 = vpop.f32.mrb[0].mxu0
  %v3623 = vadd.f32 0.0, %v3622
  %v3624 = vpop.f32.mrb[0].mxu0
  %3625 = vmatprep.mubr.bf16.mxu0 0
  %3626 = vmatmul.mubr.bf16.gmra.mrb[0].mxu0 %v3370
  %v3627 = vpop.f32.mrb[0].mxu0
  %v3628 = vadd.f32 0.0, %v3627
  %v3629 = vpop.f32.mrb[0].mxu0
  %v3630 = vpop.f32.mrb[0].mxu0
  %v3631 = vadd.f32 0.0, %v3630
  %v3632 = vpop.f32.mrb[0].mxu0
  %3633 = vmatprep.mubr.bf16.mxu0 0
  %3634 = vmatmul.mubr.bf16.gmra.mrb[0].mxu0 %v3373
  %v3635 = vpop.f32.mrb[0].mxu0
  %v3636 = vadd.f32 0.0, %v3635
  %v3637 = vpop.f32.mrb[0].mxu0
  %v3638 = vpop.f32.mrb[0].mxu0
  %v3639 = vadd.f32 0.0, %v3638
  %v3640 = vpop.f32.mrb[0].mxu0
  %3641 = vmatprep.mubr.bf16.mxu0 0
  %3642 = vmatmul.mubr.bf16.gmra.mrb[0].mxu0 %v3376
  %v3643 = vpop.f32.mrb[0].mxu0
  %v3644 = vadd.f32 0.0, %v3643
  %v3645 = vpop.f32.mrb[0].mxu0
  %v3646 = vpop.f32.mrb[0].mxu0
  %v3647 = vadd.f32 0.0, %v3646
  %v3648 = vpop.f32.mrb[0].mxu0
  %3649 = vmatprep.mubr.bf16.mxu0 0
  %3650 = vmatmul.mubr.bf16.gmra.mrb[0].mxu0 %v3379
  %v3651 = vpop.f32.mrb[0].mxu0
  %v3652 = vadd.f32 0.0, %v3651
  %v3653 = vpop.f32.mrb[0].mxu0
  %v3654 = vpop.f32.mrb[0].mxu0
  %v3655 = vadd.f32 0.0, %v3654
  %v3656 = vpop.f32.mrb[0].mxu0
  %3657 = vmatprep.mubr.bf16.mxu0 0
  %3658 = vmatmul.mubr.bf16.gmra.mrb[0].mxu0 %v3382
  %v3659 = vpop.f32.mrb[0].mxu0
  %v3660 = vadd.f32 0.0, %v3659
  %v3661 = vpop.f32.mrb[0].mxu0
  %v3662 = vpop.f32.mrb[0].mxu0
  %v3663 = vadd.f32 0.0, %v3662
  %v3664 = vpop.f32.mrb[0].mxu0
  %3665 = vmatprep.mubr.bf16.mxu0 0
  %3666 = vmatmul.mubr.bf16.gmra.mrb[0].mxu0 %v3385
  %v3667 = vpop.f32.mrb[0].mxu0
  %v3668 = vadd.f32 0.0, %v3667
  %v3669 = vpop.f32.mrb[0].mxu0
  %v3670 = vpop.f32.mrb[0].mxu0
  %v3671 = vadd.f32 0.0, %v3670
  %v3672 = vpop.f32.mrb[0].mxu0
  %3673 = vmatprep.mubr.bf16.mxu0 0
  %3674 = vmatmul.mubr.bf16.gmra.mrb[0].mxu0 %v3388
  %v3675 = vpop.f32.mrb[0].mxu0
  %v3676 = vadd.f32 0.0, %v3675
  %v3677 = vpop.f32.mrb[0].mxu0
  %v3678 = vpop.f32.mrb[0].mxu0
  %v3679 = vadd.f32 0.0, %v3678
  %v3680 = vpop.f32.mrb[0].mxu0
  %3681 = vdwg.mxu0
  %v3682 = vadd.f32 %v3131, %v3428
  %v3683 = vadd.f32 %v3132, %v3431
  %v3684 = vadd.f32 %v3133, %v3436
  %v3685 = vadd.f32 %v3134, %v3439
  %v3686 = vadd.f32 %v3135, %v3444
  %v3687 = vadd.f32 %v3136, %v3447
  %v3688 = vadd.f32 %v3137, %v3452
  %v3689 = vadd.f32 %v3138, %v3455
  %v3690 = vadd.f32 %v3139, %v3460
  %v3691 = vadd.f32 %v3140, %v3463
  %v3692 = vadd.f32 %v3141, %v3468
  %v3693 = vadd.f32 %v3142, %v3471
  %v3694 = vadd.f32 %v3143, %v3476
  %v3695 = vadd.f32 %v3144, %v3479
  %v3696 = vadd.f32 %v3145, %v3484
  %v3697 = vadd.f32 %v3146, %v3487
  %v3698 = vadd.f32 %v3147, %v3492
  %v3699 = vadd.f32 %v3148, %v3495
  %v3700 = vadd.f32 %v3149, %v3500
  %v3701 = vadd.f32 %v3150, %v3503
  %v3702 = vadd.f32 %v3151, %v3508
  %v3703 = vadd.f32 %v3152, %v3511
  %v3704 = vadd.f32 %v3153, %v3516
  %v3705 = vadd.f32 %v3154, %v3519
  %v3706 = vadd.f32 %v3155, %v3524
  %v3707 = vadd.f32 %v3156, %v3527
  %v3708 = vadd.f32 %v3157, %v3532
  %v3709 = vadd.f32 %v3158, %v3535
  %v3710 = vadd.f32 %v3159, %v3540
  %v3711 = vadd.f32 %v3160, %v3543
  %v3712 = vadd.f32 %v3161, %v3548
  %v3713 = vadd.f32 %v3162, %v3551
  %v3714 = vadd.f32 %v3163, %v3556
  %v3715 = vadd.f32 %v3164, %v3559
  %v3716 = vadd.f32 %v3165, %v3564
  %v3717 = vadd.f32 %v3166, %v3567
  %v3718 = vadd.f32 %v3167, %v3572
  %v3719 = vadd.f32 %v3168, %v3575
  %v3720 = vadd.f32 %v3169, %v3580
  %v3721 = vadd.f32 %v3170, %v3583
  %v3722 = vadd.f32 %v3171, %v3588
  %v3723 = vadd.f32 %v3172, %v3591
  %v3724 = vadd.f32 %v3173, %v3596
  %v3725 = vadd.f32 %v3174, %v3599
  %v3726 = vadd.f32 %v3175, %v3604
  %v3727 = vadd.f32 %v3176, %v3607
  %v3728 = vadd.f32 %v3177, %v3612
  %v3729 = vadd.f32 %v3178, %v3615
  %v3730 = vadd.f32 %v3179, %v3620
  %v3731 = vadd.f32 %v3180, %v3623
  %v3732 = vadd.f32 %v3181, %v3628
  %v3733 = vadd.f32 %v3182, %v3631
  %v3734 = vadd.f32 %v3183, %v3636
  %v3735 = vadd.f32 %v3184, %v3639
  %v3736 = vadd.f32 %v3185, %v3644
  %v3737 = vadd.f32 %v3186, %v3647
  %v3738 = vadd.f32 %v3187, %v3652
  %v3739 = vadd.f32 %v3188, %v3655
  %v3740 = vadd.f32 %v3189, %v3660
  %v3741 = vadd.f32 %v3190, %v3663
  %v3742 = vadd.f32 %v3191, %v3668
  %v3743 = vadd.f32 %v3192, %v3671
  %v3744 = vadd.f32 %v3193, %v3676
  %v3745 = vadd.f32 %v3194, %v3679
  %v3746 = vld [vmem:[%s3195 + $0x1] sm:$0xff]
  %v3747 = vld [vmem:[%s3195 + $0x9] sm:$0xff]
  %v3748 = vld [vmem:[%s3195 + $0x19] sm:$0xff]
  %v3749 = vld [vmem:[%s3195 + $0x21] sm:$0xff]
  %v3750 = vld [vmem:[%s3195 + $0x31] sm:$0xff]
  %v3751 = vld [vmem:[%s3195 + $0x39] sm:$0xff]
  %v3752 = vld [vmem:[%s3195 + $0x49] sm:$0xff]
  %v3753 = vld [vmem:[%s3195 + $0x51] sm:$0xff]
  %v3754 = vld [vmem:[%s3195 + $0x61] sm:$0xff]
  %v3755 = vld [vmem:[%s3195 + $0x69] sm:$0xff]
  %v3756 = vld [vmem:[%s3195 + $0x79] sm:$0xff]
  %v3757 = vld [vmem:[%s3195 + $0x81] sm:$0xff]
  %v3758 = vld [vmem:[%s3195 + $0x91] sm:$0xff]
  %v3759 = vld [vmem:[%s3195 + $0x99] sm:$0xff]
  %v3760 = vld [vmem:[%s3195 + $0xa9] sm:$0xff]
  %v3761 = vld [vmem:[%s3195 + $0xb1] sm:$0xff]
  %v3762 = vld [vmem:[%s3195 + $0xc1] sm:$0xff]
  %v3763 = vld [vmem:[%s3195 + $0xc9] sm:$0xff]
  %v3764 = vld [vmem:[%s3195 + $0xd9] sm:$0xff]
  %v3765 = vld [vmem:[%s3195 + $0xe1] sm:$0xff]
  %v3766 = vld [vmem:[%s3195 + $0xf1] sm:$0xff]
  %v3767 = vld [vmem:[%s3195 + $0xf9] sm:$0xff]
  %v3768 = vld [vmem:[%s3195 + $0x109] sm:$0xff]
  %v3769 = vld [vmem:[%s3195 + $0x111] sm:$0xff]
  %v3770 = vld [vmem:[%s3195 + $0x121] sm:$0xff]
  %v3771 = vld [vmem:[%s3195 + $0x129] sm:$0xff]
  %v3772 = vld [vmem:[%s3195 + $0x139] sm:$0xff]
  %v3773 = vld [vmem:[%s3195 + $0x141] sm:$0xff]
  %v3774 = vld [vmem:[%s3195 + $0x151] sm:$0xff]
  %v3775 = vld [vmem:[%s3195 + $0x159] sm:$0xff]
  %v3776 = vld [vmem:[%s3195 + $0x169] sm:$0xff]
  %v3777 = vld [vmem:[%s3195 + $0x171] sm:$0xff]
  %v3778 = vld [vmem:[%s3195 + $0x1b1] sm:$0xff]
  %v3779 = vld [vmem:[%s3195 + $0x1b9] sm:$0xff]
  %v3780 = vld [vmem:[%s3195 + $0x1c9] sm:$0xff]
  %v3781 = vld [vmem:[%s3195 + $0x1d1] sm:$0xff]
  %v3782 = vld [vmem:[%s3195 + $0x1e1] sm:$0xff]
  %v3783 = vld [vmem:[%s3195 + $0x1e9] sm:$0xff]
  %v3784 = vld [vmem:[%s3195 + $0x1f9] sm:$0xff]
  %v3785 = vld [vmem:[%s3195 + $0x201] sm:$0xff]
  %v3786 = vld [vmem:[%s3195 + $0x211] sm:$0xff]
  %v3787 = vld [vmem:[%s3195 + $0x219] sm:$0xff]
  %v3788 = vld [vmem:[%s3195 + $0x229] sm:$0xff]
  %v3789 = vld [vmem:[%s3195 + $0x231] sm:$0xff]
  %v3790 = vld [vmem:[%s3195 + $0x241] sm:$0xff]
  %v3791 = vld [vmem:[%s3195 + $0x249] sm:$0xff]
  %v3792 = vld [vmem:[%s3195 + $0x259] sm:$0xff]
  %v3793 = vld [vmem:[%s3195 + $0x261] sm:$0xff]
  %v3794 = vld [vmem:[%s3195 + $0x271] sm:$0xff]
  %v3795 = vld [vmem:[%s3195 + $0x279] sm:$0xff]
  %v3796 = vld [vmem:[%s3195 + $0x289] sm:$0xff]
  %v3797 = vld [vmem:[%s3195 + $0x291] sm:$0xff]
  %v3798 = vld [vmem:[%s3195 + $0x2a1] sm:$0xff]
  %v3799 = vld [vmem:[%s3195 + $0x2a9] sm:$0xff]
  %v3800 = vld [vmem:[%s3195 + $0x2b9] sm:$0xff]
  %v3801 = vld [vmem:[%s3195 + $0x2c1] sm:$0xff]
  %v3802 = vld [vmem:[%s3195 + $0x2d1] sm:$0xff]
  %v3803 = vld [vmem:[%s3195 + $0x2d9] sm:$0xff]
  %v3804 = vld [vmem:[%s3195 + $0x2e9] sm:$0xff]
  %v3805 = vld [vmem:[%s3195 + $0x2f1] sm:$0xff]
  %v3806 = vld [vmem:[%s3195 + $0x301] sm:$0xff]
  %v3807 = vld [vmem:[%s3195 + $0x309] sm:$0xff]
  %v3808 = vld [vmem:[%s3195 + $0x319] sm:$0xff]
  %v3809 = vld [vmem:[%s3195 + $0x321] sm:$0xff]
  %v3810 = vpack.c.bf16 %v3747, %v3746
  %v3811 = vpack.c.bf16 %v3749, %v3748
  %v3812 = vpack.c.bf16 %v3751, %v3750
  %v3813 = vpack.c.bf16 %v3753, %v3752
  %v3814 = vpack.c.bf16 %v3755, %v3754
  %v3815 = vpack.c.bf16 %v3757, %v3756
  %v3816 = vpack.c.bf16 %v3759, %v3758
  %v3817 = vpack.c.bf16 %v3761, %v3760
  %v3818 = vpack.c.bf16 %v3763, %v3762
  %v3819 = vpack.c.bf16 %v3765, %v3764
  %v3820 = vpack.c.bf16 %v3767, %v3766
  %v3821 = vpack.c.bf16 %v3769, %v3768
  %v3822 = vpack.c.bf16 %v3771, %v3770
  %v3823 = vpack.c.bf16 %v3773, %v3772
  %v3824 = vpack.c.bf16 %v3775, %v3774
  %v3825 = vpack.c.bf16 %v3777, %v3776
  %v3826 = vpack.c.bf16 %v3779, %v3778
  %v3827 = vpack.c.bf16 %v3781, %v3780
  %v3828 = vpack.c.bf16 %v3783, %v3782
  %v3829 = vpack.c.bf16 %v3785, %v3784
  %v3830 = vpack.c.bf16 %v3787, %v3786
  %v3831 = vpack.c.bf16 %v3789, %v3788
  %v3832 = vpack.c.bf16 %v3791, %v3790
  %v3833 = vpack.c.bf16 %v3793, %v3792
  %v3834 = vpack.c.bf16 %v3795, %v3794
  %v3835 = vpack.c.bf16 %v3797, %v3796
  %v3836 = vpack.c.bf16 %v3799, %v3798
  %v3837 = vpack.c.bf16 %v3801, %v3800
  %v3838 = vpack.c.bf16 %v3803, %v3802
  %v3839 = vpack.c.bf16 %v3805, %v3804
  %v3840 = vpack.c.bf16 %v3807, %v3806
  %v3841 = vpack.c.bf16 %v3809, %v3808
  %s3842 = scalar_lea.vmem %s1, 14
  %v3843 = vld [vmem:[%s3842] sm:$0x3]
  %v3845 = vsel %vm216, %v3810, 0
  %v3848 = vsel %vm216, %v3811, 0
  %v3851 = vsel %vm216, %v3812, 0
  %v3854 = vsel %vm216, %v3813, 0
  %v3857 = vsel %vm216, %v3814, 0
  %v3860 = vsel %vm216, %v3815, 0
  %v3863 = vsel %vm216, %v3816, 0
  %v3866 = vsel %vm216, %v3817, 0
  %v3869 = vsel %vm216, %v3818, 0
  %v3872 = vsel %vm216, %v3819, 0
  %v3875 = vsel %vm216, %v3820, 0
  %v3878 = vsel %vm216, %v3821, 0
  %v3881 = vsel %vm216, %v3822, 0
  %v3884 = vsel %vm216, %v3823, 0
  %v3887 = vsel %vm216, %v3824, 0
  %v3890 = vsel %vm216, %v3825, 0
  %v3893 = vsel %vm216, %v3826, 0
  %v3896 = vsel %vm216, %v3827, 0
  %v3899 = vsel %vm216, %v3828, 0
  %v3902 = vsel %vm216, %v3829, 0
  %v3905 = vsel %vm216, %v3830, 0
  %v3908 = vsel %vm216, %v3831, 0
  %v3911 = vsel %vm216, %v3832, 0
  %v3914 = vsel %vm216, %v3833, 0
  %v3917 = vsel %vm216, %v3834, 0
  %v3920 = vsel %vm216, %v3835, 0
  %v3923 = vsel %vm216, %v3836, 0
  %v3926 = vsel %vm216, %v3837, 0
  %v3929 = vsel %vm216, %v3838, 0
  %v3932 = vsel %vm216, %v3839, 0
  %v3935 = vsel %vm216, %v3840, 0
  %v3938 = vsel %vm216, %v3841, 0
  %v3941 = vsel %vm313, %v3843, 0
  %3943 = vmatprep.subr.bf16.mxu0 0
  %3944 = vmatpush1.bf16.msra.mxu0 %v3941
  %3945 = vmatprep.subr.bf16.mxu0 0
  %3946 = vmatpush1.bf16.msra.mxu0 0
  %3947 = vmatprep.subr.bf16.mxu0 0
  %3948 = vmatpush1.bf16.msra.mxu0 0
  %3949 = vmatprep.subr.bf16.mxu0 0
  %3950 = vmatpush1.bf16.msra.mxu0 0
  %3951 = vmatprep.subr.bf16.mxu0 0
  %3952 = vmatpush1.bf16.msra.mxu0 0
  %3953 = vmatprep.subr.bf16.mxu0 0
  %3954 = vmatpush1.bf16.msra.mxu0 0
  %3955 = vmatprep.subr.bf16.mxu0 0
  %3956 = vmatpush1.bf16.msra.mxu0 0
  %3957 = vmatprep.subr.bf16.mxu0 0
  %3958 = vmatpush1.bf16.msra.mxu0 0
  %3959 = vmatprep.subr.bf16.mxu0 0
  %3960 = vmatpush1.bf16.msra.mxu0 0
  %3961 = vmatprep.subr.bf16.mxu0 0
  %3962 = vmatpush1.bf16.msra.mxu0 0
  %3963 = vmatprep.subr.bf16.mxu0 0
  %3964 = vmatpush1.bf16.msra.mxu0 0
  %3965 = vmatprep.subr.bf16.mxu0 0
  %3966 = vmatpush1.bf16.msra.mxu0 0
  %3967 = vmatprep.subr.bf16.mxu0 0
  %3968 = vmatpush1.bf16.msra.mxu0 0
  %3969 = vmatprep.subr.bf16.mxu0 0
  %3970 = vmatpush1.bf16.msra.mxu0 0
  %3971 = vmatprep.subr.bf16.mxu0 0
  %3972 = vmatpush1.bf16.msra.mxu0 0
  %3973 = vmatprep.subr.bf16.mxu0 0
  %3974 = vmatpush1.bf16.msra.mxu0 0
  %3975 = vmatprep.mubr.bf16.mxu0 0
  %3976 = vmatmul.mubr.bf16.gmra.mrb[0].mxu0 %v3845
  %v3977 = vpop.f32.mrb[0].mxu0
  %v3978 = vadd.f32 0.0, %v3977
  %v3979 = vpop.f32.mrb[0].mxu0
  %v3980 = vpop.f32.mrb[0].mxu0
  %v3981 = vadd.f32 0.0, %v3980
  %v3982 = vpop.f32.mrb[0].mxu0
  %3983 = vmatprep.mubr.bf16.mxu0 0
  %3984 = vmatmul.mubr.bf16.gmra.mrb[0].mxu0 %v3848
  %v3985 = vpop.f32.mrb[0].mxu0
  %v3986 = vadd.f32 0.0, %v3985
  %v3987 = vpop.f32.mrb[0].mxu0
  %v3988 = vpop.f32.mrb[0].mxu0
  %v3989 = vadd.f32 0.0, %v3988
  %v3990 = vpop.f32.mrb[0].mxu0
  %3991 = vmatprep.mubr.bf16.mxu0 0
  %3992 = vmatmul.mubr.bf16.gmra.mrb[0].mxu0 %v3851
  %v3993 = vpop.f32.mrb[0].mxu0
  %v3994 = vadd.f32 0.0, %v3993
  %v3995 = vpop.f32.mrb[0].mxu0
  %v3996 = vpop.f32.mrb[0].mxu0
  %v3997 = vadd.f32 0.0, %v3996
  %v3998 = vpop.f32.mrb[0].mxu0
  %3999 = vmatprep.mubr.bf16.mxu0 0
  %4000 = vmatmul.mubr.bf16.gmra.mrb[0].mxu0 %v3854
  %v4001 = vpop.f32.mrb[0].mxu0
  %v4002 = vadd.f32 0.0, %v4001
  %v4003 = vpop.f32.mrb[0].mxu0
  %v4004 = vpop.f32.mrb[0].mxu0
  %v4005 = vadd.f32 0.0, %v4004
  %v4006 = vpop.f32.mrb[0].mxu0
  %4007 = vmatprep.mubr.bf16.mxu0 0
  %4008 = vmatmul.mubr.bf16.gmra.mrb[0].mxu0 %v3857
  %v4009 = vpop.f32.mrb[0].mxu0
  %v4010 = vadd.f32 0.0, %v4009
  %v4011 = vpop.f32.mrb[0].mxu0
  %v4012 = vpop.f32.mrb[0].mxu0
  %v4013 = vadd.f32 0.0, %v4012
  %v4014 = vpop.f32.mrb[0].mxu0
  %4015 = vmatprep.mubr.bf16.mxu0 0
  %4016 = vmatmul.mubr.bf16.gmra.mrb[0].mxu0 %v3860
  %v4017 = vpop.f32.mrb[0].mxu0
  %v4018 = vadd.f32 0.0, %v4017
  %v4019 = vpop.f32.mrb[0].mxu0
  %v4020 = vpop.f32.mrb[0].mxu0
  %v4021 = vadd.f32 0.0, %v4020
  %v4022 = vpop.f32.mrb[0].mxu0
  %4023 = vmatprep.mubr.bf16.mxu0 0
  %4024 = vmatmul.mubr.bf16.gmra.mrb[0].mxu0 %v3863
  %v4025 = vpop.f32.mrb[0].mxu0
  %v4026 = vadd.f32 0.0, %v4025
  %v4027 = vpop.f32.mrb[0].mxu0
  %v4028 = vpop.f32.mrb[0].mxu0
  %v4029 = vadd.f32 0.0, %v4028
  %v4030 = vpop.f32.mrb[0].mxu0
  %4031 = vmatprep.mubr.bf16.mxu0 0
  %4032 = vmatmul.mubr.bf16.gmra.mrb[0].mxu0 %v3866
  %v4033 = vpop.f32.mrb[0].mxu0
  %v4034 = vadd.f32 0.0, %v4033
  %v4035 = vpop.f32.mrb[0].mxu0
  %v4036 = vpop.f32.mrb[0].mxu0
  %v4037 = vadd.f32 0.0, %v4036
  %v4038 = vpop.f32.mrb[0].mxu0
  %4039 = vmatprep.mubr.bf16.mxu0 0
  %4040 = vmatmul.mubr.bf16.gmra.mrb[0].mxu0 %v3869
  %v4041 = vpop.f32.mrb[0].mxu0
  %v4042 = vadd.f32 0.0, %v4041
  %v4043 = vpop.f32.mrb[0].mxu0
  %v4044 = vpop.f32.mrb[0].mxu0
  %v4045 = vadd.f32 0.0, %v4044
  %v4046 = vpop.f32.mrb[0].mxu0
  %4047 = vmatprep.mubr.bf16.mxu0 0
  %4048 = vmatmul.mubr.bf16.gmra.mrb[0].mxu0 %v3872
  %v4049 = vpop.f32.mrb[0].mxu0
  %v4050 = vadd.f32 0.0, %v4049
  %v4051 = vpop.f32.mrb[0].mxu0
  %v4052 = vpop.f32.mrb[0].mxu0
  %v4053 = vadd.f32 0.0, %v4052
  %v4054 = vpop.f32.mrb[0].mxu0
  %4055 = vmatprep.mubr.bf16.mxu0 0
  %4056 = vmatmul.mubr.bf16.gmra.mrb[0].mxu0 %v3875
  %v4057 = vpop.f32.mrb[0].mxu0
  %v4058 = vadd.f32 0.0, %v4057
  %v4059 = vpop.f32.mrb[0].mxu0
  %v4060 = vpop.f32.mrb[0].mxu0
  %v4061 = vadd.f32 0.0, %v4060
  %v4062 = vpop.f32.mrb[0].mxu0
  %4063 = vmatprep.mubr.bf16.mxu0 0
  %4064 = vmatmul.mubr.bf16.gmra.mrb[0].mxu0 %v3878
  %v4065 = vpop.f32.mrb[0].mxu0
  %v4066 = vadd.f32 0.0, %v4065
  %v4067 = vpop.f32.mrb[0].mxu0
  %v4068 = vpop.f32.mrb[0].mxu0
  %v4069 = vadd.f32 0.0, %v4068
  %v4070 = vpop.f32.mrb[0].mxu0
  %4071 = vmatprep.mubr.bf16.mxu0 0
  %4072 = vmatmul.mubr.bf16.gmra.mrb[0].mxu0 %v3881
  %v4073 = vpop.f32.mrb[0].mxu0
  %v4074 = vadd.f32 0.0, %v4073
  %v4075 = vpop.f32.mrb[0].mxu0
  %v4076 = vpop.f32.mrb[0].mxu0
  %v4077 = vadd.f32 0.0, %v4076
  %v4078 = vpop.f32.mrb[0].mxu0
  %4079 = vmatprep.mubr.bf16.mxu0 0
  %4080 = vmatmul.mubr.bf16.gmra.mrb[0].mxu0 %v3884
  %v4081 = vpop.f32.mrb[0].mxu0
  %v4082 = vadd.f32 0.0, %v4081
  %v4083 = vpop.f32.mrb[0].mxu0
  %v4084 = vpop.f32.mrb[0].mxu0
  %v4085 = vadd.f32 0.0, %v4084
  %v4086 = vpop.f32.mrb[0].mxu0
  %4087 = vmatprep.mubr.bf16.mxu0 0
  %4088 = vmatmul.mubr.bf16.gmra.mrb[0].mxu0 %v3887
  %v4089 = vpop.f32.mrb[0].mxu0
  %v4090 = vadd.f32 0.0, %v4089
  %v4091 = vpop.f32.mrb[0].mxu0
  %v4092 = vpop.f32.mrb[0].mxu0
  %v4093 = vadd.f32 0.0, %v4092
  %v4094 = vpop.f32.mrb[0].mxu0
  %4095 = vmatprep.mubr.bf16.mxu0 0
  %4096 = vmatmul.mubr.bf16.gmra.mrb[0].mxu0 %v3890
  %v4097 = vpop.f32.mrb[0].mxu0
  %v4098 = vadd.f32 0.0, %v4097
  %v4099 = vpop.f32.mrb[0].mxu0
  %v4100 = vpop.f32.mrb[0].mxu0
  %v4101 = vadd.f32 0.0, %v4100
  %v4102 = vpop.f32.mrb[0].mxu0
  %4103 = vmatprep.mubr.bf16.mxu0 0
  %4104 = vmatmul.mubr.bf16.gmra.mrb[0].mxu0 %v3893
  %v4105 = vpop.f32.mrb[0].mxu0
  %v4106 = vadd.f32 0.0, %v4105
  %v4107 = vpop.f32.mrb[0].mxu0
  %v4108 = vpop.f32.mrb[0].mxu0
  %v4109 = vadd.f32 0.0, %v4108
  %v4110 = vpop.f32.mrb[0].mxu0
  %4111 = vmatprep.mubr.bf16.mxu0 0
  %4112 = vmatmul.mubr.bf16.gmra.mrb[0].mxu0 %v3896
  %v4113 = vpop.f32.mrb[0].mxu0
  %v4114 = vadd.f32 0.0, %v4113
  %v4115 = vpop.f32.mrb[0].mxu0
  %v4116 = vpop.f32.mrb[0].mxu0
  %v4117 = vadd.f32 0.0, %v4116
  %v4118 = vpop.f32.mrb[0].mxu0
  %4119 = vmatprep.mubr.bf16.mxu0 0
  %4120 = vmatmul.mubr.bf16.gmra.mrb[0].mxu0 %v3899
  %v4121 = vpop.f32.mrb[0].mxu0
  %v4122 = vadd.f32 0.0, %v4121
  %v4123 = vpop.f32.mrb[0].mxu0
  %v4124 = vpop.f32.mrb[0].mxu0
  %v4125 = vadd.f32 0.0, %v4124
  %v4126 = vpop.f32.mrb[0].mxu0
  %4127 = vmatprep.mubr.bf16.mxu0 0
  %4128 = vmatmul.mubr.bf16.gmra.mrb[0].mxu0 %v3902
  %v4129 = vpop.f32.mrb[0].mxu0
  %v4130 = vadd.f32 0.0, %v4129
  %v4131 = vpop.f32.mrb[0].mxu0
  %v4132 = vpop.f32.mrb[0].mxu0
  %v4133 = vadd.f32 0.0, %v4132
  %v4134 = vpop.f32.mrb[0].mxu0
  %4135 = vmatprep.mubr.bf16.mxu0 0
  %4136 = vmatmul.mubr.bf16.gmra.mrb[0].mxu0 %v3905
  %v4137 = vpop.f32.mrb[0].mxu0
  %v4138 = vadd.f32 0.0, %v4137
  %v4139 = vpop.f32.mrb[0].mxu0
  %v4140 = vpop.f32.mrb[0].mxu0
  %v4141 = vadd.f32 0.0, %v4140
  %v4142 = vpop.f32.mrb[0].mxu0
  %4143 = vmatprep.mubr.bf16.mxu0 0
  %4144 = vmatmul.mubr.bf16.gmra.mrb[0].mxu0 %v3908
  %v4145 = vpop.f32.mrb[0].mxu0
  %v4146 = vadd.f32 0.0, %v4145
  %v4147 = vpop.f32.mrb[0].mxu0
  %v4148 = vpop.f32.mrb[0].mxu0
  %v4149 = vadd.f32 0.0, %v4148
  %v4150 = vpop.f32.mrb[0].mxu0
  %4151 = vmatprep.mubr.bf16.mxu0 0
  %4152 = vmatmul.mubr.bf16.gmra.mrb[0].mxu0 %v3911
  %v4153 = vpop.f32.mrb[0].mxu0
  %v4154 = vadd.f32 0.0, %v4153
  %v4155 = vpop.f32.mrb[0].mxu0
  %v4156 = vpop.f32.mrb[0].mxu0
  %v4157 = vadd.f32 0.0, %v4156
  %v4158 = vpop.f32.mrb[0].mxu0
  %4159 = vmatprep.mubr.bf16.mxu0 0
  %4160 = vmatmul.mubr.bf16.gmra.mrb[0].mxu0 %v3914
  %v4161 = vpop.f32.mrb[0].mxu0
  %v4162 = vadd.f32 0.0, %v4161
  %v4163 = vpop.f32.mrb[0].mxu0
  %v4164 = vpop.f32.mrb[0].mxu0
  %v4165 = vadd.f32 0.0, %v4164
  %v4166 = vpop.f32.mrb[0].mxu0
  %4167 = vmatprep.mubr.bf16.mxu0 0
  %4168 = vmatmul.mubr.bf16.gmra.mrb[0].mxu0 %v3917
  %v4169 = vpop.f32.mrb[0].mxu0
  %v4170 = vadd.f32 0.0, %v4169
  %v4171 = vpop.f32.mrb[0].mxu0
  %v4172 = vpop.f32.mrb[0].mxu0
  %v4173 = vadd.f32 0.0, %v4172
  %v4174 = vpop.f32.mrb[0].mxu0
  %4175 = vmatprep.mubr.bf16.mxu0 0
  %4176 = vmatmul.mubr.bf16.gmra.mrb[0].mxu0 %v3920
  %v4177 = vpop.f32.mrb[0].mxu0
  %v4178 = vadd.f32 0.0, %v4177
  %v4179 = vpop.f32.mrb[0].mxu0
  %v4180 = vpop.f32.mrb[0].mxu0
  %v4181 = vadd.f32 0.0, %v4180
  %v4182 = vpop.f32.mrb[0].mxu0
  %4183 = vmatprep.mubr.bf16.mxu0 0
  %4184 = vmatmul.mubr.bf16.gmra.mrb[0].mxu0 %v3923
  %v4185 = vpop.f32.mrb[0].mxu0
  %v4186 = vadd.f32 0.0, %v4185
  %v4187 = vpop.f32.mrb[0].mxu0
  %v4188 = vpop.f32.mrb[0].mxu0
  %v4189 = vadd.f32 0.0, %v4188
  %v4190 = vpop.f32.mrb[0].mxu0
  %4191 = vmatprep.mubr.bf16.mxu0 0
  %4192 = vmatmul.mubr.bf16.gmra.mrb[0].mxu0 %v3926
  %v4193 = vpop.f32.mrb[0].mxu0
  %v4194 = vadd.f32 0.0, %v4193
  %v4195 = vpop.f32.mrb[0].mxu0
  %v4196 = vpop.f32.mrb[0].mxu0
  %v4197 = vadd.f32 0.0, %v4196
  %v4198 = vpop.f32.mrb[0].mxu0
  %4199 = vmatprep.mubr.bf16.mxu0 0
  %4200 = vmatmul.mubr.bf16.gmra.mrb[0].mxu0 %v3929
  %v4201 = vpop.f32.mrb[0].mxu0
  %v4202 = vadd.f32 0.0, %v4201
  %v4203 = vpop.f32.mrb[0].mxu0
  %v4204 = vpop.f32.mrb[0].mxu0
  %v4205 = vadd.f32 0.0, %v4204
  %v4206 = vpop.f32.mrb[0].mxu0
  %4207 = vmatprep.mubr.bf16.mxu0 0
  %4208 = vmatmul.mubr.bf16.gmra.mrb[0].mxu0 %v3932
  %v4209 = vpop.f32.mrb[0].mxu0
  %v4210 = vadd.f32 0.0, %v4209
  %v4211 = vpop.f32.mrb[0].mxu0
  %v4212 = vpop.f32.mrb[0].mxu0
  %v4213 = vadd.f32 0.0, %v4212
  %v4214 = vpop.f32.mrb[0].mxu0
  %4215 = vmatprep.mubr.bf16.mxu0 0
  %4216 = vmatmul.mubr.bf16.gmra.mrb[0].mxu0 %v3935
  %v4217 = vpop.f32.mrb[0].mxu0
  %v4218 = vadd.f32 0.0, %v4217
  %v4219 = vpop.f32.mrb[0].mxu0
  %v4220 = vpop.f32.mrb[0].mxu0
  %v4221 = vadd.f32 0.0, %v4220
  %v4222 = vpop.f32.mrb[0].mxu0
  %4223 = vmatprep.mubr.bf16.mxu0 0
  %4224 = vmatmul.mubr.bf16.gmra.mrb[0].mxu0 %v3938
  %v4225 = vpop.f32.mrb[0].mxu0
  %v4226 = vadd.f32 0.0, %v4225
  %v4227 = vpop.f32.mrb[0].mxu0
  %v4228 = vpop.f32.mrb[0].mxu0
  %v4229 = vadd.f32 0.0, %v4228
  %v4230 = vpop.f32.mrb[0].mxu0
  %4231 = vdwg.mxu0
  %v4232 = vadd.f32 %v3682, %v3978
  %v4233 = vadd.f32 %v3683, %v3981
  %v4234 = vadd.f32 %v3684, %v3986
  %v4235 = vadd.f32 %v3685, %v3989
  %v4236 = vadd.f32 %v3686, %v3994
  %v4237 = vadd.f32 %v3687, %v3997
  %v4238 = vadd.f32 %v3688, %v4002
  %v4239 = vadd.f32 %v3689, %v4005
  %v4240 = vadd.f32 %v3690, %v4010
  %v4241 = vadd.f32 %v3691, %v4013
  %v4242 = vadd.f32 %v3692, %v4018
  %v4243 = vadd.f32 %v3693, %v4021
  %v4244 = vadd.f32 %v3694, %v4026
  %v4245 = vadd.f32 %v3695, %v4029
  %v4246 = vadd.f32 %v3696, %v4034
  %v4247 = vadd.f32 %v3697, %v4037
  %v4248 = vadd.f32 %v3698, %v4042
  %v4249 = vadd.f32 %v3699, %v4045
  %v4250 = vadd.f32 %v3700, %v4050
  %v4251 = vadd.f32 %v3701, %v4053
  %v4252 = vadd.f32 %v3702, %v4058
  %v4253 = vadd.f32 %v3703, %v4061
  %v4254 = vadd.f32 %v3704, %v4066
  %v4255 = vadd.f32 %v3705, %v4069
  %v4256 = vadd.f32 %v3706, %v4074
  %v4257 = vadd.f32 %v3707, %v4077
  %v4258 = vadd.f32 %v3708, %v4082
  %v4259 = vadd.f32 %v3709, %v4085
  %v4260 = vadd.f32 %v3710, %v4090
  %v4261 = vadd.f32 %v3711, %v4093
  %v4262 = vadd.f32 %v3712, %v4098
  %v4263 = vadd.f32 %v3713, %v4101
  %v4264 = vadd.f32 %v3714, %v4106
  %v4265 = vadd.f32 %v3715, %v4109
  %v4266 = vadd.f32 %v3716, %v4114
  %v4267 = vadd.f32 %v3717, %v4117
  %v4268 = vadd.f32 %v3718, %v4122
  %v4269 = vadd.f32 %v3719, %v4125
  %v4270 = vadd.f32 %v3720, %v4130
  %v4271 = vadd.f32 %v3721, %v4133
  %v4272 = vadd.f32 %v3722, %v4138
  %v4273 = vadd.f32 %v3723, %v4141
  %v4274 = vadd.f32 %v3724, %v4146
  %v4275 = vadd.f32 %v3725, %v4149
  %v4276 = vadd.f32 %v3726, %v4154
  %v4277 = vadd.f32 %v3727, %v4157
  %v4278 = vadd.f32 %v3728, %v4162
  %v4279 = vadd.f32 %v3729, %v4165
  %v4280 = vadd.f32 %v3730, %v4170
  %v4281 = vadd.f32 %v3731, %v4173
  %v4282 = vadd.f32 %v3732, %v4178
  %v4283 = vadd.f32 %v3733, %v4181
  %v4284 = vadd.f32 %v3734, %v4186
  %v4285 = vadd.f32 %v3735, %v4189
  %v4286 = vadd.f32 %v3736, %v4194
  %v4287 = vadd.f32 %v3737, %v4197
  %v4288 = vadd.f32 %v3738, %v4202
  %v4289 = vadd.f32 %v3739, %v4205
  %v4290 = vadd.f32 %v3740, %v4210
  %v4291 = vadd.f32 %v3741, %v4213
  %v4292 = vadd.f32 %v3742, %v4218
  %v4293 = vadd.f32 %v3743, %v4221
  %v4294 = vadd.f32 %v3744, %v4226
  %v4295 = vadd.f32 %v3745, %v4229
  %v4296 = vld [vmem:[%s3195 + $0x2] sm:$0xff]
  %v4297 = vld [vmem:[%s3195 + $0xa] sm:$0xff]
  %v4298 = vld [vmem:[%s3195 + $0x1a] sm:$0xff]
  %v4299 = vld [vmem:[%s3195 + $0x22] sm:$0xff]
  %v4300 = vld [vmem:[%s3195 + $0x32] sm:$0xff]
  %v4301 = vld [vmem:[%s3195 + $0x3a] sm:$0xff]
  %v4302 = vld [vmem:[%s3195 + $0x4a] sm:$0xff]
  %v4303 = vld [vmem:[%s3195 + $0x52] sm:$0xff]
  %v4304 = vld [vmem:[%s3195 + $0x62] sm:$0xff]
  %v4305 = vld [vmem:[%s3195 + $0x6a] sm:$0xff]
  %v4306 = vld [vmem:[%s3195 + $0x7a] sm:$0xff]
  %v4307 = vld [vmem:[%s3195 + $0x82] sm:$0xff]
  %v4308 = vld [vmem:[%s3195 + $0x92] sm:$0xff]
  %v4309 = vld [vmem:[%s3195 + $0x9a] sm:$0xff]
  %v4310 = vld [vmem:[%s3195 + $0xaa] sm:$0xff]
  %v4311 = vld [vmem:[%s3195 + $0xb2] sm:$0xff]
  %v4312 = vld [vmem:[%s3195 + $0xc2] sm:$0xff]
  %v4313 = vld [vmem:[%s3195 + $0xca] sm:$0xff]
  %v4314 = vld [vmem:[%s3195 + $0xda] sm:$0xff]
  %v4315 = vld [vmem:[%s3195 + $0xe2] sm:$0xff]
  %v4316 = vld [vmem:[%s3195 + $0xf2] sm:$0xff]
  %v4317 = vld [vmem:[%s3195 + $0xfa] sm:$0xff]
  %v4318 = vld [vmem:[%s3195 + $0x10a] sm:$0xff]
  %v4319 = vld [vmem:[%s3195 + $0x112] sm:$0xff]
  %v4320 = vld [vmem:[%s3195 + $0x122] sm:$0xff]
  %v4321 = vld [vmem:[%s3195 + $0x12a] sm:$0xff]
  %v4322 = vld [vmem:[%s3195 + $0x13a] sm:$0xff]
  %v4323 = vld [vmem:[%s3195 + $0x142] sm:$0xff]
  %v4324 = vld [vmem:[%s3195 + $0x152] sm:$0xff]
  %v4325 = vld [vmem:[%s3195 + $0x15a] sm:$0xff]
  %v4326 = vld [vmem:[%s3195 + $0x16a] sm:$0xff]
  %v4327 = vld [vmem:[%s3195 + $0x172] sm:$0xff]
  %v4328 = vld [vmem:[%s3195 + $0x1b2] sm:$0xff]
  %v4329 = vld [vmem:[%s3195 + $0x1ba] sm:$0xff]
  %v4330 = vld [vmem:[%s3195 + $0x1ca] sm:$0xff]
  %v4331 = vld [vmem:[%s3195 + $0x1d2] sm:$0xff]
  %v4332 = vld [vmem:[%s3195 + $0x1e2] sm:$0xff]
  %v4333 = vld [vmem:[%s3195 + $0x1ea] sm:$0xff]
  %v4334 = vld [vmem:[%s3195 + $0x1fa] sm:$0xff]
  %v4335 = vld [vmem:[%s3195 + $0x202] sm:$0xff]
  %v4336 = vld [vmem:[%s3195 + $0x212] sm:$0xff]
  %v4337 = vld [vmem:[%s3195 + $0x21a] sm:$0xff]
  %v4338 = vld [vmem:[%s3195 + $0x22a] sm:$0xff]
  %v4339 = vld [vmem:[%s3195 + $0x232] sm:$0xff]
  %v4340 = vld [vmem:[%s3195 + $0x242] sm:$0xff]
  %v4341 = vld [vmem:[%s3195 + $0x24a] sm:$0xff]
  %v4342 = vld [vmem:[%s3195 + $0x25a] sm:$0xff]
  %v4343 = vld [vmem:[%s3195 + $0x262] sm:$0xff]
  %v4344 = vld [vmem:[%s3195 + $0x272] sm:$0xff]
  %v4345 = vld [vmem:[%s3195 + $0x27a] sm:$0xff]
  %v4346 = vld [vmem:[%s3195 + $0x28a] sm:$0xff]
  %v4347 = vld [vmem:[%s3195 + $0x292] sm:$0xff]
  %v4348 = vld [vmem:[%s3195 + $0x2a2] sm:$0xff]
  %v4349 = vld [vmem:[%s3195 + $0x2aa] sm:$0xff]
  %v4350 = vld [vmem:[%s3195 + $0x2ba] sm:$0xff]
  %v4351 = vld [vmem:[%s3195 + $0x2c2] sm:$0xff]
  %v4352 = vld [vmem:[%s3195 + $0x2d2] sm:$0xff]
  %v4353 = vld [vmem:[%s3195 + $0x2da] sm:$0xff]
  %v4354 = vld [vmem:[%s3195 + $0x2ea] sm:$0xff]
  %v4355 = vld [vmem:[%s3195 + $0x2f2] sm:$0xff]
  %v4356 = vld [vmem:[%s3195 + $0x302] sm:$0xff]
  %v4357 = vld [vmem:[%s3195 + $0x30a] sm:$0xff]
  %v4358 = vld [vmem:[%s3195 + $0x31a] sm:$0xff]
  %v4359 = vld [vmem:[%s3195 + $0x322] sm:$0xff]
  %v4360 = vpack.c.bf16 %v4297, %v4296
  %v4361 = vpack.c.bf16 %v4299, %v4298
  %v4362 = vpack.c.bf16 %v4301, %v4300
  %v4363 = vpack.c.bf16 %v4303, %v4302
  %v4364 = vpack.c.bf16 %v4305, %v4304
  %v4365 = vpack.c.bf16 %v4307, %v4306
  %v4366 = vpack.c.bf16 %v4309, %v4308
  %v4367 = vpack.c.bf16 %v4311, %v4310
  %v4368 = vpack.c.bf16 %v4313, %v4312
  %v4369 = vpack.c.bf16 %v4315, %v4314
  %v4370 = vpack.c.bf16 %v4317, %v4316
  %v4371 = vpack.c.bf16 %v4319, %v4318
  %v4372 = vpack.c.bf16 %v4321, %v4320
  %v4373 = vpack.c.bf16 %v4323, %v4322
  %v4374 = vpack.c.bf16 %v4325, %v4324
  %v4375 = vpack.c.bf16 %v4327, %v4326
  %v4376 = vpack.c.bf16 %v4329, %v4328
  %v4377 = vpack.c.bf16 %v4331, %v4330
  %v4378 = vpack.c.bf16 %v4333, %v4332
  %v4379 = vpack.c.bf16 %v4335, %v4334
  %v4380 = vpack.c.bf16 %v4337, %v4336
  %v4381 = vpack.c.bf16 %v4339, %v4338
  %v4382 = vpack.c.bf16 %v4341, %v4340
  %v4383 = vpack.c.bf16 %v4343, %v4342
  %v4384 = vpack.c.bf16 %v4345, %v4344
  %v4385 = vpack.c.bf16 %v4347, %v4346
  %v4386 = vpack.c.bf16 %v4349, %v4348
  %v4387 = vpack.c.bf16 %v4351, %v4350
  %v4388 = vpack.c.bf16 %v4353, %v4352
  %v4389 = vpack.c.bf16 %v4355, %v4354
  %v4390 = vpack.c.bf16 %v4357, %v4356
  %v4391 = vpack.c.bf16 %v4359, %v4358
  %s4392 = scalar_lea.vmem %s1, 16
  %v4393 = vld [vmem:[%s4392] sm:$0x3]
  %v4395 = vsel %vm216, %v4360, 0
  %v4398 = vsel %vm216, %v4361, 0
  %v4401 = vsel %vm216, %v4362, 0
  %v4404 = vsel %vm216, %v4363, 0
  %v4407 = vsel %vm216, %v4364, 0
  %v4410 = vsel %vm216, %v4365, 0
  %v4413 = vsel %vm216, %v4366, 0
  %v4416 = vsel %vm216, %v4367, 0
  %v4419 = vsel %vm216, %v4368, 0
  %v4422 = vsel %vm216, %v4369, 0
  %v4425 = vsel %vm216, %v4370, 0
  %v4428 = vsel %vm216, %v4371, 0
  %v4431 = vsel %vm216, %v4372, 0
  %v4434 = vsel %vm216, %v4373, 0
  %v4437 = vsel %vm216, %v4374, 0
  %v4440 = vsel %vm216, %v4375, 0
  %v4443 = vsel %vm216, %v4376, 0
  %v4446 = vsel %vm216, %v4377, 0
  %v4449 = vsel %vm216, %v4378, 0
  %v4452 = vsel %vm216, %v4379, 0
  %v4455 = vsel %vm216, %v4380, 0
  %v4458 = vsel %vm216, %v4381, 0
  %v4461 = vsel %vm216, %v4382, 0
  %v4464 = vsel %vm216, %v4383, 0
  %v4467 = vsel %vm216, %v4384, 0
  %v4470 = vsel %vm216, %v4385, 0
  %v4473 = vsel %vm216, %v4386, 0
  %v4476 = vsel %vm216, %v4387, 0
  %v4479 = vsel %vm216, %v4388, 0
  %v4482 = vsel %vm216, %v4389, 0
  %v4485 = vsel %vm216, %v4390, 0
  %v4488 = vsel %vm216, %v4391, 0
  %v4491 = vsel %vm313, %v4393, 0
  %4493 = vmatprep.subr.bf16.mxu0 0
  %4494 = vmatpush1.bf16.msra.mxu0 %v4491
  %4495 = vmatprep.subr.bf16.mxu0 0
  %4496 = vmatpush1.bf16.msra.mxu0 0
  %4497 = vmatprep.subr.bf16.mxu0 0
  %4498 = vmatpush1.bf16.msra.mxu0 0
  %4499 = vmatprep.subr.bf16.mxu0 0
  %4500 = vmatpush1.bf16.msra.mxu0 0
  %4501 = vmatprep.subr.bf16.mxu0 0
  %4502 = vmatpush1.bf16.msra.mxu0 0
  %4503 = vmatprep.subr.bf16.mxu0 0
  %4504 = vmatpush1.bf16.msra.mxu0 0
  %4505 = vmatprep.subr.bf16.mxu0 0
  %4506 = vmatpush1.bf16.msra.mxu0 0
  %4507 = vmatprep.subr.bf16.mxu0 0
  %4508 = vmatpush1.bf16.msra.mxu0 0
  %4509 = vmatprep.subr.bf16.mxu0 0
  %4510 = vmatpush1.bf16.msra.mxu0 0
  %4511 = vmatprep.subr.bf16.mxu0 0
  %4512 = vmatpush1.bf16.msra.mxu0 0
  %4513 = vmatprep.subr.bf16.mxu0 0
  %4514 = vmatpush1.bf16.msra.mxu0 0
  %4515 = vmatprep.subr.bf16.mxu0 0
  %4516 = vmatpush1.bf16.msra.mxu0 0
  %4517 = vmatprep.subr.bf16.mxu0 0
  %4518 = vmatpush1.bf16.msra.mxu0 0
  %4519 = vmatprep.subr.bf16.mxu0 0
  %4520 = vmatpush1.bf16.msra.mxu0 0
  %4521 = vmatprep.subr.bf16.mxu0 0
  %4522 = vmatpush1.bf16.msra.mxu0 0
  %4523 = vmatprep.subr.bf16.mxu0 0
  %4524 = vmatpush1.bf16.msra.mxu0 0
  %4525 = vmatprep.mubr.bf16.mxu0 0
  %4526 = vmatmul.mubr.bf16.gmra.mrb[0].mxu0 %v4395
  %v4527 = vpop.f32.mrb[0].mxu0
  %v4528 = vadd.f32 0.0, %v4527
  %v4529 = vpop.f32.mrb[0].mxu0
  %v4530 = vpop.f32.mrb[0].mxu0
  %v4531 = vadd.f32 0.0, %v4530
  %v4532 = vpop.f32.mrb[0].mxu0
  %4533 = vmatprep.mubr.bf16.mxu0 0
  %4534 = vmatmul.mubr.bf16.gmra.mrb[0].mxu0 %v4398
  %v4535 = vpop.f32.mrb[0].mxu0
  %v4536 = vadd.f32 0.0, %v4535
  %v4537 = vpop.f32.mrb[0].mxu0
  %v4538 = vpop.f32.mrb[0].mxu0
  %v4539 = vadd.f32 0.0, %v4538
  %v4540 = vpop.f32.mrb[0].mxu0
  %4541 = vmatprep.mubr.bf16.mxu0 0
  %4542 = vmatmul.mubr.bf16.gmra.mrb[0].mxu0 %v4401
  %v4543 = vpop.f32.mrb[0].mxu0
  %v4544 = vadd.f32 0.0, %v4543
  %v4545 = vpop.f32.mrb[0].mxu0
  %v4546 = vpop.f32.mrb[0].mxu0
  %v4547 = vadd.f32 0.0, %v4546
  %v4548 = vpop.f32.mrb[0].mxu0
  %4549 = vmatprep.mubr.bf16.mxu0 0
  %4550 = vmatmul.mubr.bf16.gmra.mrb[0].mxu0 %v4404
  %v4551 = vpop.f32.mrb[0].mxu0
  %v4552 = vadd.f32 0.0, %v4551
  %v4553 = vpop.f32.mrb[0].mxu0
  %v4554 = vpop.f32.mrb[0].mxu0
  %v4555 = vadd.f32 0.0, %v4554
  %v4556 = vpop.f32.mrb[0].mxu0
  %4557 = vmatprep.mubr.bf16.mxu0 0
  %4558 = vmatmul.mubr.bf16.gmra.mrb[0].mxu0 %v4407
  %v4559 = vpop.f32.mrb[0].mxu0
  %v4560 = vadd.f32 0.0, %v4559
  %v4561 = vpop.f32.mrb[0].mxu0
  %v4562 = vpop.f32.mrb[0].mxu0
  %v4563 = vadd.f32 0.0, %v4562
  %v4564 = vpop.f32.mrb[0].mxu0
  %4565 = vmatprep.mubr.bf16.mxu0 0
  %4566 = vmatmul.mubr.bf16.gmra.mrb[0].mxu0 %v4410
  %v4567 = vpop.f32.mrb[0].mxu0
  %v4568 = vadd.f32 0.0, %v4567
  %v4569 = vpop.f32.mrb[0].mxu0
  %v4570 = vpop.f32.mrb[0].mxu0
  %v4571 = vadd.f32 0.0, %v4570
  %v4572 = vpop.f32.mrb[0].mxu0
  %4573 = vmatprep.mubr.bf16.mxu0 0
  %4574 = vmatmul.mubr.bf16.gmra.mrb[0].mxu0 %v4413
  %v4575 = vpop.f32.mrb[0].mxu0
  %v4576 = vadd.f32 0.0, %v4575
  %v4577 = vpop.f32.mrb[0].mxu0
  %v4578 = vpop.f32.mrb[0].mxu0
  %v4579 = vadd.f32 0.0, %v4578
  %v4580 = vpop.f32.mrb[0].mxu0
  %4581 = vmatprep.mubr.bf16.mxu0 0
  %4582 = vmatmul.mubr.bf16.gmra.mrb[0].mxu0 %v4416
  %v4583 = vpop.f32.mrb[0].mxu0
  %v4584 = vadd.f32 0.0, %v4583
  %v4585 = vpop.f32.mrb[0].mxu0
  %v4586 = vpop.f32.mrb[0].mxu0
  %v4587 = vadd.f32 0.0, %v4586
  %v4588 = vpop.f32.mrb[0].mxu0
  %4589 = vmatprep.mubr.bf16.mxu0 0
  %4590 = vmatmul.mubr.bf16.gmra.mrb[0].mxu0 %v4419
  %v4591 = vpop.f32.mrb[0].mxu0
  %v4592 = vadd.f32 0.0, %v4591
  %v4593 = vpop.f32.mrb[0].mxu0
  %v4594 = vpop.f32.mrb[0].mxu0
  %v4595 = vadd.f32 0.0, %v4594
  %v4596 = vpop.f32.mrb[0].mxu0
  %4597 = vmatprep.mubr.bf16.mxu0 0
  %4598 = vmatmul.mubr.bf16.gmra.mrb[0].mxu0 %v4422
  %v4599 = vpop.f32.mrb[0].mxu0
  %v4600 = vadd.f32 0.0, %v4599
  %v4601 = vpop.f32.mrb[0].mxu0
  %v4602 = vpop.f32.mrb[0].mxu0
  %v4603 = vadd.f32 0.0, %v4602
  %v4604 = vpop.f32.mrb[0].mxu0
  %4605 = vmatprep.mubr.bf16.mxu0 0
  %4606 = vmatmul.mubr.bf16.gmra.mrb[0].mxu0 %v4425
  %v4607 = vpop.f32.mrb[0].mxu0
  %v4608 = vadd.f32 0.0, %v4607
  %v4609 = vpop.f32.mrb[0].mxu0
  %v4610 = vpop.f32.mrb[0].mxu0
  %v4611 = vadd.f32 0.0, %v4610
  %v4612 = vpop.f32.mrb[0].mxu0
  %4613 = vmatprep.mubr.bf16.mxu0 0
  %4614 = vmatmul.mubr.bf16.gmra.mrb[0].mxu0 %v4428
  %v4615 = vpop.f32.mrb[0].mxu0
  %v4616 = vadd.f32 0.0, %v4615
  %v4617 = vpop.f32.mrb[0].mxu0
  %v4618 = vpop.f32.mrb[0].mxu0
  %v4619 = vadd.f32 0.0, %v4618
  %v4620 = vpop.f32.mrb[0].mxu0
  %4621 = vmatprep.mubr.bf16.mxu0 0
  %4622 = vmatmul.mubr.bf16.gmra.mrb[0].mxu0 %v4431
  %v4623 = vpop.f32.mrb[0].mxu0
  %v4624 = vadd.f32 0.0, %v4623
  %v4625 = vpop.f32.mrb[0].mxu0
  %v4626 = vpop.f32.mrb[0].mxu0
  %v4627 = vadd.f32 0.0, %v4626
  %v4628 = vpop.f32.mrb[0].mxu0
  %4629 = vmatprep.mubr.bf16.mxu0 0
  %4630 = vmatmul.mubr.bf16.gmra.mrb[0].mxu0 %v4434
  %v4631 = vpop.f32.mrb[0].mxu0
  %v4632 = vadd.f32 0.0, %v4631
  %v4633 = vpop.f32.mrb[0].mxu0
  %v4634 = vpop.f32.mrb[0].mxu0
  %v4635 = vadd.f32 0.0, %v4634
  %v4636 = vpop.f32.mrb[0].mxu0
  %4637 = vmatprep.mubr.bf16.mxu0 0
  %4638 = vmatmul.mubr.bf16.gmra.mrb[0].mxu0 %v4437
  %v4639 = vpop.f32.mrb[0].mxu0
  %v4640 = vadd.f32 0.0, %v4639
  %v4641 = vpop.f32.mrb[0].mxu0
  %v4642 = vpop.f32.mrb[0].mxu0
  %v4643 = vadd.f32 0.0, %v4642
  %v4644 = vpop.f32.mrb[0].mxu0
  %4645 = vmatprep.mubr.bf16.mxu0 0
  %4646 = vmatmul.mubr.bf16.gmra.mrb[0].mxu0 %v4440
  %v4647 = vpop.f32.mrb[0].mxu0
  %v4648 = vadd.f32 0.0, %v4647
  %v4649 = vpop.f32.mrb[0].mxu0
  %v4650 = vpop.f32.mrb[0].mxu0
  %v4651 = vadd.f32 0.0, %v4650
  %v4652 = vpop.f32.mrb[0].mxu0
  %4653 = vmatprep.mubr.bf16.mxu0 0
  %4654 = vmatmul.mubr.bf16.gmra.mrb[0].mxu0 %v4443
  %v4655 = vpop.f32.mrb[0].mxu0
  %v4656 = vadd.f32 0.0, %v4655
  %v4657 = vpop.f32.mrb[0].mxu0
  %v4658 = vpop.f32.mrb[0].mxu0
  %v4659 = vadd.f32 0.0, %v4658
  %v4660 = vpop.f32.mrb[0].mxu0
  %4661 = vmatprep.mubr.bf16.mxu0 0
  %4662 = vmatmul.mubr.bf16.gmra.mrb[0].mxu0 %v4446
  %v4663 = vpop.f32.mrb[0].mxu0
  %v4664 = vadd.f32 0.0, %v4663
  %v4665 = vpop.f32.mrb[0].mxu0
  %v4666 = vpop.f32.mrb[0].mxu0
  %v4667 = vadd.f32 0.0, %v4666
  %v4668 = vpop.f32.mrb[0].mxu0
  %4669 = vmatprep.mubr.bf16.mxu0 0
  %4670 = vmatmul.mubr.bf16.gmra.mrb[0].mxu0 %v4449
  %v4671 = vpop.f32.mrb[0].mxu0
  %v4672 = vadd.f32 0.0, %v4671
  %v4673 = vpop.f32.mrb[0].mxu0
  %v4674 = vpop.f32.mrb[0].mxu0
  %v4675 = vadd.f32 0.0, %v4674
  %v4676 = vpop.f32.mrb[0].mxu0
  %4677 = vmatprep.mubr.bf16.mxu0 0
  %4678 = vmatmul.mubr.bf16.gmra.mrb[0].mxu0 %v4452
  %v4679 = vpop.f32.mrb[0].mxu0
  %v4680 = vadd.f32 0.0, %v4679
  %v4681 = vpop.f32.mrb[0].mxu0
  %v4682 = vpop.f32.mrb[0].mxu0
  %v4683 = vadd.f32 0.0, %v4682
  %v4684 = vpop.f32.mrb[0].mxu0
  %4685 = vmatprep.mubr.bf16.mxu0 0
  %4686 = vmatmul.mubr.bf16.gmra.mrb[0].mxu0 %v4455
  %v4687 = vpop.f32.mrb[0].mxu0
  %v4688 = vadd.f32 0.0, %v4687
  %v4689 = vpop.f32.mrb[0].mxu0
  %v4690 = vpop.f32.mrb[0].mxu0
  %v4691 = vadd.f32 0.0, %v4690
  %v4692 = vpop.f32.mrb[0].mxu0
  %4693 = vmatprep.mubr.bf16.mxu0 0
  %4694 = vmatmul.mubr.bf16.gmra.mrb[0].mxu0 %v4458
  %v4695 = vpop.f32.mrb[0].mxu0
  %v4696 = vadd.f32 0.0, %v4695
  %v4697 = vpop.f32.mrb[0].mxu0
  %v4698 = vpop.f32.mrb[0].mxu0
  %v4699 = vadd.f32 0.0, %v4698
  %v4700 = vpop.f32.mrb[0].mxu0
  %4701 = vmatprep.mubr.bf16.mxu0 0
  %4702 = vmatmul.mubr.bf16.gmra.mrb[0].mxu0 %v4461
  %v4703 = vpop.f32.mrb[0].mxu0
  %v4704 = vadd.f32 0.0, %v4703
  %v4705 = vpop.f32.mrb[0].mxu0
  %v4706 = vpop.f32.mrb[0].mxu0
  %v4707 = vadd.f32 0.0, %v4706
  %v4708 = vpop.f32.mrb[0].mxu0
  %4709 = vmatprep.mubr.bf16.mxu0 0
  %4710 = vmatmul.mubr.bf16.gmra.mrb[0].mxu0 %v4464
  %v4711 = vpop.f32.mrb[0].mxu0
  %v4712 = vadd.f32 0.0, %v4711
  %v4713 = vpop.f32.mrb[0].mxu0
  %v4714 = vpop.f32.mrb[0].mxu0
  %v4715 = vadd.f32 0.0, %v4714
  %v4716 = vpop.f32.mrb[0].mxu0
  %4717 = vmatprep.mubr.bf16.mxu0 0
  %4718 = vmatmul.mubr.bf16.gmra.mrb[0].mxu0 %v4467
  %v4719 = vpop.f32.mrb[0].mxu0
  %v4720 = vadd.f32 0.0, %v4719
  %v4721 = vpop.f32.mrb[0].mxu0
  %v4722 = vpop.f32.mrb[0].mxu0
  %v4723 = vadd.f32 0.0, %v4722
  %v4724 = vpop.f32.mrb[0].mxu0
  %4725 = vmatprep.mubr.bf16.mxu0 0
  %4726 = vmatmul.mubr.bf16.gmra.mrb[0].mxu0 %v4470
  %v4727 = vpop.f32.mrb[0].mxu0
  %v4728 = vadd.f32 0.0, %v4727
  %v4729 = vpop.f32.mrb[0].mxu0
  %v4730 = vpop.f32.mrb[0].mxu0
  %v4731 = vadd.f32 0.0, %v4730
  %v4732 = vpop.f32.mrb[0].mxu0
  %4733 = vmatprep.mubr.bf16.mxu0 0
  %4734 = vmatmul.mubr.bf16.gmra.mrb[0].mxu0 %v4473
  %v4735 = vpop.f32.mrb[0].mxu0
  %v4736 = vadd.f32 0.0, %v4735
  %v4737 = vpop.f32.mrb[0].mxu0
  %v4738 = vpop.f32.mrb[0].mxu0
  %v4739 = vadd.f32 0.0, %v4738
  %v4740 = vpop.f32.mrb[0].mxu0
  %4741 = vmatprep.mubr.bf16.mxu0 0
  %4742 = vmatmul.mubr.bf16.gmra.mrb[0].mxu0 %v4476
  %v4743 = vpop.f32.mrb[0].mxu0
  %v4744 = vadd.f32 0.0, %v4743
  %v4745 = vpop.f32.mrb[0].mxu0
  %v4746 = vpop.f32.mrb[0].mxu0
  %v4747 = vadd.f32 0.0, %v4746
  %v4748 = vpop.f32.mrb[0].mxu0
  %4749 = vmatprep.mubr.bf16.mxu0 0
  %4750 = vmatmul.mubr.bf16.gmra.mrb[0].mxu0 %v4479
  %v4751 = vpop.f32.mrb[0].mxu0
  %v4752 = vadd.f32 0.0, %v4751
  %v4753 = vpop.f32.mrb[0].mxu0
  %v4754 = vpop.f32.mrb[0].mxu0
  %v4755 = vadd.f32 0.0, %v4754
  %v4756 = vpop.f32.mrb[0].mxu0
  %4757 = vmatprep.mubr.bf16.mxu0 0
  %4758 = vmatmul.mubr.bf16.gmra.mrb[0].mxu0 %v4482
  %v4759 = vpop.f32.mrb[0].mxu0
  %v4760 = vadd.f32 0.0, %v4759
  %v4761 = vpop.f32.mrb[0].mxu0
  %v4762 = vpop.f32.mrb[0].mxu0
  %v4763 = vadd.f32 0.0, %v4762
  %v4764 = vpop.f32.mrb[0].mxu0
  %4765 = vmatprep.mubr.bf16.mxu0 0
  %4766 = vmatmul.mubr.bf16.gmra.mrb[0].mxu0 %v4485
  %v4767 = vpop.f32.mrb[0].mxu0
  %v4768 = vadd.f32 0.0, %v4767
  %v4769 = vpop.f32.mrb[0].mxu0
  %v4770 = vpop.f32.mrb[0].mxu0
  %v4771 = vadd.f32 0.0, %v4770
  %v4772 = vpop.f32.mrb[0].mxu0
  %4773 = vmatprep.mubr.bf16.mxu0 0
  %4774 = vmatmul.mubr.bf16.gmra.mrb[0].mxu0 %v4488
  %v4775 = vpop.f32.mrb[0].mxu0
  %v4776 = vadd.f32 0.0, %v4775
  %v4777 = vpop.f32.mrb[0].mxu0
  %v4778 = vpop.f32.mrb[0].mxu0
  %v4779 = vadd.f32 0.0, %v4778
  %v4780 = vpop.f32.mrb[0].mxu0
  %4781 = vdwg.mxu0
  %v4782 = vadd.f32 %v4232, %v4528
  %v4783 = vadd.f32 %v4233, %v4531
  %v4784 = vadd.f32 %v4234, %v4536
  %v4785 = vadd.f32 %v4235, %v4539
  %v4786 = vadd.f32 %v4236, %v4544
  %v4787 = vadd.f32 %v4237, %v4547
  %v4788 = vadd.f32 %v4238, %v4552
  %v4789 = vadd.f32 %v4239, %v4555
  %v4790 = vadd.f32 %v4240, %v4560
  %v4791 = vadd.f32 %v4241, %v4563
  %v4792 = vadd.f32 %v4242, %v4568
  %v4793 = vadd.f32 %v4243, %v4571
  %v4794 = vadd.f32 %v4244, %v4576
  %v4795 = vadd.f32 %v4245, %v4579
  %v4796 = vadd.f32 %v4246, %v4584
  %v4797 = vadd.f32 %v4247, %v4587
  %v4798 = vadd.f32 %v4248, %v4592
  %v4799 = vadd.f32 %v4249, %v4595
  %v4800 = vadd.f32 %v4250, %v4600
  %v4801 = vadd.f32 %v4251, %v4603
  %v4802 = vadd.f32 %v4252, %v4608
  %v4803 = vadd.f32 %v4253, %v4611
  %v4804 = vadd.f32 %v4254, %v4616
  %v4805 = vadd.f32 %v4255, %v4619
  %v4806 = vadd.f32 %v4256, %v4624
  %v4807 = vadd.f32 %v4257, %v4627
  %v4808 = vadd.f32 %v4258, %v4632
  %v4809 = vadd.f32 %v4259, %v4635
  %v4810 = vadd.f32 %v4260, %v4640
  %v4811 = vadd.f32 %v4261, %v4643
  %v4812 = vadd.f32 %v4262, %v4648
  %v4813 = vadd.f32 %v4263, %v4651
  %v4814 = vadd.f32 %v4264, %v4656
  %v4815 = vadd.f32 %v4265, %v4659
  %v4816 = vadd.f32 %v4266, %v4664
  %v4817 = vadd.f32 %v4267, %v4667
  %v4818 = vadd.f32 %v4268, %v4672
  %v4819 = vadd.f32 %v4269, %v4675
  %v4820 = vadd.f32 %v4270, %v4680
  %v4821 = vadd.f32 %v4271, %v4683
  %v4822 = vadd.f32 %v4272, %v4688
  %v4823 = vadd.f32 %v4273, %v4691
  %v4824 = vadd.f32 %v4274, %v4696
  %v4825 = vadd.f32 %v4275, %v4699
  %v4826 = vadd.f32 %v4276, %v4704
  %v4827 = vadd.f32 %v4277, %v4707
  %v4828 = vadd.f32 %v4278, %v4712
  %v4829 = vadd.f32 %v4279, %v4715
  %v4830 = vadd.f32 %v4280, %v4720
  %v4831 = vadd.f32 %v4281, %v4723
  %v4832 = vadd.f32 %v4282, %v4728
  %v4833 = vadd.f32 %v4283, %v4731
  %v4834 = vadd.f32 %v4284, %v4736
  %v4835 = vadd.f32 %v4285, %v4739
  %v4836 = vadd.f32 %v4286, %v4744
  %v4837 = vadd.f32 %v4287, %v4747
  %v4838 = vadd.f32 %v4288, %v4752
  %v4839 = vadd.f32 %v4289, %v4755
  %v4840 = vadd.f32 %v4290, %v4760
  %v4841 = vadd.f32 %v4291, %v4763
  %v4842 = vadd.f32 %v4292, %v4768
  %v4843 = vadd.f32 %v4293, %v4771
  %v4844 = vadd.f32 %v4294, %v4776
  %v4845 = vadd.f32 %v4295, %v4779
  %v4846 = vld [vmem:[%s2] sm:$0x1]
  %v4847 = vlaneseq
  %v4848 = vshrl.u32 %v4847, 7
  %v4849 = vsub.s32 0, %v4848
  %v4850 = vrot.slane %v4846, %v4849
  %v4851 = vadd.f32 %v4782, %v4850
  %v4852 = vadd.f32 %v4783, %v4850
  %v4853 = vadd.f32 %v4784, %v4850
  %v4854 = vadd.f32 %v4785, %v4850
  %v4855 = vadd.f32 %v4786, %v4850
  %v4856 = vadd.f32 %v4787, %v4850
  %v4857 = vadd.f32 %v4788, %v4850
  %v4858 = vadd.f32 %v4789, %v4850
  %v4859 = vadd.f32 %v4790, %v4850
  %v4860 = vadd.f32 %v4791, %v4850
  %v4861 = vadd.f32 %v4792, %v4850
  %v4862 = vadd.f32 %v4793, %v4850
  %v4863 = vadd.f32 %v4794, %v4850
  %v4864 = vadd.f32 %v4795, %v4850
  %v4865 = vadd.f32 %v4796, %v4850
  %v4866 = vadd.f32 %v4797, %v4850
  %v4867 = vadd.f32 %v4798, %v4850
  %v4868 = vadd.f32 %v4799, %v4850
  %v4869 = vadd.f32 %v4800, %v4850
  %v4870 = vadd.f32 %v4801, %v4850
  %v4871 = vadd.f32 %v4802, %v4850
  %v4872 = vadd.f32 %v4803, %v4850
  %v4873 = vadd.f32 %v4804, %v4850
  %v4874 = vadd.f32 %v4805, %v4850
  %v4875 = vadd.f32 %v4806, %v4850
  %v4876 = vadd.f32 %v4807, %v4850
  %v4877 = vadd.f32 %v4808, %v4850
  %v4878 = vadd.f32 %v4809, %v4850
  %v4879 = vadd.f32 %v4810, %v4850
  %v4880 = vadd.f32 %v4811, %v4850
  %v4881 = vadd.f32 %v4812, %v4850
  %v4882 = vadd.f32 %v4813, %v4850
  %v4883 = vadd.f32 %v4814, %v4850
  %v4884 = vadd.f32 %v4815, %v4850
  %v4885 = vadd.f32 %v4816, %v4850
  %v4886 = vadd.f32 %v4817, %v4850
  %v4887 = vadd.f32 %v4818, %v4850
  %v4888 = vadd.f32 %v4819, %v4850
  %v4889 = vadd.f32 %v4820, %v4850
  %v4890 = vadd.f32 %v4821, %v4850
  %v4891 = vadd.f32 %v4822, %v4850
  %v4892 = vadd.f32 %v4823, %v4850
  %v4893 = vadd.f32 %v4824, %v4850
  %v4894 = vadd.f32 %v4825, %v4850
  %v4895 = vadd.f32 %v4826, %v4850
  %v4896 = vadd.f32 %v4827, %v4850
  %v4897 = vadd.f32 %v4828, %v4850
  %v4898 = vadd.f32 %v4829, %v4850
  %v4899 = vadd.f32 %v4830, %v4850
  %v4900 = vadd.f32 %v4831, %v4850
  %v4901 = vadd.f32 %v4832, %v4850
  %v4902 = vadd.f32 %v4833, %v4850
  %v4903 = vadd.f32 %v4834, %v4850
  %v4904 = vadd.f32 %v4835, %v4850
  %v4905 = vadd.f32 %v4836, %v4850
  %v4906 = vadd.f32 %v4837, %v4850
  %v4907 = vadd.f32 %v4838, %v4850
  %v4908 = vadd.f32 %v4839, %v4850
  %v4909 = vadd.f32 %v4840, %v4850
  %v4910 = vadd.f32 %v4841, %v4850
  %v4911 = vadd.f32 %v4842, %v4850
  %v4912 = vadd.f32 %v4843, %v4850
  %v4913 = vadd.f32 %v4844, %v4850
  %v4914 = vadd.f32 %v4845, %v4850
  %vm4915 = vcmask 130048
  %v4916 = vsel %vm4915, %v4851, 0.0
  %v4917 = vsel %vm4915, %v4852, 0.0
  %v4918 = vadd.f32 %v4916, %v4917
  %v4919 = vsel %vm4915, %v4853, 0.0
  %v4920 = vadd.f32 %v4918, %v4919
  %v4921 = vsel %vm4915, %v4854, 0.0
  %v4922 = vadd.f32 %v4920, %v4921
  %v4923 = vsel %vm4915, %v4855, 0.0
  %v4924 = vadd.f32 %v4922, %v4923
  %v4925 = vsel %vm4915, %v4856, 0.0
  %v4926 = vadd.f32 %v4924, %v4925
  %v4927 = vsel %vm4915, %v4857, 0.0
  %v4928 = vadd.f32 %v4926, %v4927
  %v4929 = vsel %vm4915, %v4858, 0.0
  %v4930 = vadd.f32 %v4928, %v4929
  %v4931 = vsel %vm4915, %v4859, 0.0
  %v4932 = vadd.f32 %v4930, %v4931
  %v4933 = vsel %vm4915, %v4860, 0.0
  %v4934 = vadd.f32 %v4932, %v4933
  %v4935 = vsel %vm4915, %v4861, 0.0
  %v4936 = vadd.f32 %v4934, %v4935
  %v4937 = vsel %vm4915, %v4862, 0.0
  %v4938 = vadd.f32 %v4936, %v4937
  %v4939 = vsel %vm4915, %v4863, 0.0
  %v4940 = vadd.f32 %v4938, %v4939
  %v4941 = vsel %vm4915, %v4864, 0.0
  %v4942 = vadd.f32 %v4940, %v4941
  %v4943 = vsel %vm4915, %v4865, 0.0
  %v4944 = vadd.f32 %v4942, %v4943
  %v4945 = vsel %vm4915, %v4866, 0.0
  %v4946 = vadd.f32 %v4944, %v4945
  %v4947 = vsel %vm4915, %v4867, 0.0
  %v4948 = vadd.f32 %v4946, %v4947
  %v4949 = vsel %vm4915, %v4868, 0.0
  %v4950 = vadd.f32 %v4948, %v4949
  %v4951 = vsel %vm4915, %v4869, 0.0
  %v4952 = vadd.f32 %v4950, %v4951
  %v4953 = vsel %vm4915, %v4870, 0.0
  %v4954 = vadd.f32 %v4952, %v4953
  %v4955 = vsel %vm4915, %v4871, 0.0
  %v4956 = vadd.f32 %v4954, %v4955
  %v4957 = vsel %vm4915, %v4872, 0.0
  %v4958 = vadd.f32 %v4956, %v4957
  %v4959 = vsel %vm4915, %v4873, 0.0
  %v4960 = vadd.f32 %v4958, %v4959
  %v4961 = vsel %vm4915, %v4874, 0.0
  %v4962 = vadd.f32 %v4960, %v4961
  %v4963 = vsel %vm4915, %v4875, 0.0
  %v4964 = vadd.f32 %v4962, %v4963
  %v4965 = vsel %vm4915, %v4876, 0.0
  %v4966 = vadd.f32 %v4964, %v4965
  %v4967 = vsel %vm4915, %v4877, 0.0
  %v4968 = vadd.f32 %v4966, %v4967
  %v4969 = vsel %vm4915, %v4878, 0.0
  %v4970 = vadd.f32 %v4968, %v4969
  %v4971 = vsel %vm4915, %v4879, 0.0
  %v4972 = vadd.f32 %v4970, %v4971
  %v4973 = vsel %vm4915, %v4880, 0.0
  %v4974 = vadd.f32 %v4972, %v4973
  %v4975 = vsel %vm4915, %v4881, 0.0
  %v4976 = vadd.f32 %v4974, %v4975
  %v4977 = vsel %vm4915, %v4882, 0.0
  %v4978 = vadd.f32 %v4976, %v4977
  %v4979 = vsel %vm4915, %v4883, 0.0
  %v4980 = vadd.f32 %v4978, %v4979
  %v4981 = vsel %vm4915, %v4884, 0.0
  %v4982 = vadd.f32 %v4980, %v4981
  %v4983 = vsel %vm4915, %v4885, 0.0
  %v4984 = vadd.f32 %v4982, %v4983
  %v4985 = vsel %vm4915, %v4886, 0.0
  %v4986 = vadd.f32 %v4984, %v4985
  %v4987 = vsel %vm4915, %v4887, 0.0
  %v4988 = vadd.f32 %v4986, %v4987
  %v4989 = vsel %vm4915, %v4888, 0.0
  %v4990 = vadd.f32 %v4988, %v4989
  %v4991 = vsel %vm4915, %v4889, 0.0
  %v4992 = vadd.f32 %v4990, %v4991
  %v4993 = vsel %vm4915, %v4890, 0.0
  %v4994 = vadd.f32 %v4992, %v4993
  %v4995 = vsel %vm4915, %v4891, 0.0
  %v4996 = vadd.f32 %v4994, %v4995
  %v4997 = vsel %vm4915, %v4892, 0.0
  %v4998 = vadd.f32 %v4996, %v4997
  %v4999 = vsel %vm4915, %v4893, 0.0
  %v5000 = vadd.f32 %v4998, %v4999
  %v5001 = vsel %vm4915, %v4894, 0.0
  %v5002 = vadd.f32 %v5000, %v5001
  %v5003 = vsel %vm4915, %v4895, 0.0
  %v5004 = vadd.f32 %v5002, %v5003
  %v5005 = vsel %vm4915, %v4896, 0.0
  %v5006 = vadd.f32 %v5004, %v5005
  %v5007 = vsel %vm4915, %v4897, 0.0
  %v5008 = vadd.f32 %v5006, %v5007
  %v5009 = vsel %vm4915, %v4898, 0.0
  %v5010 = vadd.f32 %v5008, %v5009
  %v5011 = vsel %vm4915, %v4899, 0.0
  %v5012 = vadd.f32 %v5010, %v5011
  %v5013 = vsel %vm4915, %v4900, 0.0
  %v5014 = vadd.f32 %v5012, %v5013
  %v5015 = vsel %vm4915, %v4901, 0.0
  %v5016 = vadd.f32 %v5014, %v5015
  %v5017 = vsel %vm4915, %v4902, 0.0
  %v5018 = vadd.f32 %v5016, %v5017
  %v5019 = vsel %vm4915, %v4903, 0.0
  %v5020 = vadd.f32 %v5018, %v5019
  %v5021 = vsel %vm4915, %v4904, 0.0
  %v5022 = vadd.f32 %v5020, %v5021
  %v5023 = vsel %vm4915, %v4905, 0.0
  %v5024 = vadd.f32 %v5022, %v5023
  %v5025 = vsel %vm4915, %v4906, 0.0
  %v5026 = vadd.f32 %v5024, %v5025
  %v5027 = vsel %vm4915, %v4907, 0.0
  %v5028 = vadd.f32 %v5026, %v5027
  %v5029 = vsel %vm4915, %v4908, 0.0
  %v5030 = vadd.f32 %v5028, %v5029
  %v5031 = vsel %vm4915, %v4909, 0.0
  %v5032 = vadd.f32 %v5030, %v5031
  %v5033 = vsel %vm4915, %v4910, 0.0
  %v5034 = vadd.f32 %v5032, %v5033
  %v5035 = vsel %vm4915, %v4911, 0.0
  %v5036 = vadd.f32 %v5034, %v5035
  %v5037 = vsel %vm4915, %v4912, 0.0
  %v5038 = vadd.f32 %v5036, %v5037
  %v5039 = vsel %vm4915, %v4913, 0.0
  %v5040 = vadd.f32 %v5038, %v5039
  %v5041 = vsel %vm4915, %v4914, 0.0
  %v5042 = vadd.f32 %v5040, %v5041
  %v5043 = vrot.slane %v5042, 4
  %v5044 = vadd.f32 %v5042, %v5043
  %v5045 = vrot.slane %v5044, 2
  %v5046 = vadd.f32 %v5044, %v5045
  %v5047 = vrot.slane %v5046, 1
  %v5048 = vadd.f32 %v5046, %v5047
  %v5049 = vrcp.pop 512.0
  %v5050 = vmul.f32 %v5048, %v5049
  %v5051 = vsub.f32 %v4851, %v5050
  %v5052 = vsub.f32 %v4852, %v5050
  %v5053 = vsub.f32 %v4853, %v5050
  %v5054 = vsub.f32 %v4854, %v5050
  %v5055 = vsub.f32 %v4855, %v5050
  %v5056 = vsub.f32 %v4856, %v5050
  %v5057 = vsub.f32 %v4857, %v5050
  %v5058 = vsub.f32 %v4858, %v5050
  %v5059 = vsub.f32 %v4859, %v5050
  %v5060 = vsub.f32 %v4860, %v5050
  %v5061 = vsub.f32 %v4861, %v5050
  %v5062 = vsub.f32 %v4862, %v5050
  %v5063 = vsub.f32 %v4863, %v5050
  %v5064 = vsub.f32 %v4864, %v5050
  %v5065 = vsub.f32 %v4865, %v5050
  %v5066 = vsub.f32 %v4866, %v5050
  %v5067 = vsub.f32 %v4867, %v5050
  %v5068 = vsub.f32 %v4868, %v5050
  %v5069 = vsub.f32 %v4869, %v5050
  %v5070 = vsub.f32 %v4870, %v5050
  %v5071 = vsub.f32 %v4871, %v5050
  %v5072 = vsub.f32 %v4872, %v5050
  %v5073 = vsub.f32 %v4873, %v5050
  %v5074 = vsub.f32 %v4874, %v5050
  %v5075 = vsub.f32 %v4875, %v5050
  %v5076 = vsub.f32 %v4876, %v5050
  %v5077 = vsub.f32 %v4877, %v5050
  %v5078 = vsub.f32 %v4878, %v5050
  %v5079 = vsub.f32 %v4879, %v5050
  %v5080 = vsub.f32 %v4880, %v5050
  %v5081 = vsub.f32 %v4881, %v5050
  %v5082 = vsub.f32 %v4882, %v5050
  %v5083 = vsub.f32 %v4883, %v5050
  %v5084 = vsub.f32 %v4884, %v5050
  %v5085 = vsub.f32 %v4885, %v5050
  %v5086 = vsub.f32 %v4886, %v5050
  %v5087 = vsub.f32 %v4887, %v5050
  %v5088 = vsub.f32 %v4888, %v5050
  %v5089 = vsub.f32 %v4889, %v5050
  %v5090 = vsub.f32 %v4890, %v5050
  %v5091 = vsub.f32 %v4891, %v5050
  %v5092 = vsub.f32 %v4892, %v5050
  %v5093 = vsub.f32 %v4893, %v5050
  %v5094 = vsub.f32 %v4894, %v5050
  %v5095 = vsub.f32 %v4895, %v5050
  %v5096 = vsub.f32 %v4896, %v5050
  %v5097 = vsub.f32 %v4897, %v5050
  %v5098 = vsub.f32 %v4898, %v5050
  %v5099 = vsub.f32 %v4899, %v5050
  %v5100 = vsub.f32 %v4900, %v5050
  %v5101 = vsub.f32 %v4901, %v5050
  %v5102 = vsub.f32 %v4902, %v5050
  %v5103 = vsub.f32 %v4903, %v5050
  %v5104 = vsub.f32 %v4904, %v5050
  %v5105 = vsub.f32 %v4905, %v5050
  %v5106 = vsub.f32 %v4906, %v5050
  %v5107 = vsub.f32 %v4907, %v5050
  %v5108 = vsub.f32 %v4908, %v5050
  %v5109 = vsub.f32 %v4909, %v5050
  %v5110 = vsub.f32 %v4910, %v5050
  %v5111 = vsub.f32 %v4911, %v5050
  %v5112 = vsub.f32 %v4912, %v5050
  %v5113 = vsub.f32 %v4913, %v5050
  %v5114 = vsub.f32 %v4914, %v5050
  %v5115 = vmul.f32 %v5051, %v5051
  %v5116 = vmul.f32 %v5052, %v5052
  %v5117 = vmul.f32 %v5053, %v5053
  %v5118 = vmul.f32 %v5054, %v5054
  %v5119 = vmul.f32 %v5055, %v5055
  %v5120 = vmul.f32 %v5056, %v5056
  %v5121 = vmul.f32 %v5057, %v5057
  %v5122 = vmul.f32 %v5058, %v5058
  %v5123 = vmul.f32 %v5059, %v5059
  %v5124 = vmul.f32 %v5060, %v5060
  %v5125 = vmul.f32 %v5061, %v5061
  %v5126 = vmul.f32 %v5062, %v5062
  %v5127 = vmul.f32 %v5063, %v5063
  %v5128 = vmul.f32 %v5064, %v5064
  %v5129 = vmul.f32 %v5065, %v5065
  %v5130 = vmul.f32 %v5066, %v5066
  %v5131 = vmul.f32 %v5067, %v5067
  %v5132 = vmul.f32 %v5068, %v5068
  %v5133 = vmul.f32 %v5069, %v5069
  %v5134 = vmul.f32 %v5070, %v5070
  %v5135 = vmul.f32 %v5071, %v5071
  %v5136 = vmul.f32 %v5072, %v5072
  %v5137 = vmul.f32 %v5073, %v5073
  %v5138 = vmul.f32 %v5074, %v5074
  %v5139 = vmul.f32 %v5075, %v5075
  %v5140 = vmul.f32 %v5076, %v5076
  %v5141 = vmul.f32 %v5077, %v5077
  %v5142 = vmul.f32 %v5078, %v5078
  %v5143 = vmul.f32 %v5079, %v5079
  %v5144 = vmul.f32 %v5080, %v5080
  %v5145 = vmul.f32 %v5081, %v5081
  %v5146 = vmul.f32 %v5082, %v5082
  %v5147 = vmul.f32 %v5083, %v5083
  %v5148 = vmul.f32 %v5084, %v5084
  %v5149 = vmul.f32 %v5085, %v5085
  %v5150 = vmul.f32 %v5086, %v5086
  %v5151 = vmul.f32 %v5087, %v5087
  %v5152 = vmul.f32 %v5088, %v5088
  %v5153 = vmul.f32 %v5089, %v5089
  %v5154 = vmul.f32 %v5090, %v5090
  %v5155 = vmul.f32 %v5091, %v5091
  %v5156 = vmul.f32 %v5092, %v5092
  %v5157 = vmul.f32 %v5093, %v5093
  %v5158 = vmul.f32 %v5094, %v5094
  %v5159 = vmul.f32 %v5095, %v5095
  %v5160 = vmul.f32 %v5096, %v5096
  %v5161 = vmul.f32 %v5097, %v5097
  %v5162 = vmul.f32 %v5098, %v5098
  %v5163 = vmul.f32 %v5099, %v5099
  %v5164 = vmul.f32 %v5100, %v5100
  %v5165 = vmul.f32 %v5101, %v5101
  %v5166 = vmul.f32 %v5102, %v5102
  %v5167 = vmul.f32 %v5103, %v5103
  %v5168 = vmul.f32 %v5104, %v5104
  %v5169 = vmul.f32 %v5105, %v5105
  %v5170 = vmul.f32 %v5106, %v5106
  %v5171 = vmul.f32 %v5107, %v5107
  %v5172 = vmul.f32 %v5108, %v5108
  %v5173 = vmul.f32 %v5109, %v5109
  %v5174 = vmul.f32 %v5110, %v5110
  %v5175 = vmul.f32 %v5111, %v5111
  %v5176 = vmul.f32 %v5112, %v5112
  %v5177 = vmul.f32 %v5113, %v5113
  %v5178 = vmul.f32 %v5114, %v5114
  %v5179 = vsel %vm4915, %v5115, 0.0
  %v5180 = vsel %vm4915, %v5116, 0.0
  %v5181 = vadd.f32 %v5179, %v5180
  %v5182 = vsel %vm4915, %v5117, 0.0
  %v5183 = vadd.f32 %v5181, %v5182
  %v5184 = vsel %vm4915, %v5118, 0.0
  %v5185 = vadd.f32 %v5183, %v5184
  %v5186 = vsel %vm4915, %v5119, 0.0
  %v5187 = vadd.f32 %v5185, %v5186
  %v5188 = vsel %vm4915, %v5120, 0.0
  %v5189 = vadd.f32 %v5187, %v5188
  %v5190 = vsel %vm4915, %v5121, 0.0
  %v5191 = vadd.f32 %v5189, %v5190
  %v5192 = vsel %vm4915, %v5122, 0.0
  %v5193 = vadd.f32 %v5191, %v5192
  %v5194 = vsel %vm4915, %v5123, 0.0
  %v5195 = vadd.f32 %v5193, %v5194
  %v5196 = vsel %vm4915, %v5124, 0.0
  %v5197 = vadd.f32 %v5195, %v5196
  %v5198 = vsel %vm4915, %v5125, 0.0
  %v5199 = vadd.f32 %v5197, %v5198
  %v5200 = vsel %vm4915, %v5126, 0.0
  %v5201 = vadd.f32 %v5199, %v5200
  %v5202 = vsel %vm4915, %v5127, 0.0
  %v5203 = vadd.f32 %v5201, %v5202
  %v5204 = vsel %vm4915, %v5128, 0.0
  %v5205 = vadd.f32 %v5203, %v5204
  %v5206 = vsel %vm4915, %v5129, 0.0
  %v5207 = vadd.f32 %v5205, %v5206
  %v5208 = vsel %vm4915, %v5130, 0.0
  %v5209 = vadd.f32 %v5207, %v5208
  %v5210 = vsel %vm4915, %v5131, 0.0
  %v5211 = vadd.f32 %v5209, %v5210
  %v5212 = vsel %vm4915, %v5132, 0.0
  %v5213 = vadd.f32 %v5211, %v5212
  %v5214 = vsel %vm4915, %v5133, 0.0
  %v5215 = vadd.f32 %v5213, %v5214
  %v5216 = vsel %vm4915, %v5134, 0.0
  %v5217 = vadd.f32 %v5215, %v5216
  %v5218 = vsel %vm4915, %v5135, 0.0
  %v5219 = vadd.f32 %v5217, %v5218
  %v5220 = vsel %vm4915, %v5136, 0.0
  %v5221 = vadd.f32 %v5219, %v5220
  %v5222 = vsel %vm4915, %v5137, 0.0
  %v5223 = vadd.f32 %v5221, %v5222
  %v5224 = vsel %vm4915, %v5138, 0.0
  %v5225 = vadd.f32 %v5223, %v5224
  %v5226 = vsel %vm4915, %v5139, 0.0
  %v5227 = vadd.f32 %v5225, %v5226
  %v5228 = vsel %vm4915, %v5140, 0.0
  %v5229 = vadd.f32 %v5227, %v5228
  %v5230 = vsel %vm4915, %v5141, 0.0
  %v5231 = vadd.f32 %v5229, %v5230
  %v5232 = vsel %vm4915, %v5142, 0.0
  %v5233 = vadd.f32 %v5231, %v5232
  %v5234 = vsel %vm4915, %v5143, 0.0
  %v5235 = vadd.f32 %v5233, %v5234
  %v5236 = vsel %vm4915, %v5144, 0.0
  %v5237 = vadd.f32 %v5235, %v5236
  %v5238 = vsel %vm4915, %v5145, 0.0
  %v5239 = vadd.f32 %v5237, %v5238
  %v5240 = vsel %vm4915, %v5146, 0.0
  %v5241 = vadd.f32 %v5239, %v5240
  %v5242 = vsel %vm4915, %v5147, 0.0
  %v5243 = vadd.f32 %v5241, %v5242
  %v5244 = vsel %vm4915, %v5148, 0.0
  %v5245 = vadd.f32 %v5243, %v5244
  %v5246 = vsel %vm4915, %v5149, 0.0
  %v5247 = vadd.f32 %v5245, %v5246
  %v5248 = vsel %vm4915, %v5150, 0.0
  %v5249 = vadd.f32 %v5247, %v5248
  %v5250 = vsel %vm4915, %v5151, 0.0
  %v5251 = vadd.f32 %v5249, %v5250
  %v5252 = vsel %vm4915, %v5152, 0.0
  %v5253 = vadd.f32 %v5251, %v5252
  %v5254 = vsel %vm4915, %v5153, 0.0
  %v5255 = vadd.f32 %v5253, %v5254
  %v5256 = vsel %vm4915, %v5154, 0.0
  %v5257 = vadd.f32 %v5255, %v5256
  %v5258 = vsel %vm4915, %v5155, 0.0
  %v5259 = vadd.f32 %v5257, %v5258
  %v5260 = vsel %vm4915, %v5156, 0.0
  %v5261 = vadd.f32 %v5259, %v5260
  %v5262 = vsel %vm4915, %v5157, 0.0
  %v5263 = vadd.f32 %v5261, %v5262
  %v5264 = vsel %vm4915, %v5158, 0.0
  %v5265 = vadd.f32 %v5263, %v5264
  %v5266 = vsel %vm4915, %v5159, 0.0
  %v5267 = vadd.f32 %v5265, %v5266
  %v5268 = vsel %vm4915, %v5160, 0.0
  %v5269 = vadd.f32 %v5267, %v5268
  %v5270 = vsel %vm4915, %v5161, 0.0
  %v5271 = vadd.f32 %v5269, %v5270
  %v5272 = vsel %vm4915, %v5162, 0.0
  %v5273 = vadd.f32 %v5271, %v5272
  %v5274 = vsel %vm4915, %v5163, 0.0
  %v5275 = vadd.f32 %v5273, %v5274
  %v5276 = vsel %vm4915, %v5164, 0.0
  %v5277 = vadd.f32 %v5275, %v5276
  %v5278 = vsel %vm4915, %v5165, 0.0
  %v5279 = vadd.f32 %v5277, %v5278
  %v5280 = vsel %vm4915, %v5166, 0.0
  %v5281 = vadd.f32 %v5279, %v5280
  %v5282 = vsel %vm4915, %v5167, 0.0
  %v5283 = vadd.f32 %v5281, %v5282
  %v5284 = vsel %vm4915, %v5168, 0.0
  %v5285 = vadd.f32 %v5283, %v5284
  %v5286 = vsel %vm4915, %v5169, 0.0
  %v5287 = vadd.f32 %v5285, %v5286
  %v5288 = vsel %vm4915, %v5170, 0.0
  %v5289 = vadd.f32 %v5287, %v5288
  %v5290 = vsel %vm4915, %v5171, 0.0
  %v5291 = vadd.f32 %v5289, %v5290
  %v5292 = vsel %vm4915, %v5172, 0.0
  %v5293 = vadd.f32 %v5291, %v5292
  %v5294 = vsel %vm4915, %v5173, 0.0
  %v5295 = vadd.f32 %v5293, %v5294
  %v5296 = vsel %vm4915, %v5174, 0.0
  %v5297 = vadd.f32 %v5295, %v5296
  %v5298 = vsel %vm4915, %v5175, 0.0
  %v5299 = vadd.f32 %v5297, %v5298
  %v5300 = vsel %vm4915, %v5176, 0.0
  %v5301 = vadd.f32 %v5299, %v5300
  %v5302 = vsel %vm4915, %v5177, 0.0
  %v5303 = vadd.f32 %v5301, %v5302
  %v5304 = vsel %vm4915, %v5178, 0.0
  %v5305 = vadd.f32 %v5303, %v5304
  %v5306 = vrot.slane %v5305, 4
  %v5307 = vadd.f32 %v5305, %v5306
  %v5308 = vrot.slane %v5307, 2
  %v5309 = vadd.f32 %v5307, %v5308
  %v5310 = vrot.slane %v5309, 1
  %v5311 = vadd.f32 %v5309, %v5310
  %v5312 = vmul.f32 %v5311, %v5049
  %v5313 = vld [vmem:[%s2 + $0x1] sm:$0x1]
  %v5314 = vadd.f32 %v5312, 1e-05
  %v5315 = vrsqrt.pop %v5314
  %v5316 = vmul.f32 %v5313, %v5315
  %v5317 = vld [vmem:[%s2 + $0x2] sm:$0x1]
  %v5318 = vmul.f32 %v5050, %v5316
  %v5319 = vsub.f32 %v5317, %v5318
  %v5320 = vlaneseq
  %v5321 = vshrl.u32 %v5320, 7
  %v5322 = vsub.s32 0, %v5321
  %v5323 = vrot.slane %v5316, %v5322
  %v5324 = vmul.f32 %v4851, %v5323
  %v5325 = vmul.f32 %v4852, %v5323
  %v5326 = vmul.f32 %v4853, %v5323
  %v5327 = vmul.f32 %v4854, %v5323
  %v5328 = vmul.f32 %v4855, %v5323
  %v5329 = vmul.f32 %v4856, %v5323
  %v5330 = vmul.f32 %v4857, %v5323
  %v5331 = vmul.f32 %v4858, %v5323
  %v5332 = vmul.f32 %v4859, %v5323
  %v5333 = vmul.f32 %v4860, %v5323
  %v5334 = vmul.f32 %v4861, %v5323
  %v5335 = vmul.f32 %v4862, %v5323
  %v5336 = vmul.f32 %v4863, %v5323
  %v5337 = vmul.f32 %v4864, %v5323
  %v5338 = vmul.f32 %v4865, %v5323
  %v5339 = vmul.f32 %v4866, %v5323
  %v5340 = vmul.f32 %v4867, %v5323
  %v5341 = vmul.f32 %v4868, %v5323
  %v5342 = vmul.f32 %v4869, %v5323
  %v5343 = vmul.f32 %v4870, %v5323
  %v5344 = vmul.f32 %v4871, %v5323
  %v5345 = vmul.f32 %v4872, %v5323
  %v5346 = vmul.f32 %v4873, %v5323
  %v5347 = vmul.f32 %v4874, %v5323
  %v5348 = vmul.f32 %v4875, %v5323
  %v5349 = vmul.f32 %v4876, %v5323
  %v5350 = vmul.f32 %v4877, %v5323
  %v5351 = vmul.f32 %v4878, %v5323
  %v5352 = vmul.f32 %v4879, %v5323
  %v5353 = vmul.f32 %v4880, %v5323
  %v5354 = vmul.f32 %v4881, %v5323
  %v5355 = vmul.f32 %v4882, %v5323
  %v5356 = vmul.f32 %v4883, %v5323
  %v5357 = vmul.f32 %v4884, %v5323
  %v5358 = vmul.f32 %v4885, %v5323
  %v5359 = vmul.f32 %v4886, %v5323
  %v5360 = vmul.f32 %v4887, %v5323
  %v5361 = vmul.f32 %v4888, %v5323
  %v5362 = vmul.f32 %v4889, %v5323
  %v5363 = vmul.f32 %v4890, %v5323
  %v5364 = vmul.f32 %v4891, %v5323
  %v5365 = vmul.f32 %v4892, %v5323
  %v5366 = vmul.f32 %v4893, %v5323
  %v5367 = vmul.f32 %v4894, %v5323
  %v5368 = vmul.f32 %v4895, %v5323
  %v5369 = vmul.f32 %v4896, %v5323
  %v5370 = vmul.f32 %v4897, %v5323
  %v5371 = vmul.f32 %v4898, %v5323
  %v5372 = vmul.f32 %v4899, %v5323
  %v5373 = vmul.f32 %v4900, %v5323
  %v5374 = vmul.f32 %v4901, %v5323
  %v5375 = vmul.f32 %v4902, %v5323
  %v5376 = vmul.f32 %v4903, %v5323
  %v5377 = vmul.f32 %v4904, %v5323
  %v5378 = vmul.f32 %v4905, %v5323
  %v5379 = vmul.f32 %v4906, %v5323
  %v5380 = vmul.f32 %v4907, %v5323
  %v5381 = vmul.f32 %v4908, %v5323
  %v5382 = vmul.f32 %v4909, %v5323
  %v5383 = vmul.f32 %v4910, %v5323
  %v5384 = vmul.f32 %v4911, %v5323
  %v5385 = vmul.f32 %v4912, %v5323
  %v5386 = vmul.f32 %v4913, %v5323
  %v5387 = vmul.f32 %v4914, %v5323
  %v5388 = vlaneseq
  %v5389 = vshrl.u32 %v5388, 7
  %v5390 = vsub.s32 0, %v5389
  %v5391 = vrot.slane %v5319, %v5390
  %v5392 = vadd.f32 %v5324, %v5391
  %v5393 = vadd.f32 %v5325, %v5391
  %v5394 = vadd.f32 %v5326, %v5391
  %v5395 = vadd.f32 %v5327, %v5391
  %v5396 = vadd.f32 %v5328, %v5391
  %v5397 = vadd.f32 %v5329, %v5391
  %v5398 = vadd.f32 %v5330, %v5391
  %v5399 = vadd.f32 %v5331, %v5391
  %v5400 = vadd.f32 %v5332, %v5391
  %v5401 = vadd.f32 %v5333, %v5391
  %v5402 = vadd.f32 %v5334, %v5391
  %v5403 = vadd.f32 %v5335, %v5391
  %v5404 = vadd.f32 %v5336, %v5391
  %v5405 = vadd.f32 %v5337, %v5391
  %v5406 = vadd.f32 %v5338, %v5391
  %v5407 = vadd.f32 %v5339, %v5391
  %v5408 = vadd.f32 %v5340, %v5391
  %v5409 = vadd.f32 %v5341, %v5391
  %v5410 = vadd.f32 %v5342, %v5391
  %v5411 = vadd.f32 %v5343, %v5391
  %v5412 = vadd.f32 %v5344, %v5391
  %v5413 = vadd.f32 %v5345, %v5391
  %v5414 = vadd.f32 %v5346, %v5391
  %v5415 = vadd.f32 %v5347, %v5391
  %v5416 = vadd.f32 %v5348, %v5391
  %v5417 = vadd.f32 %v5349, %v5391
  %v5418 = vadd.f32 %v5350, %v5391
  %v5419 = vadd.f32 %v5351, %v5391
  %v5420 = vadd.f32 %v5352, %v5391
  %v5421 = vadd.f32 %v5353, %v5391
  %v5422 = vadd.f32 %v5354, %v5391
  %v5423 = vadd.f32 %v5355, %v5391
  %v5424 = vadd.f32 %v5356, %v5391
  %v5425 = vadd.f32 %v5357, %v5391
  %v5426 = vadd.f32 %v5358, %v5391
  %v5427 = vadd.f32 %v5359, %v5391
  %v5428 = vadd.f32 %v5360, %v5391
  %v5429 = vadd.f32 %v5361, %v5391
  %v5430 = vadd.f32 %v5362, %v5391
  %v5431 = vadd.f32 %v5363, %v5391
  %v5432 = vadd.f32 %v5364, %v5391
  %v5433 = vadd.f32 %v5365, %v5391
  %v5434 = vadd.f32 %v5366, %v5391
  %v5435 = vadd.f32 %v5367, %v5391
  %v5436 = vadd.f32 %v5368, %v5391
  %v5437 = vadd.f32 %v5369, %v5391
  %v5438 = vadd.f32 %v5370, %v5391
  %v5439 = vadd.f32 %v5371, %v5391
  %v5440 = vadd.f32 %v5372, %v5391
  %v5441 = vadd.f32 %v5373, %v5391
  %v5442 = vadd.f32 %v5374, %v5391
  %v5443 = vadd.f32 %v5375, %v5391
  %v5444 = vadd.f32 %v5376, %v5391
  %v5445 = vadd.f32 %v5377, %v5391
  %v5446 = vadd.f32 %v5378, %v5391
  %v5447 = vadd.f32 %v5379, %v5391
  %v5448 = vadd.f32 %v5380, %v5391
  %v5449 = vadd.f32 %v5381, %v5391
  %v5450 = vadd.f32 %v5382, %v5391
  %v5451 = vadd.f32 %v5383, %v5391
  %v5452 = vadd.f32 %v5384, %v5391
  %v5453 = vadd.f32 %v5385, %v5391
  %v5454 = vadd.f32 %v5386, %v5391
  %v5455 = vadd.f32 %v5387, %v5391
  %v5456 = vmax.f32 %v5392, 0.0
  %v5457 = vmax.f32 %v5393, 0.0
  %v5458 = vmax.f32 %v5394, 0.0
  %v5459 = vmax.f32 %v5395, 0.0
  %v5460 = vmax.f32 %v5396, 0.0
  %v5461 = vmax.f32 %v5397, 0.0
  %v5462 = vmax.f32 %v5398, 0.0
  %v5463 = vmax.f32 %v5399, 0.0
  %v5464 = vmax.f32 %v5400, 0.0
  %v5465 = vmax.f32 %v5401, 0.0
  %v5466 = vmax.f32 %v5402, 0.0
  %v5467 = vmax.f32 %v5403, 0.0
  %v5468 = vmax.f32 %v5404, 0.0
  %v5469 = vmax.f32 %v5405, 0.0
  %v5470 = vmax.f32 %v5406, 0.0
  %v5471 = vmax.f32 %v5407, 0.0
  %v5472 = vmax.f32 %v5408, 0.0
  %v5473 = vmax.f32 %v5409, 0.0
  %v5474 = vmax.f32 %v5410, 0.0
  %v5475 = vmax.f32 %v5411, 0.0
  %v5476 = vmax.f32 %v5412, 0.0
  %v5477 = vmax.f32 %v5413, 0.0
  %v5478 = vmax.f32 %v5414, 0.0
  %v5479 = vmax.f32 %v5415, 0.0
  %v5480 = vmax.f32 %v5416, 0.0
  %v5481 = vmax.f32 %v5417, 0.0
  %v5482 = vmax.f32 %v5418, 0.0
  %v5483 = vmax.f32 %v5419, 0.0
  %v5484 = vmax.f32 %v5420, 0.0
  %v5485 = vmax.f32 %v5421, 0.0
  %v5486 = vmax.f32 %v5422, 0.0
  %v5487 = vmax.f32 %v5423, 0.0
  %v5488 = vmax.f32 %v5424, 0.0
  %v5489 = vmax.f32 %v5425, 0.0
  %v5490 = vmax.f32 %v5426, 0.0
  %v5491 = vmax.f32 %v5427, 0.0
  %v5492 = vmax.f32 %v5428, 0.0
  %v5493 = vmax.f32 %v5429, 0.0
  %v5494 = vmax.f32 %v5430, 0.0
  %v5495 = vmax.f32 %v5431, 0.0
  %v5496 = vmax.f32 %v5432, 0.0
  %v5497 = vmax.f32 %v5433, 0.0
  %v5498 = vmax.f32 %v5434, 0.0
  %v5499 = vmax.f32 %v5435, 0.0
  %v5500 = vmax.f32 %v5436, 0.0
  %v5501 = vmax.f32 %v5437, 0.0
  %v5502 = vmax.f32 %v5438, 0.0
  %v5503 = vmax.f32 %v5439, 0.0
  %v5504 = vmax.f32 %v5440, 0.0
  %v5505 = vmax.f32 %v5441, 0.0
  %v5506 = vmax.f32 %v5442, 0.0
  %v5507 = vmax.f32 %v5443, 0.0
  %v5508 = vmax.f32 %v5444, 0.0
  %v5509 = vmax.f32 %v5445, 0.0
  %v5510 = vmax.f32 %v5446, 0.0
  %v5511 = vmax.f32 %v5447, 0.0
  %v5512 = vmax.f32 %v5448, 0.0
  %v5513 = vmax.f32 %v5449, 0.0
  %v5514 = vmax.f32 %v5450, 0.0
  %v5515 = vmax.f32 %v5451, 0.0
  %v5516 = vmax.f32 %v5452, 0.0
  %v5517 = vmax.f32 %v5453, 0.0
  %v5518 = vmax.f32 %v5454, 0.0
  %v5519 = vmax.f32 %v5455, 0.0
  %5520 = vst.msk [vmem:[#allocation2] sm:$0xff] %vm4915, 0.0
  %5521 = vst.msk [vmem:[#allocation2 + $0x8] sm:$0xff] %vm4915, 0.0
  %vm5522 = vcmask 123904
  %5523 = vst.msk [vmem:[#allocation2 + $0x10] sm:$0x3] %vm5522, 0.0
  %5524 = vst.msk [vmem:[#allocation2 + $0x18] sm:$0xff] %vm4915, 0.0
  %5525 = vst.msk [vmem:[#allocation2 + $0x20] sm:$0xff] %vm4915, 0.0
  %5526 = vst.msk [vmem:[#allocation2 + $0x28] sm:$0x3] %vm5522, 0.0
  %5527 = vst.msk [vmem:[#allocation2 + $0x30] sm:$0xff] %vm4915, 0.0
  %5528 = vst.msk [vmem:[#allocation2 + $0x38] sm:$0xff] %vm4915, 0.0
  %5529 = vst.msk [vmem:[#allocation2 + $0x40] sm:$0x3] %vm5522, 0.0
  %5530 = vst.msk [vmem:[#allocation2 + $0x48] sm:$0xff] %vm4915, 0.0
  %5531 = vst.msk [vmem:[#allocation2 + $0x50] sm:$0xff] %vm4915, 0.0
  %5532 = vst.msk [vmem:[#allocation2 + $0x58] sm:$0x3] %vm5522, 0.0
  %5533 = vst.msk [vmem:[#allocation2 + $0x60] sm:$0xff] %vm4915, 0.0
  %5534 = vst.msk [vmem:[#allocation2 + $0x68] sm:$0xff] %vm4915, 0.0
  %5535 = vst.msk [vmem:[#allocation2 + $0x70] sm:$0x3] %vm5522, 0.0
  %5536 = vst.msk [vmem:[#allocation2 + $0x78] sm:$0xff] %vm4915, 0.0
  %5537 = vst.msk [vmem:[#allocation2 + $0x80] sm:$0xff] %vm4915, 0.0
  %5538 = vst.msk [vmem:[#allocation2 + $0x88] sm:$0x3] %vm5522, 0.0
  %5539 = vst.msk [vmem:[#allocation2 + $0x90] sm:$0xff] %vm4915, 0.0
  %5540 = vst.msk [vmem:[#allocation2 + $0x98] sm:$0xff] %vm4915, 0.0
  %5541 = vst.msk [vmem:[#allocation2 + $0xa0] sm:$0x3] %vm5522, 0.0
  %5542 = vst.msk [vmem:[#allocation2 + $0xa8] sm:$0xff] %vm4915, 0.0
  %5543 = vst.msk [vmem:[#allocation2 + $0xb0] sm:$0xff] %vm4915, 0.0
  %5544 = vst.msk [vmem:[#allocation2 + $0xb8] sm:$0x3] %vm5522, 0.0
  %5545 = vst.msk [vmem:[#allocation2 + $0xc0] sm:$0xff] %vm4915, 0.0
  %5546 = vst.msk [vmem:[#allocation2 + $0xc8] sm:$0xff] %vm4915, 0.0
  %5547 = vst.msk [vmem:[#allocation2 + $0xd0] sm:$0x3] %vm5522, 0.0
  %5548 = vst.msk [vmem:[#allocation2 + $0xd8] sm:$0xff] %vm4915, 0.0
  %5549 = vst.msk [vmem:[#allocation2 + $0xe0] sm:$0xff] %vm4915, 0.0
  %5550 = vst.msk [vmem:[#allocation2 + $0xe8] sm:$0x3] %vm5522, 0.0
  %5551 = vst.msk [vmem:[#allocation2 + $0xf0] sm:$0xff] %vm4915, 0.0
  %5552 = vst.msk [vmem:[#allocation2 + $0xf8] sm:$0xff] %vm4915, 0.0
  %5553 = vst.msk [vmem:[#allocation2 + $0x100] sm:$0x3] %vm5522, 0.0
  %5554 = vst.msk [vmem:[#allocation2 + $0x108] sm:$0xff] %vm4915, 0.0
  %5555 = vst.msk [vmem:[#allocation2 + $0x110] sm:$0xff] %vm4915, 0.0
  %5556 = vst.msk [vmem:[#allocation2 + $0x118] sm:$0x3] %vm5522, 0.0
  %5557 = vst.msk [vmem:[#allocation2 + $0x120] sm:$0xff] %vm4915, 0.0
  %5558 = vst.msk [vmem:[#allocation2 + $0x128] sm:$0xff] %vm4915, 0.0
  %5559 = vst.msk [vmem:[#allocation2 + $0x130] sm:$0x3] %vm5522, 0.0
  %5560 = vst.msk [vmem:[#allocation2 + $0x138] sm:$0xff] %vm4915, 0.0
  %5561 = vst.msk [vmem:[#allocation2 + $0x140] sm:$0xff] %vm4915, 0.0
  %5562 = vst.msk [vmem:[#allocation2 + $0x148] sm:$0x3] %vm5522, 0.0
  %5563 = vst.msk [vmem:[#allocation2 + $0x150] sm:$0xff] %vm4915, 0.0
  %5564 = vst.msk [vmem:[#allocation2 + $0x158] sm:$0xff] %vm4915, 0.0
  %5565 = vst.msk [vmem:[#allocation2 + $0x160] sm:$0x3] %vm5522, 0.0
  %5566 = vst.msk [vmem:[#allocation2 + $0x168] sm:$0xff] %vm4915, 0.0
  %5567 = vst.msk [vmem:[#allocation2 + $0x170] sm:$0xff] %vm4915, 0.0
  %5568 = vst.msk [vmem:[#allocation2 + $0x178] sm:$0x3] %vm5522, 0.0
  %5569 = vst.msk [vmem:[#allocation2 + $0x180] sm:$0xff] %vm4915, 0.0
  %5570 = vst.msk [vmem:[#allocation2 + $0x188] sm:$0xff] %vm4915, 0.0
  %5571 = vst.msk [vmem:[#allocation2 + $0x190] sm:$0x3] %vm5522, 0.0
  %5572 = vst.msk [vmem:[#allocation2 + $0x198] sm:$0xff] %vm4915, 0.0
  %5573 = vst.msk [vmem:[#allocation2 + $0x1a0] sm:$0xff] %vm4915, 0.0
  %5574 = vst.msk [vmem:[#allocation2 + $0x1a8] sm:$0x3] %vm5522, 0.0
  %5575 = vst.msk [vmem:[#allocation2 + $0x1b0] sm:$0xff] %vm4915, 0.0
  %5576 = vst.msk [vmem:[#allocation2 + $0x1b8] sm:$0xff] %vm4915, 0.0
  %5577 = vst.msk [vmem:[#allocation2 + $0x1c0] sm:$0x3] %vm5522, 0.0
  %5578 = vst.msk [vmem:[#allocation2 + $0x1c8] sm:$0xff] %vm4915, 0.0
  %5579 = vst.msk [vmem:[#allocation2 + $0x1d0] sm:$0xff] %vm4915, 0.0
  %5580 = vst.msk [vmem:[#allocation2 + $0x1d8] sm:$0x3] %vm5522, 0.0
  %5581 = vst.msk [vmem:[#allocation2 + $0x1e0] sm:$0xff] %vm4915, 0.0
  %5582 = vst.msk [vmem:[#allocation2 + $0x1e8] sm:$0xff] %vm4915, 0.0
  %5583 = vst.msk [vmem:[#allocation2 + $0x1f0] sm:$0x3] %vm5522, 0.0
  %5584 = vst.msk [vmem:[#allocation2 + $0x1f8] sm:$0xff] %vm4915, 0.0
  %5585 = vst.msk [vmem:[#allocation2 + $0x200] sm:$0xff] %vm4915, 0.0
  %5586 = vst.msk [vmem:[#allocation2 + $0x208] sm:$0x3] %vm5522, 0.0
  %5587 = vst.msk [vmem:[#allocation2 + $0x210] sm:$0xff] %vm4915, 0.0
  %5588 = vst.msk [vmem:[#allocation2 + $0x218] sm:$0xff] %vm4915, 0.0
  %5589 = vst.msk [vmem:[#allocation2 + $0x220] sm:$0x3] %vm5522, 0.0
  %5590 = vst.msk [vmem:[#allocation2 + $0x228] sm:$0xff] %vm4915, 0.0
  %5591 = vst.msk [vmem:[#allocation2 + $0x230] sm:$0xff] %vm4915, 0.0
  %5592 = vst.msk [vmem:[#allocation2 + $0x238] sm:$0x3] %vm5522, 0.0
  %5593 = vst.msk [vmem:[#allocation2 + $0x240] sm:$0xff] %vm4915, 0.0
  %5594 = vst.msk [vmem:[#allocation2 + $0x248] sm:$0xff] %vm4915, 0.0
  %5595 = vst.msk [vmem:[#allocation2 + $0x250] sm:$0x3] %vm5522, 0.0
  %5596 = vst.msk [vmem:[#allocation2 + $0x258] sm:$0xff] %vm4915, 0.0
  %5597 = vst.msk [vmem:[#allocation2 + $0x260] sm:$0xff] %vm4915, 0.0
  %5598 = vst.msk [vmem:[#allocation2 + $0x268] sm:$0x3] %vm5522, 0.0
  %5599 = vst.msk [vmem:[#allocation2 + $0x270] sm:$0xff] %vm4915, 0.0
  %5600 = vst.msk [vmem:[#allocation2 + $0x278] sm:$0xff] %vm4915, 0.0
  %5601 = vst.msk [vmem:[#allocation2 + $0x280] sm:$0x3] %vm5522, 0.0
  %5602 = vst.msk [vmem:[#allocation2 + $0x288] sm:$0xff] %vm4915, 0.0
  %5603 = vst.msk [vmem:[#allocation2 + $0x290] sm:$0xff] %vm4915, 0.0
  %5604 = vst.msk [vmem:[#allocation2 + $0x298] sm:$0x3] %vm5522, 0.0
  %5605 = vst.msk [vmem:[#allocation2 + $0x2a0] sm:$0xff] %vm4915, 0.0
  %5606 = vst.msk [vmem:[#allocation2 + $0x2a8] sm:$0xff] %vm4915, 0.0
  %5607 = vst.msk [vmem:[#allocation2 + $0x2b0] sm:$0x3] %vm5522, 0.0
  %5608 = vst.msk [vmem:[#allocation2 + $0x2b8] sm:$0xff] %vm4915, 0.0
  %5609 = vst.msk [vmem:[#allocation2 + $0x2c0] sm:$0xff] %vm4915, 0.0
  %5610 = vst.msk [vmem:[#allocation2 + $0x2c8] sm:$0x3] %vm5522, 0.0
  %5611 = vst.msk [vmem:[#allocation2 + $0x2d0] sm:$0xff] %vm4915, 0.0
  %5612 = vst.msk [vmem:[#allocation2 + $0x2d8] sm:$0xff] %vm4915, 0.0
  %5613 = vst.msk [vmem:[#allocation2 + $0x2e0] sm:$0x3] %vm5522, 0.0
  %5614 = vst.msk [vmem:[#allocation2 + $0x2e8] sm:$0xff] %vm4915, 0.0
  %5615 = vst.msk [vmem:[#allocation2 + $0x2f0] sm:$0xff] %vm4915, 0.0
  %5616 = vst.msk [vmem:[#allocation2 + $0x2f8] sm:$0x3] %vm5522, 0.0
  %5617 = vst.msk [vmem:[#allocation2 + $0x300] sm:$0xff] %vm4915, 0.0
  %5618 = vst.msk [vmem:[#allocation2 + $0x308] sm:$0xff] %vm4915, 0.0
  %5619 = vst.msk [vmem:[#allocation2 + $0x310] sm:$0x3] %vm5522, 0.0
  %5620 = vst.msk [vmem:[#allocation2 + $0x318] sm:$0xff] %vm4915, 0.0
  %5621 = vst.msk [vmem:[#allocation2 + $0x320] sm:$0xff] %vm4915, 0.0
  %5622 = vst.msk [vmem:[#allocation2 + $0x328] sm:$0x3] %vm5522, 0.0
  %5623 = vst.msk [vmem:[#allocation2 + $0x330] sm:$0xff] %vm4915, 0.0
  %5624 = vst.msk [vmem:[#allocation2 + $0x338] sm:$0xff] %vm4915, 0.0
  %5625 = vst.msk [vmem:[#allocation2 + $0x340] sm:$0x3] %vm5522, 0.0
  %5626 = vst.msk [vmem:[#allocation2 + $0x348] sm:$0xff] %vm4915, 0.0
  %5627 = vst.msk [vmem:[#allocation2 + $0x350] sm:$0xff] %vm4915, 0.0
  %5628 = vst.msk [vmem:[#allocation2 + $0x358] sm:$0x3] %vm5522, 0.0
  %s5629 = scalar_lea.vmem [#allocation2], 24
  %5630 = vst.msk [vmem:[%s5629 + $0x1] sm:$0xff] %vm4915, %v5456
  %5631 = vst.msk [vmem:[%s5629 + $0x9] sm:$0xff] %vm4915, %v5457
  %5632 = vst.msk [vmem:[%s5629 + $0x19] sm:$0xff] %vm4915, %v5458
  %5633 = vst.msk [vmem:[%s5629 + $0x21] sm:$0xff] %vm4915, %v5459
  %5634 = vst.msk [vmem:[%s5629 + $0x31] sm:$0xff] %vm4915, %v5460
  %5635 = vst.msk [vmem:[%s5629 + $0x39] sm:$0xff] %vm4915, %v5461
  %5636 = vst.msk [vmem:[%s5629 + $0x49] sm:$0xff] %vm4915, %v5462
  %5637 = vst.msk [vmem:[%s5629 + $0x51] sm:$0xff] %vm4915, %v5463
  %5638 = vst.msk [vmem:[%s5629 + $0x61] sm:$0xff] %vm4915, %v5464
  %5639 = vst.msk [vmem:[%s5629 + $0x69] sm:$0xff] %vm4915, %v5465
  %5640 = vst.msk [vmem:[%s5629 + $0x79] sm:$0xff] %vm4915, %v5466
  %5641 = vst.msk [vmem:[%s5629 + $0x81] sm:$0xff] %vm4915, %v5467
  %5642 = vst.msk [vmem:[%s5629 + $0x91] sm:$0xff] %vm4915, %v5468
  %5643 = vst.msk [vmem:[%s5629 + $0x99] sm:$0xff] %vm4915, %v5469
  %5644 = vst.msk [vmem:[%s5629 + $0xa9] sm:$0xff] %vm4915, %v5470
  %5645 = vst.msk [vmem:[%s5629 + $0xb1] sm:$0xff] %vm4915, %v5471
  %5646 = vst.msk [vmem:[%s5629 + $0xc1] sm:$0xff] %vm4915, %v5472
  %5647 = vst.msk [vmem:[%s5629 + $0xc9] sm:$0xff] %vm4915, %v5473
  %5648 = vst.msk [vmem:[%s5629 + $0xd9] sm:$0xff] %vm4915, %v5474
  %5649 = vst.msk [vmem:[%s5629 + $0xe1] sm:$0xff] %vm4915, %v5475
  %5650 = vst.msk [vmem:[%s5629 + $0xf1] sm:$0xff] %vm4915, %v5476
  %5651 = vst.msk [vmem:[%s5629 + $0xf9] sm:$0xff] %vm4915, %v5477
  %5652 = vst.msk [vmem:[%s5629 + $0x109] sm:$0xff] %vm4915, %v5478
  %5653 = vst.msk [vmem:[%s5629 + $0x111] sm:$0xff] %vm4915, %v5479
  %5654 = vst.msk [vmem:[%s5629 + $0x121] sm:$0xff] %vm4915, %v5480
  %5655 = vst.msk [vmem:[%s5629 + $0x129] sm:$0xff] %vm4915, %v5481
  %5656 = vst.msk [vmem:[%s5629 + $0x139] sm:$0xff] %vm4915, %v5482
  %5657 = vst.msk [vmem:[%s5629 + $0x141] sm:$0xff] %vm4915, %v5483
  %5658 = vst.msk [vmem:[%s5629 + $0x151] sm:$0xff] %vm4915, %v5484
  %5659 = vst.msk [vmem:[%s5629 + $0x159] sm:$0xff] %vm4915, %v5485
  %5660 = vst.msk [vmem:[%s5629 + $0x169] sm:$0xff] %vm4915, %v5486
  %5661 = vst.msk [vmem:[%s5629 + $0x171] sm:$0xff] %vm4915, %v5487
  %5662 = vst.msk [vmem:[%s5629 + $0x1b1] sm:$0xff] %vm4915, %v5488
  %5663 = vst.msk [vmem:[%s5629 + $0x1b9] sm:$0xff] %vm4915, %v5489
  %5664 = vst.msk [vmem:[%s5629 + $0x1c9] sm:$0xff] %vm4915, %v5490
  %5665 = vst.msk [vmem:[%s5629 + $0x1d1] sm:$0xff] %vm4915, %v5491
  %5666 = vst.msk [vmem:[%s5629 + $0x1e1] sm:$0xff] %vm4915, %v5492
  %5667 = vst.msk [vmem:[%s5629 + $0x1e9] sm:$0xff] %vm4915, %v5493
  %5668 = vst.msk [vmem:[%s5629 + $0x1f9] sm:$0xff] %vm4915, %v5494
  %5669 = vst.msk [vmem:[%s5629 + $0x201] sm:$0xff] %vm4915, %v5495
  %5670 = vst.msk [vmem:[%s5629 + $0x211] sm:$0xff] %vm4915, %v5496
  %5671 = vst.msk [vmem:[%s5629 + $0x219] sm:$0xff] %vm4915, %v5497
  %5672 = vst.msk [vmem:[%s5629 + $0x229] sm:$0xff] %vm4915, %v5498
  %5673 = vst.msk [vmem:[%s5629 + $0x231] sm:$0xff] %vm4915, %v5499
  %5674 = vst.msk [vmem:[%s5629 + $0x241] sm:$0xff] %vm4915, %v5500
  %5675 = vst.msk [vmem:[%s5629 + $0x249] sm:$0xff] %vm4915, %v5501
  %5676 = vst.msk [vmem:[%s5629 + $0x259] sm:$0xff] %vm4915, %v5502
  %5677 = vst.msk [vmem:[%s5629 + $0x261] sm:$0xff] %vm4915, %v5503
  %5678 = vst.msk [vmem:[%s5629 + $0x271] sm:$0xff] %vm4915, %v5504
  %5679 = vst.msk [vmem:[%s5629 + $0x279] sm:$0xff] %vm4915, %v5505
  %5680 = vst.msk [vmem:[%s5629 + $0x289] sm:$0xff] %vm4915, %v5506
  %5681 = vst.msk [vmem:[%s5629 + $0x291] sm:$0xff] %vm4915, %v5507
  %5682 = vst.msk [vmem:[%s5629 + $0x2a1] sm:$0xff] %vm4915, %v5508
  %5683 = vst.msk [vmem:[%s5629 + $0x2a9] sm:$0xff] %vm4915, %v5509
  %5684 = vst.msk [vmem:[%s5629 + $0x2b9] sm:$0xff] %vm4915, %v5510
  %5685 = vst.msk [vmem:[%s5629 + $0x2c1] sm:$0xff] %vm4915, %v5511
  %5686 = vst.msk [vmem:[%s5629 + $0x2d1] sm:$0xff] %vm4915, %v5512
  %5687 = vst.msk [vmem:[%s5629 + $0x2d9] sm:$0xff] %vm4915, %v5513
  %5688 = vst.msk [vmem:[%s5629 + $0x2e9] sm:$0xff] %vm4915, %v5514
  %5689 = vst.msk [vmem:[%s5629 + $0x2f1] sm:$0xff] %vm4915, %v5515
  %5690 = vst.msk [vmem:[%s5629 + $0x301] sm:$0xff] %vm4915, %v5516
  %5691 = vst.msk [vmem:[%s5629 + $0x309] sm:$0xff] %vm4915, %v5517
  %5692 = vst.msk [vmem:[%s5629 + $0x319] sm:$0xff] %vm4915, %v5518
  %5693 = vst.msk [vmem:[%s5629 + $0x321] sm:$0xff] %vm4915, %v5519
  %v5694 = vld [vmem:[#allocation2] sm:$0xff]
  %v5695 = vld [vmem:[#allocation2 + $0x8] sm:$0xff]
  %v5696 = vld [vmem:[#allocation2 + $0x18] sm:$0xff]
  %v5697 = vld [vmem:[#allocation2 + $0x20] sm:$0xff]
  %v5698 = vld [vmem:[#allocation2 + $0x30] sm:$0xff]
  %v5699 = vld [vmem:[#allocation2 + $0x38] sm:$0xff]
  %v5700 = vld [vmem:[#allocation2 + $0x48] sm:$0xff]
  %v5701 = vld [vmem:[#allocation2 + $0x50] sm:$0xff]
  %v5702 = vld [vmem:[#allocation2 + $0x60] sm:$0xff]
  %v5703 = vld [vmem:[#allocation2 + $0x68] sm:$0xff]
  %v5704 = vld [vmem:[#allocation2 + $0x78] sm:$0xff]
  %v5705 = vld [vmem:[#allocation2 + $0x80] sm:$0xff]
  %v5706 = vld [vmem:[#allocation2 + $0x90] sm:$0xff]
  %v5707 = vld [vmem:[#allocation2 + $0x98] sm:$0xff]
  %v5708 = vld [vmem:[#allocation2 + $0xa8] sm:$0xff]
  %v5709 = vld [vmem:[#allocation2 + $0xb0] sm:$0xff]
  %v5710 = vld [vmem:[#allocation2 + $0xc0] sm:$0xff]
  %v5711 = vld [vmem:[#allocation2 + $0xc8] sm:$0xff]
  %v5712 = vld [vmem:[#allocation2 + $0xd8] sm:$0xff]
  %v5713 = vld [vmem:[#allocation2 + $0xe0] sm:$0xff]
  %v5714 = vld [vmem:[#allocation2 + $0xf0] sm:$0xff]
  %v5715 = vld [vmem:[#allocation2 + $0xf8] sm:$0xff]
  %v5716 = vld [vmem:[#allocation2 + $0x108] sm:$0xff]
  %v5717 = vld [vmem:[#allocation2 + $0x110] sm:$0xff]
  %v5718 = vld [vmem:[#allocation2 + $0x120] sm:$0xff]
  %v5719 = vld [vmem:[#allocation2 + $0x128] sm:$0xff]
  %v5720 = vld [vmem:[#allocation2 + $0x138] sm:$0xff]
  %v5721 = vld [vmem:[#allocation2 + $0x140] sm:$0xff]
  %v5722 = vld [vmem:[#allocation2 + $0x150] sm:$0xff]
  %v5723 = vld [vmem:[#allocation2 + $0x158] sm:$0xff]
  %v5724 = vld [vmem:[#allocation2 + $0x168] sm:$0xff]
  %v5725 = vld [vmem:[#allocation2 + $0x170] sm:$0xff]
  %v5726 = vld [vmem:[#allocation2 + $0x1b0] sm:$0xff]
  %v5727 = vld [vmem:[#allocation2 + $0x1b8] sm:$0xff]
  %v5728 = vld [vmem:[#allocation2 + $0x1c8] sm:$0xff]
  %v5729 = vld [vmem:[#allocation2 + $0x1d0] sm:$0xff]
  %v5730 = vld [vmem:[#allocation2 + $0x1e0] sm:$0xff]
  %v5731 = vld [vmem:[#allocation2 + $0x1e8] sm:$0xff]
  %v5732 = vld [vmem:[#allocation2 + $0x1f8] sm:$0xff]
  %v5733 = vld [vmem:[#allocation2 + $0x200] sm:$0xff]
  %v5734 = vld [vmem:[#allocation2 + $0x210] sm:$0xff]
  %v5735 = vld [vmem:[#allocation2 + $0x218] sm:$0xff]
  %v5736 = vld [vmem:[#allocation2 + $0x228] sm:$0xff]
  %v5737 = vld [vmem:[#allocation2 + $0x230] sm:$0xff]
  %v5738 = vld [vmem:[#allocation2 + $0x240] sm:$0xff]
  %v5739 = vld [vmem:[#allocation2 + $0x248] sm:$0xff]
  %v5740 = vld [vmem:[#allocation2 + $0x258] sm:$0xff]
  %v5741 = vld [vmem:[#allocation2 + $0x260] sm:$0xff]
  %v5742 = vld [vmem:[#allocation2 + $0x270] sm:$0xff]
  %v5743 = vld [vmem:[#allocation2 + $0x278] sm:$0xff]
  %v5744 = vld [vmem:[#allocation2 + $0x288] sm:$0xff]
  %v5745 = vld [vmem:[#allocation2 + $0x290] sm:$0xff]
  %v5746 = vld [vmem:[#allocation2 + $0x2a0] sm:$0xff]
  %v5747 = vld [vmem:[#allocation2 + $0x2a8] sm:$0xff]
  %v5748 = vld [vmem:[#allocation2 + $0x2b8] sm:$0xff]
  %v5749 = vld [vmem:[#allocation2 + $0x2c0] sm:$0xff]
  %v5750 = vld [vmem:[#allocation2 + $0x2d0] sm:$0xff]
  %v5751 = vld [vmem:[#allocation2 + $0x2d8] sm:$0xff]
  %v5752 = vld [vmem:[#allocation2 + $0x2e8] sm:$0xff]
  %v5753 = vld [vmem:[#allocation2 + $0x2f0] sm:$0xff]
  %v5754 = vld [vmem:[#allocation2 + $0x300] sm:$0xff]
  %v5755 = vld [vmem:[#allocation2 + $0x308] sm:$0xff]
  %v5756 = vld [vmem:[#allocation2 + $0x318] sm:$0xff]
  %v5757 = vld [vmem:[#allocation2 + $0x320] sm:$0xff]
  %v5758 = vpack.c.bf16 %v5695, %v5694
  %v5759 = vpack.c.bf16 %v5697, %v5696
  %v5760 = vpack.c.bf16 %v5699, %v5698
  %v5761 = vpack.c.bf16 %v5701, %v5700
  %v5762 = vpack.c.bf16 %v5703, %v5702
  %v5763 = vpack.c.bf16 %v5705, %v5704
  %v5764 = vpack.c.bf16 %v5707, %v5706
  %v5765 = vpack.c.bf16 %v5709, %v5708
  %v5766 = vpack.c.bf16 %v5711, %v5710
  %v5767 = vpack.c.bf16 %v5713, %v5712
  %v5768 = vpack.c.bf16 %v5715, %v5714
  %v5769 = vpack.c.bf16 %v5717, %v5716
  %v5770 = vpack.c.bf16 %v5719, %v5718
  %v5771 = vpack.c.bf16 %v5721, %v5720
  %v5772 = vpack.c.bf16 %v5723, %v5722
  %v5773 = vpack.c.bf16 %v5725, %v5724
  %v5774 = vpack.c.bf16 %v5727, %v5726
  %v5775 = vpack.c.bf16 %v5729, %v5728
  %v5776 = vpack.c.bf16 %v5731, %v5730
  %v5777 = vpack.c.bf16 %v5733, %v5732
  %v5778 = vpack.c.bf16 %v5735, %v5734
  %v5779 = vpack.c.bf16 %v5737, %v5736
  %v5780 = vpack.c.bf16 %v5739, %v5738
  %v5781 = vpack.c.bf16 %v5741, %v5740
  %v5782 = vpack.c.bf16 %v5743, %v5742
  %v5783 = vpack.c.bf16 %v5745, %v5744
  %v5784 = vpack.c.bf16 %v5747, %v5746
  %v5785 = vpack.c.bf16 %v5749, %v5748
  %v5786 = vpack.c.bf16 %v5751, %v5750
  %v5787 = vpack.c.bf16 %v5753, %v5752
  %v5788 = vpack.c.bf16 %v5755, %v5754
  %v5789 = vpack.c.bf16 %v5757, %v5756
  %v5790 = vld [vmem:[%s3] sm:$0xf]
  %v5791 = vld [vmem:[%s3 + $0x4] sm:$0xf]
  %v5792 = vld [vmem:[#allocation2 + $0x1] sm:$0xff]
  %v5793 = vld [vmem:[#allocation2 + $0x9] sm:$0xff]
  %v5794 = vld [vmem:[#allocation2 + $0x19] sm:$0xff]
  %v5795 = vld [vmem:[#allocation2 + $0x21] sm:$0xff]
  %v5796 = vld [vmem:[#allocation2 + $0x31] sm:$0xff]
  %v5797 = vld [vmem:[#allocation2 + $0x39] sm:$0xff]
  %v5798 = vld [vmem:[#allocation2 + $0x49] sm:$0xff]
  %v5799 = vld [vmem:[#allocation2 + $0x51] sm:$0xff]
  %v5800 = vld [vmem:[#allocation2 + $0x61] sm:$0xff]
  %v5801 = vld [vmem:[#allocation2 + $0x69] sm:$0xff]
  %v5802 = vld [vmem:[#allocation2 + $0x79] sm:$0xff]
  %v5803 = vld [vmem:[#allocation2 + $0x81] sm:$0xff]
  %v5804 = vld [vmem:[#allocation2 + $0x91] sm:$0xff]
  %v5805 = vld [vmem:[#allocation2 + $0x99] sm:$0xff]
  %v5806 = vld [vmem:[#allocation2 + $0xa9] sm:$0xff]
  %v5807 = vld [vmem:[#allocation2 + $0xb1] sm:$0xff]
  %v5808 = vld [vmem:[#allocation2 + $0xc1] sm:$0xff]
  %v5809 = vld [vmem:[#allocation2 + $0xc9] sm:$0xff]
  %v5810 = vld [vmem:[#allocation2 + $0xd9] sm:$0xff]
  %v5811 = vld [vmem:[#allocation2 + $0xe1] sm:$0xff]
  %v5812 = vld [vmem:[#allocation2 + $0xf1] sm:$0xff]
  %v5813 = vld [vmem:[#allocation2 + $0xf9] sm:$0xff]
  %v5814 = vld [vmem:[#allocation2 + $0x109] sm:$0xff]
  %v5815 = vld [vmem:[#allocation2 + $0x111] sm:$0xff]
  %v5816 = vld [vmem:[#allocation2 + $0x121] sm:$0xff]
  %v5817 = vld [vmem:[#allocation2 + $0x129] sm:$0xff]
  %v5818 = vld [vmem:[#allocation2 + $0x139] sm:$0xff]
  %v5819 = vld [vmem:[#allocation2 + $0x141] sm:$0xff]
  %v5820 = vld [vmem:[#allocation2 + $0x151] sm:$0xff]
  %v5821 = vld [vmem:[#allocation2 + $0x159] sm:$0xff]
  %v5822 = vld [vmem:[#allocation2 + $0x169] sm:$0xff]
  %v5823 = vld [vmem:[#allocation2 + $0x171] sm:$0xff]
  %v5824 = vld [vmem:[#allocation2 + $0x1b1] sm:$0xff]
  %v5825 = vld [vmem:[#allocation2 + $0x1b9] sm:$0xff]
  %v5826 = vld [vmem:[#allocation2 + $0x1c9] sm:$0xff]
  %v5827 = vld [vmem:[#allocation2 + $0x1d1] sm:$0xff]
  %v5828 = vld [vmem:[#allocation2 + $0x1e1] sm:$0xff]
  %v5829 = vld [vmem:[#allocation2 + $0x1e9] sm:$0xff]
  %v5830 = vld [vmem:[#allocation2 + $0x1f9] sm:$0xff]
  %v5831 = vld [vmem:[#allocation2 + $0x201] sm:$0xff]
  %v5832 = vld [vmem:[#allocation2 + $0x211] sm:$0xff]
  %v5833 = vld [vmem:[#allocation2 + $0x219] sm:$0xff]
  %v5834 = vld [vmem:[#allocation2 + $0x229] sm:$0xff]
  %v5835 = vld [vmem:[#allocation2 + $0x231] sm:$0xff]
  %v5836 = vld [vmem:[#allocation2 + $0x241] sm:$0xff]
  %v5837 = vld [vmem:[#allocation2 + $0x249] sm:$0xff]
  %v5838 = vld [vmem:[#allocation2 + $0x259] sm:$0xff]
  %v5839 = vld [vmem:[#allocation2 + $0x261] sm:$0xff]
  %v5840 = vld [vmem:[#allocation2 + $0x271] sm:$0xff]
  %v5841 = vld [vmem:[#allocation2 + $0x279] sm:$0xff]
  %v5842 = vld [vmem:[#allocation2 + $0x289] sm:$0xff]
  %v5843 = vld [vmem:[#allocation2 + $0x291] sm:$0xff]
  %v5844 = vld [vmem:[#allocation2 + $0x2a1] sm:$0xff]
  %v5845 = vld [vmem:[#allocation2 + $0x2a9] sm:$0xff]
  %v5846 = vld [vmem:[#allocation2 + $0x2b9] sm:$0xff]
  %v5847 = vld [vmem:[#allocation2 + $0x2c1] sm:$0xff]
  %v5848 = vld [vmem:[#allocation2 + $0x2d1] sm:$0xff]
  %v5849 = vld [vmem:[#allocation2 + $0x2d9] sm:$0xff]
  %v5850 = vld [vmem:[#allocation2 + $0x2e9] sm:$0xff]
  %v5851 = vld [vmem:[#allocation2 + $0x2f1] sm:$0xff]
  %v5852 = vld [vmem:[#allocation2 + $0x301] sm:$0xff]
  %v5853 = vld [vmem:[#allocation2 + $0x309] sm:$0xff]
  %v5854 = vld [vmem:[#allocation2 + $0x319] sm:$0xff]
  %v5855 = vld [vmem:[#allocation2 + $0x321] sm:$0xff]
  %v5856 = vpack.c.bf16 %v5793, %v5792
  %v5857 = vpack.c.bf16 %v5795, %v5794
  %v5858 = vpack.c.bf16 %v5797, %v5796
  %v5859 = vpack.c.bf16 %v5799, %v5798
  %v5860 = vpack.c.bf16 %v5801, %v5800
  %v5861 = vpack.c.bf16 %v5803, %v5802
  %v5862 = vpack.c.bf16 %v5805, %v5804
  %v5863 = vpack.c.bf16 %v5807, %v5806
  %v5864 = vpack.c.bf16 %v5809, %v5808
  %v5865 = vpack.c.bf16 %v5811, %v5810
  %v5866 = vpack.c.bf16 %v5813, %v5812
  %v5867 = vpack.c.bf16 %v5815, %v5814
  %v5868 = vpack.c.bf16 %v5817, %v5816
  %v5869 = vpack.c.bf16 %v5819, %v5818
  %v5870 = vpack.c.bf16 %v5821, %v5820
  %v5871 = vpack.c.bf16 %v5823, %v5822
  %v5872 = vpack.c.bf16 %v5825, %v5824
  %v5873 = vpack.c.bf16 %v5827, %v5826
  %v5874 = vpack.c.bf16 %v5829, %v5828
  %v5875 = vpack.c.bf16 %v5831, %v5830
  %v5876 = vpack.c.bf16 %v5833, %v5832
  %v5877 = vpack.c.bf16 %v5835, %v5834
  %v5878 = vpack.c.bf16 %v5837, %v5836
  %v5879 = vpack.c.bf16 %v5839, %v5838
  %v5880 = vpack.c.bf16 %v5841, %v5840
  %v5881 = vpack.c.bf16 %v5843, %v5842
  %v5882 = vpack.c.bf16 %v5845, %v5844
  %v5883 = vpack.c.bf16 %v5847, %v5846
  %v5884 = vpack.c.bf16 %v5849, %v5848
  %v5885 = vpack.c.bf16 %v5851, %v5850
  %v5886 = vpack.c.bf16 %v5853, %v5852
  %v5887 = vpack.c.bf16 %v5855, %v5854
  %s5888 = scalar_lea.vmem %s3, 8
  %v5889 = vld [vmem:[%s5888] sm:$0xf]
  %v5890 = vld [vmem:[%s5888 + $0x4] sm:$0xf]
  %v5893 = vunpack.c.l.b16 %v5889
  %v5894 = vunpack.c.l.b16 %v5890
  %v5895 = vpack.c.b16 %v5894, %v5893
  %v5898 = vsel %vm4915, %v5856, 0
  %v5901 = vsel %vm4915, %v5857, 0
  %v5904 = vsel %vm4915, %v5858, 0
  %v5907 = vsel %vm4915, %v5859, 0
  %v5910 = vsel %vm4915, %v5860, 0
  %v5913 = vsel %vm4915, %v5861, 0
  %v5916 = vsel %vm4915, %v5862, 0
  %v5919 = vsel %vm4915, %v5863, 0
  %v5922 = vsel %vm4915, %v5864, 0
  %v5925 = vsel %vm4915, %v5865, 0
  %v5928 = vsel %vm4915, %v5866, 0
  %v5931 = vsel %vm4915, %v5867, 0
  %v5934 = vsel %vm4915, %v5868, 0
  %v5937 = vsel %vm4915, %v5869, 0
  %v5940 = vsel %vm4915, %v5870, 0
  %v5943 = vsel %vm4915, %v5871, 0
  %v5946 = vsel %vm4915, %v5872, 0
  %v5949 = vsel %vm4915, %v5873, 0
  %v5952 = vsel %vm4915, %v5874, 0
  %v5955 = vsel %vm4915, %v5875, 0
  %v5958 = vsel %vm4915, %v5876, 0
  %v5961 = vsel %vm4915, %v5877, 0
  %v5964 = vsel %vm4915, %v5878, 0
  %v5967 = vsel %vm4915, %v5879, 0
  %v5970 = vsel %vm4915, %v5880, 0
  %v5973 = vsel %vm4915, %v5881, 0
  %v5976 = vsel %vm4915, %v5882, 0
  %v5979 = vsel %vm4915, %v5883, 0
  %v5982 = vsel %vm4915, %v5884, 0
  %v5985 = vsel %vm4915, %v5885, 0
  %v5988 = vsel %vm4915, %v5886, 0
  %v5991 = vsel %vm4915, %v5887, 0
  %5993 = vmatprep.subr.bf16.mxu0 0
  %5994 = vmatpush1.bf16.msra.mxu0 %v5895
  %5995 = vmatprep.subr.bf16.mxu0 0
  %5996 = vmatpush1.bf16.msra.mxu0 0
  %5997 = vmatprep.subr.bf16.mxu0 0
  %5998 = vmatpush1.bf16.msra.mxu0 0
  %5999 = vmatprep.subr.bf16.mxu0 0
  %6000 = vmatpush1.bf16.msra.mxu0 0
  %6001 = vmatprep.subr.bf16.mxu0 0
  %6002 = vmatpush1.bf16.msra.mxu0 0
  %6003 = vmatprep.subr.bf16.mxu0 0
  %6004 = vmatpush1.bf16.msra.mxu0 0
  %6005 = vmatprep.subr.bf16.mxu0 0
  %6006 = vmatpush1.bf16.msra.mxu0 0
  %6007 = vmatprep.subr.bf16.mxu0 0
  %6008 = vmatpush1.bf16.msra.mxu0 0
  %6009 = vmatprep.subr.bf16.mxu0 0
  %6010 = vmatpush1.bf16.msra.mxu0 0
  %6011 = vmatprep.subr.bf16.mxu0 0
  %6012 = vmatpush1.bf16.msra.mxu0 0
  %6013 = vmatprep.subr.bf16.mxu0 0
  %6014 = vmatpush1.bf16.msra.mxu0 0
  %6015 = vmatprep.subr.bf16.mxu0 0
  %6016 = vmatpush1.bf16.msra.mxu0 0
  %6017 = vmatprep.subr.bf16.mxu0 0
  %6018 = vmatpush1.bf16.msra.mxu0 0
  %6019 = vmatprep.subr.bf16.mxu0 0
  %6020 = vmatpush1.bf16.msra.mxu0 0
  %6021 = vmatprep.subr.bf16.mxu0 0
  %6022 = vmatpush1.bf16.msra.mxu0 0
  %6023 = vmatprep.subr.bf16.mxu0 0
  %6024 = vmatpush1.bf16.msra.mxu0 0
  %6025 = vmatprep.mubr.bf16.mxu0 0
  %6026 = vmatmul.mubr.bf16.gmra.mrb[0].mxu0 %v5898
  %v6027 = vpop.f32.mrb[0].mxu0
  %v6028 = vadd.f32 0.0, %v6027
  %v6029 = vpop.f32.mrb[0].mxu0
  %v6030 = vpop.f32.mrb[0].mxu0
  %v6031 = vadd.f32 0.0, %v6030
  %v6032 = vpop.f32.mrb[0].mxu0
  %6033 = vmatprep.mubr.bf16.mxu0 0
  %6034 = vmatmul.mubr.bf16.gmra.mrb[0].mxu0 %v5901
  %v6035 = vpop.f32.mrb[0].mxu0
  %v6036 = vadd.f32 0.0, %v6035
  %v6037 = vpop.f32.mrb[0].mxu0
  %v6038 = vpop.f32.mrb[0].mxu0
  %v6039 = vadd.f32 0.0, %v6038
  %v6040 = vpop.f32.mrb[0].mxu0
  %6041 = vmatprep.mubr.bf16.mxu0 0
  %6042 = vmatmul.mubr.bf16.gmra.mrb[0].mxu0 %v5904
  %v6043 = vpop.f32.mrb[0].mxu0
  %v6044 = vadd.f32 0.0, %v6043
  %v6045 = vpop.f32.mrb[0].mxu0
  %v6046 = vpop.f32.mrb[0].mxu0
  %v6047 = vadd.f32 0.0, %v6046
  %v6048 = vpop.f32.mrb[0].mxu0
  %6049 = vmatprep.mubr.bf16.mxu0 0
  %6050 = vmatmul.mubr.bf16.gmra.mrb[0].mxu0 %v5907
  %v6051 = vpop.f32.mrb[0].mxu0
  %v6052 = vadd.f32 0.0, %v6051
  %v6053 = vpop.f32.mrb[0].mxu0
  %v6054 = vpop.f32.mrb[0].mxu0
  %v6055 = vadd.f32 0.0, %v6054
  %v6056 = vpop.f32.mrb[0].mxu0
  %6057 = vmatprep.mubr.bf16.mxu0 0
  %6058 = vmatmul.mubr.bf16.gmra.mrb[0].mxu0 %v5910
  %v6059 = vpop.f32.mrb[0].mxu0
  %v6060 = vadd.f32 0.0, %v6059
  %v6061 = vpop.f32.mrb[0].mxu0
  %v6062 = vpop.f32.mrb[0].mxu0
  %v6063 = vadd.f32 0.0, %v6062
  %v6064 = vpop.f32.mrb[0].mxu0
  %6065 = vmatprep.mubr.bf16.mxu0 0
  %6066 = vmatmul.mubr.bf16.gmra.mrb[0].mxu0 %v5913
  %v6067 = vpop.f32.mrb[0].mxu0
  %v6068 = vadd.f32 0.0, %v6067
  %v6069 = vpop.f32.mrb[0].mxu0
  %v6070 = vpop.f32.mrb[0].mxu0
  %v6071 = vadd.f32 0.0, %v6070
  %v6072 = vpop.f32.mrb[0].mxu0
  %6073 = vmatprep.mubr.bf16.mxu0 0
  %6074 = vmatmul.mubr.bf16.gmra.mrb[0].mxu0 %v5916
  %v6075 = vpop.f32.mrb[0].mxu0
  %v6076 = vadd.f32 0.0, %v6075
  %v6077 = vpop.f32.mrb[0].mxu0
  %v6078 = vpop.f32.mrb[0].mxu0
  %v6079 = vadd.f32 0.0, %v6078
  %v6080 = vpop.f32.mrb[0].mxu0
  %6081 = vmatprep.mubr.bf16.mxu0 0
  %6082 = vmatmul.mubr.bf16.gmra.mrb[0].mxu0 %v5919
  %v6083 = vpop.f32.mrb[0].mxu0
  %v6084 = vadd.f32 0.0, %v6083
  %v6085 = vpop.f32.mrb[0].mxu0
  %v6086 = vpop.f32.mrb[0].mxu0
  %v6087 = vadd.f32 0.0, %v6086
  %v6088 = vpop.f32.mrb[0].mxu0
  %6089 = vmatprep.mubr.bf16.mxu0 0
  %6090 = vmatmul.mubr.bf16.gmra.mrb[0].mxu0 %v5922
  %v6091 = vpop.f32.mrb[0].mxu0
  %v6092 = vadd.f32 0.0, %v6091
  %v6093 = vpop.f32.mrb[0].mxu0
  %v6094 = vpop.f32.mrb[0].mxu0
  %v6095 = vadd.f32 0.0, %v6094
  %v6096 = vpop.f32.mrb[0].mxu0
  %6097 = vmatprep.mubr.bf16.mxu0 0
  %6098 = vmatmul.mubr.bf16.gmra.mrb[0].mxu0 %v5925
  %v6099 = vpop.f32.mrb[0].mxu0
  %v6100 = vadd.f32 0.0, %v6099
  %v6101 = vpop.f32.mrb[0].mxu0
  %v6102 = vpop.f32.mrb[0].mxu0
  %v6103 = vadd.f32 0.0, %v6102
  %v6104 = vpop.f32.mrb[0].mxu0
  %6105 = vmatprep.mubr.bf16.mxu0 0
  %6106 = vmatmul.mubr.bf16.gmra.mrb[0].mxu0 %v5928
  %v6107 = vpop.f32.mrb[0].mxu0
  %v6108 = vadd.f32 0.0, %v6107
  %v6109 = vpop.f32.mrb[0].mxu0
  %v6110 = vpop.f32.mrb[0].mxu0
  %v6111 = vadd.f32 0.0, %v6110
  %v6112 = vpop.f32.mrb[0].mxu0
  %6113 = vmatprep.mubr.bf16.mxu0 0
  %6114 = vmatmul.mubr.bf16.gmra.mrb[0].mxu0 %v5931
  %v6115 = vpop.f32.mrb[0].mxu0
  %v6116 = vadd.f32 0.0, %v6115
  %v6117 = vpop.f32.mrb[0].mxu0
  %v6118 = vpop.f32.mrb[0].mxu0
  %v6119 = vadd.f32 0.0, %v6118
  %v6120 = vpop.f32.mrb[0].mxu0
  %6121 = vmatprep.mubr.bf16.mxu0 0
  %6122 = vmatmul.mubr.bf16.gmra.mrb[0].mxu0 %v5934
  %v6123 = vpop.f32.mrb[0].mxu0
  %v6124 = vadd.f32 0.0, %v6123
  %v6125 = vpop.f32.mrb[0].mxu0
  %v6126 = vpop.f32.mrb[0].mxu0
  %v6127 = vadd.f32 0.0, %v6126
  %v6128 = vpop.f32.mrb[0].mxu0
  %6129 = vmatprep.mubr.bf16.mxu0 0
  %6130 = vmatmul.mubr.bf16.gmra.mrb[0].mxu0 %v5937
  %v6131 = vpop.f32.mrb[0].mxu0
  %v6132 = vadd.f32 0.0, %v6131
  %v6133 = vpop.f32.mrb[0].mxu0
  %v6134 = vpop.f32.mrb[0].mxu0
  %v6135 = vadd.f32 0.0, %v6134
  %v6136 = vpop.f32.mrb[0].mxu0
  %6137 = vmatprep.mubr.bf16.mxu0 0
  %6138 = vmatmul.mubr.bf16.gmra.mrb[0].mxu0 %v5940
  %v6139 = vpop.f32.mrb[0].mxu0
  %v6140 = vadd.f32 0.0, %v6139
  %v6141 = vpop.f32.mrb[0].mxu0
  %v6142 = vpop.f32.mrb[0].mxu0
  %v6143 = vadd.f32 0.0, %v6142
  %v6144 = vpop.f32.mrb[0].mxu0
  %6145 = vmatprep.mubr.bf16.mxu0 0
  %6146 = vmatmul.mubr.bf16.gmra.mrb[0].mxu0 %v5943
  %v6147 = vpop.f32.mrb[0].mxu0
  %v6148 = vadd.f32 0.0, %v6147
  %v6149 = vpop.f32.mrb[0].mxu0
  %v6150 = vpop.f32.mrb[0].mxu0
  %v6151 = vadd.f32 0.0, %v6150
  %v6152 = vpop.f32.mrb[0].mxu0
  %6153 = vmatprep.mubr.bf16.mxu0 0
  %6154 = vmatmul.mubr.bf16.gmra.mrb[0].mxu0 %v5946
  %v6155 = vpop.f32.mrb[0].mxu0
  %v6156 = vadd.f32 0.0, %v6155
  %v6157 = vpop.f32.mrb[0].mxu0
  %v6158 = vpop.f32.mrb[0].mxu0
  %v6159 = vadd.f32 0.0, %v6158
  %v6160 = vpop.f32.mrb[0].mxu0
  %6161 = vmatprep.mubr.bf16.mxu0 0
  %6162 = vmatmul.mubr.bf16.gmra.mrb[0].mxu0 %v5949
  %v6163 = vpop.f32.mrb[0].mxu0
  %v6164 = vadd.f32 0.0, %v6163
  %v6165 = vpop.f32.mrb[0].mxu0
  %v6166 = vpop.f32.mrb[0].mxu0
  %v6167 = vadd.f32 0.0, %v6166
  %v6168 = vpop.f32.mrb[0].mxu0
  %6169 = vmatprep.mubr.bf16.mxu0 0
  %6170 = vmatmul.mubr.bf16.gmra.mrb[0].mxu0 %v5952
  %v6171 = vpop.f32.mrb[0].mxu0
  %v6172 = vadd.f32 0.0, %v6171
  %v6173 = vpop.f32.mrb[0].mxu0
  %v6174 = vpop.f32.mrb[0].mxu0
  %v6175 = vadd.f32 0.0, %v6174
  %v6176 = vpop.f32.mrb[0].mxu0
  %6177 = vmatprep.mubr.bf16.mxu0 0
  %6178 = vmatmul.mubr.bf16.gmra.mrb[0].mxu0 %v5955
  %v6179 = vpop.f32.mrb[0].mxu0
  %v6180 = vadd.f32 0.0, %v6179
  %v6181 = vpop.f32.mrb[0].mxu0
  %v6182 = vpop.f32.mrb[0].mxu0
  %v6183 = vadd.f32 0.0, %v6182
  %v6184 = vpop.f32.mrb[0].mxu0
  %6185 = vmatprep.mubr.bf16.mxu0 0
  %6186 = vmatmul.mubr.bf16.gmra.mrb[0].mxu0 %v5958
  %v6187 = vpop.f32.mrb[0].mxu0
  %v6188 = vadd.f32 0.0, %v6187
  %v6189 = vpop.f32.mrb[0].mxu0
  %v6190 = vpop.f32.mrb[0].mxu0
  %v6191 = vadd.f32 0.0, %v6190
  %v6192 = vpop.f32.mrb[0].mxu0
  %6193 = vmatprep.mubr.bf16.mxu0 0
  %6194 = vmatmul.mubr.bf16.gmra.mrb[0].mxu0 %v5961
  %v6195 = vpop.f32.mrb[0].mxu0
  %v6196 = vadd.f32 0.0, %v6195
  %v6197 = vpop.f32.mrb[0].mxu0
  %v6198 = vpop.f32.mrb[0].mxu0
  %v6199 = vadd.f32 0.0, %v6198
  %v6200 = vpop.f32.mrb[0].mxu0
  %6201 = vmatprep.mubr.bf16.mxu0 0
  %6202 = vmatmul.mubr.bf16.gmra.mrb[0].mxu0 %v5964
  %v6203 = vpop.f32.mrb[0].mxu0
  %v6204 = vadd.f32 0.0, %v6203
  %v6205 = vpop.f32.mrb[0].mxu0
  %v6206 = vpop.f32.mrb[0].mxu0
  %v6207 = vadd.f32 0.0, %v6206
  %v6208 = vpop.f32.mrb[0].mxu0
  %6209 = vmatprep.mubr.bf16.mxu0 0
  %6210 = vmatmul.mubr.bf16.gmra.mrb[0].mxu0 %v5967
  %v6211 = vpop.f32.mrb[0].mxu0
  %v6212 = vadd.f32 0.0, %v6211
  %v6213 = vpop.f32.mrb[0].mxu0
  %v6214 = vpop.f32.mrb[0].mxu0
  %v6215 = vadd.f32 0.0, %v6214
  %v6216 = vpop.f32.mrb[0].mxu0
  %6217 = vmatprep.mubr.bf16.mxu0 0
  %6218 = vmatmul.mubr.bf16.gmra.mrb[0].mxu0 %v5970
  %v6219 = vpop.f32.mrb[0].mxu0
  %v6220 = vadd.f32 0.0, %v6219
  %v6221 = vpop.f32.mrb[0].mxu0
  %v6222 = vpop.f32.mrb[0].mxu0
  %v6223 = vadd.f32 0.0, %v6222
  %v6224 = vpop.f32.mrb[0].mxu0
  %6225 = vmatprep.mubr.bf16.mxu0 0
  %6226 = vmatmul.mubr.bf16.gmra.mrb[0].mxu0 %v5973
  %v6227 = vpop.f32.mrb[0].mxu0
  %v6228 = vadd.f32 0.0, %v6227
  %v6229 = vpop.f32.mrb[0].mxu0
  %v6230 = vpop.f32.mrb[0].mxu0
  %v6231 = vadd.f32 0.0, %v6230
  %v6232 = vpop.f32.mrb[0].mxu0
  %6233 = vmatprep.mubr.bf16.mxu0 0
  %6234 = vmatmul.mubr.bf16.gmra.mrb[0].mxu0 %v5976
  %v6235 = vpop.f32.mrb[0].mxu0
  %v6236 = vadd.f32 0.0, %v6235
  %v6237 = vpop.f32.mrb[0].mxu0
  %v6238 = vpop.f32.mrb[0].mxu0
  %v6239 = vadd.f32 0.0, %v6238
  %v6240 = vpop.f32.mrb[0].mxu0
  %6241 = vmatprep.mubr.bf16.mxu0 0
  %6242 = vmatmul.mubr.bf16.gmra.mrb[0].mxu0 %v5979
  %v6243 = vpop.f32.mrb[0].mxu0
  %v6244 = vadd.f32 0.0, %v6243
  %v6245 = vpop.f32.mrb[0].mxu0
  %v6246 = vpop.f32.mrb[0].mxu0
  %v6247 = vadd.f32 0.0, %v6246
  %v6248 = vpop.f32.mrb[0].mxu0
  %6249 = vmatprep.mubr.bf16.mxu0 0
  %6250 = vmatmul.mubr.bf16.gmra.mrb[0].mxu0 %v5982
  %v6251 = vpop.f32.mrb[0].mxu0
  %v6252 = vadd.f32 0.0, %v6251
  %v6253 = vpop.f32.mrb[0].mxu0
  %v6254 = vpop.f32.mrb[0].mxu0
  %v6255 = vadd.f32 0.0, %v6254
  %v6256 = vpop.f32.mrb[0].mxu0
  %6257 = vmatprep.mubr.bf16.mxu0 0
  %6258 = vmatmul.mubr.bf16.gmra.mrb[0].mxu0 %v5985
  %v6259 = vpop.f32.mrb[0].mxu0
  %v6260 = vadd.f32 0.0, %v6259
  %v6261 = vpop.f32.mrb[0].mxu0
  %v6262 = vpop.f32.mrb[0].mxu0
  %v6263 = vadd.f32 0.0, %v6262
  %v6264 = vpop.f32.mrb[0].mxu0
  %6265 = vmatprep.mubr.bf16.mxu0 0
  %6266 = vmatmul.mubr.bf16.gmra.mrb[0].mxu0 %v5988
  %v6267 = vpop.f32.mrb[0].mxu0
  %v6268 = vadd.f32 0.0, %v6267
  %v6269 = vpop.f32.mrb[0].mxu0
  %v6270 = vpop.f32.mrb[0].mxu0
  %v6271 = vadd.f32 0.0, %v6270
  %v6272 = vpop.f32.mrb[0].mxu0
  %6273 = vmatprep.mubr.bf16.mxu0 0
  %6274 = vmatmul.mubr.bf16.gmra.mrb[0].mxu0 %v5991
  %v6275 = vpop.f32.mrb[0].mxu0
  %v6276 = vadd.f32 0.0, %v6275
  %v6277 = vpop.f32.mrb[0].mxu0
  %v6278 = vpop.f32.mrb[0].mxu0
  %v6279 = vadd.f32 0.0, %v6278
  %v6280 = vpop.f32.mrb[0].mxu0
  %6281 = vdwg.mxu0
  %v6284 = vunpack.c.l.b16 %v5790
  %v6285 = vunpack.c.l.b16 %v5791
  %v6286 = vpack.c.b16 %v6285, %v6284
  %v6289 = vsel %vm4915, %v5758, 0
  %v6292 = vsel %vm4915, %v5759, 0
  %v6295 = vsel %vm4915, %v5760, 0
  %v6298 = vsel %vm4915, %v5761, 0
  %v6301 = vsel %vm4915, %v5762, 0
  %v6304 = vsel %vm4915, %v5763, 0
  %v6307 = vsel %vm4915, %v5764, 0
  %v6310 = vsel %vm4915, %v5765, 0
  %v6313 = vsel %vm4915, %v5766, 0
  %v6316 = vsel %vm4915, %v5767, 0
  %v6319 = vsel %vm4915, %v5768, 0
  %v6322 = vsel %vm4915, %v5769, 0
  %v6325 = vsel %vm4915, %v5770, 0
  %v6328 = vsel %vm4915, %v5771, 0
  %v6331 = vsel %vm4915, %v5772, 0
  %v6334 = vsel %vm4915, %v5773, 0
  %v6337 = vsel %vm4915, %v5774, 0
  %v6340 = vsel %vm4915, %v5775, 0
  %v6343 = vsel %vm4915, %v5776, 0
  %v6346 = vsel %vm4915, %v5777, 0
  %v6349 = vsel %vm4915, %v5778, 0
  %v6352 = vsel %vm4915, %v5779, 0
  %v6355 = vsel %vm4915, %v5780, 0
  %v6358 = vsel %vm4915, %v5781, 0
  %v6361 = vsel %vm4915, %v5782, 0
  %v6364 = vsel %vm4915, %v5783, 0
  %v6367 = vsel %vm4915, %v5784, 0
  %v6370 = vsel %vm4915, %v5785, 0
  %v6373 = vsel %vm4915, %v5786, 0
  %v6376 = vsel %vm4915, %v5787, 0
  %v6379 = vsel %vm4915, %v5788, 0
  %v6382 = vsel %vm4915, %v5789, 0
  %6384 = vmatprep.subr.bf16.mxu0 0
  %6385 = vmatpush1.bf16.msra.mxu0 %v6286
  %6386 = vmatprep.subr.bf16.mxu0 0
  %6387 = vmatpush1.bf16.msra.mxu0 0
  %6388 = vmatprep.subr.bf16.mxu0 0
  %6389 = vmatpush1.bf16.msra.mxu0 0
  %6390 = vmatprep.subr.bf16.mxu0 0
  %6391 = vmatpush1.bf16.msra.mxu0 0
  %6392 = vmatprep.subr.bf16.mxu0 0
  %6393 = vmatpush1.bf16.msra.mxu0 0
  %6394 = vmatprep.subr.bf16.mxu0 0
  %6395 = vmatpush1.bf16.msra.mxu0 0
  %6396 = vmatprep.subr.bf16.mxu0 0
  %6397 = vmatpush1.bf16.msra.mxu0 0
  %6398 = vmatprep.subr.bf16.mxu0 0
  %6399 = vmatpush1.bf16.msra.mxu0 0
  %6400 = vmatprep.subr.bf16.mxu0 0
  %6401 = vmatpush1.bf16.msra.mxu0 0
  %6402 = vmatprep.subr.bf16.mxu0 0
  %6403 = vmatpush1.bf16.msra.mxu0 0
  %6404 = vmatprep.subr.bf16.mxu0 0
  %6405 = vmatpush1.bf16.msra.mxu0 0
  %6406 = vmatprep.subr.bf16.mxu0 0
  %6407 = vmatpush1.bf16.msra.mxu0 0
  %6408 = vmatprep.subr.bf16.mxu0 0
  %6409 = vmatpush1.bf16.msra.mxu0 0
  %6410 = vmatprep.subr.bf16.mxu0 0
  %6411 = vmatpush1.bf16.msra.mxu0 0
  %6412 = vmatprep.subr.bf16.mxu0 0
  %6413 = vmatpush1.bf16.msra.mxu0 0
  %6414 = vmatprep.subr.bf16.mxu0 0
  %6415 = vmatpush1.bf16.msra.mxu0 0
  %6416 = vmatprep.mubr.bf16.mxu0 0
  %6417 = vmatmul.mubr.bf16.gmra.mrb[0].mxu0 %v6289
  %v6418 = vpop.f32.mrb[0].mxu0
  %v6419 = vadd.f32 %v6028, %v6418
  %v6420 = vpop.f32.mrb[0].mxu0
  %v6421 = vpop.f32.mrb[0].mxu0
  %v6422 = vadd.f32 %v6031, %v6421
  %v6423 = vpop.f32.mrb[0].mxu0
  %6424 = vmatprep.mubr.bf16.mxu0 0
  %6425 = vmatmul.mubr.bf16.gmra.mrb[0].mxu0 %v6292
  %v6426 = vpop.f32.mrb[0].mxu0
  %v6427 = vadd.f32 %v6036, %v6426
  %v6428 = vpop.f32.mrb[0].mxu0
  %v6429 = vpop.f32.mrb[0].mxu0
  %v6430 = vadd.f32 %v6039, %v6429
  %v6431 = vpop.f32.mrb[0].mxu0
  %6432 = vmatprep.mubr.bf16.mxu0 0
  %6433 = vmatmul.mubr.bf16.gmra.mrb[0].mxu0 %v6295
  %v6434 = vpop.f32.mrb[0].mxu0
  %v6435 = vadd.f32 %v6044, %v6434
  %v6436 = vpop.f32.mrb[0].mxu0
  %v6437 = vpop.f32.mrb[0].mxu0
  %v6438 = vadd.f32 %v6047, %v6437
  %v6439 = vpop.f32.mrb[0].mxu0
  %6440 = vmatprep.mubr.bf16.mxu0 0
  %6441 = vmatmul.mubr.bf16.gmra.mrb[0].mxu0 %v6298
  %v6442 = vpop.f32.mrb[0].mxu0
  %v6443 = vadd.f32 %v6052, %v6442
  %v6444 = vpop.f32.mrb[0].mxu0
  %v6445 = vpop.f32.mrb[0].mxu0
  %v6446 = vadd.f32 %v6055, %v6445
  %v6447 = vpop.f32.mrb[0].mxu0
  %6448 = vmatprep.mubr.bf16.mxu0 0
  %6449 = vmatmul.mubr.bf16.gmra.mrb[0].mxu0 %v6301
  %v6450 = vpop.f32.mrb[0].mxu0
  %v6451 = vadd.f32 %v6060, %v6450
  %v6452 = vpop.f32.mrb[0].mxu0
  %v6453 = vpop.f32.mrb[0].mxu0
  %v6454 = vadd.f32 %v6063, %v6453
  %v6455 = vpop.f32.mrb[0].mxu0
  %6456 = vmatprep.mubr.bf16.mxu0 0
  %6457 = vmatmul.mubr.bf16.gmra.mrb[0].mxu0 %v6304
  %v6458 = vpop.f32.mrb[0].mxu0
  %v6459 = vadd.f32 %v6068, %v6458
  %v6460 = vpop.f32.mrb[0].mxu0
  %v6461 = vpop.f32.mrb[0].mxu0
  %v6462 = vadd.f32 %v6071, %v6461
  %v6463 = vpop.f32.mrb[0].mxu0
  %6464 = vmatprep.mubr.bf16.mxu0 0
  %6465 = vmatmul.mubr.bf16.gmra.mrb[0].mxu0 %v6307
  %v6466 = vpop.f32.mrb[0].mxu0
  %v6467 = vadd.f32 %v6076, %v6466
  %v6468 = vpop.f32.mrb[0].mxu0
  %v6469 = vpop.f32.mrb[0].mxu0
  %v6470 = vadd.f32 %v6079, %v6469
  %v6471 = vpop.f32.mrb[0].mxu0
  %6472 = vmatprep.mubr.bf16.mxu0 0
  %6473 = vmatmul.mubr.bf16.gmra.mrb[0].mxu0 %v6310
  %v6474 = vpop.f32.mrb[0].mxu0
  %v6475 = vadd.f32 %v6084, %v6474
  %v6476 = vpop.f32.mrb[0].mxu0
  %v6477 = vpop.f32.mrb[0].mxu0
  %v6478 = vadd.f32 %v6087, %v6477
  %v6479 = vpop.f32.mrb[0].mxu0
  %6480 = vmatprep.mubr.bf16.mxu0 0
  %6481 = vmatmul.mubr.bf16.gmra.mrb[0].mxu0 %v6313
  %v6482 = vpop.f32.mrb[0].mxu0
  %v6483 = vadd.f32 %v6092, %v6482
  %v6484 = vpop.f32.mrb[0].mxu0
  %v6485 = vpop.f32.mrb[0].mxu0
  %v6486 = vadd.f32 %v6095, %v6485
  %v6487 = vpop.f32.mrb[0].mxu0
  %6488 = vmatprep.mubr.bf16.mxu0 0
  %6489 = vmatmul.mubr.bf16.gmra.mrb[0].mxu0 %v6316
  %v6490 = vpop.f32.mrb[0].mxu0
  %v6491 = vadd.f32 %v6100, %v6490
  %v6492 = vpop.f32.mrb[0].mxu0
  %v6493 = vpop.f32.mrb[0].mxu0
  %v6494 = vadd.f32 %v6103, %v6493
  %v6495 = vpop.f32.mrb[0].mxu0
  %6496 = vmatprep.mubr.bf16.mxu0 0
  %6497 = vmatmul.mubr.bf16.gmra.mrb[0].mxu0 %v6319
  %v6498 = vpop.f32.mrb[0].mxu0
  %v6499 = vadd.f32 %v6108, %v6498
  %v6500 = vpop.f32.mrb[0].mxu0
  %v6501 = vpop.f32.mrb[0].mxu0
  %v6502 = vadd.f32 %v6111, %v6501
  %v6503 = vpop.f32.mrb[0].mxu0
  %6504 = vmatprep.mubr.bf16.mxu0 0
  %6505 = vmatmul.mubr.bf16.gmra.mrb[0].mxu0 %v6322
  %v6506 = vpop.f32.mrb[0].mxu0
  %v6507 = vadd.f32 %v6116, %v6506
  %v6508 = vpop.f32.mrb[0].mxu0
  %v6509 = vpop.f32.mrb[0].mxu0
  %v6510 = vadd.f32 %v6119, %v6509
  %v6511 = vpop.f32.mrb[0].mxu0
  %6512 = vmatprep.mubr.bf16.mxu0 0
  %6513 = vmatmul.mubr.bf16.gmra.mrb[0].mxu0 %v6325
  %v6514 = vpop.f32.mrb[0].mxu0
  %v6515 = vadd.f32 %v6124, %v6514
  %v6516 = vpop.f32.mrb[0].mxu0
  %v6517 = vpop.f32.mrb[0].mxu0
  %v6518 = vadd.f32 %v6127, %v6517
  %v6519 = vpop.f32.mrb[0].mxu0
  %6520 = vmatprep.mubr.bf16.mxu0 0
  %6521 = vmatmul.mubr.bf16.gmra.mrb[0].mxu0 %v6328
  %v6522 = vpop.f32.mrb[0].mxu0
  %v6523 = vadd.f32 %v6132, %v6522
  %v6524 = vpop.f32.mrb[0].mxu0
  %v6525 = vpop.f32.mrb[0].mxu0
  %v6526 = vadd.f32 %v6135, %v6525
  %v6527 = vpop.f32.mrb[0].mxu0
  %6528 = vmatprep.mubr.bf16.mxu0 0
  %6529 = vmatmul.mubr.bf16.gmra.mrb[0].mxu0 %v6331
  %v6530 = vpop.f32.mrb[0].mxu0
  %v6531 = vadd.f32 %v6140, %v6530
  %v6532 = vpop.f32.mrb[0].mxu0
  %v6533 = vpop.f32.mrb[0].mxu0
  %v6534 = vadd.f32 %v6143, %v6533
  %v6535 = vpop.f32.mrb[0].mxu0
  %6536 = vmatprep.mubr.bf16.mxu0 0
  %6537 = vmatmul.mubr.bf16.gmra.mrb[0].mxu0 %v6334
  %v6538 = vpop.f32.mrb[0].mxu0
  %v6539 = vadd.f32 %v6148, %v6538
  %v6540 = vpop.f32.mrb[0].mxu0
  %v6541 = vpop.f32.mrb[0].mxu0
  %v6542 = vadd.f32 %v6151, %v6541
  %v6543 = vpop.f32.mrb[0].mxu0
  %6544 = vmatprep.mubr.bf16.mxu0 0
  %6545 = vmatmul.mubr.bf16.gmra.mrb[0].mxu0 %v6337
  %v6546 = vpop.f32.mrb[0].mxu0
  %v6547 = vadd.f32 %v6156, %v6546
  %v6548 = vpop.f32.mrb[0].mxu0
  %v6549 = vpop.f32.mrb[0].mxu0
  %v6550 = vadd.f32 %v6159, %v6549
  %v6551 = vpop.f32.mrb[0].mxu0
  %6552 = vmatprep.mubr.bf16.mxu0 0
  %6553 = vmatmul.mubr.bf16.gmra.mrb[0].mxu0 %v6340
  %v6554 = vpop.f32.mrb[0].mxu0
  %v6555 = vadd.f32 %v6164, %v6554
  %v6556 = vpop.f32.mrb[0].mxu0
  %v6557 = vpop.f32.mrb[0].mxu0
  %v6558 = vadd.f32 %v6167, %v6557
  %v6559 = vpop.f32.mrb[0].mxu0
  %6560 = vmatprep.mubr.bf16.mxu0 0
  %6561 = vmatmul.mubr.bf16.gmra.mrb[0].mxu0 %v6343
  %v6562 = vpop.f32.mrb[0].mxu0
  %v6563 = vadd.f32 %v6172, %v6562
  %v6564 = vpop.f32.mrb[0].mxu0
  %v6565 = vpop.f32.mrb[0].mxu0
  %v6566 = vadd.f32 %v6175, %v6565
  %v6567 = vpop.f32.mrb[0].mxu0
  %6568 = vmatprep.mubr.bf16.mxu0 0
  %6569 = vmatmul.mubr.bf16.gmra.mrb[0].mxu0 %v6346
  %v6570 = vpop.f32.mrb[0].mxu0
  %v6571 = vadd.f32 %v6180, %v6570
  %v6572 = vpop.f32.mrb[0].mxu0
  %v6573 = vpop.f32.mrb[0].mxu0
  %v6574 = vadd.f32 %v6183, %v6573
  %v6575 = vpop.f32.mrb[0].mxu0
  %6576 = vmatprep.mubr.bf16.mxu0 0
  %6577 = vmatmul.mubr.bf16.gmra.mrb[0].mxu0 %v6349
  %v6578 = vpop.f32.mrb[0].mxu0
  %v6579 = vadd.f32 %v6188, %v6578
  %v6580 = vpop.f32.mrb[0].mxu0
  %v6581 = vpop.f32.mrb[0].mxu0
  %v6582 = vadd.f32 %v6191, %v6581
  %v6583 = vpop.f32.mrb[0].mxu0
  %6584 = vmatprep.mubr.bf16.mxu0 0
  %6585 = vmatmul.mubr.bf16.gmra.mrb[0].mxu0 %v6352
  %v6586 = vpop.f32.mrb[0].mxu0
  %v6587 = vadd.f32 %v6196, %v6586
  %v6588 = vpop.f32.mrb[0].mxu0
  %v6589 = vpop.f32.mrb[0].mxu0
  %v6590 = vadd.f32 %v6199, %v6589
  %v6591 = vpop.f32.mrb[0].mxu0
  %6592 = vmatprep.mubr.bf16.mxu0 0
  %6593 = vmatmul.mubr.bf16.gmra.mrb[0].mxu0 %v6355
  %v6594 = vpop.f32.mrb[0].mxu0
  %v6595 = vadd.f32 %v6204, %v6594
  %v6596 = vpop.f32.mrb[0].mxu0
  %v6597 = vpop.f32.mrb[0].mxu0
  %v6598 = vadd.f32 %v6207, %v6597
  %v6599 = vpop.f32.mrb[0].mxu0
  %6600 = vmatprep.mubr.bf16.mxu0 0
  %6601 = vmatmul.mubr.bf16.gmra.mrb[0].mxu0 %v6358
  %v6602 = vpop.f32.mrb[0].mxu0
  %v6603 = vadd.f32 %v6212, %v6602
  %v6604 = vpop.f32.mrb[0].mxu0
  %v6605 = vpop.f32.mrb[0].mxu0
  %v6606 = vadd.f32 %v6215, %v6605
  %v6607 = vpop.f32.mrb[0].mxu0
  %6608 = vmatprep.mubr.bf16.mxu0 0
  %6609 = vmatmul.mubr.bf16.gmra.mrb[0].mxu0 %v6361
  %v6610 = vpop.f32.mrb[0].mxu0
  %v6611 = vadd.f32 %v6220, %v6610
  %v6612 = vpop.f32.mrb[0].mxu0
  %v6613 = vpop.f32.mrb[0].mxu0
  %v6614 = vadd.f32 %v6223, %v6613
  %v6615 = vpop.f32.mrb[0].mxu0
  %6616 = vmatprep.mubr.bf16.mxu0 0
  %6617 = vmatmul.mubr.bf16.gmra.mrb[0].mxu0 %v6364
  %v6618 = vpop.f32.mrb[0].mxu0
  %v6619 = vadd.f32 %v6228, %v6618
  %v6620 = vpop.f32.mrb[0].mxu0
  %v6621 = vpop.f32.mrb[0].mxu0
  %v6622 = vadd.f32 %v6231, %v6621
  %v6623 = vpop.f32.mrb[0].mxu0
  %6624 = vmatprep.mubr.bf16.mxu0 0
  %6625 = vmatmul.mubr.bf16.gmra.mrb[0].mxu0 %v6367
  %v6626 = vpop.f32.mrb[0].mxu0
  %v6627 = vadd.f32 %v6236, %v6626
  %v6628 = vpop.f32.mrb[0].mxu0
  %v6629 = vpop.f32.mrb[0].mxu0
  %v6630 = vadd.f32 %v6239, %v6629
  %v6631 = vpop.f32.mrb[0].mxu0
  %6632 = vmatprep.mubr.bf16.mxu0 0
  %6633 = vmatmul.mubr.bf16.gmra.mrb[0].mxu0 %v6370
  %v6634 = vpop.f32.mrb[0].mxu0
  %v6635 = vadd.f32 %v6244, %v6634
  %v6636 = vpop.f32.mrb[0].mxu0
  %v6637 = vpop.f32.mrb[0].mxu0
  %v6638 = vadd.f32 %v6247, %v6637
  %v6639 = vpop.f32.mrb[0].mxu0
  %6640 = vmatprep.mubr.bf16.mxu0 0
  %6641 = vmatmul.mubr.bf16.gmra.mrb[0].mxu0 %v6373
  %v6642 = vpop.f32.mrb[0].mxu0
  %v6643 = vadd.f32 %v6252, %v6642
  %v6644 = vpop.f32.mrb[0].mxu0
  %v6645 = vpop.f32.mrb[0].mxu0
  %v6646 = vadd.f32 %v6255, %v6645
  %v6647 = vpop.f32.mrb[0].mxu0
  %6648 = vmatprep.mubr.bf16.mxu0 0
  %6649 = vmatmul.mubr.bf16.gmra.mrb[0].mxu0 %v6376
  %v6650 = vpop.f32.mrb[0].mxu0
  %v6651 = vadd.f32 %v6260, %v6650
  %v6652 = vpop.f32.mrb[0].mxu0
  %v6653 = vpop.f32.mrb[0].mxu0
  %v6654 = vadd.f32 %v6263, %v6653
  %v6655 = vpop.f32.mrb[0].mxu0
  %6656 = vmatprep.mubr.bf16.mxu0 0
  %6657 = vmatmul.mubr.bf16.gmra.mrb[0].mxu0 %v6379
  %v6658 = vpop.f32.mrb[0].mxu0
  %v6659 = vadd.f32 %v6268, %v6658
  %v6660 = vpop.f32.mrb[0].mxu0
  %v6661 = vpop.f32.mrb[0].mxu0
  %v6662 = vadd.f32 %v6271, %v6661
  %v6663 = vpop.f32.mrb[0].mxu0
  %6664 = vmatprep.mubr.bf16.mxu0 0
  %6665 = vmatmul.mubr.bf16.gmra.mrb[0].mxu0 %v6382
  %v6666 = vpop.f32.mrb[0].mxu0
  %v6667 = vadd.f32 %v6276, %v6666
  %v6668 = vpop.f32.mrb[0].mxu0
  %v6669 = vpop.f32.mrb[0].mxu0
  %v6670 = vadd.f32 %v6279, %v6669
  %v6671 = vpop.f32.mrb[0].mxu0
  %6672 = vdwg.mxu0
  %v6673 = vld [vmem:[#allocation2 + $0x2] sm:$0xff]
  %v6674 = vld [vmem:[#allocation2 + $0xa] sm:$0xff]
  %v6675 = vld [vmem:[#allocation2 + $0x1a] sm:$0xff]
  %v6676 = vld [vmem:[#allocation2 + $0x22] sm:$0xff]
  %v6677 = vld [vmem:[#allocation2 + $0x32] sm:$0xff]
  %v6678 = vld [vmem:[#allocation2 + $0x3a] sm:$0xff]
  %v6679 = vld [vmem:[#allocation2 + $0x4a] sm:$0xff]
  %v6680 = vld [vmem:[#allocation2 + $0x52] sm:$0xff]
  %v6681 = vld [vmem:[#allocation2 + $0x62] sm:$0xff]
  %v6682 = vld [vmem:[#allocation2 + $0x6a] sm:$0xff]
  %v6683 = vld [vmem:[#allocation2 + $0x7a] sm:$0xff]
  %v6684 = vld [vmem:[#allocation2 + $0x82] sm:$0xff]
  %v6685 = vld [vmem:[#allocation2 + $0x92] sm:$0xff]
  %v6686 = vld [vmem:[#allocation2 + $0x9a] sm:$0xff]
  %v6687 = vld [vmem:[#allocation2 + $0xaa] sm:$0xff]
  %v6688 = vld [vmem:[#allocation2 + $0xb2] sm:$0xff]
  %v6689 = vld [vmem:[#allocation2 + $0xc2] sm:$0xff]
  %v6690 = vld [vmem:[#allocation2 + $0xca] sm:$0xff]
  %v6691 = vld [vmem:[#allocation2 + $0xda] sm:$0xff]
  %v6692 = vld [vmem:[#allocation2 + $0xe2] sm:$0xff]
  %v6693 = vld [vmem:[#allocation2 + $0xf2] sm:$0xff]
  %v6694 = vld [vmem:[#allocation2 + $0xfa] sm:$0xff]
  %v6695 = vld [vmem:[#allocation2 + $0x10a] sm:$0xff]
  %v6696 = vld [vmem:[#allocation2 + $0x112] sm:$0xff]
  %v6697 = vld [vmem:[#allocation2 + $0x122] sm:$0xff]
  %v6698 = vld [vmem:[#allocation2 + $0x12a] sm:$0xff]
  %v6699 = vld [vmem:[#allocation2 + $0x13a] sm:$0xff]
  %v6700 = vld [vmem:[#allocation2 + $0x142] sm:$0xff]
  %v6701 = vld [vmem:[#allocation2 + $0x152] sm:$0xff]
  %v6702 = vld [vmem:[#allocation2 + $0x15a] sm:$0xff]
  %v6703 = vld [vmem:[#allocation2 + $0x16a] sm:$0xff]
  %v6704 = vld [vmem:[#allocation2 + $0x172] sm:$0xff]
  %v6705 = vld [vmem:[#allocation2 + $0x1b2] sm:$0xff]
  %v6706 = vld [vmem:[#allocation2 + $0x1ba] sm:$0xff]
  %v6707 = vld [vmem:[#allocation2 + $0x1ca] sm:$0xff]
  %v6708 = vld [vmem:[#allocation2 + $0x1d2] sm:$0xff]
  %v6709 = vld [vmem:[#allocation2 + $0x1e2] sm:$0xff]
  %v6710 = vld [vmem:[#allocation2 + $0x1ea] sm:$0xff]
  %v6711 = vld [vmem:[#allocation2 + $0x1fa] sm:$0xff]
  %v6712 = vld [vmem:[#allocation2 + $0x202] sm:$0xff]
  %v6713 = vld [vmem:[#allocation2 + $0x212] sm:$0xff]
  %v6714 = vld [vmem:[#allocation2 + $0x21a] sm:$0xff]
  %v6715 = vld [vmem:[#allocation2 + $0x22a] sm:$0xff]
  %v6716 = vld [vmem:[#allocation2 + $0x232] sm:$0xff]
  %v6717 = vld [vmem:[#allocation2 + $0x242] sm:$0xff]
  %v6718 = vld [vmem:[#allocation2 + $0x24a] sm:$0xff]
  %v6719 = vld [vmem:[#allocation2 + $0x25a] sm:$0xff]
  %v6720 = vld [vmem:[#allocation2 + $0x262] sm:$0xff]
  %v6721 = vld [vmem:[#allocation2 + $0x272] sm:$0xff]
  %v6722 = vld [vmem:[#allocation2 + $0x27a] sm:$0xff]
  %v6723 = vld [vmem:[#allocation2 + $0x28a] sm:$0xff]
  %v6724 = vld [vmem:[#allocation2 + $0x292] sm:$0xff]
  %v6725 = vld [vmem:[#allocation2 + $0x2a2] sm:$0xff]
  %v6726 = vld [vmem:[#allocation2 + $0x2aa] sm:$0xff]
  %v6727 = vld [vmem:[#allocation2 + $0x2ba] sm:$0xff]
  %v6728 = vld [vmem:[#allocation2 + $0x2c2] sm:$0xff]
  %v6729 = vld [vmem:[#allocation2 + $0x2d2] sm:$0xff]
  %v6730 = vld [vmem:[#allocation2 + $0x2da] sm:$0xff]
  %v6731 = vld [vmem:[#allocation2 + $0x2ea] sm:$0xff]
  %v6732 = vld [vmem:[#allocation2 + $0x2f2] sm:$0xff]
  %v6733 = vld [vmem:[#allocation2 + $0x302] sm:$0xff]
  %v6734 = vld [vmem:[#allocation2 + $0x30a] sm:$0xff]
  %v6735 = vld [vmem:[#allocation2 + $0x31a] sm:$0xff]
  %v6736 = vld [vmem:[#allocation2 + $0x322] sm:$0xff]
  %v6737 = vpack.c.bf16 %v6674, %v6673
  %v6738 = vpack.c.bf16 %v6676, %v6675
  %v6739 = vpack.c.bf16 %v6678, %v6677
  %v6740 = vpack.c.bf16 %v6680, %v6679
  %v6741 = vpack.c.bf16 %v6682, %v6681
  %v6742 = vpack.c.bf16 %v6684, %v6683
  %v6743 = vpack.c.bf16 %v6686, %v6685
  %v6744 = vpack.c.bf16 %v6688, %v6687
  %v6745 = vpack.c.bf16 %v6690, %v6689
  %v6746 = vpack.c.bf16 %v6692, %v6691
  %v6747 = vpack.c.bf16 %v6694, %v6693
  %v6748 = vpack.c.bf16 %v6696, %v6695
  %v6749 = vpack.c.bf16 %v6698, %v6697
  %v6750 = vpack.c.bf16 %v6700, %v6699
  %v6751 = vpack.c.bf16 %v6702, %v6701
  %v6752 = vpack.c.bf16 %v6704, %v6703
  %v6753 = vpack.c.bf16 %v6706, %v6705
  %v6754 = vpack.c.bf16 %v6708, %v6707
  %v6755 = vpack.c.bf16 %v6710, %v6709
  %v6756 = vpack.c.bf16 %v6712, %v6711
  %v6757 = vpack.c.bf16 %v6714, %v6713
  %v6758 = vpack.c.bf16 %v6716, %v6715
  %v6759 = vpack.c.bf16 %v6718, %v6717
  %v6760 = vpack.c.bf16 %v6720, %v6719
  %v6761 = vpack.c.bf16 %v6722, %v6721
  %v6762 = vpack.c.bf16 %v6724, %v6723
  %v6763 = vpack.c.bf16 %v6726, %v6725
  %v6764 = vpack.c.bf16 %v6728, %v6727
  %v6765 = vpack.c.bf16 %v6730, %v6729
  %v6766 = vpack.c.bf16 %v6732, %v6731
  %v6767 = vpack.c.bf16 %v6734, %v6733
  %v6768 = vpack.c.bf16 %v6736, %v6735
  %s6769 = scalar_lea.vmem %s3, 16
  %v6770 = vld [vmem:[%s6769] sm:$0xf]
  %v6771 = vld [vmem:[%s6769 + $0x4] sm:$0xf]
  %v6774 = vunpack.c.l.b16 %v6770
  %v6775 = vunpack.c.l.b16 %v6771
  %v6776 = vpack.c.b16 %v6775, %v6774
  %v6779 = vsel %vm4915, %v6737, 0
  %v6782 = vsel %vm4915, %v6738, 0
  %v6785 = vsel %vm4915, %v6739, 0
  %v6788 = vsel %vm4915, %v6740, 0
  %v6791 = vsel %vm4915, %v6741, 0
  %v6794 = vsel %vm4915, %v6742, 0
  %v6797 = vsel %vm4915, %v6743, 0
  %v6800 = vsel %vm4915, %v6744, 0
  %v6803 = vsel %vm4915, %v6745, 0
  %v6806 = vsel %vm4915, %v6746, 0
  %v6809 = vsel %vm4915, %v6747, 0
  %v6812 = vsel %vm4915, %v6748, 0
  %v6815 = vsel %vm4915, %v6749, 0
  %v6818 = vsel %vm4915, %v6750, 0
  %v6821 = vsel %vm4915, %v6751, 0
  %v6824 = vsel %vm4915, %v6752, 0
  %v6827 = vsel %vm4915, %v6753, 0
  %v6830 = vsel %vm4915, %v6754, 0
  %v6833 = vsel %vm4915, %v6755, 0
  %v6836 = vsel %vm4915, %v6756, 0
  %v6839 = vsel %vm4915, %v6757, 0
  %v6842 = vsel %vm4915, %v6758, 0
  %v6845 = vsel %vm4915, %v6759, 0
  %v6848 = vsel %vm4915, %v6760, 0
  %v6851 = vsel %vm4915, %v6761, 0
  %v6854 = vsel %vm4915, %v6762, 0
  %v6857 = vsel %vm4915, %v6763, 0
  %v6860 = vsel %vm4915, %v6764, 0
  %v6863 = vsel %vm4915, %v6765, 0
  %v6866 = vsel %vm4915, %v6766, 0
  %v6869 = vsel %vm4915, %v6767, 0
  %v6872 = vsel %vm4915, %v6768, 0
  %6874 = vmatprep.subr.bf16.mxu0 0
  %6875 = vmatpush1.bf16.msra.mxu0 %v6776
  %6876 = vmatprep.subr.bf16.mxu0 0
  %6877 = vmatpush1.bf16.msra.mxu0 0
  %6878 = vmatprep.subr.bf16.mxu0 0
  %6879 = vmatpush1.bf16.msra.mxu0 0
  %6880 = vmatprep.subr.bf16.mxu0 0
  %6881 = vmatpush1.bf16.msra.mxu0 0
  %6882 = vmatprep.subr.bf16.mxu0 0
  %6883 = vmatpush1.bf16.msra.mxu0 0
  %6884 = vmatprep.subr.bf16.mxu0 0
  %6885 = vmatpush1.bf16.msra.mxu0 0
  %6886 = vmatprep.subr.bf16.mxu0 0
  %6887 = vmatpush1.bf16.msra.mxu0 0
  %6888 = vmatprep.subr.bf16.mxu0 0
  %6889 = vmatpush1.bf16.msra.mxu0 0
  %6890 = vmatprep.subr.bf16.mxu0 0
  %6891 = vmatpush1.bf16.msra.mxu0 0
  %6892 = vmatprep.subr.bf16.mxu0 0
  %6893 = vmatpush1.bf16.msra.mxu0 0
  %6894 = vmatprep.subr.bf16.mxu0 0
  %6895 = vmatpush1.bf16.msra.mxu0 0
  %6896 = vmatprep.subr.bf16.mxu0 0
  %6897 = vmatpush1.bf16.msra.mxu0 0
  %6898 = vmatprep.subr.bf16.mxu0 0
  %6899 = vmatpush1.bf16.msra.mxu0 0
  %6900 = vmatprep.subr.bf16.mxu0 0
  %6901 = vmatpush1.bf16.msra.mxu0 0
  %6902 = vmatprep.subr.bf16.mxu0 0
  %6903 = vmatpush1.bf16.msra.mxu0 0
  %6904 = vmatprep.subr.bf16.mxu0 0
  %6905 = vmatpush1.bf16.msra.mxu0 0
  %6906 = vmatprep.mubr.bf16.mxu0 0
  %6907 = vmatmul.mubr.bf16.gmra.mrb[0].mxu0 %v6779
  %v6908 = vpop.f32.mrb[0].mxu0
  %v6909 = vadd.f32 0.0, %v6908
  %v6910 = vpop.f32.mrb[0].mxu0
  %v6911 = vpop.f32.mrb[0].mxu0
  %v6912 = vadd.f32 0.0, %v6911
  %v6913 = vpop.f32.mrb[0].mxu0
  %6914 = vmatprep.mubr.bf16.mxu0 0
  %6915 = vmatmul.mubr.bf16.gmra.mrb[0].mxu0 %v6782
  %v6916 = vpop.f32.mrb[0].mxu0
  %v6917 = vadd.f32 0.0, %v6916
  %v6918 = vpop.f32.mrb[0].mxu0
  %v6919 = vpop.f32.mrb[0].mxu0
  %v6920 = vadd.f32 0.0, %v6919
  %v6921 = vpop.f32.mrb[0].mxu0
  %6922 = vmatprep.mubr.bf16.mxu0 0
  %6923 = vmatmul.mubr.bf16.gmra.mrb[0].mxu0 %v6785
  %v6924 = vpop.f32.mrb[0].mxu0
  %v6925 = vadd.f32 0.0, %v6924
  %v6926 = vpop.f32.mrb[0].mxu0
  %v6927 = vpop.f32.mrb[0].mxu0
  %v6928 = vadd.f32 0.0, %v6927
  %v6929 = vpop.f32.mrb[0].mxu0
  %6930 = vmatprep.mubr.bf16.mxu0 0
  %6931 = vmatmul.mubr.bf16.gmra.mrb[0].mxu0 %v6788
  %v6932 = vpop.f32.mrb[0].mxu0
  %v6933 = vadd.f32 0.0, %v6932
  %v6934 = vpop.f32.mrb[0].mxu0
  %v6935 = vpop.f32.mrb[0].mxu0
  %v6936 = vadd.f32 0.0, %v6935
  %v6937 = vpop.f32.mrb[0].mxu0
  %6938 = vmatprep.mubr.bf16.mxu0 0
  %6939 = vmatmul.mubr.bf16.gmra.mrb[0].mxu0 %v6791
  %v6940 = vpop.f32.mrb[0].mxu0
  %v6941 = vadd.f32 0.0, %v6940
  %v6942 = vpop.f32.mrb[0].mxu0
  %v6943 = vpop.f32.mrb[0].mxu0
  %v6944 = vadd.f32 0.0, %v6943
  %v6945 = vpop.f32.mrb[0].mxu0
  %6946 = vmatprep.mubr.bf16.mxu0 0
  %6947 = vmatmul.mubr.bf16.gmra.mrb[0].mxu0 %v6794
  %v6948 = vpop.f32.mrb[0].mxu0
  %v6949 = vadd.f32 0.0, %v6948
  %v6950 = vpop.f32.mrb[0].mxu0
  %v6951 = vpop.f32.mrb[0].mxu0
  %v6952 = vadd.f32 0.0, %v6951
  %v6953 = vpop.f32.mrb[0].mxu0
  %6954 = vmatprep.mubr.bf16.mxu0 0
  %6955 = vmatmul.mubr.bf16.gmra.mrb[0].mxu0 %v6797
  %v6956 = vpop.f32.mrb[0].mxu0
  %v6957 = vadd.f32 0.0, %v6956
  %v6958 = vpop.f32.mrb[0].mxu0
  %v6959 = vpop.f32.mrb[0].mxu0
  %v6960 = vadd.f32 0.0, %v6959
  %v6961 = vpop.f32.mrb[0].mxu0
  %6962 = vmatprep.mubr.bf16.mxu0 0
  %6963 = vmatmul.mubr.bf16.gmra.mrb[0].mxu0 %v6800
  %v6964 = vpop.f32.mrb[0].mxu0
  %v6965 = vadd.f32 0.0, %v6964
  %v6966 = vpop.f32.mrb[0].mxu0
  %v6967 = vpop.f32.mrb[0].mxu0
  %v6968 = vadd.f32 0.0, %v6967
  %v6969 = vpop.f32.mrb[0].mxu0
  %6970 = vmatprep.mubr.bf16.mxu0 0
  %6971 = vmatmul.mubr.bf16.gmra.mrb[0].mxu0 %v6803
  %v6972 = vpop.f32.mrb[0].mxu0
  %v6973 = vadd.f32 0.0, %v6972
  %v6974 = vpop.f32.mrb[0].mxu0
  %v6975 = vpop.f32.mrb[0].mxu0
  %v6976 = vadd.f32 0.0, %v6975
  %v6977 = vpop.f32.mrb[0].mxu0
  %6978 = vmatprep.mubr.bf16.mxu0 0
  %6979 = vmatmul.mubr.bf16.gmra.mrb[0].mxu0 %v6806
  %v6980 = vpop.f32.mrb[0].mxu0
  %v6981 = vadd.f32 0.0, %v6980
  %v6982 = vpop.f32.mrb[0].mxu0
  %v6983 = vpop.f32.mrb[0].mxu0
  %v6984 = vadd.f32 0.0, %v6983
  %v6985 = vpop.f32.mrb[0].mxu0
  %6986 = vmatprep.mubr.bf16.mxu0 0
  %6987 = vmatmul.mubr.bf16.gmra.mrb[0].mxu0 %v6809
  %v6988 = vpop.f32.mrb[0].mxu0
  %v6989 = vadd.f32 0.0, %v6988
  %v6990 = vpop.f32.mrb[0].mxu0
  %v6991 = vpop.f32.mrb[0].mxu0
  %v6992 = vadd.f32 0.0, %v6991
  %v6993 = vpop.f32.mrb[0].mxu0
  %6994 = vmatprep.mubr.bf16.mxu0 0
  %6995 = vmatmul.mubr.bf16.gmra.mrb[0].mxu0 %v6812
  %v6996 = vpop.f32.mrb[0].mxu0
  %v6997 = vadd.f32 0.0, %v6996
  %v6998 = vpop.f32.mrb[0].mxu0
  %v6999 = vpop.f32.mrb[0].mxu0
  %v7000 = vadd.f32 0.0, %v6999
  %v7001 = vpop.f32.mrb[0].mxu0
  %7002 = vmatprep.mubr.bf16.mxu0 0
  %7003 = vmatmul.mubr.bf16.gmra.mrb[0].mxu0 %v6815
  %v7004 = vpop.f32.mrb[0].mxu0
  %v7005 = vadd.f32 0.0, %v7004
  %v7006 = vpop.f32.mrb[0].mxu0
  %v7007 = vpop.f32.mrb[0].mxu0
  %v7008 = vadd.f32 0.0, %v7007
  %v7009 = vpop.f32.mrb[0].mxu0
  %7010 = vmatprep.mubr.bf16.mxu0 0
  %7011 = vmatmul.mubr.bf16.gmra.mrb[0].mxu0 %v6818
  %v7012 = vpop.f32.mrb[0].mxu0
  %v7013 = vadd.f32 0.0, %v7012
  %v7014 = vpop.f32.mrb[0].mxu0
  %v7015 = vpop.f32.mrb[0].mxu0
  %v7016 = vadd.f32 0.0, %v7015
  %v7017 = vpop.f32.mrb[0].mxu0
  %7018 = vmatprep.mubr.bf16.mxu0 0
  %7019 = vmatmul.mubr.bf16.gmra.mrb[0].mxu0 %v6821
  %v7020 = vpop.f32.mrb[0].mxu0
  %v7021 = vadd.f32 0.0, %v7020
  %v7022 = vpop.f32.mrb[0].mxu0
  %v7023 = vpop.f32.mrb[0].mxu0
  %v7024 = vadd.f32 0.0, %v7023
  %v7025 = vpop.f32.mrb[0].mxu0
  %7026 = vmatprep.mubr.bf16.mxu0 0
  %7027 = vmatmul.mubr.bf16.gmra.mrb[0].mxu0 %v6824
  %v7028 = vpop.f32.mrb[0].mxu0
  %v7029 = vadd.f32 0.0, %v7028
  %v7030 = vpop.f32.mrb[0].mxu0
  %v7031 = vpop.f32.mrb[0].mxu0
  %v7032 = vadd.f32 0.0, %v7031
  %v7033 = vpop.f32.mrb[0].mxu0
  %7034 = vmatprep.mubr.bf16.mxu0 0
  %7035 = vmatmul.mubr.bf16.gmra.mrb[0].mxu0 %v6827
  %v7036 = vpop.f32.mrb[0].mxu0
  %v7037 = vadd.f32 0.0, %v7036
  %v7038 = vpop.f32.mrb[0].mxu0
  %v7039 = vpop.f32.mrb[0].mxu0
  %v7040 = vadd.f32 0.0, %v7039
  %v7041 = vpop.f32.mrb[0].mxu0
  %7042 = vmatprep.mubr.bf16.mxu0 0
  %7043 = vmatmul.mubr.bf16.gmra.mrb[0].mxu0 %v6830
  %v7044 = vpop.f32.mrb[0].mxu0
  %v7045 = vadd.f32 0.0, %v7044
  %v7046 = vpop.f32.mrb[0].mxu0
  %v7047 = vpop.f32.mrb[0].mxu0
  %v7048 = vadd.f32 0.0, %v7047
  %v7049 = vpop.f32.mrb[0].mxu0
  %7050 = vmatprep.mubr.bf16.mxu0 0
  %7051 = vmatmul.mubr.bf16.gmra.mrb[0].mxu0 %v6833
  %v7052 = vpop.f32.mrb[0].mxu0
  %v7053 = vadd.f32 0.0, %v7052
  %v7054 = vpop.f32.mrb[0].mxu0
  %v7055 = vpop.f32.mrb[0].mxu0
  %v7056 = vadd.f32 0.0, %v7055
  %v7057 = vpop.f32.mrb[0].mxu0
  %7058 = vmatprep.mubr.bf16.mxu0 0
  %7059 = vmatmul.mubr.bf16.gmra.mrb[0].mxu0 %v6836
  %v7060 = vpop.f32.mrb[0].mxu0
  %v7061 = vadd.f32 0.0, %v7060
  %v7062 = vpop.f32.mrb[0].mxu0
  %v7063 = vpop.f32.mrb[0].mxu0
  %v7064 = vadd.f32 0.0, %v7063
  %v7065 = vpop.f32.mrb[0].mxu0
  %7066 = vmatprep.mubr.bf16.mxu0 0
  %7067 = vmatmul.mubr.bf16.gmra.mrb[0].mxu0 %v6839
  %v7068 = vpop.f32.mrb[0].mxu0
  %v7069 = vadd.f32 0.0, %v7068
  %v7070 = vpop.f32.mrb[0].mxu0
  %v7071 = vpop.f32.mrb[0].mxu0
  %v7072 = vadd.f32 0.0, %v7071
  %v7073 = vpop.f32.mrb[0].mxu0
  %7074 = vmatprep.mubr.bf16.mxu0 0
  %7075 = vmatmul.mubr.bf16.gmra.mrb[0].mxu0 %v6842
  %v7076 = vpop.f32.mrb[0].mxu0
  %v7077 = vadd.f32 0.0, %v7076
  %v7078 = vpop.f32.mrb[0].mxu0
  %v7079 = vpop.f32.mrb[0].mxu0
  %v7080 = vadd.f32 0.0, %v7079
  %v7081 = vpop.f32.mrb[0].mxu0
  %7082 = vmatprep.mubr.bf16.mxu0 0
  %7083 = vmatmul.mubr.bf16.gmra.mrb[0].mxu0 %v6845
  %v7084 = vpop.f32.mrb[0].mxu0
  %v7085 = vadd.f32 0.0, %v7084
  %v7086 = vpop.f32.mrb[0].mxu0
  %v7087 = vpop.f32.mrb[0].mxu0
  %v7088 = vadd.f32 0.0, %v7087
  %v7089 = vpop.f32.mrb[0].mxu0
  %7090 = vmatprep.mubr.bf16.mxu0 0
  %7091 = vmatmul.mubr.bf16.gmra.mrb[0].mxu0 %v6848
  %v7092 = vpop.f32.mrb[0].mxu0
  %v7093 = vadd.f32 0.0, %v7092
  %v7094 = vpop.f32.mrb[0].mxu0
  %v7095 = vpop.f32.mrb[0].mxu0
  %v7096 = vadd.f32 0.0, %v7095
  %v7097 = vpop.f32.mrb[0].mxu0
  %7098 = vmatprep.mubr.bf16.mxu0 0
  %7099 = vmatmul.mubr.bf16.gmra.mrb[0].mxu0 %v6851
  %v7100 = vpop.f32.mrb[0].mxu0
  %v7101 = vadd.f32 0.0, %v7100
  %v7102 = vpop.f32.mrb[0].mxu0
  %v7103 = vpop.f32.mrb[0].mxu0
  %v7104 = vadd.f32 0.0, %v7103
  %v7105 = vpop.f32.mrb[0].mxu0
  %7106 = vmatprep.mubr.bf16.mxu0 0
  %7107 = vmatmul.mubr.bf16.gmra.mrb[0].mxu0 %v6854
  %v7108 = vpop.f32.mrb[0].mxu0
  %v7109 = vadd.f32 0.0, %v7108
  %v7110 = vpop.f32.mrb[0].mxu0
  %v7111 = vpop.f32.mrb[0].mxu0
  %v7112 = vadd.f32 0.0, %v7111
  %v7113 = vpop.f32.mrb[0].mxu0
  %7114 = vmatprep.mubr.bf16.mxu0 0
  %7115 = vmatmul.mubr.bf16.gmra.mrb[0].mxu0 %v6857
  %v7116 = vpop.f32.mrb[0].mxu0
  %v7117 = vadd.f32 0.0, %v7116
  %v7118 = vpop.f32.mrb[0].mxu0
  %v7119 = vpop.f32.mrb[0].mxu0
  %v7120 = vadd.f32 0.0, %v7119
  %v7121 = vpop.f32.mrb[0].mxu0
  %7122 = vmatprep.mubr.bf16.mxu0 0
  %7123 = vmatmul.mubr.bf16.gmra.mrb[0].mxu0 %v6860
  %v7124 = vpop.f32.mrb[0].mxu0
  %v7125 = vadd.f32 0.0, %v7124
  %v7126 = vpop.f32.mrb[0].mxu0
  %v7127 = vpop.f32.mrb[0].mxu0
  %v7128 = vadd.f32 0.0, %v7127
  %v7129 = vpop.f32.mrb[0].mxu0
  %7130 = vmatprep.mubr.bf16.mxu0 0
  %7131 = vmatmul.mubr.bf16.gmra.mrb[0].mxu0 %v6863
  %v7132 = vpop.f32.mrb[0].mxu0
  %v7133 = vadd.f32 0.0, %v7132
  %v7134 = vpop.f32.mrb[0].mxu0
  %v7135 = vpop.f32.mrb[0].mxu0
  %v7136 = vadd.f32 0.0, %v7135
  %v7137 = vpop.f32.mrb[0].mxu0
  %7138 = vmatprep.mubr.bf16.mxu0 0
  %7139 = vmatmul.mubr.bf16.gmra.mrb[0].mxu0 %v6866
  %v7140 = vpop.f32.mrb[0].mxu0
  %v7141 = vadd.f32 0.0, %v7140
  %v7142 = vpop.f32.mrb[0].mxu0
  %v7143 = vpop.f32.mrb[0].mxu0
  %v7144 = vadd.f32 0.0, %v7143
  %v7145 = vpop.f32.mrb[0].mxu0
  %7146 = vmatprep.mubr.bf16.mxu0 0
  %7147 = vmatmul.mubr.bf16.gmra.mrb[0].mxu0 %v6869
  %v7148 = vpop.f32.mrb[0].mxu0
  %v7149 = vadd.f32 0.0, %v7148
  %v7150 = vpop.f32.mrb[0].mxu0
  %v7151 = vpop.f32.mrb[0].mxu0
  %v7152 = vadd.f32 0.0, %v7151
  %v7153 = vpop.f32.mrb[0].mxu0
  %7154 = vmatprep.mubr.bf16.mxu0 0
  %7155 = vmatmul.mubr.bf16.gmra.mrb[0].mxu0 %v6872
  %v7156 = vpop.f32.mrb[0].mxu0
  %v7157 = vadd.f32 0.0, %v7156
  %v7158 = vpop.f32.mrb[0].mxu0
  %v7159 = vpop.f32.mrb[0].mxu0
  %v7160 = vadd.f32 0.0, %v7159
  %v7161 = vpop.f32.mrb[0].mxu0
  %7162 = vdwg.mxu0
  %v7163 = vadd.f32 %v6419, %v6909
  %v7164 = vadd.f32 %v6422, %v6912
  %v7165 = vadd.f32 %v6427, %v6917
  %v7166 = vadd.f32 %v6430, %v6920
  %v7167 = vadd.f32 %v6435, %v6925
  %v7168 = vadd.f32 %v6438, %v6928
  %v7169 = vadd.f32 %v6443, %v6933
  %v7170 = vadd.f32 %v6446, %v6936
  %v7171 = vadd.f32 %v6451, %v6941
  %v7172 = vadd.f32 %v6454, %v6944
  %v7173 = vadd.f32 %v6459, %v6949
  %v7174 = vadd.f32 %v6462, %v6952
  %v7175 = vadd.f32 %v6467, %v6957
  %v7176 = vadd.f32 %v6470, %v6960
  %v7177 = vadd.f32 %v6475, %v6965
  %v7178 = vadd.f32 %v6478, %v6968
  %v7179 = vadd.f32 %v6483, %v6973
  %v7180 = vadd.f32 %v6486, %v6976
  %v7181 = vadd.f32 %v6491, %v6981
  %v7182 = vadd.f32 %v6494, %v6984
  %v7183 = vadd.f32 %v6499, %v6989
  %v7184 = vadd.f32 %v6502, %v6992
  %v7185 = vadd.f32 %v6507, %v6997
  %v7186 = vadd.f32 %v6510, %v7000
  %v7187 = vadd.f32 %v6515, %v7005
  %v7188 = vadd.f32 %v6518, %v7008
  %v7189 = vadd.f32 %v6523, %v7013
  %v7190 = vadd.f32 %v6526, %v7016
  %v7191 = vadd.f32 %v6531, %v7021
  %v7192 = vadd.f32 %v6534, %v7024
  %v7193 = vadd.f32 %v6539, %v7029
  %v7194 = vadd.f32 %v6542, %v7032
  %v7195 = vadd.f32 %v6547, %v7037
  %v7196 = vadd.f32 %v6550, %v7040
  %v7197 = vadd.f32 %v6555, %v7045
  %v7198 = vadd.f32 %v6558, %v7048
  %v7199 = vadd.f32 %v6563, %v7053
  %v7200 = vadd.f32 %v6566, %v7056
  %v7201 = vadd.f32 %v6571, %v7061
  %v7202 = vadd.f32 %v6574, %v7064
  %v7203 = vadd.f32 %v6579, %v7069
  %v7204 = vadd.f32 %v6582, %v7072
  %v7205 = vadd.f32 %v6587, %v7077
  %v7206 = vadd.f32 %v6590, %v7080
  %v7207 = vadd.f32 %v6595, %v7085
  %v7208 = vadd.f32 %v6598, %v7088
  %v7209 = vadd.f32 %v6603, %v7093
  %v7210 = vadd.f32 %v6606, %v7096
  %v7211 = vadd.f32 %v6611, %v7101
  %v7212 = vadd.f32 %v6614, %v7104
  %v7213 = vadd.f32 %v6619, %v7109
  %v7214 = vadd.f32 %v6622, %v7112
  %v7215 = vadd.f32 %v6627, %v7117
  %v7216 = vadd.f32 %v6630, %v7120
  %v7217 = vadd.f32 %v6635, %v7125
  %v7218 = vadd.f32 %v6638, %v7128
  %v7219 = vadd.f32 %v6643, %v7133
  %v7220 = vadd.f32 %v6646, %v7136
  %v7221 = vadd.f32 %v6651, %v7141
  %v7222 = vadd.f32 %v6654, %v7144
  %v7223 = vadd.f32 %v6659, %v7149
  %v7224 = vadd.f32 %v6662, %v7152
  %v7225 = vadd.f32 %v6667, %v7157
  %v7226 = vadd.f32 %v6670, %v7160
  %v7227 = vld [vmem:[%s5629] sm:$0xff]
  %v7228 = vld [vmem:[%s5629 + $0x8] sm:$0xff]
  %v7229 = vld [vmem:[%s5629 + $0x18] sm:$0xff]
  %v7230 = vld [vmem:[%s5629 + $0x20] sm:$0xff]
  %v7231 = vld [vmem:[%s5629 + $0x30] sm:$0xff]
  %v7232 = vld [vmem:[%s5629 + $0x38] sm:$0xff]
  %v7233 = vld [vmem:[%s5629 + $0x48] sm:$0xff]
  %v7234 = vld [vmem:[%s5629 + $0x50] sm:$0xff]
  %v7235 = vld [vmem:[%s5629 + $0x60] sm:$0xff]
  %v7236 = vld [vmem:[%s5629 + $0x68] sm:$0xff]
  %v7237 = vld [vmem:[%s5629 + $0x78] sm:$0xff]
  %v7238 = vld [vmem:[%s5629 + $0x80] sm:$0xff]
  %v7239 = vld [vmem:[%s5629 + $0x90] sm:$0xff]
  %v7240 = vld [vmem:[%s5629 + $0x98] sm:$0xff]
  %v7241 = vld [vmem:[%s5629 + $0xa8] sm:$0xff]
  %v7242 = vld [vmem:[%s5629 + $0xb0] sm:$0xff]
  %v7243 = vld [vmem:[%s5629 + $0xc0] sm:$0xff]
  %v7244 = vld [vmem:[%s5629 + $0xc8] sm:$0xff]
  %v7245 = vld [vmem:[%s5629 + $0xd8] sm:$0xff]
  %v7246 = vld [vmem:[%s5629 + $0xe0] sm:$0xff]
  %v7247 = vld [vmem:[%s5629 + $0xf0] sm:$0xff]
  %v7248 = vld [vmem:[%s5629 + $0xf8] sm:$0xff]
  %v7249 = vld [vmem:[%s5629 + $0x108] sm:$0xff]
  %v7250 = vld [vmem:[%s5629 + $0x110] sm:$0xff]
  %v7251 = vld [vmem:[%s5629 + $0x120] sm:$0xff]
  %v7252 = vld [vmem:[%s5629 + $0x128] sm:$0xff]
  %v7253 = vld [vmem:[%s5629 + $0x138] sm:$0xff]
  %v7254 = vld [vmem:[%s5629 + $0x140] sm:$0xff]
  %v7255 = vld [vmem:[%s5629 + $0x150] sm:$0xff]
  %v7256 = vld [vmem:[%s5629 + $0x158] sm:$0xff]
  %v7257 = vld [vmem:[%s5629 + $0x168] sm:$0xff]
  %v7258 = vld [vmem:[%s5629 + $0x170] sm:$0xff]
  %v7259 = vld [vmem:[%s5629 + $0x1b0] sm:$0xff]
  %v7260 = vld [vmem:[%s5629 + $0x1b8] sm:$0xff]
  %v7261 = vld [vmem:[%s5629 + $0x1c8] sm:$0xff]
  %v7262 = vld [vmem:[%s5629 + $0x1d0] sm:$0xff]
  %v7263 = vld [vmem:[%s5629 + $0x1e0] sm:$0xff]
  %v7264 = vld [vmem:[%s5629 + $0x1e8] sm:$0xff]
  %v7265 = vld [vmem:[%s5629 + $0x1f8] sm:$0xff]
  %v7266 = vld [vmem:[%s5629 + $0x200] sm:$0xff]
  %v7267 = vld [vmem:[%s5629 + $0x210] sm:$0xff]
  %v7268 = vld [vmem:[%s5629 + $0x218] sm:$0xff]
  %v7269 = vld [vmem:[%s5629 + $0x228] sm:$0xff]
  %v7270 = vld [vmem:[%s5629 + $0x230] sm:$0xff]
  %v7271 = vld [vmem:[%s5629 + $0x240] sm:$0xff]
  %v7272 = vld [vmem:[%s5629 + $0x248] sm:$0xff]
  %v7273 = vld [vmem:[%s5629 + $0x258] sm:$0xff]
  %v7274 = vld [vmem:[%s5629 + $0x260] sm:$0xff]
  %v7275 = vld [vmem:[%s5629 + $0x270] sm:$0xff]
  %v7276 = vld [vmem:[%s5629 + $0x278] sm:$0xff]
  %v7277 = vld [vmem:[%s5629 + $0x288] sm:$0xff]
  %v7278 = vld [vmem:[%s5629 + $0x290] sm:$0xff]
  %v7279 = vld [vmem:[%s5629 + $0x2a0] sm:$0xff]
  %v7280 = vld [vmem:[%s5629 + $0x2a8] sm:$0xff]
  %v7281 = vld [vmem:[%s5629 + $0x2b8] sm:$0xff]
  %v7282 = vld [vmem:[%s5629 + $0x2c0] sm:$0xff]
  %v7283 = vld [vmem:[%s5629 + $0x2d0] sm:$0xff]
  %v7284 = vld [vmem:[%s5629 + $0x2d8] sm:$0xff]
  %v7285 = vld [vmem:[%s5629 + $0x2e8] sm:$0xff]
  %v7286 = vld [vmem:[%s5629 + $0x2f0] sm:$0xff]
  %v7287 = vld [vmem:[%s5629 + $0x300] sm:$0xff]
  %v7288 = vld [vmem:[%s5629 + $0x308] sm:$0xff]
  %v7289 = vld [vmem:[%s5629 + $0x318] sm:$0xff]
  %v7290 = vld [vmem:[%s5629 + $0x320] sm:$0xff]
  %v7291 = vpack.c.bf16 %v7228, %v7227
  %v7292 = vpack.c.bf16 %v7230, %v7229
  %v7293 = vpack.c.bf16 %v7232, %v7231
  %v7294 = vpack.c.bf16 %v7234, %v7233
  %v7295 = vpack.c.bf16 %v7236, %v7235
  %v7296 = vpack.c.bf16 %v7238, %v7237
  %v7297 = vpack.c.bf16 %v7240, %v7239
  %v7298 = vpack.c.bf16 %v7242, %v7241
  %v7299 = vpack.c.bf16 %v7244, %v7243
  %v7300 = vpack.c.bf16 %v7246, %v7245
  %v7301 = vpack.c.bf16 %v7248, %v7247
  %v7302 = vpack.c.bf16 %v7250, %v7249
  %v7303 = vpack.c.bf16 %v7252, %v7251
  %v7304 = vpack.c.bf16 %v7254, %v7253
  %v7305 = vpack.c.bf16 %v7256, %v7255
  %v7306 = vpack.c.bf16 %v7258, %v7257
  %v7307 = vpack.c.bf16 %v7260, %v7259
  %v7308 = vpack.c.bf16 %v7262, %v7261
  %v7309 = vpack.c.bf16 %v7264, %v7263
  %v7310 = vpack.c.bf16 %v7266, %v7265
  %v7311 = vpack.c.bf16 %v7268, %v7267
  %v7312 = vpack.c.bf16 %v7270, %v7269
  %v7313 = vpack.c.bf16 %v7272, %v7271
  %v7314 = vpack.c.bf16 %v7274, %v7273
  %v7315 = vpack.c.bf16 %v7276, %v7275
  %v7316 = vpack.c.bf16 %v7278, %v7277
  %v7317 = vpack.c.bf16 %v7280, %v7279
  %v7318 = vpack.c.bf16 %v7282, %v7281
  %v7319 = vpack.c.bf16 %v7284, %v7283
  %v7320 = vpack.c.bf16 %v7286, %v7285
  %v7321 = vpack.c.bf16 %v7288, %v7287
  %v7322 = vpack.c.bf16 %v7290, %v7289
  %s7323 = scalar_lea.vmem %s3, 24
  %v7324 = vld [vmem:[%s7323] sm:$0xf]
  %v7325 = vld [vmem:[%s7323 + $0x4] sm:$0xf]
  %v7328 = vunpack.c.l.b16 %v7324
  %v7329 = vunpack.c.l.b16 %v7325
  %v7330 = vpack.c.b16 %v7329, %v7328
  %v7333 = vsel %vm4915, %v7291, 0
  %v7336 = vsel %vm4915, %v7292, 0
  %v7339 = vsel %vm4915, %v7293, 0
  %v7342 = vsel %vm4915, %v7294, 0
  %v7345 = vsel %vm4915, %v7295, 0
  %v7348 = vsel %vm4915, %v7296, 0
  %v7351 = vsel %vm4915, %v7297, 0
  %v7354 = vsel %vm4915, %v7298, 0
  %v7357 = vsel %vm4915, %v7299, 0
  %v7360 = vsel %vm4915, %v7300, 0
  %v7363 = vsel %vm4915, %v7301, 0
  %v7366 = vsel %vm4915, %v7302, 0
  %v7369 = vsel %vm4915, %v7303, 0
  %v7372 = vsel %vm4915, %v7304, 0
  %v7375 = vsel %vm4915, %v7305, 0
  %v7378 = vsel %vm4915, %v7306, 0
  %v7381 = vsel %vm4915, %v7307, 0
  %v7384 = vsel %vm4915, %v7308, 0
  %v7387 = vsel %vm4915, %v7309, 0
  %v7390 = vsel %vm4915, %v7310, 0
  %v7393 = vsel %vm4915, %v7311, 0
  %v7396 = vsel %vm4915, %v7312, 0
  %v7399 = vsel %vm4915, %v7313, 0
  %v7402 = vsel %vm4915, %v7314, 0
  %v7405 = vsel %vm4915, %v7315, 0
  %v7408 = vsel %vm4915, %v7316, 0
  %v7411 = vsel %vm4915, %v7317, 0
  %v7414 = vsel %vm4915, %v7318, 0
  %v7417 = vsel %vm4915, %v7319, 0
  %v7420 = vsel %vm4915, %v7320, 0
  %v7423 = vsel %vm4915, %v7321, 0
  %v7426 = vsel %vm4915, %v7322, 0
  %7428 = vmatprep.subr.bf16.mxu0 0
  %7429 = vmatpush1.bf16.msra.mxu0 %v7330
  %7430 = vmatprep.subr.bf16.mxu0 0
  %7431 = vmatpush1.bf16.msra.mxu0 0
  %7432 = vmatprep.subr.bf16.mxu0 0
  %7433 = vmatpush1.bf16.msra.mxu0 0
  %7434 = vmatprep.subr.bf16.mxu0 0
  %7435 = vmatpush1.bf16.msra.mxu0 0
  %7436 = vmatprep.subr.bf16.mxu0 0
  %7437 = vmatpush1.bf16.msra.mxu0 0
  %7438 = vmatprep.subr.bf16.mxu0 0
  %7439 = vmatpush1.bf16.msra.mxu0 0
  %7440 = vmatprep.subr.bf16.mxu0 0
  %7441 = vmatpush1.bf16.msra.mxu0 0
  %7442 = vmatprep.subr.bf16.mxu0 0
  %7443 = vmatpush1.bf16.msra.mxu0 0
  %7444 = vmatprep.subr.bf16.mxu0 0
  %7445 = vmatpush1.bf16.msra.mxu0 0
  %7446 = vmatprep.subr.bf16.mxu0 0
  %7447 = vmatpush1.bf16.msra.mxu0 0
  %7448 = vmatprep.subr.bf16.mxu0 0
  %7449 = vmatpush1.bf16.msra.mxu0 0
  %7450 = vmatprep.subr.bf16.mxu0 0
  %7451 = vmatpush1.bf16.msra.mxu0 0
  %7452 = vmatprep.subr.bf16.mxu0 0
  %7453 = vmatpush1.bf16.msra.mxu0 0
  %7454 = vmatprep.subr.bf16.mxu0 0
  %7455 = vmatpush1.bf16.msra.mxu0 0
  %7456 = vmatprep.subr.bf16.mxu0 0
  %7457 = vmatpush1.bf16.msra.mxu0 0
  %7458 = vmatprep.subr.bf16.mxu0 0
  %7459 = vmatpush1.bf16.msra.mxu0 0
  %7460 = vmatprep.mubr.bf16.mxu0 0
  %7461 = vmatmul.mubr.bf16.gmra.mrb[0].mxu0 %v7333
  %v7462 = vpop.f32.mrb[0].mxu0
  %v7463 = vadd.f32 0.0, %v7462
  %v7464 = vpop.f32.mrb[0].mxu0
  %v7465 = vpop.f32.mrb[0].mxu0
  %v7466 = vadd.f32 0.0, %v7465
  %v7467 = vpop.f32.mrb[0].mxu0
  %7468 = vmatprep.mubr.bf16.mxu0 0
  %7469 = vmatmul.mubr.bf16.gmra.mrb[0].mxu0 %v7336
  %v7470 = vpop.f32.mrb[0].mxu0
  %v7471 = vadd.f32 0.0, %v7470
  %v7472 = vpop.f32.mrb[0].mxu0
  %v7473 = vpop.f32.mrb[0].mxu0
  %v7474 = vadd.f32 0.0, %v7473
  %v7475 = vpop.f32.mrb[0].mxu0
  %7476 = vmatprep.mubr.bf16.mxu0 0
  %7477 = vmatmul.mubr.bf16.gmra.mrb[0].mxu0 %v7339
  %v7478 = vpop.f32.mrb[0].mxu0
  %v7479 = vadd.f32 0.0, %v7478
  %v7480 = vpop.f32.mrb[0].mxu0
  %v7481 = vpop.f32.mrb[0].mxu0
  %v7482 = vadd.f32 0.0, %v7481
  %v7483 = vpop.f32.mrb[0].mxu0
  %7484 = vmatprep.mubr.bf16.mxu0 0
  %7485 = vmatmul.mubr.bf16.gmra.mrb[0].mxu0 %v7342
  %v7486 = vpop.f32.mrb[0].mxu0
  %v7487 = vadd.f32 0.0, %v7486
  %v7488 = vpop.f32.mrb[0].mxu0
  %v7489 = vpop.f32.mrb[0].mxu0
  %v7490 = vadd.f32 0.0, %v7489
  %v7491 = vpop.f32.mrb[0].mxu0
  %7492 = vmatprep.mubr.bf16.mxu0 0
  %7493 = vmatmul.mubr.bf16.gmra.mrb[0].mxu0 %v7345
  %v7494 = vpop.f32.mrb[0].mxu0
  %v7495 = vadd.f32 0.0, %v7494
  %v7496 = vpop.f32.mrb[0].mxu0
  %v7497 = vpop.f32.mrb[0].mxu0
  %v7498 = vadd.f32 0.0, %v7497
  %v7499 = vpop.f32.mrb[0].mxu0
  %7500 = vmatprep.mubr.bf16.mxu0 0
  %7501 = vmatmul.mubr.bf16.gmra.mrb[0].mxu0 %v7348
  %v7502 = vpop.f32.mrb[0].mxu0
  %v7503 = vadd.f32 0.0, %v7502
  %v7504 = vpop.f32.mrb[0].mxu0
  %v7505 = vpop.f32.mrb[0].mxu0
  %v7506 = vadd.f32 0.0, %v7505
  %v7507 = vpop.f32.mrb[0].mxu0
  %7508 = vmatprep.mubr.bf16.mxu0 0
  %7509 = vmatmul.mubr.bf16.gmra.mrb[0].mxu0 %v7351
  %v7510 = vpop.f32.mrb[0].mxu0
  %v7511 = vadd.f32 0.0, %v7510
  %v7512 = vpop.f32.mrb[0].mxu0
  %v7513 = vpop.f32.mrb[0].mxu0
  %v7514 = vadd.f32 0.0, %v7513
  %v7515 = vpop.f32.mrb[0].mxu0
  %7516 = vmatprep.mubr.bf16.mxu0 0
  %7517 = vmatmul.mubr.bf16.gmra.mrb[0].mxu0 %v7354
  %v7518 = vpop.f32.mrb[0].mxu0
  %v7519 = vadd.f32 0.0, %v7518
  %v7520 = vpop.f32.mrb[0].mxu0
  %v7521 = vpop.f32.mrb[0].mxu0
  %v7522 = vadd.f32 0.0, %v7521
  %v7523 = vpop.f32.mrb[0].mxu0
  %7524 = vmatprep.mubr.bf16.mxu0 0
  %7525 = vmatmul.mubr.bf16.gmra.mrb[0].mxu0 %v7357
  %v7526 = vpop.f32.mrb[0].mxu0
  %v7527 = vadd.f32 0.0, %v7526
  %v7528 = vpop.f32.mrb[0].mxu0
  %v7529 = vpop.f32.mrb[0].mxu0
  %v7530 = vadd.f32 0.0, %v7529
  %v7531 = vpop.f32.mrb[0].mxu0
  %7532 = vmatprep.mubr.bf16.mxu0 0
  %7533 = vmatmul.mubr.bf16.gmra.mrb[0].mxu0 %v7360
  %v7534 = vpop.f32.mrb[0].mxu0
  %v7535 = vadd.f32 0.0, %v7534
  %v7536 = vpop.f32.mrb[0].mxu0
  %v7537 = vpop.f32.mrb[0].mxu0
  %v7538 = vadd.f32 0.0, %v7537
  %v7539 = vpop.f32.mrb[0].mxu0
  %7540 = vmatprep.mubr.bf16.mxu0 0
  %7541 = vmatmul.mubr.bf16.gmra.mrb[0].mxu0 %v7363
  %v7542 = vpop.f32.mrb[0].mxu0
  %v7543 = vadd.f32 0.0, %v7542
  %v7544 = vpop.f32.mrb[0].mxu0
  %v7545 = vpop.f32.mrb[0].mxu0
  %v7546 = vadd.f32 0.0, %v7545
  %v7547 = vpop.f32.mrb[0].mxu0
  %7548 = vmatprep.mubr.bf16.mxu0 0
  %7549 = vmatmul.mubr.bf16.gmra.mrb[0].mxu0 %v7366
  %v7550 = vpop.f32.mrb[0].mxu0
  %v7551 = vadd.f32 0.0, %v7550
  %v7552 = vpop.f32.mrb[0].mxu0
  %v7553 = vpop.f32.mrb[0].mxu0
  %v7554 = vadd.f32 0.0, %v7553
  %v7555 = vpop.f32.mrb[0].mxu0
  %7556 = vmatprep.mubr.bf16.mxu0 0
  %7557 = vmatmul.mubr.bf16.gmra.mrb[0].mxu0 %v7369
  %v7558 = vpop.f32.mrb[0].mxu0
  %v7559 = vadd.f32 0.0, %v7558
  %v7560 = vpop.f32.mrb[0].mxu0
  %v7561 = vpop.f32.mrb[0].mxu0
  %v7562 = vadd.f32 0.0, %v7561
  %v7563 = vpop.f32.mrb[0].mxu0
  %7564 = vmatprep.mubr.bf16.mxu0 0
  %7565 = vmatmul.mubr.bf16.gmra.mrb[0].mxu0 %v7372
  %v7566 = vpop.f32.mrb[0].mxu0
  %v7567 = vadd.f32 0.0, %v7566
  %v7568 = vpop.f32.mrb[0].mxu0
  %v7569 = vpop.f32.mrb[0].mxu0
  %v7570 = vadd.f32 0.0, %v7569
  %v7571 = vpop.f32.mrb[0].mxu0
  %7572 = vmatprep.mubr.bf16.mxu0 0
  %7573 = vmatmul.mubr.bf16.gmra.mrb[0].mxu0 %v7375
  %v7574 = vpop.f32.mrb[0].mxu0
  %v7575 = vadd.f32 0.0, %v7574
  %v7576 = vpop.f32.mrb[0].mxu0
  %v7577 = vpop.f32.mrb[0].mxu0
  %v7578 = vadd.f32 0.0, %v7577
  %v7579 = vpop.f32.mrb[0].mxu0
  %7580 = vmatprep.mubr.bf16.mxu0 0
  %7581 = vmatmul.mubr.bf16.gmra.mrb[0].mxu0 %v7378
  %v7582 = vpop.f32.mrb[0].mxu0
  %v7583 = vadd.f32 0.0, %v7582
  %v7584 = vpop.f32.mrb[0].mxu0
  %v7585 = vpop.f32.mrb[0].mxu0
  %v7586 = vadd.f32 0.0, %v7585
  %v7587 = vpop.f32.mrb[0].mxu0
  %7588 = vmatprep.mubr.bf16.mxu0 0
  %7589 = vmatmul.mubr.bf16.gmra.mrb[0].mxu0 %v7381
  %v7590 = vpop.f32.mrb[0].mxu0
  %v7591 = vadd.f32 0.0, %v7590
  %v7592 = vpop.f32.mrb[0].mxu0
  %v7593 = vpop.f32.mrb[0].mxu0
  %v7594 = vadd.f32 0.0, %v7593
  %v7595 = vpop.f32.mrb[0].mxu0
  %7596 = vmatprep.mubr.bf16.mxu0 0
  %7597 = vmatmul.mubr.bf16.gmra.mrb[0].mxu0 %v7384
  %v7598 = vpop.f32.mrb[0].mxu0
  %v7599 = vadd.f32 0.0, %v7598
  %v7600 = vpop.f32.mrb[0].mxu0
  %v7601 = vpop.f32.mrb[0].mxu0
  %v7602 = vadd.f32 0.0, %v7601
  %v7603 = vpop.f32.mrb[0].mxu0
  %7604 = vmatprep.mubr.bf16.mxu0 0
  %7605 = vmatmul.mubr.bf16.gmra.mrb[0].mxu0 %v7387
  %v7606 = vpop.f32.mrb[0].mxu0
  %v7607 = vadd.f32 0.0, %v7606
  %v7608 = vpop.f32.mrb[0].mxu0
  %v7609 = vpop.f32.mrb[0].mxu0
  %v7610 = vadd.f32 0.0, %v7609
  %v7611 = vpop.f32.mrb[0].mxu0
  %7612 = vmatprep.mubr.bf16.mxu0 0
  %7613 = vmatmul.mubr.bf16.gmra.mrb[0].mxu0 %v7390
  %v7614 = vpop.f32.mrb[0].mxu0
  %v7615 = vadd.f32 0.0, %v7614
  %v7616 = vpop.f32.mrb[0].mxu0
  %v7617 = vpop.f32.mrb[0].mxu0
  %v7618 = vadd.f32 0.0, %v7617
  %v7619 = vpop.f32.mrb[0].mxu0
  %7620 = vmatprep.mubr.bf16.mxu0 0
  %7621 = vmatmul.mubr.bf16.gmra.mrb[0].mxu0 %v7393
  %v7622 = vpop.f32.mrb[0].mxu0
  %v7623 = vadd.f32 0.0, %v7622
  %v7624 = vpop.f32.mrb[0].mxu0
  %v7625 = vpop.f32.mrb[0].mxu0
  %v7626 = vadd.f32 0.0, %v7625
  %v7627 = vpop.f32.mrb[0].mxu0
  %7628 = vmatprep.mubr.bf16.mxu0 0
  %7629 = vmatmul.mubr.bf16.gmra.mrb[0].mxu0 %v7396
  %v7630 = vpop.f32.mrb[0].mxu0
  %v7631 = vadd.f32 0.0, %v7630
  %v7632 = vpop.f32.mrb[0].mxu0
  %v7633 = vpop.f32.mrb[0].mxu0
  %v7634 = vadd.f32 0.0, %v7633
  %v7635 = vpop.f32.mrb[0].mxu0
  %7636 = vmatprep.mubr.bf16.mxu0 0
  %7637 = vmatmul.mubr.bf16.gmra.mrb[0].mxu0 %v7399
  %v7638 = vpop.f32.mrb[0].mxu0
  %v7639 = vadd.f32 0.0, %v7638
  %v7640 = vpop.f32.mrb[0].mxu0
  %v7641 = vpop.f32.mrb[0].mxu0
  %v7642 = vadd.f32 0.0, %v7641
  %v7643 = vpop.f32.mrb[0].mxu0
  %7644 = vmatprep.mubr.bf16.mxu0 0
  %7645 = vmatmul.mubr.bf16.gmra.mrb[0].mxu0 %v7402
  %v7646 = vpop.f32.mrb[0].mxu0
  %v7647 = vadd.f32 0.0, %v7646
  %v7648 = vpop.f32.mrb[0].mxu0
  %v7649 = vpop.f32.mrb[0].mxu0
  %v7650 = vadd.f32 0.0, %v7649
  %v7651 = vpop.f32.mrb[0].mxu0
  %7652 = vmatprep.mubr.bf16.mxu0 0
  %7653 = vmatmul.mubr.bf16.gmra.mrb[0].mxu0 %v7405
  %v7654 = vpop.f32.mrb[0].mxu0
  %v7655 = vadd.f32 0.0, %v7654
  %v7656 = vpop.f32.mrb[0].mxu0
  %v7657 = vpop.f32.mrb[0].mxu0
  %v7658 = vadd.f32 0.0, %v7657
  %v7659 = vpop.f32.mrb[0].mxu0
  %7660 = vmatprep.mubr.bf16.mxu0 0
  %7661 = vmatmul.mubr.bf16.gmra.mrb[0].mxu0 %v7408
  %v7662 = vpop.f32.mrb[0].mxu0
  %v7663 = vadd.f32 0.0, %v7662
  %v7664 = vpop.f32.mrb[0].mxu0
  %v7665 = vpop.f32.mrb[0].mxu0
  %v7666 = vadd.f32 0.0, %v7665
  %v7667 = vpop.f32.mrb[0].mxu0
  %7668 = vmatprep.mubr.bf16.mxu0 0
  %7669 = vmatmul.mubr.bf16.gmra.mrb[0].mxu0 %v7411
  %v7670 = vpop.f32.mrb[0].mxu0
  %v7671 = vadd.f32 0.0, %v7670
  %v7672 = vpop.f32.mrb[0].mxu0
  %v7673 = vpop.f32.mrb[0].mxu0
  %v7674 = vadd.f32 0.0, %v7673
  %v7675 = vpop.f32.mrb[0].mxu0
  %7676 = vmatprep.mubr.bf16.mxu0 0
  %7677 = vmatmul.mubr.bf16.gmra.mrb[0].mxu0 %v7414
  %v7678 = vpop.f32.mrb[0].mxu0
  %v7679 = vadd.f32 0.0, %v7678
  %v7680 = vpop.f32.mrb[0].mxu0
  %v7681 = vpop.f32.mrb[0].mxu0
  %v7682 = vadd.f32 0.0, %v7681
  %v7683 = vpop.f32.mrb[0].mxu0
  %7684 = vmatprep.mubr.bf16.mxu0 0
  %7685 = vmatmul.mubr.bf16.gmra.mrb[0].mxu0 %v7417
  %v7686 = vpop.f32.mrb[0].mxu0
  %v7687 = vadd.f32 0.0, %v7686
  %v7688 = vpop.f32.mrb[0].mxu0
  %v7689 = vpop.f32.mrb[0].mxu0
  %v7690 = vadd.f32 0.0, %v7689
  %v7691 = vpop.f32.mrb[0].mxu0
  %7692 = vmatprep.mubr.bf16.mxu0 0
  %7693 = vmatmul.mubr.bf16.gmra.mrb[0].mxu0 %v7420
  %v7694 = vpop.f32.mrb[0].mxu0
  %v7695 = vadd.f32 0.0, %v7694
  %v7696 = vpop.f32.mrb[0].mxu0
  %v7697 = vpop.f32.mrb[0].mxu0
  %v7698 = vadd.f32 0.0, %v7697
  %v7699 = vpop.f32.mrb[0].mxu0
  %7700 = vmatprep.mubr.bf16.mxu0 0
  %7701 = vmatmul.mubr.bf16.gmra.mrb[0].mxu0 %v7423
  %v7702 = vpop.f32.mrb[0].mxu0
  %v7703 = vadd.f32 0.0, %v7702
  %v7704 = vpop.f32.mrb[0].mxu0
  %v7705 = vpop.f32.mrb[0].mxu0
  %v7706 = vadd.f32 0.0, %v7705
  %v7707 = vpop.f32.mrb[0].mxu0
  %7708 = vmatprep.mubr.bf16.mxu0 0
  %7709 = vmatmul.mubr.bf16.gmra.mrb[0].mxu0 %v7426
  %v7710 = vpop.f32.mrb[0].mxu0
  %v7711 = vadd.f32 0.0, %v7710
  %v7712 = vpop.f32.mrb[0].mxu0
  %v7713 = vpop.f32.mrb[0].mxu0
  %v7714 = vadd.f32 0.0, %v7713
  %v7715 = vpop.f32.mrb[0].mxu0
  %7716 = vdwg.mxu0
  %v7717 = vadd.f32 %v7163, %v7463
  %v7718 = vadd.f32 %v7164, %v7466
  %v7719 = vadd.f32 %v7165, %v7471
  %v7720 = vadd.f32 %v7166, %v7474
  %v7721 = vadd.f32 %v7167, %v7479
  %v7722 = vadd.f32 %v7168, %v7482
  %v7723 = vadd.f32 %v7169, %v7487
  %v7724 = vadd.f32 %v7170, %v7490
  %v7725 = vadd.f32 %v7171, %v7495
  %v7726 = vadd.f32 %v7172, %v7498
  %v7727 = vadd.f32 %v7173, %v7503
  %v7728 = vadd.f32 %v7174, %v7506
  %v7729 = vadd.f32 %v7175, %v7511
  %v7730 = vadd.f32 %v7176, %v7514
  %v7731 = vadd.f32 %v7177, %v7519
  %v7732 = vadd.f32 %v7178, %v7522
  %v7733 = vadd.f32 %v7179, %v7527
  %v7734 = vadd.f32 %v7180, %v7530
  %v7735 = vadd.f32 %v7181, %v7535
  %v7736 = vadd.f32 %v7182, %v7538
  %v7737 = vadd.f32 %v7183, %v7543
  %v7738 = vadd.f32 %v7184, %v7546
  %v7739 = vadd.f32 %v7185, %v7551
  %v7740 = vadd.f32 %v7186, %v7554
  %v7741 = vadd.f32 %v7187, %v7559
  %v7742 = vadd.f32 %v7188, %v7562
  %v7743 = vadd.f32 %v7189, %v7567
  %v7744 = vadd.f32 %v7190, %v7570
  %v7745 = vadd.f32 %v7191, %v7575
  %v7746 = vadd.f32 %v7192, %v7578
  %v7747 = vadd.f32 %v7193, %v7583
  %v7748 = vadd.f32 %v7194, %v7586
  %v7749 = vadd.f32 %v7195, %v7591
  %v7750 = vadd.f32 %v7196, %v7594
  %v7751 = vadd.f32 %v7197, %v7599
  %v7752 = vadd.f32 %v7198, %v7602
  %v7753 = vadd.f32 %v7199, %v7607
  %v7754 = vadd.f32 %v7200, %v7610
  %v7755 = vadd.f32 %v7201, %v7615
  %v7756 = vadd.f32 %v7202, %v7618
  %v7757 = vadd.f32 %v7203, %v7623
  %v7758 = vadd.f32 %v7204, %v7626
  %v7759 = vadd.f32 %v7205, %v7631
  %v7760 = vadd.f32 %v7206, %v7634
  %v7761 = vadd.f32 %v7207, %v7639
  %v7762 = vadd.f32 %v7208, %v7642
  %v7763 = vadd.f32 %v7209, %v7647
  %v7764 = vadd.f32 %v7210, %v7650
  %v7765 = vadd.f32 %v7211, %v7655
  %v7766 = vadd.f32 %v7212, %v7658
  %v7767 = vadd.f32 %v7213, %v7663
  %v7768 = vadd.f32 %v7214, %v7666
  %v7769 = vadd.f32 %v7215, %v7671
  %v7770 = vadd.f32 %v7216, %v7674
  %v7771 = vadd.f32 %v7217, %v7679
  %v7772 = vadd.f32 %v7218, %v7682
  %v7773 = vadd.f32 %v7219, %v7687
  %v7774 = vadd.f32 %v7220, %v7690
  %v7775 = vadd.f32 %v7221, %v7695
  %v7776 = vadd.f32 %v7222, %v7698
  %v7777 = vadd.f32 %v7223, %v7703
  %v7778 = vadd.f32 %v7224, %v7706
  %v7779 = vadd.f32 %v7225, %v7711
  %v7780 = vadd.f32 %v7226, %v7714
  %v7781 = vld [vmem:[%s5629 + $0x1] sm:$0xff]
  %v7782 = vld [vmem:[%s5629 + $0x9] sm:$0xff]
  %v7783 = vld [vmem:[%s5629 + $0x19] sm:$0xff]
  %v7784 = vld [vmem:[%s5629 + $0x21] sm:$0xff]
  %v7785 = vld [vmem:[%s5629 + $0x31] sm:$0xff]
  %v7786 = vld [vmem:[%s5629 + $0x39] sm:$0xff]
  %v7787 = vld [vmem:[%s5629 + $0x49] sm:$0xff]
  %v7788 = vld [vmem:[%s5629 + $0x51] sm:$0xff]
  %v7789 = vld [vmem:[%s5629 + $0x61] sm:$0xff]
  %v7790 = vld [vmem:[%s5629 + $0x69] sm:$0xff]
  %v7791 = vld [vmem:[%s5629 + $0x79] sm:$0xff]
  %v7792 = vld [vmem:[%s5629 + $0x81] sm:$0xff]
  %v7793 = vld [vmem:[%s5629 + $0x91] sm:$0xff]
  %v7794 = vld [vmem:[%s5629 + $0x99] sm:$0xff]
  %v7795 = vld [vmem:[%s5629 + $0xa9] sm:$0xff]
  %v7796 = vld [vmem:[%s5629 + $0xb1] sm:$0xff]
  %v7797 = vld [vmem:[%s5629 + $0xc1] sm:$0xff]
  %v7798 = vld [vmem:[%s5629 + $0xc9] sm:$0xff]
  %v7799 = vld [vmem:[%s5629 + $0xd9] sm:$0xff]
  %v7800 = vld [vmem:[%s5629 + $0xe1] sm:$0xff]
  %v7801 = vld [vmem:[%s5629 + $0xf1] sm:$0xff]
  %v7802 = vld [vmem:[%s5629 + $0xf9] sm:$0xff]
  %v7803 = vld [vmem:[%s5629 + $0x109] sm:$0xff]
  %v7804 = vld [vmem:[%s5629 + $0x111] sm:$0xff]
  %v7805 = vld [vmem:[%s5629 + $0x121] sm:$0xff]
  %v7806 = vld [vmem:[%s5629 + $0x129] sm:$0xff]
  %v7807 = vld [vmem:[%s5629 + $0x139] sm:$0xff]
  %v7808 = vld [vmem:[%s5629 + $0x141] sm:$0xff]
  %v7809 = vld [vmem:[%s5629 + $0x151] sm:$0xff]
  %v7810 = vld [vmem:[%s5629 + $0x159] sm:$0xff]
  %v7811 = vld [vmem:[%s5629 + $0x169] sm:$0xff]
  %v7812 = vld [vmem:[%s5629 + $0x171] sm:$0xff]
  %v7813 = vld [vmem:[%s5629 + $0x1b1] sm:$0xff]
  %v7814 = vld [vmem:[%s5629 + $0x1b9] sm:$0xff]
  %v7815 = vld [vmem:[%s5629 + $0x1c9] sm:$0xff]
  %v7816 = vld [vmem:[%s5629 + $0x1d1] sm:$0xff]
  %v7817 = vld [vmem:[%s5629 + $0x1e1] sm:$0xff]
  %v7818 = vld [vmem:[%s5629 + $0x1e9] sm:$0xff]
  %v7819 = vld [vmem:[%s5629 + $0x1f9] sm:$0xff]
  %v7820 = vld [vmem:[%s5629 + $0x201] sm:$0xff]
  %v7821 = vld [vmem:[%s5629 + $0x211] sm:$0xff]
  %v7822 = vld [vmem:[%s5629 + $0x219] sm:$0xff]
  %v7823 = vld [vmem:[%s5629 + $0x229] sm:$0xff]
  %v7824 = vld [vmem:[%s5629 + $0x231] sm:$0xff]
  %v7825 = vld [vmem:[%s5629 + $0x241] sm:$0xff]
  %v7826 = vld [vmem:[%s5629 + $0x249] sm:$0xff]
  %v7827 = vld [vmem:[%s5629 + $0x259] sm:$0xff]
  %v7828 = vld [vmem:[%s5629 + $0x261] sm:$0xff]
  %v7829 = vld [vmem:[%s5629 + $0x271] sm:$0xff]
  %v7830 = vld [vmem:[%s5629 + $0x279] sm:$0xff]
  %v7831 = vld [vmem:[%s5629 + $0x289] sm:$0xff]
  %v7832 = vld [vmem:[%s5629 + $0x291] sm:$0xff]
  %v7833 = vld [vmem:[%s5629 + $0x2a1] sm:$0xff]
  %v7834 = vld [vmem:[%s5629 + $0x2a9] sm:$0xff]
  %v7835 = vld [vmem:[%s5629 + $0x2b9] sm:$0xff]
  %v7836 = vld [vmem:[%s5629 + $0x2c1] sm:$0xff]
  %v7837 = vld [vmem:[%s5629 + $0x2d1] sm:$0xff]
  %v7838 = vld [vmem:[%s5629 + $0x2d9] sm:$0xff]
  %v7839 = vld [vmem:[%s5629 + $0x2e9] sm:$0xff]
  %v7840 = vld [vmem:[%s5629 + $0x2f1] sm:$0xff]
  %v7841 = vld [vmem:[%s5629 + $0x301] sm:$0xff]
  %v7842 = vld [vmem:[%s5629 + $0x309] sm:$0xff]
  %v7843 = vld [vmem:[%s5629 + $0x319] sm:$0xff]
  %v7844 = vld [vmem:[%s5629 + $0x321] sm:$0xff]
  %v7845 = vpack.c.bf16 %v7782, %v7781
  %v7846 = vpack.c.bf16 %v7784, %v7783
  %v7847 = vpack.c.bf16 %v7786, %v7785
  %v7848 = vpack.c.bf16 %v7788, %v7787
  %v7849 = vpack.c.bf16 %v7790, %v7789
  %v7850 = vpack.c.bf16 %v7792, %v7791
  %v7851 = vpack.c.bf16 %v7794, %v7793
  %v7852 = vpack.c.bf16 %v7796, %v7795
  %v7853 = vpack.c.bf16 %v7798, %v7797
  %v7854 = vpack.c.bf16 %v7800, %v7799
  %v7855 = vpack.c.bf16 %v7802, %v7801
  %v7856 = vpack.c.bf16 %v7804, %v7803
  %v7857 = vpack.c.bf16 %v7806, %v7805
  %v7858 = vpack.c.bf16 %v7808, %v7807
  %v7859 = vpack.c.bf16 %v7810, %v7809
  %v7860 = vpack.c.bf16 %v7812, %v7811
  %v7861 = vpack.c.bf16 %v7814, %v7813
  %v7862 = vpack.c.bf16 %v7816, %v7815
  %v7863 = vpack.c.bf16 %v7818, %v7817
  %v7864 = vpack.c.bf16 %v7820, %v7819
  %v7865 = vpack.c.bf16 %v7822, %v7821
  %v7866 = vpack.c.bf16 %v7824, %v7823
  %v7867 = vpack.c.bf16 %v7826, %v7825
  %v7868 = vpack.c.bf16 %v7828, %v7827
  %v7869 = vpack.c.bf16 %v7830, %v7829
  %v7870 = vpack.c.bf16 %v7832, %v7831
  %v7871 = vpack.c.bf16 %v7834, %v7833
  %v7872 = vpack.c.bf16 %v7836, %v7835
  %v7873 = vpack.c.bf16 %v7838, %v7837
  %v7874 = vpack.c.bf16 %v7840, %v7839
  %v7875 = vpack.c.bf16 %v7842, %v7841
  %v7876 = vpack.c.bf16 %v7844, %v7843
  %s7877 = scalar_lea.vmem %s3, 32
  %v7878 = vld [vmem:[%s7877] sm:$0xf]
  %v7879 = vld [vmem:[%s7877 + $0x4] sm:$0xf]
  %v7882 = vunpack.c.l.b16 %v7878
  %v7883 = vunpack.c.l.b16 %v7879
  %v7884 = vpack.c.b16 %v7883, %v7882
  %v7887 = vsel %vm4915, %v7845, 0
  %v7890 = vsel %vm4915, %v7846, 0
  %v7893 = vsel %vm4915, %v7847, 0
  %v7896 = vsel %vm4915, %v7848, 0
  %v7899 = vsel %vm4915, %v7849, 0
  %v7902 = vsel %vm4915, %v7850, 0
  %v7905 = vsel %vm4915, %v7851, 0
  %v7908 = vsel %vm4915, %v7852, 0
  %v7911 = vsel %vm4915, %v7853, 0
  %v7914 = vsel %vm4915, %v7854, 0
  %v7917 = vsel %vm4915, %v7855, 0
  %v7920 = vsel %vm4915, %v7856, 0
  %v7923 = vsel %vm4915, %v7857, 0
  %v7926 = vsel %vm4915, %v7858, 0
  %v7929 = vsel %vm4915, %v7859, 0
  %v7932 = vsel %vm4915, %v7860, 0
  %v7935 = vsel %vm4915, %v7861, 0
  %v7938 = vsel %vm4915, %v7862, 0
  %v7941 = vsel %vm4915, %v7863, 0
  %v7944 = vsel %vm4915, %v7864, 0
  %v7947 = vsel %vm4915, %v7865, 0
  %v7950 = vsel %vm4915, %v7866, 0
  %v7953 = vsel %vm4915, %v7867, 0
  %v7956 = vsel %vm4915, %v7868, 0
  %v7959 = vsel %vm4915, %v7869, 0
  %v7962 = vsel %vm4915, %v7870, 0
  %v7965 = vsel %vm4915, %v7871, 0
  %v7968 = vsel %vm4915, %v7872, 0
  %v7971 = vsel %vm4915, %v7873, 0
  %v7974 = vsel %vm4915, %v7874, 0
  %v7977 = vsel %vm4915, %v7875, 0
  %v7980 = vsel %vm4915, %v7876, 0
  %7982 = vmatprep.subr.bf16.mxu0 0
  %7983 = vmatpush1.bf16.msra.mxu0 %v7884
  %7984 = vmatprep.subr.bf16.mxu0 0
  %7985 = vmatpush1.bf16.msra.mxu0 0
  %7986 = vmatprep.subr.bf16.mxu0 0
  %7987 = vmatpush1.bf16.msra.mxu0 0
  %7988 = vmatprep.subr.bf16.mxu0 0
  %7989 = vmatpush1.bf16.msra.mxu0 0
  %7990 = vmatprep.subr.bf16.mxu0 0
  %7991 = vmatpush1.bf16.msra.mxu0 0
  %7992 = vmatprep.subr.bf16.mxu0 0
  %7993 = vmatpush1.bf16.msra.mxu0 0
  %7994 = vmatprep.subr.bf16.mxu0 0
  %7995 = vmatpush1.bf16.msra.mxu0 0
  %7996 = vmatprep.subr.bf16.mxu0 0
  %7997 = vmatpush1.bf16.msra.mxu0 0
  %7998 = vmatprep.subr.bf16.mxu0 0
  %7999 = vmatpush1.bf16.msra.mxu0 0
  %8000 = vmatprep.subr.bf16.mxu0 0
  %8001 = vmatpush1.bf16.msra.mxu0 0
  %8002 = vmatprep.subr.bf16.mxu0 0
  %8003 = vmatpush1.bf16.msra.mxu0 0
  %8004 = vmatprep.subr.bf16.mxu0 0
  %8005 = vmatpush1.bf16.msra.mxu0 0
  %8006 = vmatprep.subr.bf16.mxu0 0
  %8007 = vmatpush1.bf16.msra.mxu0 0
  %8008 = vmatprep.subr.bf16.mxu0 0
  %8009 = vmatpush1.bf16.msra.mxu0 0
  %8010 = vmatprep.subr.bf16.mxu0 0
  %8011 = vmatpush1.bf16.msra.mxu0 0
  %8012 = vmatprep.subr.bf16.mxu0 0
  %8013 = vmatpush1.bf16.msra.mxu0 0
  %8014 = vmatprep.mubr.bf16.mxu0 0
  %8015 = vmatmul.mubr.bf16.gmra.mrb[0].mxu0 %v7887
  %v8016 = vpop.f32.mrb[0].mxu0
  %v8017 = vadd.f32 0.0, %v8016
  %v8018 = vpop.f32.mrb[0].mxu0
  %v8019 = vpop.f32.mrb[0].mxu0
  %v8020 = vadd.f32 0.0, %v8019
  %v8021 = vpop.f32.mrb[0].mxu0
  %8022 = vmatprep.mubr.bf16.mxu0 0
  %8023 = vmatmul.mubr.bf16.gmra.mrb[0].mxu0 %v7890
  %v8024 = vpop.f32.mrb[0].mxu0
  %v8025 = vadd.f32 0.0, %v8024
  %v8026 = vpop.f32.mrb[0].mxu0
  %v8027 = vpop.f32.mrb[0].mxu0
  %v8028 = vadd.f32 0.0, %v8027
  %v8029 = vpop.f32.mrb[0].mxu0
  %8030 = vmatprep.mubr.bf16.mxu0 0
  %8031 = vmatmul.mubr.bf16.gmra.mrb[0].mxu0 %v7893
  %v8032 = vpop.f32.mrb[0].mxu0
  %v8033 = vadd.f32 0.0, %v8032
  %v8034 = vpop.f32.mrb[0].mxu0
  %v8035 = vpop.f32.mrb[0].mxu0
  %v8036 = vadd.f32 0.0, %v8035
  %v8037 = vpop.f32.mrb[0].mxu0
  %8038 = vmatprep.mubr.bf16.mxu0 0
  %8039 = vmatmul.mubr.bf16.gmra.mrb[0].mxu0 %v7896
  %v8040 = vpop.f32.mrb[0].mxu0
  %v8041 = vadd.f32 0.0, %v8040
  %v8042 = vpop.f32.mrb[0].mxu0
  %v8043 = vpop.f32.mrb[0].mxu0
  %v8044 = vadd.f32 0.0, %v8043
  %v8045 = vpop.f32.mrb[0].mxu0
  %8046 = vmatprep.mubr.bf16.mxu0 0
  %8047 = vmatmul.mubr.bf16.gmra.mrb[0].mxu0 %v7899
  %v8048 = vpop.f32.mrb[0].mxu0
  %v8049 = vadd.f32 0.0, %v8048
  %v8050 = vpop.f32.mrb[0].mxu0
  %v8051 = vpop.f32.mrb[0].mxu0
  %v8052 = vadd.f32 0.0, %v8051
  %v8053 = vpop.f32.mrb[0].mxu0
  %8054 = vmatprep.mubr.bf16.mxu0 0
  %8055 = vmatmul.mubr.bf16.gmra.mrb[0].mxu0 %v7902
  %v8056 = vpop.f32.mrb[0].mxu0
  %v8057 = vadd.f32 0.0, %v8056
  %v8058 = vpop.f32.mrb[0].mxu0
  %v8059 = vpop.f32.mrb[0].mxu0
  %v8060 = vadd.f32 0.0, %v8059
  %v8061 = vpop.f32.mrb[0].mxu0
  %8062 = vmatprep.mubr.bf16.mxu0 0
  %8063 = vmatmul.mubr.bf16.gmra.mrb[0].mxu0 %v7905
  %v8064 = vpop.f32.mrb[0].mxu0
  %v8065 = vadd.f32 0.0, %v8064
  %v8066 = vpop.f32.mrb[0].mxu0
  %v8067 = vpop.f32.mrb[0].mxu0
  %v8068 = vadd.f32 0.0, %v8067
  %v8069 = vpop.f32.mrb[0].mxu0
  %8070 = vmatprep.mubr.bf16.mxu0 0
  %8071 = vmatmul.mubr.bf16.gmra.mrb[0].mxu0 %v7908
  %v8072 = vpop.f32.mrb[0].mxu0
  %v8073 = vadd.f32 0.0, %v8072
  %v8074 = vpop.f32.mrb[0].mxu0
  %v8075 = vpop.f32.mrb[0].mxu0
  %v8076 = vadd.f32 0.0, %v8075
  %v8077 = vpop.f32.mrb[0].mxu0
  %8078 = vmatprep.mubr.bf16.mxu0 0
  %8079 = vmatmul.mubr.bf16.gmra.mrb[0].mxu0 %v7911
  %v8080 = vpop.f32.mrb[0].mxu0
  %v8081 = vadd.f32 0.0, %v8080
  %v8082 = vpop.f32.mrb[0].mxu0
  %v8083 = vpop.f32.mrb[0].mxu0
  %v8084 = vadd.f32 0.0, %v8083
  %v8085 = vpop.f32.mrb[0].mxu0
  %8086 = vmatprep.mubr.bf16.mxu0 0
  %8087 = vmatmul.mubr.bf16.gmra.mrb[0].mxu0 %v7914
  %v8088 = vpop.f32.mrb[0].mxu0
  %v8089 = vadd.f32 0.0, %v8088
  %v8090 = vpop.f32.mrb[0].mxu0
  %v8091 = vpop.f32.mrb[0].mxu0
  %v8092 = vadd.f32 0.0, %v8091
  %v8093 = vpop.f32.mrb[0].mxu0
  %8094 = vmatprep.mubr.bf16.mxu0 0
  %8095 = vmatmul.mubr.bf16.gmra.mrb[0].mxu0 %v7917
  %v8096 = vpop.f32.mrb[0].mxu0
  %v8097 = vadd.f32 0.0, %v8096
  %v8098 = vpop.f32.mrb[0].mxu0
  %v8099 = vpop.f32.mrb[0].mxu0
  %v8100 = vadd.f32 0.0, %v8099
  %v8101 = vpop.f32.mrb[0].mxu0
  %8102 = vmatprep.mubr.bf16.mxu0 0
  %8103 = vmatmul.mubr.bf16.gmra.mrb[0].mxu0 %v7920
  %v8104 = vpop.f32.mrb[0].mxu0
  %v8105 = vadd.f32 0.0, %v8104
  %v8106 = vpop.f32.mrb[0].mxu0
  %v8107 = vpop.f32.mrb[0].mxu0
  %v8108 = vadd.f32 0.0, %v8107
  %v8109 = vpop.f32.mrb[0].mxu0
  %8110 = vmatprep.mubr.bf16.mxu0 0
  %8111 = vmatmul.mubr.bf16.gmra.mrb[0].mxu0 %v7923
  %v8112 = vpop.f32.mrb[0].mxu0
  %v8113 = vadd.f32 0.0, %v8112
  %v8114 = vpop.f32.mrb[0].mxu0
  %v8115 = vpop.f32.mrb[0].mxu0
  %v8116 = vadd.f32 0.0, %v8115
  %v8117 = vpop.f32.mrb[0].mxu0
  %8118 = vmatprep.mubr.bf16.mxu0 0
  %8119 = vmatmul.mubr.bf16.gmra.mrb[0].mxu0 %v7926
  %v8120 = vpop.f32.mrb[0].mxu0
  %v8121 = vadd.f32 0.0, %v8120
  %v8122 = vpop.f32.mrb[0].mxu0
  %v8123 = vpop.f32.mrb[0].mxu0
  %v8124 = vadd.f32 0.0, %v8123
  %v8125 = vpop.f32.mrb[0].mxu0
  %8126 = vmatprep.mubr.bf16.mxu0 0
  %8127 = vmatmul.mubr.bf16.gmra.mrb[0].mxu0 %v7929
  %v8128 = vpop.f32.mrb[0].mxu0
  %v8129 = vadd.f32 0.0, %v8128
  %v8130 = vpop.f32.mrb[0].mxu0
  %v8131 = vpop.f32.mrb[0].mxu0
  %v8132 = vadd.f32 0.0, %v8131
  %v8133 = vpop.f32.mrb[0].mxu0
  %8134 = vmatprep.mubr.bf16.mxu0 0
  %8135 = vmatmul.mubr.bf16.gmra.mrb[0].mxu0 %v7932
  %v8136 = vpop.f32.mrb[0].mxu0
  %v8137 = vadd.f32 0.0, %v8136
  %v8138 = vpop.f32.mrb[0].mxu0
  %v8139 = vpop.f32.mrb[0].mxu0
  %v8140 = vadd.f32 0.0, %v8139
  %v8141 = vpop.f32.mrb[0].mxu0
  %8142 = vmatprep.mubr.bf16.mxu0 0
  %8143 = vmatmul.mubr.bf16.gmra.mrb[0].mxu0 %v7935
  %v8144 = vpop.f32.mrb[0].mxu0
  %v8145 = vadd.f32 0.0, %v8144
  %v8146 = vpop.f32.mrb[0].mxu0
  %v8147 = vpop.f32.mrb[0].mxu0
  %v8148 = vadd.f32 0.0, %v8147
  %v8149 = vpop.f32.mrb[0].mxu0
  %8150 = vmatprep.mubr.bf16.mxu0 0
  %8151 = vmatmul.mubr.bf16.gmra.mrb[0].mxu0 %v7938
  %v8152 = vpop.f32.mrb[0].mxu0
  %v8153 = vadd.f32 0.0, %v8152
  %v8154 = vpop.f32.mrb[0].mxu0
  %v8155 = vpop.f32.mrb[0].mxu0
  %v8156 = vadd.f32 0.0, %v8155
  %v8157 = vpop.f32.mrb[0].mxu0
  %8158 = vmatprep.mubr.bf16.mxu0 0
  %8159 = vmatmul.mubr.bf16.gmra.mrb[0].mxu0 %v7941
  %v8160 = vpop.f32.mrb[0].mxu0
  %v8161 = vadd.f32 0.0, %v8160
  %v8162 = vpop.f32.mrb[0].mxu0
  %v8163 = vpop.f32.mrb[0].mxu0
  %v8164 = vadd.f32 0.0, %v8163
  %v8165 = vpop.f32.mrb[0].mxu0
  %8166 = vmatprep.mubr.bf16.mxu0 0
  %8167 = vmatmul.mubr.bf16.gmra.mrb[0].mxu0 %v7944
  %v8168 = vpop.f32.mrb[0].mxu0
  %v8169 = vadd.f32 0.0, %v8168
  %v8170 = vpop.f32.mrb[0].mxu0
  %v8171 = vpop.f32.mrb[0].mxu0
  %v8172 = vadd.f32 0.0, %v8171
  %v8173 = vpop.f32.mrb[0].mxu0
  %8174 = vmatprep.mubr.bf16.mxu0 0
  %8175 = vmatmul.mubr.bf16.gmra.mrb[0].mxu0 %v7947
  %v8176 = vpop.f32.mrb[0].mxu0
  %v8177 = vadd.f32 0.0, %v8176
  %v8178 = vpop.f32.mrb[0].mxu0
  %v8179 = vpop.f32.mrb[0].mxu0
  %v8180 = vadd.f32 0.0, %v8179
  %v8181 = vpop.f32.mrb[0].mxu0
  %8182 = vmatprep.mubr.bf16.mxu0 0
  %8183 = vmatmul.mubr.bf16.gmra.mrb[0].mxu0 %v7950
  %v8184 = vpop.f32.mrb[0].mxu0
  %v8185 = vadd.f32 0.0, %v8184
  %v8186 = vpop.f32.mrb[0].mxu0
  %v8187 = vpop.f32.mrb[0].mxu0
  %v8188 = vadd.f32 0.0, %v8187
  %v8189 = vpop.f32.mrb[0].mxu0
  %8190 = vmatprep.mubr.bf16.mxu0 0
  %8191 = vmatmul.mubr.bf16.gmra.mrb[0].mxu0 %v7953
  %v8192 = vpop.f32.mrb[0].mxu0
  %v8193 = vadd.f32 0.0, %v8192
  %v8194 = vpop.f32.mrb[0].mxu0
  %v8195 = vpop.f32.mrb[0].mxu0
  %v8196 = vadd.f32 0.0, %v8195
  %v8197 = vpop.f32.mrb[0].mxu0
  %8198 = vmatprep.mubr.bf16.mxu0 0
  %8199 = vmatmul.mubr.bf16.gmra.mrb[0].mxu0 %v7956
  %v8200 = vpop.f32.mrb[0].mxu0
  %v8201 = vadd.f32 0.0, %v8200
  %v8202 = vpop.f32.mrb[0].mxu0
  %v8203 = vpop.f32.mrb[0].mxu0
  %v8204 = vadd.f32 0.0, %v8203
  %v8205 = vpop.f32.mrb[0].mxu0
  %8206 = vmatprep.mubr.bf16.mxu0 0
  %8207 = vmatmul.mubr.bf16.gmra.mrb[0].mxu0 %v7959
  %v8208 = vpop.f32.mrb[0].mxu0
  %v8209 = vadd.f32 0.0, %v8208
  %v8210 = vpop.f32.mrb[0].mxu0
  %v8211 = vpop.f32.mrb[0].mxu0
  %v8212 = vadd.f32 0.0, %v8211
  %v8213 = vpop.f32.mrb[0].mxu0
  %8214 = vmatprep.mubr.bf16.mxu0 0
  %8215 = vmatmul.mubr.bf16.gmra.mrb[0].mxu0 %v7962
  %v8216 = vpop.f32.mrb[0].mxu0
  %v8217 = vadd.f32 0.0, %v8216
  %v8218 = vpop.f32.mrb[0].mxu0
  %v8219 = vpop.f32.mrb[0].mxu0
  %v8220 = vadd.f32 0.0, %v8219
  %v8221 = vpop.f32.mrb[0].mxu0
  %8222 = vmatprep.mubr.bf16.mxu0 0
  %8223 = vmatmul.mubr.bf16.gmra.mrb[0].mxu0 %v7965
  %v8224 = vpop.f32.mrb[0].mxu0
  %v8225 = vadd.f32 0.0, %v8224
  %v8226 = vpop.f32.mrb[0].mxu0
  %v8227 = vpop.f32.mrb[0].mxu0
  %v8228 = vadd.f32 0.0, %v8227
  %v8229 = vpop.f32.mrb[0].mxu0
  %8230 = vmatprep.mubr.bf16.mxu0 0
  %8231 = vmatmul.mubr.bf16.gmra.mrb[0].mxu0 %v7968
  %v8232 = vpop.f32.mrb[0].mxu0
  %v8233 = vadd.f32 0.0, %v8232
  %v8234 = vpop.f32.mrb[0].mxu0
  %v8235 = vpop.f32.mrb[0].mxu0
  %v8236 = vadd.f32 0.0, %v8235
  %v8237 = vpop.f32.mrb[0].mxu0
  %8238 = vmatprep.mubr.bf16.mxu0 0
  %8239 = vmatmul.mubr.bf16.gmra.mrb[0].mxu0 %v7971
  %v8240 = vpop.f32.mrb[0].mxu0
  %v8241 = vadd.f32 0.0, %v8240
  %v8242 = vpop.f32.mrb[0].mxu0
  %v8243 = vpop.f32.mrb[0].mxu0
  %v8244 = vadd.f32 0.0, %v8243
  %v8245 = vpop.f32.mrb[0].mxu0
  %8246 = vmatprep.mubr.bf16.mxu0 0
  %8247 = vmatmul.mubr.bf16.gmra.mrb[0].mxu0 %v7974
  %v8248 = vpop.f32.mrb[0].mxu0
  %v8249 = vadd.f32 0.0, %v8248
  %v8250 = vpop.f32.mrb[0].mxu0
  %v8251 = vpop.f32.mrb[0].mxu0
  %v8252 = vadd.f32 0.0, %v8251
  %v8253 = vpop.f32.mrb[0].mxu0
  %8254 = vmatprep.mubr.bf16.mxu0 0
  %8255 = vmatmul.mubr.bf16.gmra.mrb[0].mxu0 %v7977
  %v8256 = vpop.f32.mrb[0].mxu0
  %v8257 = vadd.f32 0.0, %v8256
  %v8258 = vpop.f32.mrb[0].mxu0
  %v8259 = vpop.f32.mrb[0].mxu0
  %v8260 = vadd.f32 0.0, %v8259
  %v8261 = vpop.f32.mrb[0].mxu0
  %8262 = vmatprep.mubr.bf16.mxu0 0
  %8263 = vmatmul.mubr.bf16.gmra.mrb[0].mxu0 %v7980
  %v8264 = vpop.f32.mrb[0].mxu0
  %v8265 = vadd.f32 0.0, %v8264
  %v8266 = vpop.f32.mrb[0].mxu0
  %v8267 = vpop.f32.mrb[0].mxu0
  %v8268 = vadd.f32 0.0, %v8267
  %v8269 = vpop.f32.mrb[0].mxu0
  %8270 = vdwg.mxu0
  %v8271 = vadd.f32 %v7717, %v8017
  %v8272 = vadd.f32 %v7718, %v8020
  %v8273 = vadd.f32 %v7719, %v8025
  %v8274 = vadd.f32 %v7720, %v8028
  %v8275 = vadd.f32 %v7721, %v8033
  %v8276 = vadd.f32 %v7722, %v8036
  %v8277 = vadd.f32 %v7723, %v8041
  %v8278 = vadd.f32 %v7724, %v8044
  %v8279 = vadd.f32 %v7725, %v8049
  %v8280 = vadd.f32 %v7726, %v8052
  %v8281 = vadd.f32 %v7727, %v8057
  %v8282 = vadd.f32 %v7728, %v8060
  %v8283 = vadd.f32 %v7729, %v8065
  %v8284 = vadd.f32 %v7730, %v8068
  %v8285 = vadd.f32 %v7731, %v8073
  %v8286 = vadd.f32 %v7732, %v8076
  %v8287 = vadd.f32 %v7733, %v8081
  %v8288 = vadd.f32 %v7734, %v8084
  %v8289 = vadd.f32 %v7735, %v8089
  %v8290 = vadd.f32 %v7736, %v8092
  %v8291 = vadd.f32 %v7737, %v8097
  %v8292 = vadd.f32 %v7738, %v8100
  %v8293 = vadd.f32 %v7739, %v8105
  %v8294 = vadd.f32 %v7740, %v8108
  %v8295 = vadd.f32 %v7741, %v8113
  %v8296 = vadd.f32 %v7742, %v8116
  %v8297 = vadd.f32 %v7743, %v8121
  %v8298 = vadd.f32 %v7744, %v8124
  %v8299 = vadd.f32 %v7745, %v8129
  %v8300 = vadd.f32 %v7746, %v8132
  %v8301 = vadd.f32 %v7747, %v8137
  %v8302 = vadd.f32 %v7748, %v8140
  %v8303 = vadd.f32 %v7749, %v8145
  %v8304 = vadd.f32 %v7750, %v8148
  %v8305 = vadd.f32 %v7751, %v8153
  %v8306 = vadd.f32 %v7752, %v8156
  %v8307 = vadd.f32 %v7753, %v8161
  %v8308 = vadd.f32 %v7754, %v8164
  %v8309 = vadd.f32 %v7755, %v8169
  %v8310 = vadd.f32 %v7756, %v8172
  %v8311 = vadd.f32 %v7757, %v8177
  %v8312 = vadd.f32 %v7758, %v8180
  %v8313 = vadd.f32 %v7759, %v8185
  %v8314 = vadd.f32 %v7760, %v8188
  %v8315 = vadd.f32 %v7761, %v8193
  %v8316 = vadd.f32 %v7762, %v8196
  %v8317 = vadd.f32 %v7763, %v8201
  %v8318 = vadd.f32 %v7764, %v8204
  %v8319 = vadd.f32 %v7765, %v8209
  %v8320 = vadd.f32 %v7766, %v8212
  %v8321 = vadd.f32 %v7767, %v8217
  %v8322 = vadd.f32 %v7768, %v8220
  %v8323 = vadd.f32 %v7769, %v8225
  %v8324 = vadd.f32 %v7770, %v8228
  %v8325 = vadd.f32 %v7771, %v8233
  %v8326 = vadd.f32 %v7772, %v8236
  %v8327 = vadd.f32 %v7773, %v8241
  %v8328 = vadd.f32 %v7774, %v8244
  %v8329 = vadd.f32 %v7775, %v8249
  %v8330 = vadd.f32 %v7776, %v8252
  %v8331 = vadd.f32 %v7777, %v8257
  %v8332 = vadd.f32 %v7778, %v8260
  %v8333 = vadd.f32 %v7779, %v8265
  %v8334 = vadd.f32 %v7780, %v8268
  %v8335 = vld [vmem:[%s5629 + $0x2] sm:$0xff]
  %v8336 = vld [vmem:[%s5629 + $0xa] sm:$0xff]
  %v8337 = vld [vmem:[%s5629 + $0x1a] sm:$0xff]
  %v8338 = vld [vmem:[%s5629 + $0x22] sm:$0xff]
  %v8339 = vld [vmem:[%s5629 + $0x32] sm:$0xff]
  %v8340 = vld [vmem:[%s5629 + $0x3a] sm:$0xff]
  %v8341 = vld [vmem:[%s5629 + $0x4a] sm:$0xff]
  %v8342 = vld [vmem:[%s5629 + $0x52] sm:$0xff]
  %v8343 = vld [vmem:[%s5629 + $0x62] sm:$0xff]
  %v8344 = vld [vmem:[%s5629 + $0x6a] sm:$0xff]
  %v8345 = vld [vmem:[%s5629 + $0x7a] sm:$0xff]
  %v8346 = vld [vmem:[%s5629 + $0x82] sm:$0xff]
  %v8347 = vld [vmem:[%s5629 + $0x92] sm:$0xff]
  %v8348 = vld [vmem:[%s5629 + $0x9a] sm:$0xff]
  %v8349 = vld [vmem:[%s5629 + $0xaa] sm:$0xff]
  %v8350 = vld [vmem:[%s5629 + $0xb2] sm:$0xff]
  %v8351 = vld [vmem:[%s5629 + $0xc2] sm:$0xff]
  %v8352 = vld [vmem:[%s5629 + $0xca] sm:$0xff]
  %v8353 = vld [vmem:[%s5629 + $0xda] sm:$0xff]
  %v8354 = vld [vmem:[%s5629 + $0xe2] sm:$0xff]
  %v8355 = vld [vmem:[%s5629 + $0xf2] sm:$0xff]
  %v8356 = vld [vmem:[%s5629 + $0xfa] sm:$0xff]
  %v8357 = vld [vmem:[%s5629 + $0x10a] sm:$0xff]
  %v8358 = vld [vmem:[%s5629 + $0x112] sm:$0xff]
  %v8359 = vld [vmem:[%s5629 + $0x122] sm:$0xff]
  %v8360 = vld [vmem:[%s5629 + $0x12a] sm:$0xff]
  %v8361 = vld [vmem:[%s5629 + $0x13a] sm:$0xff]
  %v8362 = vld [vmem:[%s5629 + $0x142] sm:$0xff]
  %v8363 = vld [vmem:[%s5629 + $0x152] sm:$0xff]
  %v8364 = vld [vmem:[%s5629 + $0x15a] sm:$0xff]
  %v8365 = vld [vmem:[%s5629 + $0x16a] sm:$0xff]
  %v8366 = vld [vmem:[%s5629 + $0x172] sm:$0xff]
  %v8367 = vld [vmem:[%s5629 + $0x1b2] sm:$0xff]
  %v8368 = vld [vmem:[%s5629 + $0x1ba] sm:$0xff]
  %v8369 = vld [vmem:[%s5629 + $0x1ca] sm:$0xff]
  %v8370 = vld [vmem:[%s5629 + $0x1d2] sm:$0xff]
  %v8371 = vld [vmem:[%s5629 + $0x1e2] sm:$0xff]
  %v8372 = vld [vmem:[%s5629 + $0x1ea] sm:$0xff]
  %v8373 = vld [vmem:[%s5629 + $0x1fa] sm:$0xff]
  %v8374 = vld [vmem:[%s5629 + $0x202] sm:$0xff]
  %v8375 = vld [vmem:[%s5629 + $0x212] sm:$0xff]
  %v8376 = vld [vmem:[%s5629 + $0x21a] sm:$0xff]
  %v8377 = vld [vmem:[%s5629 + $0x22a] sm:$0xff]
  %v8378 = vld [vmem:[%s5629 + $0x232] sm:$0xff]
  %v8379 = vld [vmem:[%s5629 + $0x242] sm:$0xff]
  %v8380 = vld [vmem:[%s5629 + $0x24a] sm:$0xff]
  %v8381 = vld [vmem:[%s5629 + $0x25a] sm:$0xff]
  %v8382 = vld [vmem:[%s5629 + $0x262] sm:$0xff]
  %v8383 = vld [vmem:[%s5629 + $0x272] sm:$0xff]
  %v8384 = vld [vmem:[%s5629 + $0x27a] sm:$0xff]
  %v8385 = vld [vmem:[%s5629 + $0x28a] sm:$0xff]
  %v8386 = vld [vmem:[%s5629 + $0x292] sm:$0xff]
  %v8387 = vld [vmem:[%s5629 + $0x2a2] sm:$0xff]
  %v8388 = vld [vmem:[%s5629 + $0x2aa] sm:$0xff]
  %v8389 = vld [vmem:[%s5629 + $0x2ba] sm:$0xff]
  %v8390 = vld [vmem:[%s5629 + $0x2c2] sm:$0xff]
  %v8391 = vld [vmem:[%s5629 + $0x2d2] sm:$0xff]
  %v8392 = vld [vmem:[%s5629 + $0x2da] sm:$0xff]
  %v8393 = vld [vmem:[%s5629 + $0x2ea] sm:$0xff]
  %v8394 = vld [vmem:[%s5629 + $0x2f2] sm:$0xff]
  %v8395 = vld [vmem:[%s5629 + $0x302] sm:$0xff]
  %v8396 = vld [vmem:[%s5629 + $0x30a] sm:$0xff]
  %v8397 = vld [vmem:[%s5629 + $0x31a] sm:$0xff]
  %v8398 = vld [vmem:[%s5629 + $0x322] sm:$0xff]
  %v8399 = vpack.c.bf16 %v8336, %v8335
  %v8400 = vpack.c.bf16 %v8338, %v8337
  %v8401 = vpack.c.bf16 %v8340, %v8339
  %v8402 = vpack.c.bf16 %v8342, %v8341
  %v8403 = vpack.c.bf16 %v8344, %v8343
  %v8404 = vpack.c.bf16 %v8346, %v8345
  %v8405 = vpack.c.bf16 %v8348, %v8347
  %v8406 = vpack.c.bf16 %v8350, %v8349
  %v8407 = vpack.c.bf16 %v8352, %v8351
  %v8408 = vpack.c.bf16 %v8354, %v8353
  %v8409 = vpack.c.bf16 %v8356, %v8355
  %v8410 = vpack.c.bf16 %v8358, %v8357
  %v8411 = vpack.c.bf16 %v8360, %v8359
  %v8412 = vpack.c.bf16 %v8362, %v8361
  %v8413 = vpack.c.bf16 %v8364, %v8363
  %v8414 = vpack.c.bf16 %v8366, %v8365
  %v8415 = vpack.c.bf16 %v8368, %v8367
  %v8416 = vpack.c.bf16 %v8370, %v8369
  %v8417 = vpack.c.bf16 %v8372, %v8371
  %v8418 = vpack.c.bf16 %v8374, %v8373
  %v8419 = vpack.c.bf16 %v8376, %v8375
  %v8420 = vpack.c.bf16 %v8378, %v8377
  %v8421 = vpack.c.bf16 %v8380, %v8379
  %v8422 = vpack.c.bf16 %v8382, %v8381
  %v8423 = vpack.c.bf16 %v8384, %v8383
  %v8424 = vpack.c.bf16 %v8386, %v8385
  %v8425 = vpack.c.bf16 %v8388, %v8387
  %v8426 = vpack.c.bf16 %v8390, %v8389
  %v8427 = vpack.c.bf16 %v8392, %v8391
  %v8428 = vpack.c.bf16 %v8394, %v8393
  %v8429 = vpack.c.bf16 %v8396, %v8395
  %v8430 = vpack.c.bf16 %v8398, %v8397
  %s8431 = scalar_lea.vmem %s3, 40
  %v8432 = vld [vmem:[%s8431] sm:$0xf]
  %v8433 = vld [vmem:[%s8431 + $0x4] sm:$0xf]
  %v8436 = vunpack.c.l.b16 %v8432
  %v8437 = vunpack.c.l.b16 %v8433
  %v8438 = vpack.c.b16 %v8437, %v8436
  %v8441 = vsel %vm4915, %v8399, 0
  %v8444 = vsel %vm4915, %v8400, 0
  %v8447 = vsel %vm4915, %v8401, 0
  %v8450 = vsel %vm4915, %v8402, 0
  %v8453 = vsel %vm4915, %v8403, 0
  %v8456 = vsel %vm4915, %v8404, 0
  %v8459 = vsel %vm4915, %v8405, 0
  %v8462 = vsel %vm4915, %v8406, 0
  %v8465 = vsel %vm4915, %v8407, 0
  %v8468 = vsel %vm4915, %v8408, 0
  %v8471 = vsel %vm4915, %v8409, 0
  %v8474 = vsel %vm4915, %v8410, 0
  %v8477 = vsel %vm4915, %v8411, 0
  %v8480 = vsel %vm4915, %v8412, 0
  %v8483 = vsel %vm4915, %v8413, 0
  %v8486 = vsel %vm4915, %v8414, 0
  %v8489 = vsel %vm4915, %v8415, 0
  %v8492 = vsel %vm4915, %v8416, 0
  %v8495 = vsel %vm4915, %v8417, 0
  %v8498 = vsel %vm4915, %v8418, 0
  %v8501 = vsel %vm4915, %v8419, 0
  %v8504 = vsel %vm4915, %v8420, 0
  %v8507 = vsel %vm4915, %v8421, 0
  %v8510 = vsel %vm4915, %v8422, 0
  %v8513 = vsel %vm4915, %v8423, 0
  %v8516 = vsel %vm4915, %v8424, 0
  %v8519 = vsel %vm4915, %v8425, 0
  %v8522 = vsel %vm4915, %v8426, 0
  %v8525 = vsel %vm4915, %v8427, 0
  %v8528 = vsel %vm4915, %v8428, 0
  %v8531 = vsel %vm4915, %v8429, 0
  %v8534 = vsel %vm4915, %v8430, 0
  %8536 = vmatprep.subr.bf16.mxu0 0
  %8537 = vmatpush1.bf16.msra.mxu0 %v8438
  %8538 = vmatprep.subr.bf16.mxu0 0
  %8539 = vmatpush1.bf16.msra.mxu0 0
  %8540 = vmatprep.subr.bf16.mxu0 0
  %8541 = vmatpush1.bf16.msra.mxu0 0
  %8542 = vmatprep.subr.bf16.mxu0 0
  %8543 = vmatpush1.bf16.msra.mxu0 0
  %8544 = vmatprep.subr.bf16.mxu0 0
  %8545 = vmatpush1.bf16.msra.mxu0 0
  %8546 = vmatprep.subr.bf16.mxu0 0
  %8547 = vmatpush1.bf16.msra.mxu0 0
  %8548 = vmatprep.subr.bf16.mxu0 0
  %8549 = vmatpush1.bf16.msra.mxu0 0
  %8550 = vmatprep.subr.bf16.mxu0 0
  %8551 = vmatpush1.bf16.msra.mxu0 0
  %8552 = vmatprep.subr.bf16.mxu0 0
  %8553 = vmatpush1.bf16.msra.mxu0 0
  %8554 = vmatprep.subr.bf16.mxu0 0
  %8555 = vmatpush1.bf16.msra.mxu0 0
  %8556 = vmatprep.subr.bf16.mxu0 0
  %8557 = vmatpush1.bf16.msra.mxu0 0
  %8558 = vmatprep.subr.bf16.mxu0 0
  %8559 = vmatpush1.bf16.msra.mxu0 0
  %8560 = vmatprep.subr.bf16.mxu0 0
  %8561 = vmatpush1.bf16.msra.mxu0 0
  %8562 = vmatprep.subr.bf16.mxu0 0
  %8563 = vmatpush1.bf16.msra.mxu0 0
  %8564 = vmatprep.subr.bf16.mxu0 0
  %8565 = vmatpush1.bf16.msra.mxu0 0
  %8566 = vmatprep.subr.bf16.mxu0 0
  %8567 = vmatpush1.bf16.msra.mxu0 0
  %8568 = vmatprep.mubr.bf16.mxu0 0
  %8569 = vmatmul.mubr.bf16.gmra.mrb[0].mxu0 %v8441
  %v8570 = vpop.f32.mrb[0].mxu0
  %v8571 = vadd.f32 0.0, %v8570
  %v8572 = vpop.f32.mrb[0].mxu0
  %v8573 = vpop.f32.mrb[0].mxu0
  %v8574 = vadd.f32 0.0, %v8573
  %v8575 = vpop.f32.mrb[0].mxu0
  %8576 = vmatprep.mubr.bf16.mxu0 0
  %8577 = vmatmul.mubr.bf16.gmra.mrb[0].mxu0 %v8444
  %v8578 = vpop.f32.mrb[0].mxu0
  %v8579 = vadd.f32 0.0, %v8578
  %v8580 = vpop.f32.mrb[0].mxu0
  %v8581 = vpop.f32.mrb[0].mxu0
  %v8582 = vadd.f32 0.0, %v8581
  %v8583 = vpop.f32.mrb[0].mxu0
  %8584 = vmatprep.mubr.bf16.mxu0 0
  %8585 = vmatmul.mubr.bf16.gmra.mrb[0].mxu0 %v8447
  %v8586 = vpop.f32.mrb[0].mxu0
  %v8587 = vadd.f32 0.0, %v8586
  %v8588 = vpop.f32.mrb[0].mxu0
  %v8589 = vpop.f32.mrb[0].mxu0
  %v8590 = vadd.f32 0.0, %v8589
  %v8591 = vpop.f32.mrb[0].mxu0
  %8592 = vmatprep.mubr.bf16.mxu0 0
  %8593 = vmatmul.mubr.bf16.gmra.mrb[0].mxu0 %v8450
  %v8594 = vpop.f32.mrb[0].mxu0
  %v8595 = vadd.f32 0.0, %v8594
  %v8596 = vpop.f32.mrb[0].mxu0
  %v8597 = vpop.f32.mrb[0].mxu0
  %v8598 = vadd.f32 0.0, %v8597
  %v8599 = vpop.f32.mrb[0].mxu0
  %8600 = vmatprep.mubr.bf16.mxu0 0
  %8601 = vmatmul.mubr.bf16.gmra.mrb[0].mxu0 %v8453
  %v8602 = vpop.f32.mrb[0].mxu0
  %v8603 = vadd.f32 0.0, %v8602
  %v8604 = vpop.f32.mrb[0].mxu0
  %v8605 = vpop.f32.mrb[0].mxu0
  %v8606 = vadd.f32 0.0, %v8605
  %v8607 = vpop.f32.mrb[0].mxu0
  %8608 = vmatprep.mubr.bf16.mxu0 0
  %8609 = vmatmul.mubr.bf16.gmra.mrb[0].mxu0 %v8456
  %v8610 = vpop.f32.mrb[0].mxu0
  %v8611 = vadd.f32 0.0, %v8610
  %v8612 = vpop.f32.mrb[0].mxu0
  %v8613 = vpop.f32.mrb[0].mxu0
  %v8614 = vadd.f32 0.0, %v8613
  %v8615 = vpop.f32.mrb[0].mxu0
  %8616 = vmatprep.mubr.bf16.mxu0 0
  %8617 = vmatmul.mubr.bf16.gmra.mrb[0].mxu0 %v8459
  %v8618 = vpop.f32.mrb[0].mxu0
  %v8619 = vadd.f32 0.0, %v8618
  %v8620 = vpop.f32.mrb[0].mxu0
  %v8621 = vpop.f32.mrb[0].mxu0
  %v8622 = vadd.f32 0.0, %v8621
  %v8623 = vpop.f32.mrb[0].mxu0
  %8624 = vmatprep.mubr.bf16.mxu0 0
  %8625 = vmatmul.mubr.bf16.gmra.mrb[0].mxu0 %v8462
  %v8626 = vpop.f32.mrb[0].mxu0
  %v8627 = vadd.f32 0.0, %v8626
  %v8628 = vpop.f32.mrb[0].mxu0
  %v8629 = vpop.f32.mrb[0].mxu0
  %v8630 = vadd.f32 0.0, %v8629
  %v8631 = vpop.f32.mrb[0].mxu0
  %8632 = vmatprep.mubr.bf16.mxu0 0
  %8633 = vmatmul.mubr.bf16.gmra.mrb[0].mxu0 %v8465
  %v8634 = vpop.f32.mrb[0].mxu0
  %v8635 = vadd.f32 0.0, %v8634
  %v8636 = vpop.f32.mrb[0].mxu0
  %v8637 = vpop.f32.mrb[0].mxu0
  %v8638 = vadd.f32 0.0, %v8637
  %v8639 = vpop.f32.mrb[0].mxu0
  %8640 = vmatprep.mubr.bf16.mxu0 0
  %8641 = vmatmul.mubr.bf16.gmra.mrb[0].mxu0 %v8468
  %v8642 = vpop.f32.mrb[0].mxu0
  %v8643 = vadd.f32 0.0, %v8642
  %v8644 = vpop.f32.mrb[0].mxu0
  %v8645 = vpop.f32.mrb[0].mxu0
  %v8646 = vadd.f32 0.0, %v8645
  %v8647 = vpop.f32.mrb[0].mxu0
  %8648 = vmatprep.mubr.bf16.mxu0 0
  %8649 = vmatmul.mubr.bf16.gmra.mrb[0].mxu0 %v8471
  %v8650 = vpop.f32.mrb[0].mxu0
  %v8651 = vadd.f32 0.0, %v8650
  %v8652 = vpop.f32.mrb[0].mxu0
  %v8653 = vpop.f32.mrb[0].mxu0
  %v8654 = vadd.f32 0.0, %v8653
  %v8655 = vpop.f32.mrb[0].mxu0
  %8656 = vmatprep.mubr.bf16.mxu0 0
  %8657 = vmatmul.mubr.bf16.gmra.mrb[0].mxu0 %v8474
  %v8658 = vpop.f32.mrb[0].mxu0
  %v8659 = vadd.f32 0.0, %v8658
  %v8660 = vpop.f32.mrb[0].mxu0
  %v8661 = vpop.f32.mrb[0].mxu0
  %v8662 = vadd.f32 0.0, %v8661
  %v8663 = vpop.f32.mrb[0].mxu0
  %8664 = vmatprep.mubr.bf16.mxu0 0
  %8665 = vmatmul.mubr.bf16.gmra.mrb[0].mxu0 %v8477
  %v8666 = vpop.f32.mrb[0].mxu0
  %v8667 = vadd.f32 0.0, %v8666
  %v8668 = vpop.f32.mrb[0].mxu0
  %v8669 = vpop.f32.mrb[0].mxu0
  %v8670 = vadd.f32 0.0, %v8669
  %v8671 = vpop.f32.mrb[0].mxu0
  %8672 = vmatprep.mubr.bf16.mxu0 0
  %8673 = vmatmul.mubr.bf16.gmra.mrb[0].mxu0 %v8480
  %v8674 = vpop.f32.mrb[0].mxu0
  %v8675 = vadd.f32 0.0, %v8674
  %v8676 = vpop.f32.mrb[0].mxu0
  %v8677 = vpop.f32.mrb[0].mxu0
  %v8678 = vadd.f32 0.0, %v8677
  %v8679 = vpop.f32.mrb[0].mxu0
  %8680 = vmatprep.mubr.bf16.mxu0 0
  %8681 = vmatmul.mubr.bf16.gmra.mrb[0].mxu0 %v8483
  %v8682 = vpop.f32.mrb[0].mxu0
  %v8683 = vadd.f32 0.0, %v8682
  %v8684 = vpop.f32.mrb[0].mxu0
  %v8685 = vpop.f32.mrb[0].mxu0
  %v8686 = vadd.f32 0.0, %v8685
  %v8687 = vpop.f32.mrb[0].mxu0
  %8688 = vmatprep.mubr.bf16.mxu0 0
  %8689 = vmatmul.mubr.bf16.gmra.mrb[0].mxu0 %v8486
  %v8690 = vpop.f32.mrb[0].mxu0
  %v8691 = vadd.f32 0.0, %v8690
  %v8692 = vpop.f32.mrb[0].mxu0
  %v8693 = vpop.f32.mrb[0].mxu0
  %v8694 = vadd.f32 0.0, %v8693
  %v8695 = vpop.f32.mrb[0].mxu0
  %8696 = vmatprep.mubr.bf16.mxu0 0
  %8697 = vmatmul.mubr.bf16.gmra.mrb[0].mxu0 %v8489
  %v8698 = vpop.f32.mrb[0].mxu0
  %v8699 = vadd.f32 0.0, %v8698
  %v8700 = vpop.f32.mrb[0].mxu0
  %v8701 = vpop.f32.mrb[0].mxu0
  %v8702 = vadd.f32 0.0, %v8701
  %v8703 = vpop.f32.mrb[0].mxu0
  %8704 = vmatprep.mubr.bf16.mxu0 0
  %8705 = vmatmul.mubr.bf16.gmra.mrb[0].mxu0 %v8492
  %v8706 = vpop.f32.mrb[0].mxu0
  %v8707 = vadd.f32 0.0, %v8706
  %v8708 = vpop.f32.mrb[0].mxu0
  %v8709 = vpop.f32.mrb[0].mxu0
  %v8710 = vadd.f32 0.0, %v8709
  %v8711 = vpop.f32.mrb[0].mxu0
  %8712 = vmatprep.mubr.bf16.mxu0 0
  %8713 = vmatmul.mubr.bf16.gmra.mrb[0].mxu0 %v8495
  %v8714 = vpop.f32.mrb[0].mxu0
  %v8715 = vadd.f32 0.0, %v8714
  %v8716 = vpop.f32.mrb[0].mxu0
  %v8717 = vpop.f32.mrb[0].mxu0
  %v8718 = vadd.f32 0.0, %v8717
  %v8719 = vpop.f32.mrb[0].mxu0
  %8720 = vmatprep.mubr.bf16.mxu0 0
  %8721 = vmatmul.mubr.bf16.gmra.mrb[0].mxu0 %v8498
  %v8722 = vpop.f32.mrb[0].mxu0
  %v8723 = vadd.f32 0.0, %v8722
  %v8724 = vpop.f32.mrb[0].mxu0
  %v8725 = vpop.f32.mrb[0].mxu0
  %v8726 = vadd.f32 0.0, %v8725
  %v8727 = vpop.f32.mrb[0].mxu0
  %8728 = vmatprep.mubr.bf16.mxu0 0
  %8729 = vmatmul.mubr.bf16.gmra.mrb[0].mxu0 %v8501
  %v8730 = vpop.f32.mrb[0].mxu0
  %v8731 = vadd.f32 0.0, %v8730
  %v8732 = vpop.f32.mrb[0].mxu0
  %v8733 = vpop.f32.mrb[0].mxu0
  %v8734 = vadd.f32 0.0, %v8733
  %v8735 = vpop.f32.mrb[0].mxu0
  %8736 = vmatprep.mubr.bf16.mxu0 0
  %8737 = vmatmul.mubr.bf16.gmra.mrb[0].mxu0 %v8504
  %v8738 = vpop.f32.mrb[0].mxu0
  %v8739 = vadd.f32 0.0, %v8738
  %v8740 = vpop.f32.mrb[0].mxu0
  %v8741 = vpop.f32.mrb[0].mxu0
  %v8742 = vadd.f32 0.0, %v8741
  %v8743 = vpop.f32.mrb[0].mxu0
  %8744 = vmatprep.mubr.bf16.mxu0 0
  %8745 = vmatmul.mubr.bf16.gmra.mrb[0].mxu0 %v8507
  %v8746 = vpop.f32.mrb[0].mxu0
  %v8747 = vadd.f32 0.0, %v8746
  %v8748 = vpop.f32.mrb[0].mxu0
  %v8749 = vpop.f32.mrb[0].mxu0
  %v8750 = vadd.f32 0.0, %v8749
  %v8751 = vpop.f32.mrb[0].mxu0
  %8752 = vmatprep.mubr.bf16.mxu0 0
  %8753 = vmatmul.mubr.bf16.gmra.mrb[0].mxu0 %v8510
  %v8754 = vpop.f32.mrb[0].mxu0
  %v8755 = vadd.f32 0.0, %v8754
  %v8756 = vpop.f32.mrb[0].mxu0
  %v8757 = vpop.f32.mrb[0].mxu0
  %v8758 = vadd.f32 0.0, %v8757
  %v8759 = vpop.f32.mrb[0].mxu0
  %8760 = vmatprep.mubr.bf16.mxu0 0
  %8761 = vmatmul.mubr.bf16.gmra.mrb[0].mxu0 %v8513
  %v8762 = vpop.f32.mrb[0].mxu0
  %v8763 = vadd.f32 0.0, %v8762
  %v8764 = vpop.f32.mrb[0].mxu0
  %v8765 = vpop.f32.mrb[0].mxu0
  %v8766 = vadd.f32 0.0, %v8765
  %v8767 = vpop.f32.mrb[0].mxu0
  %8768 = vmatprep.mubr.bf16.mxu0 0
  %8769 = vmatmul.mubr.bf16.gmra.mrb[0].mxu0 %v8516
  %v8770 = vpop.f32.mrb[0].mxu0
  %v8771 = vadd.f32 0.0, %v8770
  %v8772 = vpop.f32.mrb[0].mxu0
  %v8773 = vpop.f32.mrb[0].mxu0
  %v8774 = vadd.f32 0.0, %v8773
  %v8775 = vpop.f32.mrb[0].mxu0
  %8776 = vmatprep.mubr.bf16.mxu0 0
  %8777 = vmatmul.mubr.bf16.gmra.mrb[0].mxu0 %v8519
  %v8778 = vpop.f32.mrb[0].mxu0
  %v8779 = vadd.f32 0.0, %v8778
  %v8780 = vpop.f32.mrb[0].mxu0
  %v8781 = vpop.f32.mrb[0].mxu0
  %v8782 = vadd.f32 0.0, %v8781
  %v8783 = vpop.f32.mrb[0].mxu0
  %8784 = vmatprep.mubr.bf16.mxu0 0
  %8785 = vmatmul.mubr.bf16.gmra.mrb[0].mxu0 %v8522
  %v8786 = vpop.f32.mrb[0].mxu0
  %v8787 = vadd.f32 0.0, %v8786
  %v8788 = vpop.f32.mrb[0].mxu0
  %v8789 = vpop.f32.mrb[0].mxu0
  %v8790 = vadd.f32 0.0, %v8789
  %v8791 = vpop.f32.mrb[0].mxu0
  %8792 = vmatprep.mubr.bf16.mxu0 0
  %8793 = vmatmul.mubr.bf16.gmra.mrb[0].mxu0 %v8525
  %v8794 = vpop.f32.mrb[0].mxu0
  %v8795 = vadd.f32 0.0, %v8794
  %v8796 = vpop.f32.mrb[0].mxu0
  %v8797 = vpop.f32.mrb[0].mxu0
  %v8798 = vadd.f32 0.0, %v8797
  %v8799 = vpop.f32.mrb[0].mxu0
  %8800 = vmatprep.mubr.bf16.mxu0 0
  %8801 = vmatmul.mubr.bf16.gmra.mrb[0].mxu0 %v8528
  %v8802 = vpop.f32.mrb[0].mxu0
  %v8803 = vadd.f32 0.0, %v8802
  %v8804 = vpop.f32.mrb[0].mxu0
  %v8805 = vpop.f32.mrb[0].mxu0
  %v8806 = vadd.f32 0.0, %v8805
  %v8807 = vpop.f32.mrb[0].mxu0
  %8808 = vmatprep.mubr.bf16.mxu0 0
  %8809 = vmatmul.mubr.bf16.gmra.mrb[0].mxu0 %v8531
  %v8810 = vpop.f32.mrb[0].mxu0
  %v8811 = vadd.f32 0.0, %v8810
  %v8812 = vpop.f32.mrb[0].mxu0
  %v8813 = vpop.f32.mrb[0].mxu0
  %v8814 = vadd.f32 0.0, %v8813
  %v8815 = vpop.f32.mrb[0].mxu0
  %8816 = vmatprep.mubr.bf16.mxu0 0
  %8817 = vmatmul.mubr.bf16.gmra.mrb[0].mxu0 %v8534
  %v8818 = vpop.f32.mrb[0].mxu0
  %v8819 = vadd.f32 0.0, %v8818
  %v8820 = vpop.f32.mrb[0].mxu0
  %v8821 = vpop.f32.mrb[0].mxu0
  %v8822 = vadd.f32 0.0, %v8821
  %v8823 = vpop.f32.mrb[0].mxu0
  %8824 = vdwg.mxu0
  %v8825 = vadd.f32 %v8271, %v8571
  %v8826 = vadd.f32 %v8272, %v8574
  %v8827 = vadd.f32 %v8273, %v8579
  %v8828 = vadd.f32 %v8274, %v8582
  %v8829 = vadd.f32 %v8275, %v8587
  %v8830 = vadd.f32 %v8276, %v8590
  %v8831 = vadd.f32 %v8277, %v8595
  %v8832 = vadd.f32 %v8278, %v8598
  %v8833 = vadd.f32 %v8279, %v8603
  %v8834 = vadd.f32 %v8280, %v8606
  %v8835 = vadd.f32 %v8281, %v8611
  %v8836 = vadd.f32 %v8282, %v8614
  %v8837 = vadd.f32 %v8283, %v8619
  %v8838 = vadd.f32 %v8284, %v8622
  %v8839 = vadd.f32 %v8285, %v8627
  %v8840 = vadd.f32 %v8286, %v8630
  %v8841 = vadd.f32 %v8287, %v8635
  %v8842 = vadd.f32 %v8288, %v8638
  %v8843 = vadd.f32 %v8289, %v8643
  %v8844 = vadd.f32 %v8290, %v8646
  %v8845 = vadd.f32 %v8291, %v8651
  %v8846 = vadd.f32 %v8292, %v8654
  %v8847 = vadd.f32 %v8293, %v8659
  %v8848 = vadd.f32 %v8294, %v8662
  %v8849 = vadd.f32 %v8295, %v8667
  %v8850 = vadd.f32 %v8296, %v8670
  %v8851 = vadd.f32 %v8297, %v8675
  %v8852 = vadd.f32 %v8298, %v8678
  %v8853 = vadd.f32 %v8299, %v8683
  %v8854 = vadd.f32 %v8300, %v8686
  %v8855 = vadd.f32 %v8301, %v8691
  %v8856 = vadd.f32 %v8302, %v8694
  %v8857 = vadd.f32 %v8303, %v8699
  %v8858 = vadd.f32 %v8304, %v8702
  %v8859 = vadd.f32 %v8305, %v8707
  %v8860 = vadd.f32 %v8306, %v8710
  %v8861 = vadd.f32 %v8307, %v8715
  %v8862 = vadd.f32 %v8308, %v8718
  %v8863 = vadd.f32 %v8309, %v8723
  %v8864 = vadd.f32 %v8310, %v8726
  %v8865 = vadd.f32 %v8311, %v8731
  %v8866 = vadd.f32 %v8312, %v8734
  %v8867 = vadd.f32 %v8313, %v8739
  %v8868 = vadd.f32 %v8314, %v8742
  %v8869 = vadd.f32 %v8315, %v8747
  %v8870 = vadd.f32 %v8316, %v8750
  %v8871 = vadd.f32 %v8317, %v8755
  %v8872 = vadd.f32 %v8318, %v8758
  %v8873 = vadd.f32 %v8319, %v8763
  %v8874 = vadd.f32 %v8320, %v8766
  %v8875 = vadd.f32 %v8321, %v8771
  %v8876 = vadd.f32 %v8322, %v8774
  %v8877 = vadd.f32 %v8323, %v8779
  %v8878 = vadd.f32 %v8324, %v8782
  %v8879 = vadd.f32 %v8325, %v8787
  %v8880 = vadd.f32 %v8326, %v8790
  %v8881 = vadd.f32 %v8327, %v8795
  %v8882 = vadd.f32 %v8328, %v8798
  %v8883 = vadd.f32 %v8329, %v8803
  %v8884 = vadd.f32 %v8330, %v8806
  %v8885 = vadd.f32 %v8331, %v8811
  %v8886 = vadd.f32 %v8332, %v8814
  %v8887 = vadd.f32 %v8333, %v8819
  %v8888 = vadd.f32 %v8334, %v8822
  %s8889 = scalar_lea.vmem [#allocation2], 48
  %v8890 = vld [vmem:[%s8889] sm:$0xff]
  %v8891 = vld [vmem:[%s8889 + $0x8] sm:$0xff]
  %v8892 = vld [vmem:[%s8889 + $0x18] sm:$0xff]
  %v8893 = vld [vmem:[%s8889 + $0x20] sm:$0xff]
  %v8894 = vld [vmem:[%s8889 + $0x30] sm:$0xff]
  %v8895 = vld [vmem:[%s8889 + $0x38] sm:$0xff]
  %v8896 = vld [vmem:[%s8889 + $0x48] sm:$0xff]
  %v8897 = vld [vmem:[%s8889 + $0x50] sm:$0xff]
  %v8898 = vld [vmem:[%s8889 + $0x60] sm:$0xff]
  %v8899 = vld [vmem:[%s8889 + $0x68] sm:$0xff]
  %v8900 = vld [vmem:[%s8889 + $0x78] sm:$0xff]
  %v8901 = vld [vmem:[%s8889 + $0x80] sm:$0xff]
  %v8902 = vld [vmem:[%s8889 + $0x90] sm:$0xff]
  %v8903 = vld [vmem:[%s8889 + $0x98] sm:$0xff]
  %v8904 = vld [vmem:[%s8889 + $0xa8] sm:$0xff]
  %v8905 = vld [vmem:[%s8889 + $0xb0] sm:$0xff]
  %v8906 = vld [vmem:[%s8889 + $0xc0] sm:$0xff]
  %v8907 = vld [vmem:[%s8889 + $0xc8] sm:$0xff]
  %v8908 = vld [vmem:[%s8889 + $0xd8] sm:$0xff]
  %v8909 = vld [vmem:[%s8889 + $0xe0] sm:$0xff]
  %v8910 = vld [vmem:[%s8889 + $0xf0] sm:$0xff]
  %v8911 = vld [vmem:[%s8889 + $0xf8] sm:$0xff]
  %v8912 = vld [vmem:[%s8889 + $0x108] sm:$0xff]
  %v8913 = vld [vmem:[%s8889 + $0x110] sm:$0xff]
  %v8914 = vld [vmem:[%s8889 + $0x120] sm:$0xff]
  %v8915 = vld [vmem:[%s8889 + $0x128] sm:$0xff]
  %v8916 = vld [vmem:[%s8889 + $0x138] sm:$0xff]
  %v8917 = vld [vmem:[%s8889 + $0x140] sm:$0xff]
  %v8918 = vld [vmem:[%s8889 + $0x150] sm:$0xff]
  %v8919 = vld [vmem:[%s8889 + $0x158] sm:$0xff]
  %v8920 = vld [vmem:[%s8889 + $0x168] sm:$0xff]
  %v8921 = vld [vmem:[%s8889 + $0x170] sm:$0xff]
  %v8922 = vld [vmem:[%s8889 + $0x1b0] sm:$0xff]
  %v8923 = vld [vmem:[%s8889 + $0x1b8] sm:$0xff]
  %v8924 = vld [vmem:[%s8889 + $0x1c8] sm:$0xff]
  %v8925 = vld [vmem:[%s8889 + $0x1d0] sm:$0xff]
  %v8926 = vld [vmem:[%s8889 + $0x1e0] sm:$0xff]
  %v8927 = vld [vmem:[%s8889 + $0x1e8] sm:$0xff]
  %v8928 = vld [vmem:[%s8889 + $0x1f8] sm:$0xff]
  %v8929 = vld [vmem:[%s8889 + $0x200] sm:$0xff]
  %v8930 = vld [vmem:[%s8889 + $0x210] sm:$0xff]
  %v8931 = vld [vmem:[%s8889 + $0x218] sm:$0xff]
  %v8932 = vld [vmem:[%s8889 + $0x228] sm:$0xff]
  %v8933 = vld [vmem:[%s8889 + $0x230] sm:$0xff]
  %v8934 = vld [vmem:[%s8889 + $0x240] sm:$0xff]
  %v8935 = vld [vmem:[%s8889 + $0x248] sm:$0xff]
  %v8936 = vld [vmem:[%s8889 + $0x258] sm:$0xff]
  %v8937 = vld [vmem:[%s8889 + $0x260] sm:$0xff]
  %v8938 = vld [vmem:[%s8889 + $0x270] sm:$0xff]
  %v8939 = vld [vmem:[%s8889 + $0x278] sm:$0xff]
  %v8940 = vld [vmem:[%s8889 + $0x288] sm:$0xff]
  %v8941 = vld [vmem:[%s8889 + $0x290] sm:$0xff]
  %v8942 = vld [vmem:[%s8889 + $0x2a0] sm:$0xff]
  %v8943 = vld [vmem:[%s8889 + $0x2a8] sm:$0xff]
  %v8944 = vld [vmem:[%s8889 + $0x2b8] sm:$0xff]
  %v8945 = vld [vmem:[%s8889 + $0x2c0] sm:$0xff]
  %v8946 = vld [vmem:[%s8889 + $0x2d0] sm:$0xff]
  %v8947 = vld [vmem:[%s8889 + $0x2d8] sm:$0xff]
  %v8948 = vld [vmem:[%s8889 + $0x2e8] sm:$0xff]
  %v8949 = vld [vmem:[%s8889 + $0x2f0] sm:$0xff]
  %v8950 = vld [vmem:[%s8889 + $0x300] sm:$0xff]
  %v8951 = vld [vmem:[%s8889 + $0x308] sm:$0xff]
  %v8952 = vld [vmem:[%s8889 + $0x318] sm:$0xff]
  %v8953 = vld [vmem:[%s8889 + $0x320] sm:$0xff]
  %v8954 = vpack.c.bf16 %v8891, %v8890
  %v8955 = vpack.c.bf16 %v8893, %v8892
  %v8956 = vpack.c.bf16 %v8895, %v8894
  %v8957 = vpack.c.bf16 %v8897, %v8896
  %v8958 = vpack.c.bf16 %v8899, %v8898
  %v8959 = vpack.c.bf16 %v8901, %v8900
  %v8960 = vpack.c.bf16 %v8903, %v8902
  %v8961 = vpack.c.bf16 %v8905, %v8904
  %v8962 = vpack.c.bf16 %v8907, %v8906
  %v8963 = vpack.c.bf16 %v8909, %v8908
  %v8964 = vpack.c.bf16 %v8911, %v8910
  %v8965 = vpack.c.bf16 %v8913, %v8912
  %v8966 = vpack.c.bf16 %v8915, %v8914
  %v8967 = vpack.c.bf16 %v8917, %v8916
  %v8968 = vpack.c.bf16 %v8919, %v8918
  %v8969 = vpack.c.bf16 %v8921, %v8920
  %v8970 = vpack.c.bf16 %v8923, %v8922
  %v8971 = vpack.c.bf16 %v8925, %v8924
  %v8972 = vpack.c.bf16 %v8927, %v8926
  %v8973 = vpack.c.bf16 %v8929, %v8928
  %v8974 = vpack.c.bf16 %v8931, %v8930
  %v8975 = vpack.c.bf16 %v8933, %v8932
  %v8976 = vpack.c.bf16 %v8935, %v8934
  %v8977 = vpack.c.bf16 %v8937, %v8936
  %v8978 = vpack.c.bf16 %v8939, %v8938
  %v8979 = vpack.c.bf16 %v8941, %v8940
  %v8980 = vpack.c.bf16 %v8943, %v8942
  %v8981 = vpack.c.bf16 %v8945, %v8944
  %v8982 = vpack.c.bf16 %v8947, %v8946
  %v8983 = vpack.c.bf16 %v8949, %v8948
  %v8984 = vpack.c.bf16 %v8951, %v8950
  %v8985 = vpack.c.bf16 %v8953, %v8952
  %s8986 = scalar_lea.vmem %s3, 48
  %v8987 = vld [vmem:[%s8986] sm:$0xf]
  %v8988 = vld [vmem:[%s8986 + $0x4] sm:$0xf]
  %v8991 = vunpack.c.l.b16 %v8987
  %v8992 = vunpack.c.l.b16 %v8988
  %v8993 = vpack.c.b16 %v8992, %v8991
  %v8996 = vsel %vm4915, %v8954, 0
  %v8999 = vsel %vm4915, %v8955, 0
  %v9002 = vsel %vm4915, %v8956, 0
  %v9005 = vsel %vm4915, %v8957, 0
  %v9008 = vsel %vm4915, %v8958, 0
  %v9011 = vsel %vm4915, %v8959, 0
  %v9014 = vsel %vm4915, %v8960, 0
  %v9017 = vsel %vm4915, %v8961, 0
  %v9020 = vsel %vm4915, %v8962, 0
  %v9023 = vsel %vm4915, %v8963, 0
  %v9026 = vsel %vm4915, %v8964, 0
  %v9029 = vsel %vm4915, %v8965, 0
  %v9032 = vsel %vm4915, %v8966, 0
  %v9035 = vsel %vm4915, %v8967, 0
  %v9038 = vsel %vm4915, %v8968, 0
  %v9041 = vsel %vm4915, %v8969, 0
  %v9044 = vsel %vm4915, %v8970, 0
  %v9047 = vsel %vm4915, %v8971, 0
  %v9050 = vsel %vm4915, %v8972, 0
  %v9053 = vsel %vm4915, %v8973, 0
  %v9056 = vsel %vm4915, %v8974, 0
  %v9059 = vsel %vm4915, %v8975, 0
  %v9062 = vsel %vm4915, %v8976, 0
  %v9065 = vsel %vm4915, %v8977, 0
  %v9068 = vsel %vm4915, %v8978, 0
  %v9071 = vsel %vm4915, %v8979, 0
  %v9074 = vsel %vm4915, %v8980, 0
  %v9077 = vsel %vm4915, %v8981, 0
  %v9080 = vsel %vm4915, %v8982, 0
  %v9083 = vsel %vm4915, %v8983, 0
  %v9086 = vsel %vm4915, %v8984, 0
  %v9089 = vsel %vm4915, %v8985, 0
  %9091 = vmatprep.subr.bf16.mxu0 0
  %9092 = vmatpush1.bf16.msra.mxu0 %v8993
  %9093 = vmatprep.subr.bf16.mxu0 0
  %9094 = vmatpush1.bf16.msra.mxu0 0
  %9095 = vmatprep.subr.bf16.mxu0 0
  %9096 = vmatpush1.bf16.msra.mxu0 0
  %9097 = vmatprep.subr.bf16.mxu0 0
  %9098 = vmatpush1.bf16.msra.mxu0 0
  %9099 = vmatprep.subr.bf16.mxu0 0
  %9100 = vmatpush1.bf16.msra.mxu0 0
  %9101 = vmatprep.subr.bf16.mxu0 0
  %9102 = vmatpush1.bf16.msra.mxu0 0
  %9103 = vmatprep.subr.bf16.mxu0 0
  %9104 = vmatpush1.bf16.msra.mxu0 0
  %9105 = vmatprep.subr.bf16.mxu0 0
  %9106 = vmatpush1.bf16.msra.mxu0 0
  %9107 = vmatprep.subr.bf16.mxu0 0
  %9108 = vmatpush1.bf16.msra.mxu0 0
  %9109 = vmatprep.subr.bf16.mxu0 0
  %9110 = vmatpush1.bf16.msra.mxu0 0
  %9111 = vmatprep.subr.bf16.mxu0 0
  %9112 = vmatpush1.bf16.msra.mxu0 0
  %9113 = vmatprep.subr.bf16.mxu0 0
  %9114 = vmatpush1.bf16.msra.mxu0 0
  %9115 = vmatprep.subr.bf16.mxu0 0
  %9116 = vmatpush1.bf16.msra.mxu0 0
  %9117 = vmatprep.subr.bf16.mxu0 0
  %9118 = vmatpush1.bf16.msra.mxu0 0
  %9119 = vmatprep.subr.bf16.mxu0 0
  %9120 = vmatpush1.bf16.msra.mxu0 0
  %9121 = vmatprep.subr.bf16.mxu0 0
  %9122 = vmatpush1.bf16.msra.mxu0 0
  %9123 = vmatprep.mubr.bf16.mxu0 0
  %9124 = vmatmul.mubr.bf16.gmra.mrb[0].mxu0 %v8996
  %v9125 = vpop.f32.mrb[0].mxu0
  %v9126 = vadd.f32 0.0, %v9125
  %v9127 = vpop.f32.mrb[0].mxu0
  %v9128 = vpop.f32.mrb[0].mxu0
  %v9129 = vadd.f32 0.0, %v9128
  %v9130 = vpop.f32.mrb[0].mxu0
  %9131 = vmatprep.mubr.bf16.mxu0 0
  %9132 = vmatmul.mubr.bf16.gmra.mrb[0].mxu0 %v8999
  %v9133 = vpop.f32.mrb[0].mxu0
  %v9134 = vadd.f32 0.0, %v9133
  %v9135 = vpop.f32.mrb[0].mxu0
  %v9136 = vpop.f32.mrb[0].mxu0
  %v9137 = vadd.f32 0.0, %v9136
  %v9138 = vpop.f32.mrb[0].mxu0
  %9139 = vmatprep.mubr.bf16.mxu0 0
  %9140 = vmatmul.mubr.bf16.gmra.mrb[0].mxu0 %v9002
  %v9141 = vpop.f32.mrb[0].mxu0
  %v9142 = vadd.f32 0.0, %v9141
  %v9143 = vpop.f32.mrb[0].mxu0
  %v9144 = vpop.f32.mrb[0].mxu0
  %v9145 = vadd.f32 0.0, %v9144
  %v9146 = vpop.f32.mrb[0].mxu0
  %9147 = vmatprep.mubr.bf16.mxu0 0
  %9148 = vmatmul.mubr.bf16.gmra.mrb[0].mxu0 %v9005
  %v9149 = vpop.f32.mrb[0].mxu0
  %v9150 = vadd.f32 0.0, %v9149
  %v9151 = vpop.f32.mrb[0].mxu0
  %v9152 = vpop.f32.mrb[0].mxu0
  %v9153 = vadd.f32 0.0, %v9152
  %v9154 = vpop.f32.mrb[0].mxu0
  %9155 = vmatprep.mubr.bf16.mxu0 0
  %9156 = vmatmul.mubr.bf16.gmra.mrb[0].mxu0 %v9008
  %v9157 = vpop.f32.mrb[0].mxu0
  %v9158 = vadd.f32 0.0, %v9157
  %v9159 = vpop.f32.mrb[0].mxu0
  %v9160 = vpop.f32.mrb[0].mxu0
  %v9161 = vadd.f32 0.0, %v9160
  %v9162 = vpop.f32.mrb[0].mxu0
  %9163 = vmatprep.mubr.bf16.mxu0 0
  %9164 = vmatmul.mubr.bf16.gmra.mrb[0].mxu0 %v9011
  %v9165 = vpop.f32.mrb[0].mxu0
  %v9166 = vadd.f32 0.0, %v9165
  %v9167 = vpop.f32.mrb[0].mxu0
  %v9168 = vpop.f32.mrb[0].mxu0
  %v9169 = vadd.f32 0.0, %v9168
  %v9170 = vpop.f32.mrb[0].mxu0
  %9171 = vmatprep.mubr.bf16.mxu0 0
  %9172 = vmatmul.mubr.bf16.gmra.mrb[0].mxu0 %v9014
  %v9173 = vpop.f32.mrb[0].mxu0
  %v9174 = vadd.f32 0.0, %v9173
  %v9175 = vpop.f32.mrb[0].mxu0
  %v9176 = vpop.f32.mrb[0].mxu0
  %v9177 = vadd.f32 0.0, %v9176
  %v9178 = vpop.f32.mrb[0].mxu0
  %9179 = vmatprep.mubr.bf16.mxu0 0
  %9180 = vmatmul.mubr.bf16.gmra.mrb[0].mxu0 %v9017
  %v9181 = vpop.f32.mrb[0].mxu0
  %v9182 = vadd.f32 0.0, %v9181
  %v9183 = vpop.f32.mrb[0].mxu0
  %v9184 = vpop.f32.mrb[0].mxu0
  %v9185 = vadd.f32 0.0, %v9184
  %v9186 = vpop.f32.mrb[0].mxu0
  %9187 = vmatprep.mubr.bf16.mxu0 0
  %9188 = vmatmul.mubr.bf16.gmra.mrb[0].mxu0 %v9020
  %v9189 = vpop.f32.mrb[0].mxu0
  %v9190 = vadd.f32 0.0, %v9189
  %v9191 = vpop.f32.mrb[0].mxu0
  %v9192 = vpop.f32.mrb[0].mxu0
  %v9193 = vadd.f32 0.0, %v9192
  %v9194 = vpop.f32.mrb[0].mxu0
  %9195 = vmatprep.mubr.bf16.mxu0 0
  %9196 = vmatmul.mubr.bf16.gmra.mrb[0].mxu0 %v9023
  %v9197 = vpop.f32.mrb[0].mxu0
  %v9198 = vadd.f32 0.0, %v9197
  %v9199 = vpop.f32.mrb[0].mxu0
  %v9200 = vpop.f32.mrb[0].mxu0
  %v9201 = vadd.f32 0.0, %v9200
  %v9202 = vpop.f32.mrb[0].mxu0
  %9203 = vmatprep.mubr.bf16.mxu0 0
  %9204 = vmatmul.mubr.bf16.gmra.mrb[0].mxu0 %v9026
  %v9205 = vpop.f32.mrb[0].mxu0
  %v9206 = vadd.f32 0.0, %v9205
  %v9207 = vpop.f32.mrb[0].mxu0
  %v9208 = vpop.f32.mrb[0].mxu0
  %v9209 = vadd.f32 0.0, %v9208
  %v9210 = vpop.f32.mrb[0].mxu0
  %9211 = vmatprep.mubr.bf16.mxu0 0
  %9212 = vmatmul.mubr.bf16.gmra.mrb[0].mxu0 %v9029
  %v9213 = vpop.f32.mrb[0].mxu0
  %v9214 = vadd.f32 0.0, %v9213
  %v9215 = vpop.f32.mrb[0].mxu0
  %v9216 = vpop.f32.mrb[0].mxu0
  %v9217 = vadd.f32 0.0, %v9216
  %v9218 = vpop.f32.mrb[0].mxu0
  %9219 = vmatprep.mubr.bf16.mxu0 0
  %9220 = vmatmul.mubr.bf16.gmra.mrb[0].mxu0 %v9032
  %v9221 = vpop.f32.mrb[0].mxu0
  %v9222 = vadd.f32 0.0, %v9221
  %v9223 = vpop.f32.mrb[0].mxu0
  %v9224 = vpop.f32.mrb[0].mxu0
  %v9225 = vadd.f32 0.0, %v9224
  %v9226 = vpop.f32.mrb[0].mxu0
  %9227 = vmatprep.mubr.bf16.mxu0 0
  %9228 = vmatmul.mubr.bf16.gmra.mrb[0].mxu0 %v9035
  %v9229 = vpop.f32.mrb[0].mxu0
  %v9230 = vadd.f32 0.0, %v9229
  %v9231 = vpop.f32.mrb[0].mxu0
  %v9232 = vpop.f32.mrb[0].mxu0
  %v9233 = vadd.f32 0.0, %v9232
  %v9234 = vpop.f32.mrb[0].mxu0
  %9235 = vmatprep.mubr.bf16.mxu0 0
  %9236 = vmatmul.mubr.bf16.gmra.mrb[0].mxu0 %v9038
  %v9237 = vpop.f32.mrb[0].mxu0
  %v9238 = vadd.f32 0.0, %v9237
  %v9239 = vpop.f32.mrb[0].mxu0
  %v9240 = vpop.f32.mrb[0].mxu0
  %v9241 = vadd.f32 0.0, %v9240
  %v9242 = vpop.f32.mrb[0].mxu0
  %9243 = vmatprep.mubr.bf16.mxu0 0
  %9244 = vmatmul.mubr.bf16.gmra.mrb[0].mxu0 %v9041
  %v9245 = vpop.f32.mrb[0].mxu0
  %v9246 = vadd.f32 0.0, %v9245
  %v9247 = vpop.f32.mrb[0].mxu0
  %v9248 = vpop.f32.mrb[0].mxu0
  %v9249 = vadd.f32 0.0, %v9248
  %v9250 = vpop.f32.mrb[0].mxu0
  %9251 = vmatprep.mubr.bf16.mxu0 0
  %9252 = vmatmul.mubr.bf16.gmra.mrb[0].mxu0 %v9044
  %v9253 = vpop.f32.mrb[0].mxu0
  %v9254 = vadd.f32 0.0, %v9253
  %v9255 = vpop.f32.mrb[0].mxu0
  %v9256 = vpop.f32.mrb[0].mxu0
  %v9257 = vadd.f32 0.0, %v9256
  %v9258 = vpop.f32.mrb[0].mxu0
  %9259 = vmatprep.mubr.bf16.mxu0 0
  %9260 = vmatmul.mubr.bf16.gmra.mrb[0].mxu0 %v9047
  %v9261 = vpop.f32.mrb[0].mxu0
  %v9262 = vadd.f32 0.0, %v9261
  %v9263 = vpop.f32.mrb[0].mxu0
  %v9264 = vpop.f32.mrb[0].mxu0
  %v9265 = vadd.f32 0.0, %v9264
  %v9266 = vpop.f32.mrb[0].mxu0
  %9267 = vmatprep.mubr.bf16.mxu0 0
  %9268 = vmatmul.mubr.bf16.gmra.mrb[0].mxu0 %v9050
  %v9269 = vpop.f32.mrb[0].mxu0
  %v9270 = vadd.f32 0.0, %v9269
  %v9271 = vpop.f32.mrb[0].mxu0
  %v9272 = vpop.f32.mrb[0].mxu0
  %v9273 = vadd.f32 0.0, %v9272
  %v9274 = vpop.f32.mrb[0].mxu0
  %9275 = vmatprep.mubr.bf16.mxu0 0
  %9276 = vmatmul.mubr.bf16.gmra.mrb[0].mxu0 %v9053
  %v9277 = vpop.f32.mrb[0].mxu0
  %v9278 = vadd.f32 0.0, %v9277
  %v9279 = vpop.f32.mrb[0].mxu0
  %v9280 = vpop.f32.mrb[0].mxu0
  %v9281 = vadd.f32 0.0, %v9280
  %v9282 = vpop.f32.mrb[0].mxu0
  %9283 = vmatprep.mubr.bf16.mxu0 0
  %9284 = vmatmul.mubr.bf16.gmra.mrb[0].mxu0 %v9056
  %v9285 = vpop.f32.mrb[0].mxu0
  %v9286 = vadd.f32 0.0, %v9285
  %v9287 = vpop.f32.mrb[0].mxu0
  %v9288 = vpop.f32.mrb[0].mxu0
  %v9289 = vadd.f32 0.0, %v9288
  %v9290 = vpop.f32.mrb[0].mxu0
  %9291 = vmatprep.mubr.bf16.mxu0 0
  %9292 = vmatmul.mubr.bf16.gmra.mrb[0].mxu0 %v9059
  %v9293 = vpop.f32.mrb[0].mxu0
  %v9294 = vadd.f32 0.0, %v9293
  %v9295 = vpop.f32.mrb[0].mxu0
  %v9296 = vpop.f32.mrb[0].mxu0
  %v9297 = vadd.f32 0.0, %v9296
  %v9298 = vpop.f32.mrb[0].mxu0
  %9299 = vmatprep.mubr.bf16.mxu0 0
  %9300 = vmatmul.mubr.bf16.gmra.mrb[0].mxu0 %v9062
  %v9301 = vpop.f32.mrb[0].mxu0
  %v9302 = vadd.f32 0.0, %v9301
  %v9303 = vpop.f32.mrb[0].mxu0
  %v9304 = vpop.f32.mrb[0].mxu0
  %v9305 = vadd.f32 0.0, %v9304
  %v9306 = vpop.f32.mrb[0].mxu0
  %9307 = vmatprep.mubr.bf16.mxu0 0
  %9308 = vmatmul.mubr.bf16.gmra.mrb[0].mxu0 %v9065
  %v9309 = vpop.f32.mrb[0].mxu0
  %v9310 = vadd.f32 0.0, %v9309
  %v9311 = vpop.f32.mrb[0].mxu0
  %v9312 = vpop.f32.mrb[0].mxu0
  %v9313 = vadd.f32 0.0, %v9312
  %v9314 = vpop.f32.mrb[0].mxu0
  %9315 = vmatprep.mubr.bf16.mxu0 0
  %9316 = vmatmul.mubr.bf16.gmra.mrb[0].mxu0 %v9068
  %v9317 = vpop.f32.mrb[0].mxu0
  %v9318 = vadd.f32 0.0, %v9317
  %v9319 = vpop.f32.mrb[0].mxu0
  %v9320 = vpop.f32.mrb[0].mxu0
  %v9321 = vadd.f32 0.0, %v9320
  %v9322 = vpop.f32.mrb[0].mxu0
  %9323 = vmatprep.mubr.bf16.mxu0 0
  %9324 = vmatmul.mubr.bf16.gmra.mrb[0].mxu0 %v9071
  %v9325 = vpop.f32.mrb[0].mxu0
  %v9326 = vadd.f32 0.0, %v9325
  %v9327 = vpop.f32.mrb[0].mxu0
  %v9328 = vpop.f32.mrb[0].mxu0
  %v9329 = vadd.f32 0.0, %v9328
  %v9330 = vpop.f32.mrb[0].mxu0
  %9331 = vmatprep.mubr.bf16.mxu0 0
  %9332 = vmatmul.mubr.bf16.gmra.mrb[0].mxu0 %v9074
  %v9333 = vpop.f32.mrb[0].mxu0
  %v9334 = vadd.f32 0.0, %v9333
  %v9335 = vpop.f32.mrb[0].mxu0
  %v9336 = vpop.f32.mrb[0].mxu0
  %v9337 = vadd.f32 0.0, %v9336
  %v9338 = vpop.f32.mrb[0].mxu0
  %9339 = vmatprep.mubr.bf16.mxu0 0
  %9340 = vmatmul.mubr.bf16.gmra.mrb[0].mxu0 %v9077
  %v9341 = vpop.f32.mrb[0].mxu0
  %v9342 = vadd.f32 0.0, %v9341
  %v9343 = vpop.f32.mrb[0].mxu0
  %v9344 = vpop.f32.mrb[0].mxu0
  %v9345 = vadd.f32 0.0, %v9344
  %v9346 = vpop.f32.mrb[0].mxu0
  %9347 = vmatprep.mubr.bf16.mxu0 0
  %9348 = vmatmul.mubr.bf16.gmra.mrb[0].mxu0 %v9080
  %v9349 = vpop.f32.mrb[0].mxu0
  %v9350 = vadd.f32 0.0, %v9349
  %v9351 = vpop.f32.mrb[0].mxu0
  %v9352 = vpop.f32.mrb[0].mxu0
  %v9353 = vadd.f32 0.0, %v9352
  %v9354 = vpop.f32.mrb[0].mxu0
  %9355 = vmatprep.mubr.bf16.mxu0 0
  %9356 = vmatmul.mubr.bf16.gmra.mrb[0].mxu0 %v9083
  %v9357 = vpop.f32.mrb[0].mxu0
  %v9358 = vadd.f32 0.0, %v9357
  %v9359 = vpop.f32.mrb[0].mxu0
  %v9360 = vpop.f32.mrb[0].mxu0
  %v9361 = vadd.f32 0.0, %v9360
  %v9362 = vpop.f32.mrb[0].mxu0
  %9363 = vmatprep.mubr.bf16.mxu0 0
  %9364 = vmatmul.mubr.bf16.gmra.mrb[0].mxu0 %v9086
  %v9365 = vpop.f32.mrb[0].mxu0
  %v9366 = vadd.f32 0.0, %v9365
  %v9367 = vpop.f32.mrb[0].mxu0
  %v9368 = vpop.f32.mrb[0].mxu0
  %v9369 = vadd.f32 0.0, %v9368
  %v9370 = vpop.f32.mrb[0].mxu0
  %9371 = vmatprep.mubr.bf16.mxu0 0
  %9372 = vmatmul.mubr.bf16.gmra.mrb[0].mxu0 %v9089
  %v9373 = vpop.f32.mrb[0].mxu0
  %v9374 = vadd.f32 0.0, %v9373
  %v9375 = vpop.f32.mrb[0].mxu0
  %v9376 = vpop.f32.mrb[0].mxu0
  %v9377 = vadd.f32 0.0, %v9376
  %v9378 = vpop.f32.mrb[0].mxu0
  %9379 = vdwg.mxu0
  %v9380 = vadd.f32 %v8825, %v9126
  %v9381 = vadd.f32 %v8826, %v9129
  %v9382 = vadd.f32 %v8827, %v9134
  %v9383 = vadd.f32 %v8828, %v9137
  %v9384 = vadd.f32 %v8829, %v9142
  %v9385 = vadd.f32 %v8830, %v9145
  %v9386 = vadd.f32 %v8831, %v9150
  %v9387 = vadd.f32 %v8832, %v9153
  %v9388 = vadd.f32 %v8833, %v9158
  %v9389 = vadd.f32 %v8834, %v9161
  %v9390 = vadd.f32 %v8835, %v9166
  %v9391 = vadd.f32 %v8836, %v9169
  %v9392 = vadd.f32 %v8837, %v9174
  %v9393 = vadd.f32 %v8838, %v9177
  %v9394 = vadd.f32 %v8839, %v9182
  %v9395 = vadd.f32 %v8840, %v9185
  %v9396 = vadd.f32 %v8841, %v9190
  %v9397 = vadd.f32 %v8842, %v9193
  %v9398 = vadd.f32 %v8843, %v9198
  %v9399 = vadd.f32 %v8844, %v9201
  %v9400 = vadd.f32 %v8845, %v9206
  %v9401 = vadd.f32 %v8846, %v9209
  %v9402 = vadd.f32 %v8847, %v9214
  %v9403 = vadd.f32 %v8848, %v9217
  %v9404 = vadd.f32 %v8849, %v9222
  %v9405 = vadd.f32 %v8850, %v9225
  %v9406 = vadd.f32 %v8851, %v9230
  %v9407 = vadd.f32 %v8852, %v9233
  %v9408 = vadd.f32 %v8853, %v9238
  %v9409 = vadd.f32 %v8854, %v9241
  %v9410 = vadd.f32 %v8855, %v9246
  %v9411 = vadd.f32 %v8856, %v9249
  %v9412 = vadd.f32 %v8857, %v9254
  %v9413 = vadd.f32 %v8858, %v9257
  %v9414 = vadd.f32 %v8859, %v9262
  %v9415 = vadd.f32 %v8860, %v9265
  %v9416 = vadd.f32 %v8861, %v9270
  %v9417 = vadd.f32 %v8862, %v9273
  %v9418 = vadd.f32 %v8863, %v9278
  %v9419 = vadd.f32 %v8864, %v9281
  %v9420 = vadd.f32 %v8865, %v9286
  %v9421 = vadd.f32 %v8866, %v9289
  %v9422 = vadd.f32 %v8867, %v9294
  %v9423 = vadd.f32 %v8868, %v9297
  %v9424 = vadd.f32 %v8869, %v9302
  %v9425 = vadd.f32 %v8870, %v9305
  %v9426 = vadd.f32 %v8871, %v9310
  %v9427 = vadd.f32 %v8872, %v9313
  %v9428 = vadd.f32 %v8873, %v9318
  %v9429 = vadd.f32 %v8874, %v9321
  %v9430 = vadd.f32 %v8875, %v9326
  %v9431 = vadd.f32 %v8876, %v9329
  %v9432 = vadd.f32 %v8877, %v9334
  %v9433 = vadd.f32 %v8878, %v9337
  %v9434 = vadd.f32 %v8879, %v9342
  %v9435 = vadd.f32 %v8880, %v9345
  %v9436 = vadd.f32 %v8881, %v9350
  %v9437 = vadd.f32 %v8882, %v9353
  %v9438 = vadd.f32 %v8883, %v9358
  %v9439 = vadd.f32 %v8884, %v9361
  %v9440 = vadd.f32 %v8885, %v9366
  %v9441 = vadd.f32 %v8886, %v9369
  %v9442 = vadd.f32 %v8887, %v9374
  %v9443 = vadd.f32 %v8888, %v9377
  %v9444 = vld [vmem:[%s8889 + $0x1] sm:$0xff]
  %v9445 = vld [vmem:[%s8889 + $0x9] sm:$0xff]
  %v9446 = vld [vmem:[%s8889 + $0x19] sm:$0xff]
  %v9447 = vld [vmem:[%s8889 + $0x21] sm:$0xff]
  %v9448 = vld [vmem:[%s8889 + $0x31] sm:$0xff]
  %v9449 = vld [vmem:[%s8889 + $0x39] sm:$0xff]
  %v9450 = vld [vmem:[%s8889 + $0x49] sm:$0xff]
  %v9451 = vld [vmem:[%s8889 + $0x51] sm:$0xff]
  %v9452 = vld [vmem:[%s8889 + $0x61] sm:$0xff]
  %v9453 = vld [vmem:[%s8889 + $0x69] sm:$0xff]
  %v9454 = vld [vmem:[%s8889 + $0x79] sm:$0xff]
  %v9455 = vld [vmem:[%s8889 + $0x81] sm:$0xff]
  %v9456 = vld [vmem:[%s8889 + $0x91] sm:$0xff]
  %v9457 = vld [vmem:[%s8889 + $0x99] sm:$0xff]
  %v9458 = vld [vmem:[%s8889 + $0xa9] sm:$0xff]
  %v9459 = vld [vmem:[%s8889 + $0xb1] sm:$0xff]
  %v9460 = vld [vmem:[%s8889 + $0xc1] sm:$0xff]
  %v9461 = vld [vmem:[%s8889 + $0xc9] sm:$0xff]
  %v9462 = vld [vmem:[%s8889 + $0xd9] sm:$0xff]
  %v9463 = vld [vmem:[%s8889 + $0xe1] sm:$0xff]
  %v9464 = vld [vmem:[%s8889 + $0xf1] sm:$0xff]
  %v9465 = vld [vmem:[%s8889 + $0xf9] sm:$0xff]
  %v9466 = vld [vmem:[%s8889 + $0x109] sm:$0xff]
  %v9467 = vld [vmem:[%s8889 + $0x111] sm:$0xff]
  %v9468 = vld [vmem:[%s8889 + $0x121] sm:$0xff]
  %v9469 = vld [vmem:[%s8889 + $0x129] sm:$0xff]
  %v9470 = vld [vmem:[%s8889 + $0x139] sm:$0xff]
  %v9471 = vld [vmem:[%s8889 + $0x141] sm:$0xff]
  %v9472 = vld [vmem:[%s8889 + $0x151] sm:$0xff]
  %v9473 = vld [vmem:[%s8889 + $0x159] sm:$0xff]
  %v9474 = vld [vmem:[%s8889 + $0x169] sm:$0xff]
  %v9475 = vld [vmem:[%s8889 + $0x171] sm:$0xff]
  %v9476 = vld [vmem:[%s8889 + $0x1b1] sm:$0xff]
  %v9477 = vld [vmem:[%s8889 + $0x1b9] sm:$0xff]
  %v9478 = vld [vmem:[%s8889 + $0x1c9] sm:$0xff]
  %v9479 = vld [vmem:[%s8889 + $0x1d1] sm:$0xff]
  %v9480 = vld [vmem:[%s8889 + $0x1e1] sm:$0xff]
  %v9481 = vld [vmem:[%s8889 + $0x1e9] sm:$0xff]
  %v9482 = vld [vmem:[%s8889 + $0x1f9] sm:$0xff]
  %v9483 = vld [vmem:[%s8889 + $0x201] sm:$0xff]
  %v9484 = vld [vmem:[%s8889 + $0x211] sm:$0xff]
  %v9485 = vld [vmem:[%s8889 + $0x219] sm:$0xff]
  %v9486 = vld [vmem:[%s8889 + $0x229] sm:$0xff]
  %v9487 = vld [vmem:[%s8889 + $0x231] sm:$0xff]
  %v9488 = vld [vmem:[%s8889 + $0x241] sm:$0xff]
  %v9489 = vld [vmem:[%s8889 + $0x249] sm:$0xff]
  %v9490 = vld [vmem:[%s8889 + $0x259] sm:$0xff]
  %v9491 = vld [vmem:[%s8889 + $0x261] sm:$0xff]
  %v9492 = vld [vmem:[%s8889 + $0x271] sm:$0xff]
  %v9493 = vld [vmem:[%s8889 + $0x279] sm:$0xff]
  %v9494 = vld [vmem:[%s8889 + $0x289] sm:$0xff]
  %v9495 = vld [vmem:[%s8889 + $0x291] sm:$0xff]
  %v9496 = vld [vmem:[%s8889 + $0x2a1] sm:$0xff]
  %v9497 = vld [vmem:[%s8889 + $0x2a9] sm:$0xff]
  %v9498 = vld [vmem:[%s8889 + $0x2b9] sm:$0xff]
  %v9499 = vld [vmem:[%s8889 + $0x2c1] sm:$0xff]
  %v9500 = vld [vmem:[%s8889 + $0x2d1] sm:$0xff]
  %v9501 = vld [vmem:[%s8889 + $0x2d9] sm:$0xff]
  %v9502 = vld [vmem:[%s8889 + $0x2e9] sm:$0xff]
  %v9503 = vld [vmem:[%s8889 + $0x2f1] sm:$0xff]
  %v9504 = vld [vmem:[%s8889 + $0x301] sm:$0xff]
  %v9505 = vld [vmem:[%s8889 + $0x309] sm:$0xff]
  %v9506 = vld [vmem:[%s8889 + $0x319] sm:$0xff]
  %v9507 = vld [vmem:[%s8889 + $0x321] sm:$0xff]
  %v9508 = vpack.c.bf16 %v9445, %v9444
  %v9509 = vpack.c.bf16 %v9447, %v9446
  %v9510 = vpack.c.bf16 %v9449, %v9448
  %v9511 = vpack.c.bf16 %v9451, %v9450
  %v9512 = vpack.c.bf16 %v9453, %v9452
  %v9513 = vpack.c.bf16 %v9455, %v9454
  %v9514 = vpack.c.bf16 %v9457, %v9456
  %v9515 = vpack.c.bf16 %v9459, %v9458
  %v9516 = vpack.c.bf16 %v9461, %v9460
  %v9517 = vpack.c.bf16 %v9463, %v9462
  %v9518 = vpack.c.bf16 %v9465, %v9464
  %v9519 = vpack.c.bf16 %v9467, %v9466
  %v9520 = vpack.c.bf16 %v9469, %v9468
  %v9521 = vpack.c.bf16 %v9471, %v9470
  %v9522 = vpack.c.bf16 %v9473, %v9472
  %v9523 = vpack.c.bf16 %v9475, %v9474
  %v9524 = vpack.c.bf16 %v9477, %v9476
  %v9525 = vpack.c.bf16 %v9479, %v9478
  %v9526 = vpack.c.bf16 %v9481, %v9480
  %v9527 = vpack.c.bf16 %v9483, %v9482
  %v9528 = vpack.c.bf16 %v9485, %v9484
  %v9529 = vpack.c.bf16 %v9487, %v9486
  %v9530 = vpack.c.bf16 %v9489, %v9488
  %v9531 = vpack.c.bf16 %v9491, %v9490
  %v9532 = vpack.c.bf16 %v9493, %v9492
  %v9533 = vpack.c.bf16 %v9495, %v9494
  %v9534 = vpack.c.bf16 %v9497, %v9496
  %v9535 = vpack.c.bf16 %v9499, %v9498
  %v9536 = vpack.c.bf16 %v9501, %v9500
  %v9537 = vpack.c.bf16 %v9503, %v9502
  %v9538 = vpack.c.bf16 %v9505, %v9504
  %v9539 = vpack.c.bf16 %v9507, %v9506
  %s9540 = scalar_lea.vmem %s3, 56
  %v9541 = vld [vmem:[%s9540] sm:$0xf]
  %v9542 = vld [vmem:[%s9540 + $0x4] sm:$0xf]
  %v9545 = vunpack.c.l.b16 %v9541
  %v9546 = vunpack.c.l.b16 %v9542
  %v9547 = vpack.c.b16 %v9546, %v9545
  %v9550 = vsel %vm4915, %v9508, 0
  %v9553 = vsel %vm4915, %v9509, 0
  %v9556 = vsel %vm4915, %v9510, 0
  %v9559 = vsel %vm4915, %v9511, 0
  %v9562 = vsel %vm4915, %v9512, 0
  %v9565 = vsel %vm4915, %v9513, 0
  %v9568 = vsel %vm4915, %v9514, 0
  %v9571 = vsel %vm4915, %v9515, 0
  %v9574 = vsel %vm4915, %v9516, 0
  %v9577 = vsel %vm4915, %v9517, 0
  %v9580 = vsel %vm4915, %v9518, 0
  %v9583 = vsel %vm4915, %v9519, 0
  %v9586 = vsel %vm4915, %v9520, 0
  %v9589 = vsel %vm4915, %v9521, 0
  %v9592 = vsel %vm4915, %v9522, 0
  %v9595 = vsel %vm4915, %v9523, 0
  %v9598 = vsel %vm4915, %v9524, 0
  %v9601 = vsel %vm4915, %v9525, 0
  %v9604 = vsel %vm4915, %v9526, 0
  %v9607 = vsel %vm4915, %v9527, 0
  %v9610 = vsel %vm4915, %v9528, 0
  %v9613 = vsel %vm4915, %v9529, 0
  %v9616 = vsel %vm4915, %v9530, 0
  %v9619 = vsel %vm4915, %v9531, 0
  %v9622 = vsel %vm4915, %v9532, 0
  %v9625 = vsel %vm4915, %v9533, 0
  %v9628 = vsel %vm4915, %v9534, 0
  %v9631 = vsel %vm4915, %v9535, 0
  %v9634 = vsel %vm4915, %v9536, 0
  %v9637 = vsel %vm4915, %v9537, 0
  %v9640 = vsel %vm4915, %v9538, 0
  %v9643 = vsel %vm4915, %v9539, 0
  %9645 = vmatprep.subr.bf16.mxu0 0
  %9646 = vmatpush1.bf16.msra.mxu0 %v9547
  %9647 = vmatprep.subr.bf16.mxu0 0
  %9648 = vmatpush1.bf16.msra.mxu0 0
  %9649 = vmatprep.subr.bf16.mxu0 0
  %9650 = vmatpush1.bf16.msra.mxu0 0
  %9651 = vmatprep.subr.bf16.mxu0 0
  %9652 = vmatpush1.bf16.msra.mxu0 0
  %9653 = vmatprep.subr.bf16.mxu0 0
  %9654 = vmatpush1.bf16.msra.mxu0 0
  %9655 = vmatprep.subr.bf16.mxu0 0
  %9656 = vmatpush1.bf16.msra.mxu0 0
  %9657 = vmatprep.subr.bf16.mxu0 0
  %9658 = vmatpush1.bf16.msra.mxu0 0
  %9659 = vmatprep.subr.bf16.mxu0 0
  %9660 = vmatpush1.bf16.msra.mxu0 0
  %9661 = vmatprep.subr.bf16.mxu0 0
  %9662 = vmatpush1.bf16.msra.mxu0 0
  %9663 = vmatprep.subr.bf16.mxu0 0
  %9664 = vmatpush1.bf16.msra.mxu0 0
  %9665 = vmatprep.subr.bf16.mxu0 0
  %9666 = vmatpush1.bf16.msra.mxu0 0
  %9667 = vmatprep.subr.bf16.mxu0 0
  %9668 = vmatpush1.bf16.msra.mxu0 0
  %9669 = vmatprep.subr.bf16.mxu0 0
  %9670 = vmatpush1.bf16.msra.mxu0 0
  %9671 = vmatprep.subr.bf16.mxu0 0
  %9672 = vmatpush1.bf16.msra.mxu0 0
  %9673 = vmatprep.subr.bf16.mxu0 0
  %9674 = vmatpush1.bf16.msra.mxu0 0
  %9675 = vmatprep.subr.bf16.mxu0 0
  %9676 = vmatpush1.bf16.msra.mxu0 0
  %9677 = vmatprep.mubr.bf16.mxu0 0
  %9678 = vmatmul.mubr.bf16.gmra.mrb[0].mxu0 %v9550
  %v9679 = vpop.f32.mrb[0].mxu0
  %v9680 = vadd.f32 0.0, %v9679
  %v9681 = vpop.f32.mrb[0].mxu0
  %v9682 = vpop.f32.mrb[0].mxu0
  %v9683 = vadd.f32 0.0, %v9682
  %v9684 = vpop.f32.mrb[0].mxu0
  %9685 = vmatprep.mubr.bf16.mxu0 0
  %9686 = vmatmul.mubr.bf16.gmra.mrb[0].mxu0 %v9553
  %v9687 = vpop.f32.mrb[0].mxu0
  %v9688 = vadd.f32 0.0, %v9687
  %v9689 = vpop.f32.mrb[0].mxu0
  %v9690 = vpop.f32.mrb[0].mxu0
  %v9691 = vadd.f32 0.0, %v9690
  %v9692 = vpop.f32.mrb[0].mxu0
  %9693 = vmatprep.mubr.bf16.mxu0 0
  %9694 = vmatmul.mubr.bf16.gmra.mrb[0].mxu0 %v9556
  %v9695 = vpop.f32.mrb[0].mxu0
  %v9696 = vadd.f32 0.0, %v9695
  %v9697 = vpop.f32.mrb[0].mxu0
  %v9698 = vpop.f32.mrb[0].mxu0
  %v9699 = vadd.f32 0.0, %v9698
  %v9700 = vpop.f32.mrb[0].mxu0
  %9701 = vmatprep.mubr.bf16.mxu0 0
  %9702 = vmatmul.mubr.bf16.gmra.mrb[0].mxu0 %v9559
  %v9703 = vpop.f32.mrb[0].mxu0
  %v9704 = vadd.f32 0.0, %v9703
  %v9705 = vpop.f32.mrb[0].mxu0
  %v9706 = vpop.f32.mrb[0].mxu0
  %v9707 = vadd.f32 0.0, %v9706
  %v9708 = vpop.f32.mrb[0].mxu0
  %9709 = vmatprep.mubr.bf16.mxu0 0
  %9710 = vmatmul.mubr.bf16.gmra.mrb[0].mxu0 %v9562
  %v9711 = vpop.f32.mrb[0].mxu0
  %v9712 = vadd.f32 0.0, %v9711
  %v9713 = vpop.f32.mrb[0].mxu0
  %v9714 = vpop.f32.mrb[0].mxu0
  %v9715 = vadd.f32 0.0, %v9714
  %v9716 = vpop.f32.mrb[0].mxu0
  %9717 = vmatprep.mubr.bf16.mxu0 0
  %9718 = vmatmul.mubr.bf16.gmra.mrb[0].mxu0 %v9565
  %v9719 = vpop.f32.mrb[0].mxu0
  %v9720 = vadd.f32 0.0, %v9719
  %v9721 = vpop.f32.mrb[0].mxu0
  %v9722 = vpop.f32.mrb[0].mxu0
  %v9723 = vadd.f32 0.0, %v9722
  %v9724 = vpop.f32.mrb[0].mxu0
  %9725 = vmatprep.mubr.bf16.mxu0 0
  %9726 = vmatmul.mubr.bf16.gmra.mrb[0].mxu0 %v9568
  %v9727 = vpop.f32.mrb[0].mxu0
  %v9728 = vadd.f32 0.0, %v9727
  %v9729 = vpop.f32.mrb[0].mxu0
  %v9730 = vpop.f32.mrb[0].mxu0
  %v9731 = vadd.f32 0.0, %v9730
  %v9732 = vpop.f32.mrb[0].mxu0
  %9733 = vmatprep.mubr.bf16.mxu0 0
  %9734 = vmatmul.mubr.bf16.gmra.mrb[0].mxu0 %v9571
  %v9735 = vpop.f32.mrb[0].mxu0
  %v9736 = vadd.f32 0.0, %v9735
  %v9737 = vpop.f32.mrb[0].mxu0
  %v9738 = vpop.f32.mrb[0].mxu0
  %v9739 = vadd.f32 0.0, %v9738
  %v9740 = vpop.f32.mrb[0].mxu0
  %9741 = vmatprep.mubr.bf16.mxu0 0
  %9742 = vmatmul.mubr.bf16.gmra.mrb[0].mxu0 %v9574
  %v9743 = vpop.f32.mrb[0].mxu0
  %v9744 = vadd.f32 0.0, %v9743
  %v9745 = vpop.f32.mrb[0].mxu0
  %v9746 = vpop.f32.mrb[0].mxu0
  %v9747 = vadd.f32 0.0, %v9746
  %v9748 = vpop.f32.mrb[0].mxu0
  %9749 = vmatprep.mubr.bf16.mxu0 0
  %9750 = vmatmul.mubr.bf16.gmra.mrb[0].mxu0 %v9577
  %v9751 = vpop.f32.mrb[0].mxu0
  %v9752 = vadd.f32 0.0, %v9751
  %v9753 = vpop.f32.mrb[0].mxu0
  %v9754 = vpop.f32.mrb[0].mxu0
  %v9755 = vadd.f32 0.0, %v9754
  %v9756 = vpop.f32.mrb[0].mxu0
  %9757 = vmatprep.mubr.bf16.mxu0 0
  %9758 = vmatmul.mubr.bf16.gmra.mrb[0].mxu0 %v9580
  %v9759 = vpop.f32.mrb[0].mxu0
  %v9760 = vadd.f32 0.0, %v9759
  %v9761 = vpop.f32.mrb[0].mxu0
  %v9762 = vpop.f32.mrb[0].mxu0
  %v9763 = vadd.f32 0.0, %v9762
  %v9764 = vpop.f32.mrb[0].mxu0
  %9765 = vmatprep.mubr.bf16.mxu0 0
  %9766 = vmatmul.mubr.bf16.gmra.mrb[0].mxu0 %v9583
  %v9767 = vpop.f32.mrb[0].mxu0
  %v9768 = vadd.f32 0.0, %v9767
  %v9769 = vpop.f32.mrb[0].mxu0
  %v9770 = vpop.f32.mrb[0].mxu0
  %v9771 = vadd.f32 0.0, %v9770
  %v9772 = vpop.f32.mrb[0].mxu0
  %9773 = vmatprep.mubr.bf16.mxu0 0
  %9774 = vmatmul.mubr.bf16.gmra.mrb[0].mxu0 %v9586
  %v9775 = vpop.f32.mrb[0].mxu0
  %v9776 = vadd.f32 0.0, %v9775
  %v9777 = vpop.f32.mrb[0].mxu0
  %v9778 = vpop.f32.mrb[0].mxu0
  %v9779 = vadd.f32 0.0, %v9778
  %v9780 = vpop.f32.mrb[0].mxu0
  %9781 = vmatprep.mubr.bf16.mxu0 0
  %9782 = vmatmul.mubr.bf16.gmra.mrb[0].mxu0 %v9589
  %v9783 = vpop.f32.mrb[0].mxu0
  %v9784 = vadd.f32 0.0, %v9783
  %v9785 = vpop.f32.mrb[0].mxu0
  %v9786 = vpop.f32.mrb[0].mxu0
  %v9787 = vadd.f32 0.0, %v9786
  %v9788 = vpop.f32.mrb[0].mxu0
  %9789 = vmatprep.mubr.bf16.mxu0 0
  %9790 = vmatmul.mubr.bf16.gmra.mrb[0].mxu0 %v9592
  %v9791 = vpop.f32.mrb[0].mxu0
  %v9792 = vadd.f32 0.0, %v9791
  %v9793 = vpop.f32.mrb[0].mxu0
  %v9794 = vpop.f32.mrb[0].mxu0
  %v9795 = vadd.f32 0.0, %v9794
  %v9796 = vpop.f32.mrb[0].mxu0
  %9797 = vmatprep.mubr.bf16.mxu0 0
  %9798 = vmatmul.mubr.bf16.gmra.mrb[0].mxu0 %v9595
  %v9799 = vpop.f32.mrb[0].mxu0
  %v9800 = vadd.f32 0.0, %v9799
  %v9801 = vpop.f32.mrb[0].mxu0
  %v9802 = vpop.f32.mrb[0].mxu0
  %v9803 = vadd.f32 0.0, %v9802
  %v9804 = vpop.f32.mrb[0].mxu0
  %9805 = vmatprep.mubr.bf16.mxu0 0
  %9806 = vmatmul.mubr.bf16.gmra.mrb[0].mxu0 %v9598
  %v9807 = vpop.f32.mrb[0].mxu0
  %v9808 = vadd.f32 0.0, %v9807
  %v9809 = vpop.f32.mrb[0].mxu0
  %v9810 = vpop.f32.mrb[0].mxu0
  %v9811 = vadd.f32 0.0, %v9810
  %v9812 = vpop.f32.mrb[0].mxu0
  %9813 = vmatprep.mubr.bf16.mxu0 0
  %9814 = vmatmul.mubr.bf16.gmra.mrb[0].mxu0 %v9601
  %v9815 = vpop.f32.mrb[0].mxu0
  %v9816 = vadd.f32 0.0, %v9815
  %v9817 = vpop.f32.mrb[0].mxu0
  %v9818 = vpop.f32.mrb[0].mxu0
  %v9819 = vadd.f32 0.0, %v9818
  %v9820 = vpop.f32.mrb[0].mxu0
  %9821 = vmatprep.mubr.bf16.mxu0 0
  %9822 = vmatmul.mubr.bf16.gmra.mrb[0].mxu0 %v9604
  %v9823 = vpop.f32.mrb[0].mxu0
  %v9824 = vadd.f32 0.0, %v9823
  %v9825 = vpop.f32.mrb[0].mxu0
  %v9826 = vpop.f32.mrb[0].mxu0
  %v9827 = vadd.f32 0.0, %v9826
  %v9828 = vpop.f32.mrb[0].mxu0
  %9829 = vmatprep.mubr.bf16.mxu0 0
  %9830 = vmatmul.mubr.bf16.gmra.mrb[0].mxu0 %v9607
  %v9831 = vpop.f32.mrb[0].mxu0
  %v9832 = vadd.f32 0.0, %v9831
  %v9833 = vpop.f32.mrb[0].mxu0
  %v9834 = vpop.f32.mrb[0].mxu0
  %v9835 = vadd.f32 0.0, %v9834
  %v9836 = vpop.f32.mrb[0].mxu0
  %9837 = vmatprep.mubr.bf16.mxu0 0
  %9838 = vmatmul.mubr.bf16.gmra.mrb[0].mxu0 %v9610
  %v9839 = vpop.f32.mrb[0].mxu0
  %v9840 = vadd.f32 0.0, %v9839
  %v9841 = vpop.f32.mrb[0].mxu0
  %v9842 = vpop.f32.mrb[0].mxu0
  %v9843 = vadd.f32 0.0, %v9842
  %v9844 = vpop.f32.mrb[0].mxu0
  %9845 = vmatprep.mubr.bf16.mxu0 0
  %9846 = vmatmul.mubr.bf16.gmra.mrb[0].mxu0 %v9613
  %v9847 = vpop.f32.mrb[0].mxu0
  %v9848 = vadd.f32 0.0, %v9847
  %v9849 = vpop.f32.mrb[0].mxu0
  %v9850 = vpop.f32.mrb[0].mxu0
  %v9851 = vadd.f32 0.0, %v9850
  %v9852 = vpop.f32.mrb[0].mxu0
  %9853 = vmatprep.mubr.bf16.mxu0 0
  %9854 = vmatmul.mubr.bf16.gmra.mrb[0].mxu0 %v9616
  %v9855 = vpop.f32.mrb[0].mxu0
  %v9856 = vadd.f32 0.0, %v9855
  %v9857 = vpop.f32.mrb[0].mxu0
  %v9858 = vpop.f32.mrb[0].mxu0
  %v9859 = vadd.f32 0.0, %v9858
  %v9860 = vpop.f32.mrb[0].mxu0
  %9861 = vmatprep.mubr.bf16.mxu0 0
  %9862 = vmatmul.mubr.bf16.gmra.mrb[0].mxu0 %v9619
  %v9863 = vpop.f32.mrb[0].mxu0
  %v9864 = vadd.f32 0.0, %v9863
  %v9865 = vpop.f32.mrb[0].mxu0
  %v9866 = vpop.f32.mrb[0].mxu0
  %v9867 = vadd.f32 0.0, %v9866
  %v9868 = vpop.f32.mrb[0].mxu0
  %9869 = vmatprep.mubr.bf16.mxu0 0
  %9870 = vmatmul.mubr.bf16.gmra.mrb[0].mxu0 %v9622
  %v9871 = vpop.f32.mrb[0].mxu0
  %v9872 = vadd.f32 0.0, %v9871
  %v9873 = vpop.f32.mrb[0].mxu0
  %v9874 = vpop.f32.mrb[0].mxu0
  %v9875 = vadd.f32 0.0, %v9874
  %v9876 = vpop.f32.mrb[0].mxu0
  %9877 = vmatprep.mubr.bf16.mxu0 0
  %9878 = vmatmul.mubr.bf16.gmra.mrb[0].mxu0 %v9625
  %v9879 = vpop.f32.mrb[0].mxu0
  %v9880 = vadd.f32 0.0, %v9879
  %v9881 = vpop.f32.mrb[0].mxu0
  %v9882 = vpop.f32.mrb[0].mxu0
  %v9883 = vadd.f32 0.0, %v9882
  %v9884 = vpop.f32.mrb[0].mxu0
  %9885 = vmatprep.mubr.bf16.mxu0 0
  %9886 = vmatmul.mubr.bf16.gmra.mrb[0].mxu0 %v9628
  %v9887 = vpop.f32.mrb[0].mxu0
  %v9888 = vadd.f32 0.0, %v9887
  %v9889 = vpop.f32.mrb[0].mxu0
  %v9890 = vpop.f32.mrb[0].mxu0
  %v9891 = vadd.f32 0.0, %v9890
  %v9892 = vpop.f32.mrb[0].mxu0
  %9893 = vmatprep.mubr.bf16.mxu0 0
  %9894 = vmatmul.mubr.bf16.gmra.mrb[0].mxu0 %v9631
  %v9895 = vpop.f32.mrb[0].mxu0
  %v9896 = vadd.f32 0.0, %v9895
  %v9897 = vpop.f32.mrb[0].mxu0
  %v9898 = vpop.f32.mrb[0].mxu0
  %v9899 = vadd.f32 0.0, %v9898
  %v9900 = vpop.f32.mrb[0].mxu0
  %9901 = vmatprep.mubr.bf16.mxu0 0
  %9902 = vmatmul.mubr.bf16.gmra.mrb[0].mxu0 %v9634
  %v9903 = vpop.f32.mrb[0].mxu0
  %v9904 = vadd.f32 0.0, %v9903
  %v9905 = vpop.f32.mrb[0].mxu0
  %v9906 = vpop.f32.mrb[0].mxu0
  %v9907 = vadd.f32 0.0, %v9906
  %v9908 = vpop.f32.mrb[0].mxu0
  %9909 = vmatprep.mubr.bf16.mxu0 0
  %9910 = vmatmul.mubr.bf16.gmra.mrb[0].mxu0 %v9637
  %v9911 = vpop.f32.mrb[0].mxu0
  %v9912 = vadd.f32 0.0, %v9911
  %v9913 = vpop.f32.mrb[0].mxu0
  %v9914 = vpop.f32.mrb[0].mxu0
  %v9915 = vadd.f32 0.0, %v9914
  %v9916 = vpop.f32.mrb[0].mxu0
  %9917 = vmatprep.mubr.bf16.mxu0 0
  %9918 = vmatmul.mubr.bf16.gmra.mrb[0].mxu0 %v9640
  %v9919 = vpop.f32.mrb[0].mxu0
  %v9920 = vadd.f32 0.0, %v9919
  %v9921 = vpop.f32.mrb[0].mxu0
  %v9922 = vpop.f32.mrb[0].mxu0
  %v9923 = vadd.f32 0.0, %v9922
  %v9924 = vpop.f32.mrb[0].mxu0
  %9925 = vmatprep.mubr.bf16.mxu0 0
  %9926 = vmatmul.mubr.bf16.gmra.mrb[0].mxu0 %v9643
  %v9927 = vpop.f32.mrb[0].mxu0
  %v9928 = vadd.f32 0.0, %v9927
  %v9929 = vpop.f32.mrb[0].mxu0
  %v9930 = vpop.f32.mrb[0].mxu0
  %v9931 = vadd.f32 0.0, %v9930
  %v9932 = vpop.f32.mrb[0].mxu0
  %9933 = vdwg.mxu0
  %v9934 = vadd.f32 %v9380, %v9680
  %v9935 = vadd.f32 %v9381, %v9683
  %v9936 = vadd.f32 %v9382, %v9688
  %v9937 = vadd.f32 %v9383, %v9691
  %v9938 = vadd.f32 %v9384, %v9696
  %v9939 = vadd.f32 %v9385, %v9699
  %v9940 = vadd.f32 %v9386, %v9704
  %v9941 = vadd.f32 %v9387, %v9707
  %v9942 = vadd.f32 %v9388, %v9712
  %v9943 = vadd.f32 %v9389, %v9715
  %v9944 = vadd.f32 %v9390, %v9720
  %v9945 = vadd.f32 %v9391, %v9723
  %v9946 = vadd.f32 %v9392, %v9728
  %v9947 = vadd.f32 %v9393, %v9731
  %v9948 = vadd.f32 %v9394, %v9736
  %v9949 = vadd.f32 %v9395, %v9739
  %v9950 = vadd.f32 %v9396, %v9744
  %v9951 = vadd.f32 %v9397, %v9747
  %v9952 = vadd.f32 %v9398, %v9752
  %v9953 = vadd.f32 %v9399, %v9755
  %v9954 = vadd.f32 %v9400, %v9760
  %v9955 = vadd.f32 %v9401, %v9763
  %v9956 = vadd.f32 %v9402, %v9768
  %v9957 = vadd.f32 %v9403, %v9771
  %v9958 = vadd.f32 %v9404, %v9776
  %v9959 = vadd.f32 %v9405, %v9779
  %v9960 = vadd.f32 %v9406, %v9784
  %v9961 = vadd.f32 %v9407, %v9787
  %v9962 = vadd.f32 %v9408, %v9792
  %v9963 = vadd.f32 %v9409, %v9795
  %v9964 = vadd.f32 %v9410, %v9800
  %v9965 = vadd.f32 %v9411, %v9803
  %v9966 = vadd.f32 %v9412, %v9808
  %v9967 = vadd.f32 %v9413, %v9811
  %v9968 = vadd.f32 %v9414, %v9816
  %v9969 = vadd.f32 %v9415, %v9819
  %v9970 = vadd.f32 %v9416, %v9824
  %v9971 = vadd.f32 %v9417, %v9827
  %v9972 = vadd.f32 %v9418, %v9832
  %v9973 = vadd.f32 %v9419, %v9835
  %v9974 = vadd.f32 %v9420, %v9840
  %v9975 = vadd.f32 %v9421, %v9843
  %v9976 = vadd.f32 %v9422, %v9848
  %v9977 = vadd.f32 %v9423, %v9851
  %v9978 = vadd.f32 %v9424, %v9856
  %v9979 = vadd.f32 %v9425, %v9859
  %v9980 = vadd.f32 %v9426, %v9864
  %v9981 = vadd.f32 %v9427, %v9867
  %v9982 = vadd.f32 %v9428, %v9872
  %v9983 = vadd.f32 %v9429, %v9875
  %v9984 = vadd.f32 %v9430, %v9880
  %v9985 = vadd.f32 %v9431, %v9883
  %v9986 = vadd.f32 %v9432, %v9888
  %v9987 = vadd.f32 %v9433, %v9891
  %v9988 = vadd.f32 %v9434, %v9896
  %v9989 = vadd.f32 %v9435, %v9899
  %v9990 = vadd.f32 %v9436, %v9904
  %v9991 = vadd.f32 %v9437, %v9907
  %v9992 = vadd.f32 %v9438, %v9912
  %v9993 = vadd.f32 %v9439, %v9915
  %v9994 = vadd.f32 %v9440, %v9920
  %v9995 = vadd.f32 %v9441, %v9923
  %v9996 = vadd.f32 %v9442, %v9928
  %v9997 = vadd.f32 %v9443, %v9931
  %v9998 = vld [vmem:[%s8889 + $0x2] sm:$0xff]
  %v9999 = vld [vmem:[%s8889 + $0xa] sm:$0xff]
  %v10000 = vld [vmem:[%s8889 + $0x1a] sm:$0xff]
  %v10001 = vld [vmem:[%s8889 + $0x22] sm:$0xff]
  %v10002 = vld [vmem:[%s8889 + $0x32] sm:$0xff]
  %v10003 = vld [vmem:[%s8889 + $0x3a] sm:$0xff]
  %v10004 = vld [vmem:[%s8889 + $0x4a] sm:$0xff]
  %v10005 = vld [vmem:[%s8889 + $0x52] sm:$0xff]
  %v10006 = vld [vmem:[%s8889 + $0x62] sm:$0xff]
  %v10007 = vld [vmem:[%s8889 + $0x6a] sm:$0xff]
  %v10008 = vld [vmem:[%s8889 + $0x7a] sm:$0xff]
  %v10009 = vld [vmem:[%s8889 + $0x82] sm:$0xff]
  %v10010 = vld [vmem:[%s8889 + $0x92] sm:$0xff]
  %v10011 = vld [vmem:[%s8889 + $0x9a] sm:$0xff]
  %v10012 = vld [vmem:[%s8889 + $0xaa] sm:$0xff]
  %v10013 = vld [vmem:[%s8889 + $0xb2] sm:$0xff]
  %v10014 = vld [vmem:[%s8889 + $0xc2] sm:$0xff]
  %v10015 = vld [vmem:[%s8889 + $0xca] sm:$0xff]
  %v10016 = vld [vmem:[%s8889 + $0xda] sm:$0xff]
  %v10017 = vld [vmem:[%s8889 + $0xe2] sm:$0xff]
  %v10018 = vld [vmem:[%s8889 + $0xf2] sm:$0xff]
  %v10019 = vld [vmem:[%s8889 + $0xfa] sm:$0xff]
  %v10020 = vld [vmem:[%s8889 + $0x10a] sm:$0xff]
  %v10021 = vld [vmem:[%s8889 + $0x112] sm:$0xff]
  %v10022 = vld [vmem:[%s8889 + $0x122] sm:$0xff]
  %v10023 = vld [vmem:[%s8889 + $0x12a] sm:$0xff]
  %v10024 = vld [vmem:[%s8889 + $0x13a] sm:$0xff]
  %v10025 = vld [vmem:[%s8889 + $0x142] sm:$0xff]
  %v10026 = vld [vmem:[%s8889 + $0x152] sm:$0xff]
  %v10027 = vld [vmem:[%s8889 + $0x15a] sm:$0xff]
  %v10028 = vld [vmem:[%s8889 + $0x16a] sm:$0xff]
  %v10029 = vld [vmem:[%s8889 + $0x172] sm:$0xff]
  %v10030 = vld [vmem:[%s8889 + $0x1b2] sm:$0xff]
  %v10031 = vld [vmem:[%s8889 + $0x1ba] sm:$0xff]
  %v10032 = vld [vmem:[%s8889 + $0x1ca] sm:$0xff]
  %v10033 = vld [vmem:[%s8889 + $0x1d2] sm:$0xff]
  %v10034 = vld [vmem:[%s8889 + $0x1e2] sm:$0xff]
  %v10035 = vld [vmem:[%s8889 + $0x1ea] sm:$0xff]
  %v10036 = vld [vmem:[%s8889 + $0x1fa] sm:$0xff]
  %v10037 = vld [vmem:[%s8889 + $0x202] sm:$0xff]
  %v10038 = vld [vmem:[%s8889 + $0x212] sm:$0xff]
  %v10039 = vld [vmem:[%s8889 + $0x21a] sm:$0xff]
  %v10040 = vld [vmem:[%s8889 + $0x22a] sm:$0xff]
  %v10041 = vld [vmem:[%s8889 + $0x232] sm:$0xff]
  %v10042 = vld [vmem:[%s8889 + $0x242] sm:$0xff]
  %v10043 = vld [vmem:[%s8889 + $0x24a] sm:$0xff]
  %v10044 = vld [vmem:[%s8889 + $0x25a] sm:$0xff]
  %v10045 = vld [vmem:[%s8889 + $0x262] sm:$0xff]
  %v10046 = vld [vmem:[%s8889 + $0x272] sm:$0xff]
  %v10047 = vld [vmem:[%s8889 + $0x27a] sm:$0xff]
  %v10048 = vld [vmem:[%s8889 + $0x28a] sm:$0xff]
  %v10049 = vld [vmem:[%s8889 + $0x292] sm:$0xff]
  %v10050 = vld [vmem:[%s8889 + $0x2a2] sm:$0xff]
  %v10051 = vld [vmem:[%s8889 + $0x2aa] sm:$0xff]
  %v10052 = vld [vmem:[%s8889 + $0x2ba] sm:$0xff]
  %v10053 = vld [vmem:[%s8889 + $0x2c2] sm:$0xff]
  %v10054 = vld [vmem:[%s8889 + $0x2d2] sm:$0xff]
  %v10055 = vld [vmem:[%s8889 + $0x2da] sm:$0xff]
  %v10056 = vld [vmem:[%s8889 + $0x2ea] sm:$0xff]
  %v10057 = vld [vmem:[%s8889 + $0x2f2] sm:$0xff]
  %v10058 = vld [vmem:[%s8889 + $0x302] sm:$0xff]
  %v10059 = vld [vmem:[%s8889 + $0x30a] sm:$0xff]
  %v10060 = vld [vmem:[%s8889 + $0x31a] sm:$0xff]
  %v10061 = vld [vmem:[%s8889 + $0x322] sm:$0xff]
  %v10062 = vpack.c.bf16 %v9999, %v9998
  %v10063 = vpack.c.bf16 %v10001, %v10000
  %v10064 = vpack.c.bf16 %v10003, %v10002
  %v10065 = vpack.c.bf16 %v10005, %v10004
  %v10066 = vpack.c.bf16 %v10007, %v10006
  %v10067 = vpack.c.bf16 %v10009, %v10008
  %v10068 = vpack.c.bf16 %v10011, %v10010
  %v10069 = vpack.c.bf16 %v10013, %v10012
  %v10070 = vpack.c.bf16 %v10015, %v10014
  %v10071 = vpack.c.bf16 %v10017, %v10016
  %v10072 = vpack.c.bf16 %v10019, %v10018
  %v10073 = vpack.c.bf16 %v10021, %v10020
  %v10074 = vpack.c.bf16 %v10023, %v10022
  %v10075 = vpack.c.bf16 %v10025, %v10024
  %v10076 = vpack.c.bf16 %v10027, %v10026
  %v10077 = vpack.c.bf16 %v10029, %v10028
  %v10078 = vpack.c.bf16 %v10031, %v10030
  %v10079 = vpack.c.bf16 %v10033, %v10032
  %v10080 = vpack.c.bf16 %v10035, %v10034
  %v10081 = vpack.c.bf16 %v10037, %v10036
  %v10082 = vpack.c.bf16 %v10039, %v10038
  %v10083 = vpack.c.bf16 %v10041, %v10040
  %v10084 = vpack.c.bf16 %v10043, %v10042
  %v10085 = vpack.c.bf16 %v10045, %v10044
  %v10086 = vpack.c.bf16 %v10047, %v10046
  %v10087 = vpack.c.bf16 %v10049, %v10048
  %v10088 = vpack.c.bf16 %v10051, %v10050
  %v10089 = vpack.c.bf16 %v10053, %v10052
  %v10090 = vpack.c.bf16 %v10055, %v10054
  %v10091 = vpack.c.bf16 %v10057, %v10056
  %v10092 = vpack.c.bf16 %v10059, %v10058
  %v10093 = vpack.c.bf16 %v10061, %v10060
  %s10094 = scalar_lea.vmem %s3, 64
  %v10095 = vld [vmem:[%s10094] sm:$0xf]
  %v10096 = vld [vmem:[%s10094 + $0x4] sm:$0xf]
  %v10099 = vunpack.c.l.b16 %v10095
  %v10100 = vunpack.c.l.b16 %v10096
  %v10101 = vpack.c.b16 %v10100, %v10099
  %v10104 = vsel %vm4915, %v10062, 0
  %v10107 = vsel %vm4915, %v10063, 0
  %v10110 = vsel %vm4915, %v10064, 0
  %v10113 = vsel %vm4915, %v10065, 0
  %v10116 = vsel %vm4915, %v10066, 0
  %v10119 = vsel %vm4915, %v10067, 0
  %v10122 = vsel %vm4915, %v10068, 0
  %v10125 = vsel %vm4915, %v10069, 0
  %v10128 = vsel %vm4915, %v10070, 0
  %v10131 = vsel %vm4915, %v10071, 0
  %v10134 = vsel %vm4915, %v10072, 0
  %v10137 = vsel %vm4915, %v10073, 0
  %v10140 = vsel %vm4915, %v10074, 0
  %v10143 = vsel %vm4915, %v10075, 0
  %v10146 = vsel %vm4915, %v10076, 0
  %v10149 = vsel %vm4915, %v10077, 0
  %v10152 = vsel %vm4915, %v10078, 0
  %v10155 = vsel %vm4915, %v10079, 0
  %v10158 = vsel %vm4915, %v10080, 0
  %v10161 = vsel %vm4915, %v10081, 0
  %v10164 = vsel %vm4915, %v10082, 0
  %v10167 = vsel %vm4915, %v10083, 0
  %v10170 = vsel %vm4915, %v10084, 0
  %v10173 = vsel %vm4915, %v10085, 0
  %v10176 = vsel %vm4915, %v10086, 0
  %v10179 = vsel %vm4915, %v10087, 0
  %v10182 = vsel %vm4915, %v10088, 0
  %v10185 = vsel %vm4915, %v10089, 0
  %v10188 = vsel %vm4915, %v10090, 0
  %v10191 = vsel %vm4915, %v10091, 0
  %v10194 = vsel %vm4915, %v10092, 0
  %v10197 = vsel %vm4915, %v10093, 0
  %10199 = vmatprep.subr.bf16.mxu0 0
  %10200 = vmatpush1.bf16.msra.mxu0 %v10101
  %10201 = vmatprep.subr.bf16.mxu0 0
  %10202 = vmatpush1.bf16.msra.mxu0 0
  %10203 = vmatprep.subr.bf16.mxu0 0
  %10204 = vmatpush1.bf16.msra.mxu0 0
  %10205 = vmatprep.subr.bf16.mxu0 0
  %10206 = vmatpush1.bf16.msra.mxu0 0
  %10207 = vmatprep.subr.bf16.mxu0 0
  %10208 = vmatpush1.bf16.msra.mxu0 0
  %10209 = vmatprep.subr.bf16.mxu0 0
  %10210 = vmatpush1.bf16.msra.mxu0 0
  %10211 = vmatprep.subr.bf16.mxu0 0
  %10212 = vmatpush1.bf16.msra.mxu0 0
  %10213 = vmatprep.subr.bf16.mxu0 0
  %10214 = vmatpush1.bf16.msra.mxu0 0
  %10215 = vmatprep.subr.bf16.mxu0 0
  %10216 = vmatpush1.bf16.msra.mxu0 0
  %10217 = vmatprep.subr.bf16.mxu0 0
  %10218 = vmatpush1.bf16.msra.mxu0 0
  %10219 = vmatprep.subr.bf16.mxu0 0
  %10220 = vmatpush1.bf16.msra.mxu0 0
  %10221 = vmatprep.subr.bf16.mxu0 0
  %10222 = vmatpush1.bf16.msra.mxu0 0
  %10223 = vmatprep.subr.bf16.mxu0 0
  %10224 = vmatpush1.bf16.msra.mxu0 0
  %10225 = vmatprep.subr.bf16.mxu0 0
  %10226 = vmatpush1.bf16.msra.mxu0 0
  %10227 = vmatprep.subr.bf16.mxu0 0
  %10228 = vmatpush1.bf16.msra.mxu0 0
  %10229 = vmatprep.subr.bf16.mxu0 0
  %10230 = vmatpush1.bf16.msra.mxu0 0
  %10231 = vmatprep.mubr.bf16.mxu0 0
  %10232 = vmatmul.mubr.bf16.gmra.mrb[0].mxu0 %v10104
  %v10233 = vpop.f32.mrb[0].mxu0
  %v10234 = vadd.f32 0.0, %v10233
  %v10235 = vpop.f32.mrb[0].mxu0
  %v10236 = vpop.f32.mrb[0].mxu0
  %v10237 = vadd.f32 0.0, %v10236
  %v10238 = vpop.f32.mrb[0].mxu0
  %10239 = vmatprep.mubr.bf16.mxu0 0
  %10240 = vmatmul.mubr.bf16.gmra.mrb[0].mxu0 %v10107
  %v10241 = vpop.f32.mrb[0].mxu0
  %v10242 = vadd.f32 0.0, %v10241
  %v10243 = vpop.f32.mrb[0].mxu0
  %v10244 = vpop.f32.mrb[0].mxu0
  %v10245 = vadd.f32 0.0, %v10244
  %v10246 = vpop.f32.mrb[0].mxu0
  %10247 = vmatprep.mubr.bf16.mxu0 0
  %10248 = vmatmul.mubr.bf16.gmra.mrb[0].mxu0 %v10110
  %v10249 = vpop.f32.mrb[0].mxu0
  %v10250 = vadd.f32 0.0, %v10249
  %v10251 = vpop.f32.mrb[0].mxu0
  %v10252 = vpop.f32.mrb[0].mxu0
  %v10253 = vadd.f32 0.0, %v10252
  %v10254 = vpop.f32.mrb[0].mxu0
  %10255 = vmatprep.mubr.bf16.mxu0 0
  %10256 = vmatmul.mubr.bf16.gmra.mrb[0].mxu0 %v10113
  %v10257 = vpop.f32.mrb[0].mxu0
  %v10258 = vadd.f32 0.0, %v10257
  %v10259 = vpop.f32.mrb[0].mxu0
  %v10260 = vpop.f32.mrb[0].mxu0
  %v10261 = vadd.f32 0.0, %v10260
  %v10262 = vpop.f32.mrb[0].mxu0
  %10263 = vmatprep.mubr.bf16.mxu0 0
  %10264 = vmatmul.mubr.bf16.gmra.mrb[0].mxu0 %v10116
  %v10265 = vpop.f32.mrb[0].mxu0
  %v10266 = vadd.f32 0.0, %v10265
  %v10267 = vpop.f32.mrb[0].mxu0
  %v10268 = vpop.f32.mrb[0].mxu0
  %v10269 = vadd.f32 0.0, %v10268
  %v10270 = vpop.f32.mrb[0].mxu0
  %10271 = vmatprep.mubr.bf16.mxu0 0
  %10272 = vmatmul.mubr.bf16.gmra.mrb[0].mxu0 %v10119
  %v10273 = vpop.f32.mrb[0].mxu0
  %v10274 = vadd.f32 0.0, %v10273
  %v10275 = vpop.f32.mrb[0].mxu0
  %v10276 = vpop.f32.mrb[0].mxu0
  %v10277 = vadd.f32 0.0, %v10276
  %v10278 = vpop.f32.mrb[0].mxu0
  %10279 = vmatprep.mubr.bf16.mxu0 0
  %10280 = vmatmul.mubr.bf16.gmra.mrb[0].mxu0 %v10122
  %v10281 = vpop.f32.mrb[0].mxu0
  %v10282 = vadd.f32 0.0, %v10281
  %v10283 = vpop.f32.mrb[0].mxu0
  %v10284 = vpop.f32.mrb[0].mxu0
  %v10285 = vadd.f32 0.0, %v10284
  %v10286 = vpop.f32.mrb[0].mxu0
  %10287 = vmatprep.mubr.bf16.mxu0 0
  %10288 = vmatmul.mubr.bf16.gmra.mrb[0].mxu0 %v10125
  %v10289 = vpop.f32.mrb[0].mxu0
  %v10290 = vadd.f32 0.0, %v10289
  %v10291 = vpop.f32.mrb[0].mxu0
  %v10292 = vpop.f32.mrb[0].mxu0
  %v10293 = vadd.f32 0.0, %v10292
  %v10294 = vpop.f32.mrb[0].mxu0
  %10295 = vmatprep.mubr.bf16.mxu0 0
  %10296 = vmatmul.mubr.bf16.gmra.mrb[0].mxu0 %v10128
  %v10297 = vpop.f32.mrb[0].mxu0
  %v10298 = vadd.f32 0.0, %v10297
  %v10299 = vpop.f32.mrb[0].mxu0
  %v10300 = vpop.f32.mrb[0].mxu0
  %v10301 = vadd.f32 0.0, %v10300
  %v10302 = vpop.f32.mrb[0].mxu0
  %10303 = vmatprep.mubr.bf16.mxu0 0
  %10304 = vmatmul.mubr.bf16.gmra.mrb[0].mxu0 %v10131
  %v10305 = vpop.f32.mrb[0].mxu0
  %v10306 = vadd.f32 0.0, %v10305
  %v10307 = vpop.f32.mrb[0].mxu0
  %v10308 = vpop.f32.mrb[0].mxu0
  %v10309 = vadd.f32 0.0, %v10308
  %v10310 = vpop.f32.mrb[0].mxu0
  %10311 = vmatprep.mubr.bf16.mxu0 0
  %10312 = vmatmul.mubr.bf16.gmra.mrb[0].mxu0 %v10134
  %v10313 = vpop.f32.mrb[0].mxu0
  %v10314 = vadd.f32 0.0, %v10313
  %v10315 = vpop.f32.mrb[0].mxu0
  %v10316 = vpop.f32.mrb[0].mxu0
  %v10317 = vadd.f32 0.0, %v10316
  %v10318 = vpop.f32.mrb[0].mxu0
  %10319 = vmatprep.mubr.bf16.mxu0 0
  %10320 = vmatmul.mubr.bf16.gmra.mrb[0].mxu0 %v10137
  %v10321 = vpop.f32.mrb[0].mxu0
  %v10322 = vadd.f32 0.0, %v10321
  %v10323 = vpop.f32.mrb[0].mxu0
  %v10324 = vpop.f32.mrb[0].mxu0
  %v10325 = vadd.f32 0.0, %v10324
  %v10326 = vpop.f32.mrb[0].mxu0
  %10327 = vmatprep.mubr.bf16.mxu0 0
  %10328 = vmatmul.mubr.bf16.gmra.mrb[0].mxu0 %v10140
  %v10329 = vpop.f32.mrb[0].mxu0
  %v10330 = vadd.f32 0.0, %v10329
  %v10331 = vpop.f32.mrb[0].mxu0
  %v10332 = vpop.f32.mrb[0].mxu0
  %v10333 = vadd.f32 0.0, %v10332
  %v10334 = vpop.f32.mrb[0].mxu0
  %10335 = vmatprep.mubr.bf16.mxu0 0
  %10336 = vmatmul.mubr.bf16.gmra.mrb[0].mxu0 %v10143
  %v10337 = vpop.f32.mrb[0].mxu0
  %v10338 = vadd.f32 0.0, %v10337
  %v10339 = vpop.f32.mrb[0].mxu0
  %v10340 = vpop.f32.mrb[0].mxu0
  %v10341 = vadd.f32 0.0, %v10340
  %v10342 = vpop.f32.mrb[0].mxu0
  %10343 = vmatprep.mubr.bf16.mxu0 0
  %10344 = vmatmul.mubr.bf16.gmra.mrb[0].mxu0 %v10146
  %v10345 = vpop.f32.mrb[0].mxu0
  %v10346 = vadd.f32 0.0, %v10345
  %v10347 = vpop.f32.mrb[0].mxu0
  %v10348 = vpop.f32.mrb[0].mxu0
  %v10349 = vadd.f32 0.0, %v10348
  %v10350 = vpop.f32.mrb[0].mxu0
  %10351 = vmatprep.mubr.bf16.mxu0 0
  %10352 = vmatmul.mubr.bf16.gmra.mrb[0].mxu0 %v10149
  %v10353 = vpop.f32.mrb[0].mxu0
  %v10354 = vadd.f32 0.0, %v10353
  %v10355 = vpop.f32.mrb[0].mxu0
  %v10356 = vpop.f32.mrb[0].mxu0
  %v10357 = vadd.f32 0.0, %v10356
  %v10358 = vpop.f32.mrb[0].mxu0
  %10359 = vmatprep.mubr.bf16.mxu0 0
  %10360 = vmatmul.mubr.bf16.gmra.mrb[0].mxu0 %v10152
  %v10361 = vpop.f32.mrb[0].mxu0
  %v10362 = vadd.f32 0.0, %v10361
  %v10363 = vpop.f32.mrb[0].mxu0
  %v10364 = vpop.f32.mrb[0].mxu0
  %v10365 = vadd.f32 0.0, %v10364
  %v10366 = vpop.f32.mrb[0].mxu0
  %10367 = vmatprep.mubr.bf16.mxu0 0
  %10368 = vmatmul.mubr.bf16.gmra.mrb[0].mxu0 %v10155
  %v10369 = vpop.f32.mrb[0].mxu0
  %v10370 = vadd.f32 0.0, %v10369
  %v10371 = vpop.f32.mrb[0].mxu0
  %v10372 = vpop.f32.mrb[0].mxu0
  %v10373 = vadd.f32 0.0, %v10372
  %v10374 = vpop.f32.mrb[0].mxu0
  %10375 = vmatprep.mubr.bf16.mxu0 0
  %10376 = vmatmul.mubr.bf16.gmra.mrb[0].mxu0 %v10158
  %v10377 = vpop.f32.mrb[0].mxu0
  %v10378 = vadd.f32 0.0, %v10377
  %v10379 = vpop.f32.mrb[0].mxu0
  %v10380 = vpop.f32.mrb[0].mxu0
  %v10381 = vadd.f32 0.0, %v10380
  %v10382 = vpop.f32.mrb[0].mxu0
  %10383 = vmatprep.mubr.bf16.mxu0 0
  %10384 = vmatmul.mubr.bf16.gmra.mrb[0].mxu0 %v10161
  %v10385 = vpop.f32.mrb[0].mxu0
  %v10386 = vadd.f32 0.0, %v10385
  %v10387 = vpop.f32.mrb[0].mxu0
  %v10388 = vpop.f32.mrb[0].mxu0
  %v10389 = vadd.f32 0.0, %v10388
  %v10390 = vpop.f32.mrb[0].mxu0
  %10391 = vmatprep.mubr.bf16.mxu0 0
  %10392 = vmatmul.mubr.bf16.gmra.mrb[0].mxu0 %v10164
  %v10393 = vpop.f32.mrb[0].mxu0
  %v10394 = vadd.f32 0.0, %v10393
  %v10395 = vpop.f32.mrb[0].mxu0
  %v10396 = vpop.f32.mrb[0].mxu0
  %v10397 = vadd.f32 0.0, %v10396
  %v10398 = vpop.f32.mrb[0].mxu0
  %10399 = vmatprep.mubr.bf16.mxu0 0
  %10400 = vmatmul.mubr.bf16.gmra.mrb[0].mxu0 %v10167
  %v10401 = vpop.f32.mrb[0].mxu0
  %v10402 = vadd.f32 0.0, %v10401
  %v10403 = vpop.f32.mrb[0].mxu0
  %v10404 = vpop.f32.mrb[0].mxu0
  %v10405 = vadd.f32 0.0, %v10404
  %v10406 = vpop.f32.mrb[0].mxu0
  %10407 = vmatprep.mubr.bf16.mxu0 0
  %10408 = vmatmul.mubr.bf16.gmra.mrb[0].mxu0 %v10170
  %v10409 = vpop.f32.mrb[0].mxu0
  %v10410 = vadd.f32 0.0, %v10409
  %v10411 = vpop.f32.mrb[0].mxu0
  %v10412 = vpop.f32.mrb[0].mxu0
  %v10413 = vadd.f32 0.0, %v10412
  %v10414 = vpop.f32.mrb[0].mxu0
  %10415 = vmatprep.mubr.bf16.mxu0 0
  %10416 = vmatmul.mubr.bf16.gmra.mrb[0].mxu0 %v10173
  %v10417 = vpop.f32.mrb[0].mxu0
  %v10418 = vadd.f32 0.0, %v10417
  %v10419 = vpop.f32.mrb[0].mxu0
  %v10420 = vpop.f32.mrb[0].mxu0
  %v10421 = vadd.f32 0.0, %v10420
  %v10422 = vpop.f32.mrb[0].mxu0
  %10423 = vmatprep.mubr.bf16.mxu0 0
  %10424 = vmatmul.mubr.bf16.gmra.mrb[0].mxu0 %v10176
  %v10425 = vpop.f32.mrb[0].mxu0
  %v10426 = vadd.f32 0.0, %v10425
  %v10427 = vpop.f32.mrb[0].mxu0
  %v10428 = vpop.f32.mrb[0].mxu0
  %v10429 = vadd.f32 0.0, %v10428
  %v10430 = vpop.f32.mrb[0].mxu0
  %10431 = vmatprep.mubr.bf16.mxu0 0
  %10432 = vmatmul.mubr.bf16.gmra.mrb[0].mxu0 %v10179
  %v10433 = vpop.f32.mrb[0].mxu0
  %v10434 = vadd.f32 0.0, %v10433
  %v10435 = vpop.f32.mrb[0].mxu0
  %v10436 = vpop.f32.mrb[0].mxu0
  %v10437 = vadd.f32 0.0, %v10436
  %v10438 = vpop.f32.mrb[0].mxu0
  %10439 = vmatprep.mubr.bf16.mxu0 0
  %10440 = vmatmul.mubr.bf16.gmra.mrb[0].mxu0 %v10182
  %v10441 = vpop.f32.mrb[0].mxu0
  %v10442 = vadd.f32 0.0, %v10441
  %v10443 = vpop.f32.mrb[0].mxu0
  %v10444 = vpop.f32.mrb[0].mxu0
  %v10445 = vadd.f32 0.0, %v10444
  %v10446 = vpop.f32.mrb[0].mxu0
  %10447 = vmatprep.mubr.bf16.mxu0 0
  %10448 = vmatmul.mubr.bf16.gmra.mrb[0].mxu0 %v10185
  %v10449 = vpop.f32.mrb[0].mxu0
  %v10450 = vadd.f32 0.0, %v10449
  %v10451 = vpop.f32.mrb[0].mxu0
  %v10452 = vpop.f32.mrb[0].mxu0
  %v10453 = vadd.f32 0.0, %v10452
  %v10454 = vpop.f32.mrb[0].mxu0
  %10455 = vmatprep.mubr.bf16.mxu0 0
  %10456 = vmatmul.mubr.bf16.gmra.mrb[0].mxu0 %v10188
  %v10457 = vpop.f32.mrb[0].mxu0
  %v10458 = vadd.f32 0.0, %v10457
  %v10459 = vpop.f32.mrb[0].mxu0
  %v10460 = vpop.f32.mrb[0].mxu0
  %v10461 = vadd.f32 0.0, %v10460
  %v10462 = vpop.f32.mrb[0].mxu0
  %10463 = vmatprep.mubr.bf16.mxu0 0
  %10464 = vmatmul.mubr.bf16.gmra.mrb[0].mxu0 %v10191
  %v10465 = vpop.f32.mrb[0].mxu0
  %v10466 = vadd.f32 0.0, %v10465
  %v10467 = vpop.f32.mrb[0].mxu0
  %v10468 = vpop.f32.mrb[0].mxu0
  %v10469 = vadd.f32 0.0, %v10468
  %v10470 = vpop.f32.mrb[0].mxu0
  %10471 = vmatprep.mubr.bf16.mxu0 0
  %10472 = vmatmul.mubr.bf16.gmra.mrb[0].mxu0 %v10194
  %v10473 = vpop.f32.mrb[0].mxu0
  %v10474 = vadd.f32 0.0, %v10473
  %v10475 = vpop.f32.mrb[0].mxu0
  %v10476 = vpop.f32.mrb[0].mxu0
  %v10477 = vadd.f32 0.0, %v10476
  %v10478 = vpop.f32.mrb[0].mxu0
  %10479 = vmatprep.mubr.bf16.mxu0 0
  %10480 = vmatmul.mubr.bf16.gmra.mrb[0].mxu0 %v10197
  %v10481 = vpop.f32.mrb[0].mxu0
  %v10482 = vadd.f32 0.0, %v10481
  %v10483 = vpop.f32.mrb[0].mxu0
  %v10484 = vpop.f32.mrb[0].mxu0
  %v10485 = vadd.f32 0.0, %v10484
  %v10486 = vpop.f32.mrb[0].mxu0
  %10487 = vdwg.mxu0
  %v10488 = vadd.f32 %v9934, %v10234
  %v10489 = vadd.f32 %v9935, %v10237
  %v10490 = vadd.f32 %v9936, %v10242
  %v10491 = vadd.f32 %v9937, %v10245
  %v10492 = vadd.f32 %v9938, %v10250
  %v10493 = vadd.f32 %v9939, %v10253
  %v10494 = vadd.f32 %v9940, %v10258
  %v10495 = vadd.f32 %v9941, %v10261
  %v10496 = vadd.f32 %v9942, %v10266
  %v10497 = vadd.f32 %v9943, %v10269
  %v10498 = vadd.f32 %v9944, %v10274
  %v10499 = vadd.f32 %v9945, %v10277
  %v10500 = vadd.f32 %v9946, %v10282
  %v10501 = vadd.f32 %v9947, %v10285
  %v10502 = vadd.f32 %v9948, %v10290
  %v10503 = vadd.f32 %v9949, %v10293
  %v10504 = vadd.f32 %v9950, %v10298
  %v10505 = vadd.f32 %v9951, %v10301
  %v10506 = vadd.f32 %v9952, %v10306
  %v10507 = vadd.f32 %v9953, %v10309
  %v10508 = vadd.f32 %v9954, %v10314
  %v10509 = vadd.f32 %v9955, %v10317
  %v10510 = vadd.f32 %v9956, %v10322
  %v10511 = vadd.f32 %v9957, %v10325
  %v10512 = vadd.f32 %v9958, %v10330
  %v10513 = vadd.f32 %v9959, %v10333
  %v10514 = vadd.f32 %v9960, %v10338
  %v10515 = vadd.f32 %v9961, %v10341
  %v10516 = vadd.f32 %v9962, %v10346
  %v10517 = vadd.f32 %v9963, %v10349
  %v10518 = vadd.f32 %v9964, %v10354
  %v10519 = vadd.f32 %v9965, %v10357
  %v10520 = vadd.f32 %v9966, %v10362
  %v10521 = vadd.f32 %v9967, %v10365
  %v10522 = vadd.f32 %v9968, %v10370
  %v10523 = vadd.f32 %v9969, %v10373
  %v10524 = vadd.f32 %v9970, %v10378
  %v10525 = vadd.f32 %v9971, %v10381
  %v10526 = vadd.f32 %v9972, %v10386
  %v10527 = vadd.f32 %v9973, %v10389
  %v10528 = vadd.f32 %v9974, %v10394
  %v10529 = vadd.f32 %v9975, %v10397
  %v10530 = vadd.f32 %v9976, %v10402
  %v10531 = vadd.f32 %v9977, %v10405
  %v10532 = vadd.f32 %v9978, %v10410
  %v10533 = vadd.f32 %v9979, %v10413
  %v10534 = vadd.f32 %v9980, %v10418
  %v10535 = vadd.f32 %v9981, %v10421
  %v10536 = vadd.f32 %v9982, %v10426
  %v10537 = vadd.f32 %v9983, %v10429
  %v10538 = vadd.f32 %v9984, %v10434
  %v10539 = vadd.f32 %v9985, %v10437
  %v10540 = vadd.f32 %v9986, %v10442
  %v10541 = vadd.f32 %v9987, %v10445
  %v10542 = vadd.f32 %v9988, %v10450
  %v10543 = vadd.f32 %v9989, %v10453
  %v10544 = vadd.f32 %v9990, %v10458
  %v10545 = vadd.f32 %v9991, %v10461
  %v10546 = vadd.f32 %v9992, %v10466
  %v10547 = vadd.f32 %v9993, %v10469
  %v10548 = vadd.f32 %v9994, %v10474
  %v10549 = vadd.f32 %v9995, %v10477
  %v10550 = vadd.f32 %v9996, %v10482
  %v10551 = vadd.f32 %v9997, %v10485
  %v10552 = vld [vmem:[%s4] sm:$0x1]
  %v10553 = vlaneseq
  %v10554 = vshrl.u32 %v10553, 7
  %v10555 = vsub.s32 0, %v10554
  %v10556 = vrot.slane %v10552, %v10555
  %v10557 = vadd.f32 %v10488, %v10556
  %v10558 = vadd.f32 %v10489, %v10556
  %v10559 = vadd.f32 %v10490, %v10556
  %v10560 = vadd.f32 %v10491, %v10556
  %v10561 = vadd.f32 %v10492, %v10556
  %v10562 = vadd.f32 %v10493, %v10556
  %v10563 = vadd.f32 %v10494, %v10556
  %v10564 = vadd.f32 %v10495, %v10556
  %v10565 = vadd.f32 %v10496, %v10556
  %v10566 = vadd.f32 %v10497, %v10556
  %v10567 = vadd.f32 %v10498, %v10556
  %v10568 = vadd.f32 %v10499, %v10556
  %v10569 = vadd.f32 %v10500, %v10556
  %v10570 = vadd.f32 %v10501, %v10556
  %v10571 = vadd.f32 %v10502, %v10556
  %v10572 = vadd.f32 %v10503, %v10556
  %v10573 = vadd.f32 %v10504, %v10556
  %v10574 = vadd.f32 %v10505, %v10556
  %v10575 = vadd.f32 %v10506, %v10556
  %v10576 = vadd.f32 %v10507, %v10556
  %v10577 = vadd.f32 %v10508, %v10556
  %v10578 = vadd.f32 %v10509, %v10556
  %v10579 = vadd.f32 %v10510, %v10556
  %v10580 = vadd.f32 %v10511, %v10556
  %v10581 = vadd.f32 %v10512, %v10556
  %v10582 = vadd.f32 %v10513, %v10556
  %v10583 = vadd.f32 %v10514, %v10556
  %v10584 = vadd.f32 %v10515, %v10556
  %v10585 = vadd.f32 %v10516, %v10556
  %v10586 = vadd.f32 %v10517, %v10556
  %v10587 = vadd.f32 %v10518, %v10556
  %v10588 = vadd.f32 %v10519, %v10556
  %v10589 = vadd.f32 %v10520, %v10556
  %v10590 = vadd.f32 %v10521, %v10556
  %v10591 = vadd.f32 %v10522, %v10556
  %v10592 = vadd.f32 %v10523, %v10556
  %v10593 = vadd.f32 %v10524, %v10556
  %v10594 = vadd.f32 %v10525, %v10556
  %v10595 = vadd.f32 %v10526, %v10556
  %v10596 = vadd.f32 %v10527, %v10556
  %v10597 = vadd.f32 %v10528, %v10556
  %v10598 = vadd.f32 %v10529, %v10556
  %v10599 = vadd.f32 %v10530, %v10556
  %v10600 = vadd.f32 %v10531, %v10556
  %v10601 = vadd.f32 %v10532, %v10556
  %v10602 = vadd.f32 %v10533, %v10556
  %v10603 = vadd.f32 %v10534, %v10556
  %v10604 = vadd.f32 %v10535, %v10556
  %v10605 = vadd.f32 %v10536, %v10556
  %v10606 = vadd.f32 %v10537, %v10556
  %v10607 = vadd.f32 %v10538, %v10556
  %v10608 = vadd.f32 %v10539, %v10556
  %v10609 = vadd.f32 %v10540, %v10556
  %v10610 = vadd.f32 %v10541, %v10556
  %v10611 = vadd.f32 %v10542, %v10556
  %v10612 = vadd.f32 %v10543, %v10556
  %v10613 = vadd.f32 %v10544, %v10556
  %v10614 = vadd.f32 %v10545, %v10556
  %v10615 = vadd.f32 %v10546, %v10556
  %v10616 = vadd.f32 %v10547, %v10556
  %v10617 = vadd.f32 %v10548, %v10556
  %v10618 = vadd.f32 %v10549, %v10556
  %v10619 = vadd.f32 %v10550, %v10556
  %v10620 = vadd.f32 %v10551, %v10556
  %v10621 = vsel %vm4915, %v10557, 0.0
  %v10622 = vsel %vm4915, %v10558, 0.0
  %v10623 = vadd.f32 %v10621, %v10622
  %v10624 = vsel %vm4915, %v10559, 0.0
  %v10625 = vadd.f32 %v10623, %v10624
  %v10626 = vsel %vm4915, %v10560, 0.0
  %v10627 = vadd.f32 %v10625, %v10626
  %v10628 = vsel %vm4915, %v10561, 0.0
  %v10629 = vadd.f32 %v10627, %v10628
  %v10630 = vsel %vm4915, %v10562, 0.0
  %v10631 = vadd.f32 %v10629, %v10630
  %v10632 = vsel %vm4915, %v10563, 0.0
  %v10633 = vadd.f32 %v10631, %v10632
  %v10634 = vsel %vm4915, %v10564, 0.0
  %v10635 = vadd.f32 %v10633, %v10634
  %v10636 = vsel %vm4915, %v10565, 0.0
  %v10637 = vadd.f32 %v10635, %v10636
  %v10638 = vsel %vm4915, %v10566, 0.0
  %v10639 = vadd.f32 %v10637, %v10638
  %v10640 = vsel %vm4915, %v10567, 0.0
  %v10641 = vadd.f32 %v10639, %v10640
  %v10642 = vsel %vm4915, %v10568, 0.0
  %v10643 = vadd.f32 %v10641, %v10642
  %v10644 = vsel %vm4915, %v10569, 0.0
  %v10645 = vadd.f32 %v10643, %v10644
  %v10646 = vsel %vm4915, %v10570, 0.0
  %v10647 = vadd.f32 %v10645, %v10646
  %v10648 = vsel %vm4915, %v10571, 0.0
  %v10649 = vadd.f32 %v10647, %v10648
  %v10650 = vsel %vm4915, %v10572, 0.0
  %v10651 = vadd.f32 %v10649, %v10650
  %v10652 = vsel %vm4915, %v10573, 0.0
  %v10653 = vadd.f32 %v10651, %v10652
  %v10654 = vsel %vm4915, %v10574, 0.0
  %v10655 = vadd.f32 %v10653, %v10654
  %v10656 = vsel %vm4915, %v10575, 0.0
  %v10657 = vadd.f32 %v10655, %v10656
  %v10658 = vsel %vm4915, %v10576, 0.0
  %v10659 = vadd.f32 %v10657, %v10658
  %v10660 = vsel %vm4915, %v10577, 0.0
  %v10661 = vadd.f32 %v10659, %v10660
  %v10662 = vsel %vm4915, %v10578, 0.0
  %v10663 = vadd.f32 %v10661, %v10662
  %v10664 = vsel %vm4915, %v10579, 0.0
  %v10665 = vadd.f32 %v10663, %v10664
  %v10666 = vsel %vm4915, %v10580, 0.0
  %v10667 = vadd.f32 %v10665, %v10666
  %v10668 = vsel %vm4915, %v10581, 0.0
  %v10669 = vadd.f32 %v10667, %v10668
  %v10670 = vsel %vm4915, %v10582, 0.0
  %v10671 = vadd.f32 %v10669, %v10670
  %v10672 = vsel %vm4915, %v10583, 0.0
  %v10673 = vadd.f32 %v10671, %v10672
  %v10674 = vsel %vm4915, %v10584, 0.0
  %v10675 = vadd.f32 %v10673, %v10674
  %v10676 = vsel %vm4915, %v10585, 0.0
  %v10677 = vadd.f32 %v10675, %v10676
  %v10678 = vsel %vm4915, %v10586, 0.0
  %v10679 = vadd.f32 %v10677, %v10678
  %v10680 = vsel %vm4915, %v10587, 0.0
  %v10681 = vadd.f32 %v10679, %v10680
  %v10682 = vsel %vm4915, %v10588, 0.0
  %v10683 = vadd.f32 %v10681, %v10682
  %v10684 = vsel %vm4915, %v10589, 0.0
  %v10685 = vadd.f32 %v10683, %v10684
  %v10686 = vsel %vm4915, %v10590, 0.0
  %v10687 = vadd.f32 %v10685, %v10686
  %v10688 = vsel %vm4915, %v10591, 0.0
  %v10689 = vadd.f32 %v10687, %v10688
  %v10690 = vsel %vm4915, %v10592, 0.0
  %v10691 = vadd.f32 %v10689, %v10690
  %v10692 = vsel %vm4915, %v10593, 0.0
  %v10693 = vadd.f32 %v10691, %v10692
  %v10694 = vsel %vm4915, %v10594, 0.0
  %v10695 = vadd.f32 %v10693, %v10694
  %v10696 = vsel %vm4915, %v10595, 0.0
  %v10697 = vadd.f32 %v10695, %v10696
  %v10698 = vsel %vm4915, %v10596, 0.0
  %v10699 = vadd.f32 %v10697, %v10698
  %v10700 = vsel %vm4915, %v10597, 0.0
  %v10701 = vadd.f32 %v10699, %v10700
  %v10702 = vsel %vm4915, %v10598, 0.0
  %v10703 = vadd.f32 %v10701, %v10702
  %v10704 = vsel %vm4915, %v10599, 0.0
  %v10705 = vadd.f32 %v10703, %v10704
  %v10706 = vsel %vm4915, %v10600, 0.0
  %v10707 = vadd.f32 %v10705, %v10706
  %v10708 = vsel %vm4915, %v10601, 0.0
  %v10709 = vadd.f32 %v10707, %v10708
  %v10710 = vsel %vm4915, %v10602, 0.0
  %v10711 = vadd.f32 %v10709, %v10710
  %v10712 = vsel %vm4915, %v10603, 0.0
  %v10713 = vadd.f32 %v10711, %v10712
  %v10714 = vsel %vm4915, %v10604, 0.0
  %v10715 = vadd.f32 %v10713, %v10714
  %v10716 = vsel %vm4915, %v10605, 0.0
  %v10717 = vadd.f32 %v10715, %v10716
  %v10718 = vsel %vm4915, %v10606, 0.0
  %v10719 = vadd.f32 %v10717, %v10718
  %v10720 = vsel %vm4915, %v10607, 0.0
  %v10721 = vadd.f32 %v10719, %v10720
  %v10722 = vsel %vm4915, %v10608, 0.0
  %v10723 = vadd.f32 %v10721, %v10722
  %v10724 = vsel %vm4915, %v10609, 0.0
  %v10725 = vadd.f32 %v10723, %v10724
  %v10726 = vsel %vm4915, %v10610, 0.0
  %v10727 = vadd.f32 %v10725, %v10726
  %v10728 = vsel %vm4915, %v10611, 0.0
  %v10729 = vadd.f32 %v10727, %v10728
  %v10730 = vsel %vm4915, %v10612, 0.0
  %v10731 = vadd.f32 %v10729, %v10730
  %v10732 = vsel %vm4915, %v10613, 0.0
  %v10733 = vadd.f32 %v10731, %v10732
  %v10734 = vsel %vm4915, %v10614, 0.0
  %v10735 = vadd.f32 %v10733, %v10734
  %v10736 = vsel %vm4915, %v10615, 0.0
  %v10737 = vadd.f32 %v10735, %v10736
  %v10738 = vsel %vm4915, %v10616, 0.0
  %v10739 = vadd.f32 %v10737, %v10738
  %v10740 = vsel %vm4915, %v10617, 0.0
  %v10741 = vadd.f32 %v10739, %v10740
  %v10742 = vsel %vm4915, %v10618, 0.0
  %v10743 = vadd.f32 %v10741, %v10742
  %v10744 = vsel %vm4915, %v10619, 0.0
  %v10745 = vadd.f32 %v10743, %v10744
  %v10746 = vsel %vm4915, %v10620, 0.0
  %v10747 = vadd.f32 %v10745, %v10746
  %v10748 = vrot.slane %v10747, 4
  %v10749 = vadd.f32 %v10747, %v10748
  %v10750 = vrot.slane %v10749, 2
  %v10751 = vadd.f32 %v10749, %v10750
  %v10752 = vrot.slane %v10751, 1
  %v10753 = vadd.f32 %v10751, %v10752
  %v10754 = vmul.f32 %v10753, %v5049
  %v10755 = vsub.f32 %v10557, %v10754
  %v10756 = vsub.f32 %v10558, %v10754
  %v10757 = vsub.f32 %v10559, %v10754
  %v10758 = vsub.f32 %v10560, %v10754
  %v10759 = vsub.f32 %v10561, %v10754
  %v10760 = vsub.f32 %v10562, %v10754
  %v10761 = vsub.f32 %v10563, %v10754
  %v10762 = vsub.f32 %v10564, %v10754
  %v10763 = vsub.f32 %v10565, %v10754
  %v10764 = vsub.f32 %v10566, %v10754
  %v10765 = vsub.f32 %v10567, %v10754
  %v10766 = vsub.f32 %v10568, %v10754
  %v10767 = vsub.f32 %v10569, %v10754
  %v10768 = vsub.f32 %v10570, %v10754
  %v10769 = vsub.f32 %v10571, %v10754
  %v10770 = vsub.f32 %v10572, %v10754
  %v10771 = vsub.f32 %v10573, %v10754
  %v10772 = vsub.f32 %v10574, %v10754
  %v10773 = vsub.f32 %v10575, %v10754
  %v10774 = vsub.f32 %v10576, %v10754
  %v10775 = vsub.f32 %v10577, %v10754
  %v10776 = vsub.f32 %v10578, %v10754
  %v10777 = vsub.f32 %v10579, %v10754
  %v10778 = vsub.f32 %v10580, %v10754
  %v10779 = vsub.f32 %v10581, %v10754
  %v10780 = vsub.f32 %v10582, %v10754
  %v10781 = vsub.f32 %v10583, %v10754
  %v10782 = vsub.f32 %v10584, %v10754
  %v10783 = vsub.f32 %v10585, %v10754
  %v10784 = vsub.f32 %v10586, %v10754
  %v10785 = vsub.f32 %v10587, %v10754
  %v10786 = vsub.f32 %v10588, %v10754
  %v10787 = vsub.f32 %v10589, %v10754
  %v10788 = vsub.f32 %v10590, %v10754
  %v10789 = vsub.f32 %v10591, %v10754
  %v10790 = vsub.f32 %v10592, %v10754
  %v10791 = vsub.f32 %v10593, %v10754
  %v10792 = vsub.f32 %v10594, %v10754
  %v10793 = vsub.f32 %v10595, %v10754
  %v10794 = vsub.f32 %v10596, %v10754
  %v10795 = vsub.f32 %v10597, %v10754
  %v10796 = vsub.f32 %v10598, %v10754
  %v10797 = vsub.f32 %v10599, %v10754
  %v10798 = vsub.f32 %v10600, %v10754
  %v10799 = vsub.f32 %v10601, %v10754
  %v10800 = vsub.f32 %v10602, %v10754
  %v10801 = vsub.f32 %v10603, %v10754
  %v10802 = vsub.f32 %v10604, %v10754
  %v10803 = vsub.f32 %v10605, %v10754
  %v10804 = vsub.f32 %v10606, %v10754
  %v10805 = vsub.f32 %v10607, %v10754
  %v10806 = vsub.f32 %v10608, %v10754
  %v10807 = vsub.f32 %v10609, %v10754
  %v10808 = vsub.f32 %v10610, %v10754
  %v10809 = vsub.f32 %v10611, %v10754
  %v10810 = vsub.f32 %v10612, %v10754
  %v10811 = vsub.f32 %v10613, %v10754
  %v10812 = vsub.f32 %v10614, %v10754
  %v10813 = vsub.f32 %v10615, %v10754
  %v10814 = vsub.f32 %v10616, %v10754
  %v10815 = vsub.f32 %v10617, %v10754
  %v10816 = vsub.f32 %v10618, %v10754
  %v10817 = vsub.f32 %v10619, %v10754
  %v10818 = vsub.f32 %v10620, %v10754
  %v10819 = vmul.f32 %v10755, %v10755
  %v10820 = vmul.f32 %v10756, %v10756
  %v10821 = vmul.f32 %v10757, %v10757
  %v10822 = vmul.f32 %v10758, %v10758
  %v10823 = vmul.f32 %v10759, %v10759
  %v10824 = vmul.f32 %v10760, %v10760
  %v10825 = vmul.f32 %v10761, %v10761
  %v10826 = vmul.f32 %v10762, %v10762
  %v10827 = vmul.f32 %v10763, %v10763
  %v10828 = vmul.f32 %v10764, %v10764
  %v10829 = vmul.f32 %v10765, %v10765
  %v10830 = vmul.f32 %v10766, %v10766
  %v10831 = vmul.f32 %v10767, %v10767
  %v10832 = vmul.f32 %v10768, %v10768
  %v10833 = vmul.f32 %v10769, %v10769
  %v10834 = vmul.f32 %v10770, %v10770
  %v10835 = vmul.f32 %v10771, %v10771
  %v10836 = vmul.f32 %v10772, %v10772
  %v10837 = vmul.f32 %v10773, %v10773
  %v10838 = vmul.f32 %v10774, %v10774
  %v10839 = vmul.f32 %v10775, %v10775
  %v10840 = vmul.f32 %v10776, %v10776
  %v10841 = vmul.f32 %v10777, %v10777
  %v10842 = vmul.f32 %v10778, %v10778
  %v10843 = vmul.f32 %v10779, %v10779
  %v10844 = vmul.f32 %v10780, %v10780
  %v10845 = vmul.f32 %v10781, %v10781
  %v10846 = vmul.f32 %v10782, %v10782
  %v10847 = vmul.f32 %v10783, %v10783
  %v10848 = vmul.f32 %v10784, %v10784
  %v10849 = vmul.f32 %v10785, %v10785
  %v10850 = vmul.f32 %v10786, %v10786
  %v10851 = vmul.f32 %v10787, %v10787
  %v10852 = vmul.f32 %v10788, %v10788
  %v10853 = vmul.f32 %v10789, %v10789
  %v10854 = vmul.f32 %v10790, %v10790
  %v10855 = vmul.f32 %v10791, %v10791
  %v10856 = vmul.f32 %v10792, %v10792
  %v10857 = vmul.f32 %v10793, %v10793
  %v10858 = vmul.f32 %v10794, %v10794
  %v10859 = vmul.f32 %v10795, %v10795
  %v10860 = vmul.f32 %v10796, %v10796
  %v10861 = vmul.f32 %v10797, %v10797
  %v10862 = vmul.f32 %v10798, %v10798
  %v10863 = vmul.f32 %v10799, %v10799
  %v10864 = vmul.f32 %v10800, %v10800
  %v10865 = vmul.f32 %v10801, %v10801
  %v10866 = vmul.f32 %v10802, %v10802
  %v10867 = vmul.f32 %v10803, %v10803
  %v10868 = vmul.f32 %v10804, %v10804
  %v10869 = vmul.f32 %v10805, %v10805
  %v10870 = vmul.f32 %v10806, %v10806
  %v10871 = vmul.f32 %v10807, %v10807
  %v10872 = vmul.f32 %v10808, %v10808
  %v10873 = vmul.f32 %v10809, %v10809
  %v10874 = vmul.f32 %v10810, %v10810
  %v10875 = vmul.f32 %v10811, %v10811
  %v10876 = vmul.f32 %v10812, %v10812
  %v10877 = vmul.f32 %v10813, %v10813
  %v10878 = vmul.f32 %v10814, %v10814
  %v10879 = vmul.f32 %v10815, %v10815
  %v10880 = vmul.f32 %v10816, %v10816
  %v10881 = vmul.f32 %v10817, %v10817
  %v10882 = vmul.f32 %v10818, %v10818
  %v10883 = vsel %vm4915, %v10819, 0.0
  %v10884 = vsel %vm4915, %v10820, 0.0
  %v10885 = vadd.f32 %v10883, %v10884
  %v10886 = vsel %vm4915, %v10821, 0.0
  %v10887 = vadd.f32 %v10885, %v10886
  %v10888 = vsel %vm4915, %v10822, 0.0
  %v10889 = vadd.f32 %v10887, %v10888
  %v10890 = vsel %vm4915, %v10823, 0.0
  %v10891 = vadd.f32 %v10889, %v10890
  %v10892 = vsel %vm4915, %v10824, 0.0
  %v10893 = vadd.f32 %v10891, %v10892
  %v10894 = vsel %vm4915, %v10825, 0.0
  %v10895 = vadd.f32 %v10893, %v10894
  %v10896 = vsel %vm4915, %v10826, 0.0
  %v10897 = vadd.f32 %v10895, %v10896
  %v10898 = vsel %vm4915, %v10827, 0.0
  %v10899 = vadd.f32 %v10897, %v10898
  %v10900 = vsel %vm4915, %v10828, 0.0
  %v10901 = vadd.f32 %v10899, %v10900
  %v10902 = vsel %vm4915, %v10829, 0.0
  %v10903 = vadd.f32 %v10901, %v10902
  %v10904 = vsel %vm4915, %v10830, 0.0
  %v10905 = vadd.f32 %v10903, %v10904
  %v10906 = vsel %vm4915, %v10831, 0.0
  %v10907 = vadd.f32 %v10905, %v10906
  %v10908 = vsel %vm4915, %v10832, 0.0
  %v10909 = vadd.f32 %v10907, %v10908
  %v10910 = vsel %vm4915, %v10833, 0.0
  %v10911 = vadd.f32 %v10909, %v10910
  %v10912 = vsel %vm4915, %v10834, 0.0
  %v10913 = vadd.f32 %v10911, %v10912
  %v10914 = vsel %vm4915, %v10835, 0.0
  %v10915 = vadd.f32 %v10913, %v10914
  %v10916 = vsel %vm4915, %v10836, 0.0
  %v10917 = vadd.f32 %v10915, %v10916
  %v10918 = vsel %vm4915, %v10837, 0.0
  %v10919 = vadd.f32 %v10917, %v10918
  %v10920 = vsel %vm4915, %v10838, 0.0
  %v10921 = vadd.f32 %v10919, %v10920
  %v10922 = vsel %vm4915, %v10839, 0.0
  %v10923 = vadd.f32 %v10921, %v10922
  %v10924 = vsel %vm4915, %v10840, 0.0
  %v10925 = vadd.f32 %v10923, %v10924
  %v10926 = vsel %vm4915, %v10841, 0.0
  %v10927 = vadd.f32 %v10925, %v10926
  %v10928 = vsel %vm4915, %v10842, 0.0
  %v10929 = vadd.f32 %v10927, %v10928
  %v10930 = vsel %vm4915, %v10843, 0.0
  %v10931 = vadd.f32 %v10929, %v10930
  %v10932 = vsel %vm4915, %v10844, 0.0
  %v10933 = vadd.f32 %v10931, %v10932
  %v10934 = vsel %vm4915, %v10845, 0.0
  %v10935 = vadd.f32 %v10933, %v10934
  %v10936 = vsel %vm4915, %v10846, 0.0
  %v10937 = vadd.f32 %v10935, %v10936
  %v10938 = vsel %vm4915, %v10847, 0.0
  %v10939 = vadd.f32 %v10937, %v10938
  %v10940 = vsel %vm4915, %v10848, 0.0
  %v10941 = vadd.f32 %v10939, %v10940
  %v10942 = vsel %vm4915, %v10849, 0.0
  %v10943 = vadd.f32 %v10941, %v10942
  %v10944 = vsel %vm4915, %v10850, 0.0
  %v10945 = vadd.f32 %v10943, %v10944
  %v10946 = vsel %vm4915, %v10851, 0.0
  %v10947 = vadd.f32 %v10945, %v10946
  %v10948 = vsel %vm4915, %v10852, 0.0
  %v10949 = vadd.f32 %v10947, %v10948
  %v10950 = vsel %vm4915, %v10853, 0.0
  %v10951 = vadd.f32 %v10949, %v10950
  %v10952 = vsel %vm4915, %v10854, 0.0
  %v10953 = vadd.f32 %v10951, %v10952
  %v10954 = vsel %vm4915, %v10855, 0.0
  %v10955 = vadd.f32 %v10953, %v10954
  %v10956 = vsel %vm4915, %v10856, 0.0
  %v10957 = vadd.f32 %v10955, %v10956
  %v10958 = vsel %vm4915, %v10857, 0.0
  %v10959 = vadd.f32 %v10957, %v10958
  %v10960 = vsel %vm4915, %v10858, 0.0
  %v10961 = vadd.f32 %v10959, %v10960
  %v10962 = vsel %vm4915, %v10859, 0.0
  %v10963 = vadd.f32 %v10961, %v10962
  %v10964 = vsel %vm4915, %v10860, 0.0
  %v10965 = vadd.f32 %v10963, %v10964
  %v10966 = vsel %vm4915, %v10861, 0.0
  %v10967 = vadd.f32 %v10965, %v10966
  %v10968 = vsel %vm4915, %v10862, 0.0
  %v10969 = vadd.f32 %v10967, %v10968
  %v10970 = vsel %vm4915, %v10863, 0.0
  %v10971 = vadd.f32 %v10969, %v10970
  %v10972 = vsel %vm4915, %v10864, 0.0
  %v10973 = vadd.f32 %v10971, %v10972
  %v10974 = vsel %vm4915, %v10865, 0.0
  %v10975 = vadd.f32 %v10973, %v10974
  %v10976 = vsel %vm4915, %v10866, 0.0
  %v10977 = vadd.f32 %v10975, %v10976
  %v10978 = vsel %vm4915, %v10867, 0.0
  %v10979 = vadd.f32 %v10977, %v10978
  %v10980 = vsel %vm4915, %v10868, 0.0
  %v10981 = vadd.f32 %v10979, %v10980
  %v10982 = vsel %vm4915, %v10869, 0.0
  %v10983 = vadd.f32 %v10981, %v10982
  %v10984 = vsel %vm4915, %v10870, 0.0
  %v10985 = vadd.f32 %v10983, %v10984
  %v10986 = vsel %vm4915, %v10871, 0.0
  %v10987 = vadd.f32 %v10985, %v10986
  %v10988 = vsel %vm4915, %v10872, 0.0
  %v10989 = vadd.f32 %v10987, %v10988
  %v10990 = vsel %vm4915, %v10873, 0.0
  %v10991 = vadd.f32 %v10989, %v10990
  %v10992 = vsel %vm4915, %v10874, 0.0
  %v10993 = vadd.f32 %v10991, %v10992
  %v10994 = vsel %vm4915, %v10875, 0.0
  %v10995 = vadd.f32 %v10993, %v10994
  %v10996 = vsel %vm4915, %v10876, 0.0
  %v10997 = vadd.f32 %v10995, %v10996
  %v10998 = vsel %vm4915, %v10877, 0.0
  %v10999 = vadd.f32 %v10997, %v10998
  %v11000 = vsel %vm4915, %v10878, 0.0
  %v11001 = vadd.f32 %v10999, %v11000
  %v11002 = vsel %vm4915, %v10879, 0.0
  %v11003 = vadd.f32 %v11001, %v11002
  %v11004 = vsel %vm4915, %v10880, 0.0
  %v11005 = vadd.f32 %v11003, %v11004
  %v11006 = vsel %vm4915, %v10881, 0.0
  %v11007 = vadd.f32 %v11005, %v11006
  %v11008 = vsel %vm4915, %v10882, 0.0
  %v11009 = vadd.f32 %v11007, %v11008
  %v11010 = vrot.slane %v11009, 4
  %v11011 = vadd.f32 %v11009, %v11010
  %v11012 = vrot.slane %v11011, 2
  %v11013 = vadd.f32 %v11011, %v11012
  %v11014 = vrot.slane %v11013, 1
  %v11015 = vadd.f32 %v11013, %v11014
  %v11016 = vmul.f32 %v11015, %v5049
  %v11017 = vld [vmem:[%s4 + $0x1] sm:$0x1]
  %v11018 = vadd.f32 %v11016, 1e-05
  %v11019 = vrsqrt.pop %v11018
  %v11020 = vmul.f32 %v11017, %v11019
  %v11021 = vld [vmem:[%s4 + $0x2] sm:$0x1]
  %v11022 = vmul.f32 %v10754, %v11020
  %v11023 = vsub.f32 %v11021, %v11022
  %v11024 = vlaneseq
  %v11025 = vshrl.u32 %v11024, 7
  %v11026 = vsub.s32 0, %v11025
  %v11027 = vrot.slane %v11020, %v11026
  %v11028 = vmul.f32 %v10557, %v11027
  %v11029 = vmul.f32 %v10558, %v11027
  %v11030 = vmul.f32 %v10559, %v11027
  %v11031 = vmul.f32 %v10560, %v11027
  %v11032 = vmul.f32 %v10561, %v11027
  %v11033 = vmul.f32 %v10562, %v11027
  %v11034 = vmul.f32 %v10563, %v11027
  %v11035 = vmul.f32 %v10564, %v11027
  %v11036 = vmul.f32 %v10565, %v11027
  %v11037 = vmul.f32 %v10566, %v11027
  %v11038 = vmul.f32 %v10567, %v11027
  %v11039 = vmul.f32 %v10568, %v11027
  %v11040 = vmul.f32 %v10569, %v11027
  %v11041 = vmul.f32 %v10570, %v11027
  %v11042 = vmul.f32 %v10571, %v11027
  %v11043 = vmul.f32 %v10572, %v11027
  %v11044 = vmul.f32 %v10573, %v11027
  %v11045 = vmul.f32 %v10574, %v11027
  %v11046 = vmul.f32 %v10575, %v11027
  %v11047 = vmul.f32 %v10576, %v11027
  %v11048 = vmul.f32 %v10577, %v11027
  %v11049 = vmul.f32 %v10578, %v11027
  %v11050 = vmul.f32 %v10579, %v11027
  %v11051 = vmul.f32 %v10580, %v11027
  %v11052 = vmul.f32 %v10581, %v11027
  %v11053 = vmul.f32 %v10582, %v11027
  %v11054 = vmul.f32 %v10583, %v11027
  %v11055 = vmul.f32 %v10584, %v11027
  %v11056 = vmul.f32 %v10585, %v11027
  %v11057 = vmul.f32 %v10586, %v11027
  %v11058 = vmul.f32 %v10587, %v11027
  %v11059 = vmul.f32 %v10588, %v11027
  %v11060 = vmul.f32 %v10589, %v11027
  %v11061 = vmul.f32 %v10590, %v11027
  %v11062 = vmul.f32 %v10591, %v11027
  %v11063 = vmul.f32 %v10592, %v11027
  %v11064 = vmul.f32 %v10593, %v11027
  %v11065 = vmul.f32 %v10594, %v11027
  %v11066 = vmul.f32 %v10595, %v11027
  %v11067 = vmul.f32 %v10596, %v11027
  %v11068 = vmul.f32 %v10597, %v11027
  %v11069 = vmul.f32 %v10598, %v11027
  %v11070 = vmul.f32 %v10599, %v11027
  %v11071 = vmul.f32 %v10600, %v11027
  %v11072 = vmul.f32 %v10601, %v11027
  %v11073 = vmul.f32 %v10602, %v11027
  %v11074 = vmul.f32 %v10603, %v11027
  %v11075 = vmul.f32 %v10604, %v11027
  %v11076 = vmul.f32 %v10605, %v11027
  %v11077 = vmul.f32 %v10606, %v11027
  %v11078 = vmul.f32 %v10607, %v11027
  %v11079 = vmul.f32 %v10608, %v11027
  %v11080 = vmul.f32 %v10609, %v11027
  %v11081 = vmul.f32 %v10610, %v11027
  %v11082 = vmul.f32 %v10611, %v11027
  %v11083 = vmul.f32 %v10612, %v11027
  %v11084 = vmul.f32 %v10613, %v11027
  %v11085 = vmul.f32 %v10614, %v11027
  %v11086 = vmul.f32 %v10615, %v11027
  %v11087 = vmul.f32 %v10616, %v11027
  %v11088 = vmul.f32 %v10617, %v11027
  %v11089 = vmul.f32 %v10618, %v11027
  %v11090 = vmul.f32 %v10619, %v11027
  %v11091 = vmul.f32 %v10620, %v11027
  %v11092 = vlaneseq
  %v11093 = vshrl.u32 %v11092, 7
  %v11094 = vsub.s32 0, %v11093
  %v11095 = vrot.slane %v11023, %v11094
  %v11096 = vadd.f32 %v11028, %v11095
  %v11097 = vadd.f32 %v11029, %v11095
  %v11098 = vadd.f32 %v11030, %v11095
  %v11099 = vadd.f32 %v11031, %v11095
  %v11100 = vadd.f32 %v11032, %v11095
  %v11101 = vadd.f32 %v11033, %v11095
  %v11102 = vadd.f32 %v11034, %v11095
  %v11103 = vadd.f32 %v11035, %v11095
  %v11104 = vadd.f32 %v11036, %v11095
  %v11105 = vadd.f32 %v11037, %v11095
  %v11106 = vadd.f32 %v11038, %v11095
  %v11107 = vadd.f32 %v11039, %v11095
  %v11108 = vadd.f32 %v11040, %v11095
  %v11109 = vadd.f32 %v11041, %v11095
  %v11110 = vadd.f32 %v11042, %v11095
  %v11111 = vadd.f32 %v11043, %v11095
  %v11112 = vadd.f32 %v11044, %v11095
  %v11113 = vadd.f32 %v11045, %v11095
  %v11114 = vadd.f32 %v11046, %v11095
  %v11115 = vadd.f32 %v11047, %v11095
  %v11116 = vadd.f32 %v11048, %v11095
  %v11117 = vadd.f32 %v11049, %v11095
  %v11118 = vadd.f32 %v11050, %v11095
  %v11119 = vadd.f32 %v11051, %v11095
  %v11120 = vadd.f32 %v11052, %v11095
  %v11121 = vadd.f32 %v11053, %v11095
  %v11122 = vadd.f32 %v11054, %v11095
  %v11123 = vadd.f32 %v11055, %v11095
  %v11124 = vadd.f32 %v11056, %v11095
  %v11125 = vadd.f32 %v11057, %v11095
  %v11126 = vadd.f32 %v11058, %v11095
  %v11127 = vadd.f32 %v11059, %v11095
  %v11128 = vadd.f32 %v11060, %v11095
  %v11129 = vadd.f32 %v11061, %v11095
  %v11130 = vadd.f32 %v11062, %v11095
  %v11131 = vadd.f32 %v11063, %v11095
  %v11132 = vadd.f32 %v11064, %v11095
  %v11133 = vadd.f32 %v11065, %v11095
  %v11134 = vadd.f32 %v11066, %v11095
  %v11135 = vadd.f32 %v11067, %v11095
  %v11136 = vadd.f32 %v11068, %v11095
  %v11137 = vadd.f32 %v11069, %v11095
  %v11138 = vadd.f32 %v11070, %v11095
  %v11139 = vadd.f32 %v11071, %v11095
  %v11140 = vadd.f32 %v11072, %v11095
  %v11141 = vadd.f32 %v11073, %v11095
  %v11142 = vadd.f32 %v11074, %v11095
  %v11143 = vadd.f32 %v11075, %v11095
  %v11144 = vadd.f32 %v11076, %v11095
  %v11145 = vadd.f32 %v11077, %v11095
  %v11146 = vadd.f32 %v11078, %v11095
  %v11147 = vadd.f32 %v11079, %v11095
  %v11148 = vadd.f32 %v11080, %v11095
  %v11149 = vadd.f32 %v11081, %v11095
  %v11150 = vadd.f32 %v11082, %v11095
  %v11151 = vadd.f32 %v11083, %v11095
  %v11152 = vadd.f32 %v11084, %v11095
  %v11153 = vadd.f32 %v11085, %v11095
  %v11154 = vadd.f32 %v11086, %v11095
  %v11155 = vadd.f32 %v11087, %v11095
  %v11156 = vadd.f32 %v11088, %v11095
  %v11157 = vadd.f32 %v11089, %v11095
  %v11158 = vadd.f32 %v11090, %v11095
  %v11159 = vadd.f32 %v11091, %v11095
  %v11160 = vmax.f32 %v11096, 0.0
  %v11161 = vmax.f32 %v11097, 0.0
  %v11162 = vmax.f32 %v11098, 0.0
  %v11163 = vmax.f32 %v11099, 0.0
  %v11164 = vmax.f32 %v11100, 0.0
  %v11165 = vmax.f32 %v11101, 0.0
  %v11166 = vmax.f32 %v11102, 0.0
  %v11167 = vmax.f32 %v11103, 0.0
  %v11168 = vmax.f32 %v11104, 0.0
  %v11169 = vmax.f32 %v11105, 0.0
  %v11170 = vmax.f32 %v11106, 0.0
  %v11171 = vmax.f32 %v11107, 0.0
  %v11172 = vmax.f32 %v11108, 0.0
  %v11173 = vmax.f32 %v11109, 0.0
  %v11174 = vmax.f32 %v11110, 0.0
  %v11175 = vmax.f32 %v11111, 0.0
  %v11176 = vmax.f32 %v11112, 0.0
  %v11177 = vmax.f32 %v11113, 0.0
  %v11178 = vmax.f32 %v11114, 0.0
  %v11179 = vmax.f32 %v11115, 0.0
  %v11180 = vmax.f32 %v11116, 0.0
  %v11181 = vmax.f32 %v11117, 0.0
  %v11182 = vmax.f32 %v11118, 0.0
  %v11183 = vmax.f32 %v11119, 0.0
  %v11184 = vmax.f32 %v11120, 0.0
  %v11185 = vmax.f32 %v11121, 0.0
  %v11186 = vmax.f32 %v11122, 0.0
  %v11187 = vmax.f32 %v11123, 0.0
  %v11188 = vmax.f32 %v11124, 0.0
  %v11189 = vmax.f32 %v11125, 0.0
  %v11190 = vmax.f32 %v11126, 0.0
  %v11191 = vmax.f32 %v11127, 0.0
  %v11192 = vmax.f32 %v11128, 0.0
  %v11193 = vmax.f32 %v11129, 0.0
  %v11194 = vmax.f32 %v11130, 0.0
  %v11195 = vmax.f32 %v11131, 0.0
  %v11196 = vmax.f32 %v11132, 0.0
  %v11197 = vmax.f32 %v11133, 0.0
  %v11198 = vmax.f32 %v11134, 0.0
  %v11199 = vmax.f32 %v11135, 0.0
  %v11200 = vmax.f32 %v11136, 0.0
  %v11201 = vmax.f32 %v11137, 0.0
  %v11202 = vmax.f32 %v11138, 0.0
  %v11203 = vmax.f32 %v11139, 0.0
  %v11204 = vmax.f32 %v11140, 0.0
  %v11205 = vmax.f32 %v11141, 0.0
  %v11206 = vmax.f32 %v11142, 0.0
  %v11207 = vmax.f32 %v11143, 0.0
  %v11208 = vmax.f32 %v11144, 0.0
  %v11209 = vmax.f32 %v11145, 0.0
  %v11210 = vmax.f32 %v11146, 0.0
  %v11211 = vmax.f32 %v11147, 0.0
  %v11212 = vmax.f32 %v11148, 0.0
  %v11213 = vmax.f32 %v11149, 0.0
  %v11214 = vmax.f32 %v11150, 0.0
  %v11215 = vmax.f32 %v11151, 0.0
  %v11216 = vmax.f32 %v11152, 0.0
  %v11217 = vmax.f32 %v11153, 0.0
  %v11218 = vmax.f32 %v11154, 0.0
  %v11219 = vmax.f32 %v11155, 0.0
  %v11220 = vmax.f32 %v11156, 0.0
  %v11221 = vmax.f32 %v11157, 0.0
  %v11222 = vmax.f32 %v11158, 0.0
  %v11223 = vmax.f32 %v11159, 0.0
  %11224 = vxpose.xlu0.b32.start [1/16] %v11160, 128
  %11225 = vxpose.xlu0.b32.cont [2/16] %v11161, 128
  %11226 = vxpose.xlu0.b32.cont [3/16] %v11162, 128
  %11227 = vxpose.xlu0.b32.cont [4/16] %v11163, 128
  %11228 = vxpose.xlu0.b32.cont [5/16] %v11164, 128
  %11229 = vxpose.xlu0.b32.cont [6/16] %v11165, 128
  %11230 = vxpose.xlu0.b32.cont [7/16] %v11166, 128
  %11231 = vxpose.xlu0.b32.cont [8/16] %v11167, 128
  %11232 = vxpose.xlu0.b32.cont [9/16] %v11168, 128
  %11233 = vxpose.xlu0.b32.cont [10/16] %v11169, 128
  %11234 = vxpose.xlu0.b32.cont [11/16] %v11170, 128
  %11235 = vxpose.xlu0.b32.cont [12/16] %v11171, 128
  %11236 = vxpose.xlu0.b32.cont [13/16] %v11172, 128
  %11237 = vxpose.xlu0.b32.cont [14/16] %v11173, 128
  %11238 = vxpose.xlu0.b32.cont [15/16] %v11174, 128
  %11239 = vxpose.xlu0.b32.end [16/16] %v11175, 128
  %v11240 = vpop.trf.xlu0
  %v11241 = vpop.trf.xlu0
  %v11242 = vpop.trf.xlu0
  %v11243 = vpop.trf.xlu0
  %v11244 = vpop.trf.xlu0
  %v11245 = vpop.trf.xlu0
  %v11246 = vpop.trf.xlu0
  %v11247 = vpop.trf.xlu0
  %v11248 = vpop.trf.xlu0
  %v11249 = vpop.trf.xlu0
  %v11250 = vpop.trf.xlu0
  %v11251 = vpop.trf.xlu0
  %v11252 = vpop.trf.xlu0
  %v11253 = vpop.trf.xlu0
  %v11254 = vpop.trf.xlu0
  %v11255 = vpop.trf.xlu0
  %11256 = vxpose.xlu0.b32.start [1/16] %v11176, 128
  %11257 = vxpose.xlu0.b32.cont [2/16] %v11177, 128
  %11258 = vxpose.xlu0.b32.cont [3/16] %v11178, 128
  %11259 = vxpose.xlu0.b32.cont [4/16] %v11179, 128
  %11260 = vxpose.xlu0.b32.cont [5/16] %v11180, 128
  %11261 = vxpose.xlu0.b32.cont [6/16] %v11181, 128
  %11262 = vxpose.xlu0.b32.cont [7/16] %v11182, 128
  %11263 = vxpose.xlu0.b32.cont [8/16] %v11183, 128
  %11264 = vxpose.xlu0.b32.cont [9/16] %v11184, 128
  %11265 = vxpose.xlu0.b32.cont [10/16] %v11185, 128
  %11266 = vxpose.xlu0.b32.cont [11/16] %v11186, 128
  %11267 = vxpose.xlu0.b32.cont [12/16] %v11187, 128
  %11268 = vxpose.xlu0.b32.cont [13/16] %v11188, 128
  %11269 = vxpose.xlu0.b32.cont [14/16] %v11189, 128
  %11270 = vxpose.xlu0.b32.cont [15/16] %v11190, 128
  %11271 = vxpose.xlu0.b32.end [16/16] %v11191, 128
  %v11272 = vpop.trf.xlu0
  %v11273 = vpop.trf.xlu0
  %v11274 = vpop.trf.xlu0
  %v11275 = vpop.trf.xlu0
  %v11276 = vpop.trf.xlu0
  %v11277 = vpop.trf.xlu0
  %v11278 = vpop.trf.xlu0
  %v11279 = vpop.trf.xlu0
  %v11280 = vpop.trf.xlu0
  %v11281 = vpop.trf.xlu0
  %v11282 = vpop.trf.xlu0
  %v11283 = vpop.trf.xlu0
  %v11284 = vpop.trf.xlu0
  %v11285 = vpop.trf.xlu0
  %v11286 = vpop.trf.xlu0
  %v11287 = vpop.trf.xlu0
  %11288 = vxpose.xlu0.b32.start [1/16] %v11192, 128
  %11289 = vxpose.xlu0.b32.cont [2/16] %v11193, 128
  %11290 = vxpose.xlu0.b32.cont [3/16] %v11194, 128
  %11291 = vxpose.xlu0.b32.cont [4/16] %v11195, 128
  %11292 = vxpose.xlu0.b32.cont [5/16] %v11196, 128
  %11293 = vxpose.xlu0.b32.cont [6/16] %v11197, 128
  %11294 = vxpose.xlu0.b32.cont [7/16] %v11198, 128
  %11295 = vxpose.xlu0.b32.cont [8/16] %v11199, 128
  %11296 = vxpose.xlu0.b32.cont [9/16] %v11200, 128
  %11297 = vxpose.xlu0.b32.cont [10/16] %v11201, 128
  %11298 = vxpose.xlu0.b32.cont [11/16] %v11202, 128
  %11299 = vxpose.xlu0.b32.cont [12/16] %v11203, 128
  %11300 = vxpose.xlu0.b32.cont [13/16] %v11204, 128
  %11301 = vxpose.xlu0.b32.cont [14/16] %v11205, 128
  %11302 = vxpose.xlu0.b32.cont [15/16] %v11206, 128
  %11303 = vxpose.xlu0.b32.end [16/16] %v11207, 128
  %v11304 = vpop.trf.xlu0
  %v11305 = vpop.trf.xlu0
  %v11306 = vpop.trf.xlu0
  %v11307 = vpop.trf.xlu0
  %v11308 = vpop.trf.xlu0
  %v11309 = vpop.trf.xlu0
  %v11310 = vpop.trf.xlu0
  %v11311 = vpop.trf.xlu0
  %v11312 = vpop.trf.xlu0
  %v11313 = vpop.trf.xlu0
  %v11314 = vpop.trf.xlu0
  %v11315 = vpop.trf.xlu0
  %v11316 = vpop.trf.xlu0
  %v11317 = vpop.trf.xlu0
  %v11318 = vpop.trf.xlu0
  %v11319 = vpop.trf.xlu0
  %11320 = vxpose.xlu0.b32.start [1/16] %v11208, 128
  %11321 = vxpose.xlu0.b32.cont [2/16] %v11209, 128
  %11322 = vxpose.xlu0.b32.cont [3/16] %v11210, 128
  %11323 = vxpose.xlu0.b32.cont [4/16] %v11211, 128
  %11324 = vxpose.xlu0.b32.cont [5/16] %v11212, 128
  %11325 = vxpose.xlu0.b32.cont [6/16] %v11213, 128
  %11326 = vxpose.xlu0.b32.cont [7/16] %v11214, 128
  %11327 = vxpose.xlu0.b32.cont [8/16] %v11215, 128
  %11328 = vxpose.xlu0.b32.cont [9/16] %v11216, 128
  %11329 = vxpose.xlu0.b32.cont [10/16] %v11217, 128
  %11330 = vxpose.xlu0.b32.cont [11/16] %v11218, 128
  %11331 = vxpose.xlu0.b32.cont [12/16] %v11219, 128
  %11332 = vxpose.xlu0.b32.cont [13/16] %v11220, 128
  %11333 = vxpose.xlu0.b32.cont [14/16] %v11221, 128
  %11334 = vxpose.xlu0.b32.cont [15/16] %v11222, 128
  %11335 = vxpose.xlu0.b32.end [16/16] %v11223, 128
  %v11336 = vpop.trf.xlu0
  %v11337 = vpop.trf.xlu0
  %v11338 = vpop.trf.xlu0
  %v11339 = vpop.trf.xlu0
  %v11340 = vpop.trf.xlu0
  %v11341 = vpop.trf.xlu0
  %v11342 = vpop.trf.xlu0
  %v11343 = vpop.trf.xlu0
  %v11344 = vpop.trf.xlu0
  %v11345 = vpop.trf.xlu0
  %v11346 = vpop.trf.xlu0
  %v11347 = vpop.trf.xlu0
  %v11348 = vpop.trf.xlu0
  %v11349 = vpop.trf.xlu0
  %v11350 = vpop.trf.xlu0
  %v11351 = vpop.trf.xlu0
  %11352 = vst [vmem:[%s5] sm:$0xff] %v11240
  %11353 = vst [vmem:[%s5 + $0x8] sm:$0xff] %v11272
  %11354 = vst [vmem:[%s5 + $0x10] sm:$0xff] %v11304
  %11355 = vst [vmem:[%s5 + $0x18] sm:$0xff] %v11336
  %11356 = vst [vmem:[%s5 + $0x20] sm:$0xff] %v11241
  %11357 = vst [vmem:[%s5 + $0x28] sm:$0xff] %v11273
  %11358 = vst [vmem:[%s5 + $0x30] sm:$0xff] %v11305
  %11359 = vst [vmem:[%s5 + $0x38] sm:$0xff] %v11337
  // Predicated region
  $region22: #{double_conv.1} parent=0 // pred_check
    _
  $region23: #{double_conv.1} parent=0 // pred_check_branch
    %11361 = sbr.rel (0) target = $region25
  $region24: #{double_conv.1} parent=0 // pred_region
    _
  $region25: #{double_conv.1} parent=0 // pred_fallthru
    _
  // Predicated region
  $region26: #{double_conv.1} parent=0 // pred_check
    _
  $region27: #{double_conv.1} parent=0 // pred_check_branch
    %11363 = sbr.rel (0) target = $region29
  $region28: #{double_conv.1} parent=0 // pred_region
    _
  $region29: #{double_conv.1} parent=0 // pred_fallthru
    _

</llo_original>
